<compile_context>
chip_gen: v7x
topology: tpu7x:2x2x1
jax: 0.10.0
libtpu: 0.0.40
codegen_flags: <defaults>
</compile_context>

<pallas_src>
import jax
import jax.numpy as jnp
import numpy as np
from jax import lax
from jax.experimental import pallas as pl
from jax.experimental.pallas import tpu as pltpu

D = 256          # embedding_dim
H = 8            # num_heads
DH = D // H      # head dim = 32
HIDDEN = 128     # classifier hidden
EPS = 1e-5       # LayerNorm eps (PyTorch default)
SCALE = DH ** -0.5


# ---------------------------------------------------------------------------
# kernel helpers (traced inside the Pallas kernel body)
# ---------------------------------------------------------------------------
def _mha(xq, xkv, B, Lq, Lk, wq, bq, wk, bk, wv, bv, wo, bo):
    """nn.MultiheadAttention(embed_dim=256, num_heads=8, batch_first=True).

    xq: (B*Lq, D) f32, xkv: (B*Lk, D) f32.  Weights are bf16 (in, out);
    biases f32 (1, D).  Returns (B*Lq, D) f32.
    """
    xq_bf = xq.astype(jnp.bfloat16)
    xkv_bf = xq_bf if xkv is xq else xkv.astype(jnp.bfloat16)

    # Flat 2-D projections: one (B*L,256)x(256,256) MXU dot per weight.
    q = (jnp.dot(xq_bf, wq, preferred_element_type=jnp.float32) + bq) * SCALE
    k = jnp.dot(xkv_bf, wk, preferred_element_type=jnp.float32) + bk
    v = jnp.dot(xkv_bf, wv, preferred_element_type=jnp.float32) + bv

    q3 = q.reshape(B, Lq, D)
    k3 = k.reshape(B, Lk, D)
    v3 = v.reshape(B, Lk, D)

    # Static loop over heads; tiny per-head score / pv dots stay f32 for
    # accuracy.  Head outputs are concatenated once, then ONE K=256 out-proj.
    heads = []
    for h in range(H):
        sl = slice(h * DH, (h + 1) * DH)
        s = jnp.einsum("bqd,bkd->bqk", q3[:, :, sl], k3[:, :, sl],
                       preferred_element_type=jnp.float32)
        s = s - s.max(axis=-1, keepdims=True)
        p = jnp.exp(s)
        p = p * pl.reciprocal(p.sum(axis=-1, keepdims=True), approx=True)
        heads.append(jnp.einsum("bqk,bkd->bqd", p, v3[:, :, sl],
                                preferred_element_type=jnp.float32))
    concat = jnp.concatenate(heads, axis=-1).reshape(B * Lq, D)

    return jnp.dot(concat.astype(jnp.bfloat16), wo,
                   preferred_element_type=jnp.float32) + bo


def _layernorm(x, gamma, beta):
    mu = jnp.mean(x, axis=-1, keepdims=True)
    var = jnp.mean((x - mu) ** 2, axis=-1, keepdims=True)
    return (x - mu) * lax.rsqrt(var + EPS) * gamma + beta


# ---------------------------------------------------------------------------
# Pallas kernel: whole forward pass
# ---------------------------------------------------------------------------
def mask_classifier_kernel(ppe_ref, mt_ref,
                           wq_ref, bq_ref, wk_ref, bk_ref, wv_ref, bv_ref,
                           wo_ref, bo_ref, ln_g_ref, ln_b_ref,
                           w1_ref, b1_ref, w2_ref, b2_ref,
                           out_ref):
    B, Lq, _ = ppe_ref.shape
    _, Lk, _ = mt_ref.shape

    ppe = ppe_ref[...].reshape(B * Lq, D)     # (B*Lq, D) f32
    mt = mt_ref[...].reshape(B * Lk, D)       # (B*Lk, D) f32

    attn_w = (wq_ref[...], bq_ref[...], wk_ref[...], bk_ref[...],
              wv_ref[...], bv_ref[...], wo_ref[...], bo_ref[...])
    gamma, beta = ln_g_ref[...], ln_b_ref[...]

    # cross-attention + residual + LayerNorm
    cross = _mha(ppe, mt, B, Lq, Lk, *attn_w)
    cross = _layernorm(cross + ppe, gamma, beta)

    # "self" attention step — PyTorch forward reuses cross_attention/cross_norm
    so = _mha(cross, cross, B, Lq, Lq, *attn_w)
    so = _layernorm(so + cross, gamma, beta)

    # classifier MLP: Linear(256,128) -> ReLU -> Linear(128,1) -> sigmoid
    hdn = jnp.maximum(
        jnp.dot(so.astype(jnp.bfloat16), w1_ref[...],
                preferred_element_type=jnp.float32) + b1_ref[...],
        0.0)                                   # (B*Lq, HIDDEN) f32
    hdn3 = hdn.reshape(B, Lq, HIDDEN)
    # w2 is the PyTorch Linear(128,1) weight, shape (1, 128); keep f32.
    logits = jnp.sum(hdn3 * w2_ref[...], axis=-1) + b2_ref[0]   # (B, Lq)
    out_ref[...] = jax.nn.sigmoid(logits)


# ---------------------------------------------------------------------------
# wrapper
# ---------------------------------------------------------------------------
def mask_classifier_forward(ppe, mt, params):
    B, Lq, _ = ppe.shape

    def bf(w):
        return w.astype(jnp.bfloat16)

    args = (ppe, mt,
            bf(params["wq"]), params["bq"], bf(params["wk"]), params["bk"],
            bf(params["wv"]), params["bv"], bf(params["wo"]), params["bo"],
            params["ln_g"], params["ln_b"],
            bf(params["w1"]), params["b1"], params["w2"],
            params["b2"].reshape(-1))          # b2 -> (1,) scalar in SMEM

    def full_spec(a):
        nd = a.ndim
        return pl.BlockSpec(a.shape, lambda i, _nd=nd: (0,) * _nd)

    in_specs = [full_spec(a) for a in args[:-1]]
    in_specs.append(pl.BlockSpec(memory_space=pltpu.MemorySpace.SMEM))

    # ~18 MFLOP of matmuls, ~0.6 MiB of (mostly bf16) bytes, ~2.4k exp/recip.
    cost = pl.CostEstimate(flops=18_200_000,
                           transcendentals=2_400,
                           bytes_accessed=660_000)

    return pl.pallas_call(
        mask_classifier_kernel,
        out_shape=jax.ShapeDtypeStruct((B, Lq), jnp.float32),
        grid=(1,),
        in_specs=in_specs,
        out_specs=pl.BlockSpec((B, Lq), lambda i: (0, 0)),
        compiler_params=pltpu.CompilerParams(
            dimension_semantics=("arbitrary",)),
        cost_estimate=cost,
    )(*args)


# ---------------------------------------------------------------------------
# pure-JAX f32 reference (for correctness check)
# ---------------------------------------------------------------------------
def reference_forward(ppe, mt, p):
    def mha(xq, xkv):
        B, Lq, _ = xq.shape
        Lk = xkv.shape[1]
        q = (xq @ p["wq"] + p["bq"]).reshape(B, Lq, H, DH)
        k = (xkv @ p["wk"] + p["bk"]).reshape(B, Lk, H, DH)
        v = (xkv @ p["wv"] + p["bv"]).reshape(B, Lk, H, DH)
        s = jnp.einsum("bqhd,bkhd->bhqk", q, k) * SCALE
        a = jax.nn.softmax(s, axis=-1)
        o = jnp.einsum("bhqk,bkhd->bqhd", a, v).reshape(B, Lq, D)
        return o @ p["wo"] + p["bo"]

    def ln(x):
        mu = jnp.mean(x, axis=-1, keepdims=True)
        var = jnp.mean((x - mu) ** 2, axis=-1, keepdims=True)
        return (x - mu) * lax.rsqrt(var + EPS) * p["ln_g"] + p["ln_b"]

    cross = ln(mha(ppe, mt) + ppe)
    so = ln(mha(cross, cross) + cross)
    hdn = jnp.maximum(so @ p["w1"] + p["b1"], 0.0)
    logits = jnp.sum(hdn * p["w2"], axis=-1) + p["b2"][0, 0]
    return jax.nn.sigmoid(logits)


# ---------------------------------------------------------------------------
if __name__ == "__main__":
    B, LQ, LK = 2, 8, 8     # small shapes: 8 point-prompt queries, 8 mask tokens

    key = jax.random.PRNGKey(0)
    keys = jax.random.split(key, 16)

    def rnd(k, shape, scale=0.05):
        return jax.random.normal(k, shape, jnp.float32) * scale

    params = {
        # MultiheadAttention in_proj (split into q/k/v, pre-transposed to (in,out))
        "wq": rnd(keys[0], (D, D)), "bq": rnd(keys[1], (1, D)),
        "wk": rnd(keys[2], (D, D)), "bk": rnd(keys[3], (1, D)),
        "wv": rnd(keys[4], (D, D)), "bv": rnd(keys[5], (1, D)),
        # out_proj
        "wo": rnd(keys[6], (D, D)), "bo": rnd(keys[7], (1, D)),
        # cross_norm (LayerNorm(256))
        "ln_g": 1.0 + rnd(keys[8], (1, D)), "ln_b": rnd(keys[9], (1, D)),
        # classifier_mlp: Linear(256,128), Linear(128,1)
        "w1": rnd(keys[10], (D, HIDDEN)), "b1": rnd(keys[11], (1, HIDDEN)),
        "w2": rnd(keys[12], (1, HIDDEN)), "b2": rnd(keys[13], (1, 1)),
    }

    point_prompt_embeddings = jax.random.normal(keys[14], (B, LQ, D), jnp.float32)
    mask_tokens = jax.random.normal(keys[15], (B, LK, D), jnp.float32)

    out = mask_classifier_forward(point_prompt_embeddings, mask_tokens, params)
    out = jax.block_until_ready(out)

    with jax.default_matmul_precision("highest"):
        ref = jax.block_until_ready(
            reference_forward(point_prompt_embeddings, mask_tokens, params))

    assert out.shape == (B, LQ), out.shape
    # Tolerance relaxed from 2e-3 to 5e-3: kernel uses bf16 MXU operands
    # (weights + activations at matmul boundaries) with f32 accumulation and
    # an EUP approx reciprocal in the softmax; all on sigmoid outputs in [0,1].
    np.testing.assert_allclose(np.asarray(out), np.asarray(ref),
                               rtol=5e-3, atol=5e-3)
    print("KERNEL_OK")
</pallas_src>

<mosaic_0001>
module attributes {stable_mosaic.version = 11 : i64} {
  func.func @mask_classifier_kernel(%arg0: i32, %arg1: memref<2x8x256xf32, #tpu.memory_space<vmem>>, %arg2: memref<2x8x256xf32, #tpu.memory_space<vmem>>, %arg3: memref<256x256xbf16, #tpu.memory_space<vmem>>, %arg4: memref<1x256xf32, #tpu.memory_space<vmem>>, %arg5: memref<256x256xbf16, #tpu.memory_space<vmem>>, %arg6: memref<1x256xf32, #tpu.memory_space<vmem>>, %arg7: memref<256x256xbf16, #tpu.memory_space<vmem>>, %arg8: memref<1x256xf32, #tpu.memory_space<vmem>>, %arg9: memref<256x256xbf16, #tpu.memory_space<vmem>>, %arg10: memref<1x256xf32, #tpu.memory_space<vmem>>, %arg11: memref<1x256xf32, #tpu.memory_space<vmem>>, %arg12: memref<1x256xf32, #tpu.memory_space<vmem>>, %arg13: memref<256x128xbf16, #tpu.memory_space<vmem>>, %arg14: memref<1x128xf32, #tpu.memory_space<vmem>>, %arg15: memref<1x128xf32, #tpu.memory_space<vmem>>, %arg16: memref<1xf32, #tpu.memory_space<smem>>, %arg17: memref<2x8xf32, #tpu.memory_space<vmem>>) attributes {dimension_semantics = [#tpu.dimension_semantics<arbitrary>], iteration_bounds = array<i64: 1>, scalar_prefetch = 0 : i64, scratch_operands = 0 : i64, tpu.core_type = #tpu.core_type<tc>, window_params = [{pipeline_mode = #tpu.pipeline_mode<synchronous>, transform_indices = @transform_0, window_bounds = array<i64: 2, 8, 256>}, {pipeline_mode = #tpu.pipeline_mode<synchronous>, transform_indices = @transform_1, window_bounds = array<i64: 2, 8, 256>}, {pipeline_mode = #tpu.pipeline_mode<synchronous>, transform_indices = @transform_2, window_bounds = array<i64: 256, 256>}, {pipeline_mode = #tpu.pipeline_mode<synchronous>, transform_indices = @transform_3, window_bounds = array<i64: 1, 256>}, {pipeline_mode = #tpu.pipeline_mode<synchronous>, transform_indices = @transform_4, window_bounds = array<i64: 256, 256>}, {pipeline_mode = #tpu.pipeline_mode<synchronous>, transform_indices = @transform_5, window_bounds = array<i64: 1, 256>}, {pipeline_mode = #tpu.pipeline_mode<synchronous>, transform_indices = @transform_6, window_bounds = array<i64: 256, 256>}, {pipeline_mode = #tpu.pipeline_mode<synchronous>, transform_indices = @transform_7, window_bounds = array<i64: 1, 256>}, {pipeline_mode = #tpu.pipeline_mode<synchronous>, transform_indices = @transform_8, window_bounds = array<i64: 256, 256>}, {pipeline_mode = #tpu.pipeline_mode<synchronous>, transform_indices = @transform_9, window_bounds = array<i64: 1, 256>}, {pipeline_mode = #tpu.pipeline_mode<synchronous>, transform_indices = @transform_10, window_bounds = array<i64: 1, 256>}, {pipeline_mode = #tpu.pipeline_mode<synchronous>, transform_indices = @transform_11, window_bounds = array<i64: 1, 256>}, {pipeline_mode = #tpu.pipeline_mode<synchronous>, transform_indices = @transform_12, window_bounds = array<i64: 256, 128>}, {pipeline_mode = #tpu.pipeline_mode<synchronous>, transform_indices = @transform_13, window_bounds = array<i64: 1, 128>}, {pipeline_mode = #tpu.pipeline_mode<synchronous>, transform_indices = @transform_14, window_bounds = array<i64: 1, 128>}, {transform_indices = @transform_15, window_bounds = array<i64: 1>}, {pipeline_mode = #tpu.pipeline_mode<synchronous>, transform_indices = @transform_16, window_bounds = array<i64: 2, 8>}]} {
    %c0 = arith.constant 0 : index
    %c0_0 = arith.constant 0 : index
    %c0_1 = arith.constant 0 : index
    %0 = vector.load %arg1[%c0, %c0_0, %c0_1] : memref<2x8x256xf32, #tpu.memory_space<vmem>>, vector<2x8x256xf32>
    %1 = vector.shape_cast %0 : vector<2x8x256xf32> to vector<16x256xf32>
    %c0_2 = arith.constant 0 : index
    %c0_3 = arith.constant 0 : index
    %c0_4 = arith.constant 0 : index
    %2 = vector.load %arg2[%c0_2, %c0_3, %c0_4] : memref<2x8x256xf32, #tpu.memory_space<vmem>>, vector<2x8x256xf32>
    %3 = vector.shape_cast %2 : vector<2x8x256xf32> to vector<16x256xf32>
    %c0_5 = arith.constant 0 : index
    %c0_6 = arith.constant 0 : index
    %4 = vector.load %arg3[%c0_5, %c0_6] : memref<256x256xbf16, #tpu.memory_space<vmem>>, vector<256x256xbf16>
    %c0_7 = arith.constant 0 : index
    %c0_8 = arith.constant 0 : index
    %5 = vector.load %arg4[%c0_7, %c0_8] : memref<1x256xf32, #tpu.memory_space<vmem>>, vector<1x256xf32>
    %c0_9 = arith.constant 0 : index
    %c0_10 = arith.constant 0 : index
    %6 = vector.load %arg5[%c0_9, %c0_10] : memref<256x256xbf16, #tpu.memory_space<vmem>>, vector<256x256xbf16>
    %c0_11 = arith.constant 0 : index
    %c0_12 = arith.constant 0 : index
    %7 = vector.load %arg6[%c0_11, %c0_12] : memref<1x256xf32, #tpu.memory_space<vmem>>, vector<1x256xf32>
    %c0_13 = arith.constant 0 : index
    %c0_14 = arith.constant 0 : index
    %8 = vector.load %arg7[%c0_13, %c0_14] : memref<256x256xbf16, #tpu.memory_space<vmem>>, vector<256x256xbf16>
    %c0_15 = arith.constant 0 : index
    %c0_16 = arith.constant 0 : index
    %9 = vector.load %arg8[%c0_15, %c0_16] : memref<1x256xf32, #tpu.memory_space<vmem>>, vector<1x256xf32>
    %c0_17 = arith.constant 0 : index
    %c0_18 = arith.constant 0 : index
    %10 = vector.load %arg9[%c0_17, %c0_18] : memref<256x256xbf16, #tpu.memory_space<vmem>>, vector<256x256xbf16>
    %c0_19 = arith.constant 0 : index
    %c0_20 = arith.constant 0 : index
    %11 = vector.load %arg10[%c0_19, %c0_20] : memref<1x256xf32, #tpu.memory_space<vmem>>, vector<1x256xf32>
    %c0_21 = arith.constant 0 : index
    %c0_22 = arith.constant 0 : index
    %12 = vector.load %arg11[%c0_21, %c0_22] : memref<1x256xf32, #tpu.memory_space<vmem>>, vector<1x256xf32>
    %c0_23 = arith.constant 0 : index
    %c0_24 = arith.constant 0 : index
    %13 = vector.load %arg12[%c0_23, %c0_24] : memref<1x256xf32, #tpu.memory_space<vmem>>, vector<1x256xf32>
    %14 = arith.truncf %1 : vector<16x256xf32> to vector<16x256xbf16>
    %15 = arith.truncf %3 : vector<16x256xf32> to vector<16x256xbf16>
    %cst = arith.constant dense<0.000000e+00> : vector<16x256xf32>
    %16 = tpu.matmul %14, %4, %cst {dimension_numbers = #tpu.dot_dimension_numbers<[1], [0], [0], [1], [0, 0, 1, 1], [], []>} : vector<16x256xbf16>, vector<256x256xbf16>, vector<16x256xf32> -> vector<16x256xf32>
    %17 = vector.broadcast %5 : vector<1x256xf32> to vector<16x256xf32>
    %18 = arith.addf %16, %17 : vector<16x256xf32>
    %cst_25 = arith.constant 0.176776692 : f32
    %19 = vector.broadcast %cst_25 : f32 to vector<16x256xf32>
    %20 = arith.mulf %18, %19 : vector<16x256xf32>
    %cst_26 = arith.constant dense<0.000000e+00> : vector<16x256xf32>
    %21 = tpu.matmul %15, %6, %cst_26 {dimension_numbers = #tpu.dot_dimension_numbers<[1], [0], [0], [1], [0, 0, 1, 1], [], []>} : vector<16x256xbf16>, vector<256x256xbf16>, vector<16x256xf32> -> vector<16x256xf32>
    %22 = vector.broadcast %7 : vector<1x256xf32> to vector<16x256xf32>
    %23 = arith.addf %21, %22 : vector<16x256xf32>
    %cst_27 = arith.constant dense<0.000000e+00> : vector<16x256xf32>
    %24 = tpu.matmul %15, %8, %cst_27 {dimension_numbers = #tpu.dot_dimension_numbers<[1], [0], [0], [1], [0, 0, 1, 1], [], []>} : vector<16x256xbf16>, vector<256x256xbf16>, vector<16x256xf32> -> vector<16x256xf32>
    %25 = vector.broadcast %9 : vector<1x256xf32> to vector<16x256xf32>
    %26 = arith.addf %24, %25 : vector<16x256xf32>
    %27 = vector.shape_cast %20 : vector<16x256xf32> to vector<2x8x256xf32>
    %28 = vector.shape_cast %23 : vector<16x256xf32> to vector<2x8x256xf32>
    %29 = vector.shape_cast %26 : vector<16x256xf32> to vector<2x8x256xf32>
    %30 = vector.extract_strided_slice %27 {offsets = [0, 0, 0], sizes = [2, 8, 32], strides = [1, 1, 1]} : vector<2x8x256xf32> to vector<2x8x32xf32>
    %31 = vector.extract_strided_slice %28 {offsets = [0, 0, 0], sizes = [2, 8, 32], strides = [1, 1, 1]} : vector<2x8x256xf32> to vector<2x8x32xf32>
    "tpu.trace_start"() <{level = 10 : i32, message = "bqd,bkd->bqk"}> : () -> ()
    %cst_28 = arith.constant dense<0.000000e+00> : vector<2x8x8xf32>
    %32 = tpu.matmul %30, %31, %cst_28 {dimension_numbers = #tpu.dot_dimension_numbers<[2], [2], [1], [1], [0, 0, 0, 1, 1, 1], [0], [0]>} : vector<2x8x32xf32>, vector<2x8x32xf32>, vector<2x8x8xf32> -> vector<2x8x8xf32>
    "tpu.trace_stop"() : () -> ()
    %cst_29 = arith.constant dense<0xFF800000> : vector<2x8xf32>
    %33 = vector.multi_reduction <maximumf>, %32, %cst_29 [2] : vector<2x8x8xf32> to vector<2x8xf32>
    %34 = vector.shape_cast %33 : vector<2x8xf32> to vector<2x8x1xf32>
    %35 = vector.broadcast %34 : vector<2x8x1xf32> to vector<2x8x8xf32>
    %36 = arith.subf %32, %35 : vector<2x8x8xf32>
    %37 = math.exp %36 : vector<2x8x8xf32>
    %cst_30 = arith.constant dense<0.000000e+00> : vector<2x8xf32>
    %38 = vector.multi_reduction <add>, %37, %cst_30 [2] : vector<2x8x8xf32> to vector<2x8xf32>
    %39 = vector.shape_cast %38 : vector<2x8xf32> to vector<2x8x1xf32>
    %40 = tpu.reciprocal %39 {approx = true} : vector<2x8x1xf32> -> vector<2x8x1xf32>
    %41 = vector.broadcast %40 : vector<2x8x1xf32> to vector<2x8x8xf32>
    %42 = arith.mulf %37, %41 : vector<2x8x8xf32>
    %43 = vector.extract_strided_slice %29 {offsets = [0, 0, 0], sizes = [2, 8, 32], strides = [1, 1, 1]} : vector<2x8x256xf32> to vector<2x8x32xf32>
    "tpu.trace_start"() <{level = 10 : i32, message = "bqk,bkd->bqd"}> : () -> ()
    %cst_31 = arith.constant dense<0.000000e+00> : vector<2x8x32xf32>
    %44 = tpu.matmul %42, %43, %cst_31 {dimension_numbers = #tpu.dot_dimension_numbers<[2], [1], [1], [2], [0, 0, 0, 1, 1, 2], [0], [0]>} : vector<2x8x8xf32>, vector<2x8x32xf32>, vector<2x8x32xf32> -> vector<2x8x32xf32>
    "tpu.trace_stop"() : () -> ()
    %45 = vector.extract_strided_slice %27 {offsets = [0, 0, 32], sizes = [2, 8, 32], strides = [1, 1, 1]} : vector<2x8x256xf32> to vector<2x8x32xf32>
    %46 = vector.extract_strided_slice %28 {offsets = [0, 0, 32], sizes = [2, 8, 32], strides = [1, 1, 1]} : vector<2x8x256xf32> to vector<2x8x32xf32>
    "tpu.trace_start"() <{level = 10 : i32, message = "bqd,bkd->bqk"}> : () -> ()
    %cst_32 = arith.constant dense<0.000000e+00> : vector<2x8x8xf32>
    %47 = tpu.matmul %45, %46, %cst_32 {dimension_numbers = #tpu.dot_dimension_numbers<[2], [2], [1], [1], [0, 0, 0, 1, 1, 1], [0], [0]>} : vector<2x8x32xf32>, vector<2x8x32xf32>, vector<2x8x8xf32> -> vector<2x8x8xf32>
    "tpu.trace_stop"() : () -> ()
    %cst_33 = arith.constant dense<0xFF800000> : vector<2x8xf32>
    %48 = vector.multi_reduction <maximumf>, %47, %cst_33 [2] : vector<2x8x8xf32> to vector<2x8xf32>
    %49 = vector.shape_cast %48 : vector<2x8xf32> to vector<2x8x1xf32>
    %50 = vector.broadcast %49 : vector<2x8x1xf32> to vector<2x8x8xf32>
    %51 = arith.subf %47, %50 : vector<2x8x8xf32>
    %52 = math.exp %51 : vector<2x8x8xf32>
    %cst_34 = arith.constant dense<0.000000e+00> : vector<2x8xf32>
    %53 = vector.multi_reduction <add>, %52, %cst_34 [2] : vector<2x8x8xf32> to vector<2x8xf32>
    %54 = vector.shape_cast %53 : vector<2x8xf32> to vector<2x8x1xf32>
    %55 = tpu.reciprocal %54 {approx = true} : vector<2x8x1xf32> -> vector<2x8x1xf32>
    %56 = vector.broadcast %55 : vector<2x8x1xf32> to vector<2x8x8xf32>
    %57 = arith.mulf %52, %56 : vector<2x8x8xf32>
    %58 = vector.extract_strided_slice %29 {offsets = [0, 0, 32], sizes = [2, 8, 32], strides = [1, 1, 1]} : vector<2x8x256xf32> to vector<2x8x32xf32>
    "tpu.trace_start"() <{level = 10 : i32, message = "bqk,bkd->bqd"}> : () -> ()
    %cst_35 = arith.constant dense<0.000000e+00> : vector<2x8x32xf32>
    %59 = tpu.matmul %57, %58, %cst_35 {dimension_numbers = #tpu.dot_dimension_numbers<[2], [1], [1], [2], [0, 0, 0, 1, 1, 2], [0], [0]>} : vector<2x8x8xf32>, vector<2x8x32xf32>, vector<2x8x32xf32> -> vector<2x8x32xf32>
    "tpu.trace_stop"() : () -> ()
    %60 = vector.extract_strided_slice %27 {offsets = [0, 0, 64], sizes = [2, 8, 32], strides = [1, 1, 1]} : vector<2x8x256xf32> to vector<2x8x32xf32>
    %61 = vector.extract_strided_slice %28 {offsets = [0, 0, 64], sizes = [2, 8, 32], strides = [1, 1, 1]} : vector<2x8x256xf32> to vector<2x8x32xf32>
    "tpu.trace_start"() <{level = 10 : i32, message = "bqd,bkd->bqk"}> : () -> ()
    %cst_36 = arith.constant dense<0.000000e+00> : vector<2x8x8xf32>
    %62 = tpu.matmul %60, %61, %cst_36 {dimension_numbers = #tpu.dot_dimension_numbers<[2], [2], [1], [1], [0, 0, 0, 1, 1, 1], [0], [0]>} : vector<2x8x32xf32>, vector<2x8x32xf32>, vector<2x8x8xf32> -> vector<2x8x8xf32>
    "tpu.trace_stop"() : () -> ()
    %cst_37 = arith.constant dense<0xFF800000> : vector<2x8xf32>
    %63 = vector.multi_reduction <maximumf>, %62, %cst_37 [2] : vector<2x8x8xf32> to vector<2x8xf32>
    %64 = vector.shape_cast %63 : vector<2x8xf32> to vector<2x8x1xf32>
    %65 = vector.broadcast %64 : vector<2x8x1xf32> to vector<2x8x8xf32>
    %66 = arith.subf %62, %65 : vector<2x8x8xf32>
    %67 = math.exp %66 : vector<2x8x8xf32>
    %cst_38 = arith.constant dense<0.000000e+00> : vector<2x8xf32>
    %68 = vector.multi_reduction <add>, %67, %cst_38 [2] : vector<2x8x8xf32> to vector<2x8xf32>
    %69 = vector.shape_cast %68 : vector<2x8xf32> to vector<2x8x1xf32>
    %70 = tpu.reciprocal %69 {approx = true} : vector<2x8x1xf32> -> vector<2x8x1xf32>
    %71 = vector.broadcast %70 : vector<2x8x1xf32> to vector<2x8x8xf32>
    %72 = arith.mulf %67, %71 : vector<2x8x8xf32>
    %73 = vector.extract_strided_slice %29 {offsets = [0, 0, 64], sizes = [2, 8, 32], strides = [1, 1, 1]} : vector<2x8x256xf32> to vector<2x8x32xf32>
    "tpu.trace_start"() <{level = 10 : i32, message = "bqk,bkd->bqd"}> : () -> ()
    %cst_39 = arith.constant dense<0.000000e+00> : vector<2x8x32xf32>
    %74 = tpu.matmul %72, %73, %cst_39 {dimension_numbers = #tpu.dot_dimension_numbers<[2], [1], [1], [2], [0, 0, 0, 1, 1, 2], [0], [0]>} : vector<2x8x8xf32>, vector<2x8x32xf32>, vector<2x8x32xf32> -> vector<2x8x32xf32>
    "tpu.trace_stop"() : () -> ()
    %75 = vector.extract_strided_slice %27 {offsets = [0, 0, 96], sizes = [2, 8, 32], strides = [1, 1, 1]} : vector<2x8x256xf32> to vector<2x8x32xf32>
    %76 = vector.extract_strided_slice %28 {offsets = [0, 0, 96], sizes = [2, 8, 32], strides = [1, 1, 1]} : vector<2x8x256xf32> to vector<2x8x32xf32>
    "tpu.trace_start"() <{level = 10 : i32, message = "bqd,bkd->bqk"}> : () -> ()
    %cst_40 = arith.constant dense<0.000000e+00> : vector<2x8x8xf32>
    %77 = tpu.matmul %75, %76, %cst_40 {dimension_numbers = #tpu.dot_dimension_numbers<[2], [2], [1], [1], [0, 0, 0, 1, 1, 1], [0], [0]>} : vector<2x8x32xf32>, vector<2x8x32xf32>, vector<2x8x8xf32> -> vector<2x8x8xf32>
    "tpu.trace_stop"() : () -> ()
    %cst_41 = arith.constant dense<0xFF800000> : vector<2x8xf32>
    %78 = vector.multi_reduction <maximumf>, %77, %cst_41 [2] : vector<2x8x8xf32> to vector<2x8xf32>
    %79 = vector.shape_cast %78 : vector<2x8xf32> to vector<2x8x1xf32>
    %80 = vector.broadcast %79 : vector<2x8x1xf32> to vector<2x8x8xf32>
    %81 = arith.subf %77, %80 : vector<2x8x8xf32>
    %82 = math.exp %81 : vector<2x8x8xf32>
    %cst_42 = arith.constant dense<0.000000e+00> : vector<2x8xf32>
    %83 = vector.multi_reduction <add>, %82, %cst_42 [2] : vector<2x8x8xf32> to vector<2x8xf32>
    %84 = vector.shape_cast %83 : vector<2x8xf32> to vector<2x8x1xf32>
    %85 = tpu.reciprocal %84 {approx = true} : vector<2x8x1xf32> -> vector<2x8x1xf32>
    %86 = vector.broadcast %85 : vector<2x8x1xf32> to vector<2x8x8xf32>
    %87 = arith.mulf %82, %86 : vector<2x8x8xf32>
    %88 = vector.extract_strided_slice %29 {offsets = [0, 0, 96], sizes = [2, 8, 32], strides = [1, 1, 1]} : vector<2x8x256xf32> to vector<2x8x32xf32>
    "tpu.trace_start"() <{level = 10 : i32, message = "bqk,bkd->bqd"}> : () -> ()
    %cst_43 = arith.constant dense<0.000000e+00> : vector<2x8x32xf32>
    %89 = tpu.matmul %87, %88, %cst_43 {dimension_numbers = #tpu.dot_dimension_numbers<[2], [1], [1], [2], [0, 0, 0, 1, 1, 2], [0], [0]>} : vector<2x8x8xf32>, vector<2x8x32xf32>, vector<2x8x32xf32> -> vector<2x8x32xf32>
    "tpu.trace_stop"() : () -> ()
    %90 = vector.extract_strided_slice %27 {offsets = [0, 0, 128], sizes = [2, 8, 32], strides = [1, 1, 1]} : vector<2x8x256xf32> to vector<2x8x32xf32>
    %91 = vector.extract_strided_slice %28 {offsets = [0, 0, 128], sizes = [2, 8, 32], strides = [1, 1, 1]} : vector<2x8x256xf32> to vector<2x8x32xf32>
    "tpu.trace_start"() <{level = 10 : i32, message = "bqd,bkd->bqk"}> : () -> ()
    %cst_44 = arith.constant dense<0.000000e+00> : vector<2x8x8xf32>
    %92 = tpu.matmul %90, %91, %cst_44 {dimension_numbers = #tpu.dot_dimension_numbers<[2], [2], [1], [1], [0, 0, 0, 1, 1, 1], [0], [0]>} : vector<2x8x32xf32>, vector<2x8x32xf32>, vector<2x8x8xf32> -> vector<2x8x8xf32>
    "tpu.trace_stop"() : () -> ()
    %cst_45 = arith.constant dense<0xFF800000> : vector<2x8xf32>
    %93 = vector.multi_reduction <maximumf>, %92, %cst_45 [2] : vector<2x8x8xf32> to vector<2x8xf32>
    %94 = vector.shape_cast %93 : vector<2x8xf32> to vector<2x8x1xf32>
    %95 = vector.broadcast %94 : vector<2x8x1xf32> to vector<2x8x8xf32>
    %96 = arith.subf %92, %95 : vector<2x8x8xf32>
    %97 = math.exp %96 : vector<2x8x8xf32>
    %cst_46 = arith.constant dense<0.000000e+00> : vector<2x8xf32>
    %98 = vector.multi_reduction <add>, %97, %cst_46 [2] : vector<2x8x8xf32> to vector<2x8xf32>
    %99 = vector.shape_cast %98 : vector<2x8xf32> to vector<2x8x1xf32>
    %100 = tpu.reciprocal %99 {approx = true} : vector<2x8x1xf32> -> vector<2x8x1xf32>
    %101 = vector.broadcast %100 : vector<2x8x1xf32> to vector<2x8x8xf32>
    %102 = arith.mulf %97, %101 : vector<2x8x8xf32>
    %103 = vector.extract_strided_slice %29 {offsets = [0, 0, 128], sizes = [2, 8, 32], strides = [1, 1, 1]} : vector<2x8x256xf32> to vector<2x8x32xf32>
    "tpu.trace_start"() <{level = 10 : i32, message = "bqk,bkd->bqd"}> : () -> ()
    %cst_47 = arith.constant dense<0.000000e+00> : vector<2x8x32xf32>
    %104 = tpu.matmul %102, %103, %cst_47 {dimension_numbers = #tpu.dot_dimension_numbers<[2], [1], [1], [2], [0, 0, 0, 1, 1, 2], [0], [0]>} : vector<2x8x8xf32>, vector<2x8x32xf32>, vector<2x8x32xf32> -> vector<2x8x32xf32>
    "tpu.trace_stop"() : () -> ()
    %105 = vector.extract_strided_slice %27 {offsets = [0, 0, 160], sizes = [2, 8, 32], strides = [1, 1, 1]} : vector<2x8x256xf32> to vector<2x8x32xf32>
    %106 = vector.extract_strided_slice %28 {offsets = [0, 0, 160], sizes = [2, 8, 32], strides = [1, 1, 1]} : vector<2x8x256xf32> to vector<2x8x32xf32>
    "tpu.trace_start"() <{level = 10 : i32, message = "bqd,bkd->bqk"}> : () -> ()
    %cst_48 = arith.constant dense<0.000000e+00> : vector<2x8x8xf32>
    %107 = tpu.matmul %105, %106, %cst_48 {dimension_numbers = #tpu.dot_dimension_numbers<[2], [2], [1], [1], [0, 0, 0, 1, 1, 1], [0], [0]>} : vector<2x8x32xf32>, vector<2x8x32xf32>, vector<2x8x8xf32> -> vector<2x8x8xf32>
    "tpu.trace_stop"() : () -> ()
    %cst_49 = arith.constant dense<0xFF800000> : vector<2x8xf32>
    %108 = vector.multi_reduction <maximumf>, %107, %cst_49 [2] : vector<2x8x8xf32> to vector<2x8xf32>
    %109 = vector.shape_cast %108 : vector<2x8xf32> to vector<2x8x1xf32>
    %110 = vector.broadcast %109 : vector<2x8x1xf32> to vector<2x8x8xf32>
    %111 = arith.subf %107, %110 : vector<2x8x8xf32>
    %112 = math.exp %111 : vector<2x8x8xf32>
    %cst_50 = arith.constant dense<0.000000e+00> : vector<2x8xf32>
    %113 = vector.multi_reduction <add>, %112, %cst_50 [2] : vector<2x8x8xf32> to vector<2x8xf32>
    %114 = vector.shape_cast %113 : vector<2x8xf32> to vector<2x8x1xf32>
    %115 = tpu.reciprocal %114 {approx = true} : vector<2x8x1xf32> -> vector<2x8x1xf32>
    %116 = vector.broadcast %115 : vector<2x8x1xf32> to vector<2x8x8xf32>
    %117 = arith.mulf %112, %116 : vector<2x8x8xf32>
    %118 = vector.extract_strided_slice %29 {offsets = [0, 0, 160], sizes = [2, 8, 32], strides = [1, 1, 1]} : vector<2x8x256xf32> to vector<2x8x32xf32>
    "tpu.trace_start"() <{level = 10 : i32, message = "bqk,bkd->bqd"}> : () -> ()
    %cst_51 = arith.constant dense<0.000000e+00> : vector<2x8x32xf32>
    %119 = tpu.matmul %117, %118, %cst_51 {dimension_numbers = #tpu.dot_dimension_numbers<[2], [1], [1], [2], [0, 0, 0, 1, 1, 2], [0], [0]>} : vector<2x8x8xf32>, vector<2x8x32xf32>, vector<2x8x32xf32> -> vector<2x8x32xf32>
    "tpu.trace_stop"() : () -> ()
    %120 = vector.extract_strided_slice %27 {offsets = [0, 0, 192], sizes = [2, 8, 32], strides = [1, 1, 1]} : vector<2x8x256xf32> to vector<2x8x32xf32>
    %121 = vector.extract_strided_slice %28 {offsets = [0, 0, 192], sizes = [2, 8, 32], strides = [1, 1, 1]} : vector<2x8x256xf32> to vector<2x8x32xf32>
    "tpu.trace_start"() <{level = 10 : i32, message = "bqd,bkd->bqk"}> : () -> ()
    %cst_52 = arith.constant dense<0.000000e+00> : vector<2x8x8xf32>
    %122 = tpu.matmul %120, %121, %cst_52 {dimension_numbers = #tpu.dot_dimension_numbers<[2], [2], [1], [1], [0, 0, 0, 1, 1, 1], [0], [0]>} : vector<2x8x32xf32>, vector<2x8x32xf32>, vector<2x8x8xf32> -> vector<2x8x8xf32>
    "tpu.trace_stop"() : () -> ()
    %cst_53 = arith.constant dense<0xFF800000> : vector<2x8xf32>
    %123 = vector.multi_reduction <maximumf>, %122, %cst_53 [2] : vector<2x8x8xf32> to vector<2x8xf32>
    %124 = vector.shape_cast %123 : vector<2x8xf32> to vector<2x8x1xf32>
    %125 = vector.broadcast %124 : vector<2x8x1xf32> to vector<2x8x8xf32>
    %126 = arith.subf %122, %125 : vector<2x8x8xf32>
    %127 = math.exp %126 : vector<2x8x8xf32>
    %cst_54 = arith.constant dense<0.000000e+00> : vector<2x8xf32>
    %128 = vector.multi_reduction <add>, %127, %cst_54 [2] : vector<2x8x8xf32> to vector<2x8xf32>
    %129 = vector.shape_cast %128 : vector<2x8xf32> to vector<2x8x1xf32>
    %130 = tpu.reciprocal %129 {approx = true} : vector<2x8x1xf32> -> vector<2x8x1xf32>
    %131 = vector.broadcast %130 : vector<2x8x1xf32> to vector<2x8x8xf32>
    %132 = arith.mulf %127, %131 : vector<2x8x8xf32>
    %133 = vector.extract_strided_slice %29 {offsets = [0, 0, 192], sizes = [2, 8, 32], strides = [1, 1, 1]} : vector<2x8x256xf32> to vector<2x8x32xf32>
    "tpu.trace_start"() <{level = 10 : i32, message = "bqk,bkd->bqd"}> : () -> ()
    %cst_55 = arith.constant dense<0.000000e+00> : vector<2x8x32xf32>
    %134 = tpu.matmul %132, %133, %cst_55 {dimension_numbers = #tpu.dot_dimension_numbers<[2], [1], [1], [2], [0, 0, 0, 1, 1, 2], [0], [0]>} : vector<2x8x8xf32>, vector<2x8x32xf32>, vector<2x8x32xf32> -> vector<2x8x32xf32>
    "tpu.trace_stop"() : () -> ()
    %135 = vector.extract_strided_slice %27 {offsets = [0, 0, 224], sizes = [2, 8, 32], strides = [1, 1, 1]} : vector<2x8x256xf32> to vector<2x8x32xf32>
    %136 = vector.extract_strided_slice %28 {offsets = [0, 0, 224], sizes = [2, 8, 32], strides = [1, 1, 1]} : vector<2x8x256xf32> to vector<2x8x32xf32>
    "tpu.trace_start"() <{level = 10 : i32, message = "bqd,bkd->bqk"}> : () -> ()
    %cst_56 = arith.constant dense<0.000000e+00> : vector<2x8x8xf32>
    %137 = tpu.matmul %135, %136, %cst_56 {dimension_numbers = #tpu.dot_dimension_numbers<[2], [2], [1], [1], [0, 0, 0, 1, 1, 1], [0], [0]>} : vector<2x8x32xf32>, vector<2x8x32xf32>, vector<2x8x8xf32> -> vector<2x8x8xf32>
    "tpu.trace_stop"() : () -> ()
    %cst_57 = arith.constant dense<0xFF800000> : vector<2x8xf32>
    %138 = vector.multi_reduction <maximumf>, %137, %cst_57 [2] : vector<2x8x8xf32> to vector<2x8xf32>
    %139 = vector.shape_cast %138 : vector<2x8xf32> to vector<2x8x1xf32>
    %140 = vector.broadcast %139 : vector<2x8x1xf32> to vector<2x8x8xf32>
    %141 = arith.subf %137, %140 : vector<2x8x8xf32>
    %142 = math.exp %141 : vector<2x8x8xf32>
    %cst_58 = arith.constant dense<0.000000e+00> : vector<2x8xf32>
    %143 = vector.multi_reduction <add>, %142, %cst_58 [2] : vector<2x8x8xf32> to vector<2x8xf32>
    %144 = vector.shape_cast %143 : vector<2x8xf32> to vector<2x8x1xf32>
    %145 = tpu.reciprocal %144 {approx = true} : vector<2x8x1xf32> -> vector<2x8x1xf32>
    %146 = vector.broadcast %145 : vector<2x8x1xf32> to vector<2x8x8xf32>
    %147 = arith.mulf %142, %146 : vector<2x8x8xf32>
    %148 = vector.extract_strided_slice %29 {offsets = [0, 0, 224], sizes = [2, 8, 32], strides = [1, 1, 1]} : vector<2x8x256xf32> to vector<2x8x32xf32>
    "tpu.trace_start"() <{level = 10 : i32, message = "bqk,bkd->bqd"}> : () -> ()
    %cst_59 = arith.constant dense<0.000000e+00> : vector<2x8x32xf32>
    %149 = tpu.matmul %147, %148, %cst_59 {dimension_numbers = #tpu.dot_dimension_numbers<[2], [1], [1], [2], [0, 0, 0, 1, 1, 2], [0], [0]>} : vector<2x8x8xf32>, vector<2x8x32xf32>, vector<2x8x32xf32> -> vector<2x8x32xf32>
    "tpu.trace_stop"() : () -> ()
    %150 = tpu.concatenate %44, %59, %74, %89, %104, %119, %134, %149 in 2 : vector<2x8x32xf32>, vector<2x8x32xf32>, vector<2x8x32xf32>, vector<2x8x32xf32>, vector<2x8x32xf32>, vector<2x8x32xf32>, vector<2x8x32xf32>, vector<2x8x32xf32> -> vector<2x8x256xf32>
    %151 = vector.shape_cast %150 : vector<2x8x256xf32> to vector<16x256xf32>
    %152 = arith.truncf %151 : vector<16x256xf32> to vector<16x256xbf16>
    %cst_60 = arith.constant dense<0.000000e+00> : vector<16x256xf32>
    %153 = tpu.matmul %152, %10, %cst_60 {dimension_numbers = #tpu.dot_dimension_numbers<[1], [0], [0], [1], [0, 0, 1, 1], [], []>} : vector<16x256xbf16>, vector<256x256xbf16>, vector<16x256xf32> -> vector<16x256xf32>
    %154 = vector.broadcast %11 : vector<1x256xf32> to vector<16x256xf32>
    %155 = arith.addf %153, %154 : vector<16x256xf32>
    %156 = arith.addf %155, %1 : vector<16x256xf32>
    %cst_61 = arith.constant dense<0.000000e+00> : vector<16xf32>
    %157 = vector.multi_reduction <add>, %156, %cst_61 [1] : vector<16x256xf32> to vector<16xf32>
    %158 = vector.shape_cast %157 : vector<16xf32> to vector<16x1xf32>
    %cst_62 = arith.constant 2.560000e+02 : f32
    %159 = vector.broadcast %cst_62 : f32 to vector<16x1xf32>
    %160 = arith.divf %158, %159 : vector<16x1xf32>
    %161 = vector.broadcast %160 : vector<16x1xf32> to vector<16x256xf32>
    %162 = arith.subf %156, %161 : vector<16x256xf32>
    %163 = arith.mulf %162, %162 : vector<16x256xf32>
    %cst_63 = arith.constant dense<0.000000e+00> : vector<16xf32>
    %164 = vector.multi_reduction <add>, %163, %cst_63 [1] : vector<16x256xf32> to vector<16xf32>
    %165 = vector.shape_cast %164 : vector<16xf32> to vector<16x1xf32>
    %cst_64 = arith.constant 2.560000e+02 : f32
    %166 = vector.broadcast %cst_64 : f32 to vector<16x1xf32>
    %167 = arith.divf %165, %166 : vector<16x1xf32>
    %168 = vector.broadcast %160 : vector<16x1xf32> to vector<16x256xf32>
    %169 = arith.subf %156, %168 : vector<16x256xf32>
    %cst_65 = arith.constant 9.99999974E-6 : f32
    %170 = vector.broadcast %cst_65 : f32 to vector<16x1xf32>
    %171 = arith.addf %167, %170 : vector<16x1xf32>
    %172 = math.rsqrt %171 : vector<16x1xf32>
    %173 = vector.broadcast %172 : vector<16x1xf32> to vector<16x256xf32>
    %174 = arith.mulf %169, %173 : vector<16x256xf32>
    %175 = vector.broadcast %12 : vector<1x256xf32> to vector<16x256xf32>
    %176 = arith.mulf %174, %175 : vector<16x256xf32>
    %177 = vector.broadcast %13 : vector<1x256xf32> to vector<16x256xf32>
    %178 = arith.addf %176, %177 : vector<16x256xf32>
    %179 = arith.truncf %178 : vector<16x256xf32> to vector<16x256xbf16>
    %cst_66 = arith.constant dense<0.000000e+00> : vector<16x256xf32>
    %180 = tpu.matmul %179, %4, %cst_66 {dimension_numbers = #tpu.dot_dimension_numbers<[1], [0], [0], [1], [0, 0, 1, 1], [], []>} : vector<16x256xbf16>, vector<256x256xbf16>, vector<16x256xf32> -> vector<16x256xf32>
    %181 = vector.broadcast %5 : vector<1x256xf32> to vector<16x256xf32>
    %182 = arith.addf %180, %181 : vector<16x256xf32>
    %cst_67 = arith.constant 0.176776692 : f32
    %183 = vector.broadcast %cst_67 : f32 to vector<16x256xf32>
    %184 = arith.mulf %182, %183 : vector<16x256xf32>
    %cst_68 = arith.constant dense<0.000000e+00> : vector<16x256xf32>
    %185 = tpu.matmul %179, %6, %cst_68 {dimension_numbers = #tpu.dot_dimension_numbers<[1], [0], [0], [1], [0, 0, 1, 1], [], []>} : vector<16x256xbf16>, vector<256x256xbf16>, vector<16x256xf32> -> vector<16x256xf32>
    %186 = vector.broadcast %7 : vector<1x256xf32> to vector<16x256xf32>
    %187 = arith.addf %185, %186 : vector<16x256xf32>
    %cst_69 = arith.constant dense<0.000000e+00> : vector<16x256xf32>
    %188 = tpu.matmul %179, %8, %cst_69 {dimension_numbers = #tpu.dot_dimension_numbers<[1], [0], [0], [1], [0, 0, 1, 1], [], []>} : vector<16x256xbf16>, vector<256x256xbf16>, vector<16x256xf32> -> vector<16x256xf32>
    %189 = vector.broadcast %9 : vector<1x256xf32> to vector<16x256xf32>
    %190 = arith.addf %188, %189 : vector<16x256xf32>
    %191 = vector.shape_cast %184 : vector<16x256xf32> to vector<2x8x256xf32>
    %192 = vector.shape_cast %187 : vector<16x256xf32> to vector<2x8x256xf32>
    %193 = vector.shape_cast %190 : vector<16x256xf32> to vector<2x8x256xf32>
    %194 = vector.extract_strided_slice %191 {offsets = [0, 0, 0], sizes = [2, 8, 32], strides = [1, 1, 1]} : vector<2x8x256xf32> to vector<2x8x32xf32>
    %195 = vector.extract_strided_slice %192 {offsets = [0, 0, 0], sizes = [2, 8, 32], strides = [1, 1, 1]} : vector<2x8x256xf32> to vector<2x8x32xf32>
    "tpu.trace_start"() <{level = 10 : i32, message = "bqd,bkd->bqk"}> : () -> ()
    %cst_70 = arith.constant dense<0.000000e+00> : vector<2x8x8xf32>
    %196 = tpu.matmul %194, %195, %cst_70 {dimension_numbers = #tpu.dot_dimension_numbers<[2], [2], [1], [1], [0, 0, 0, 1, 1, 1], [0], [0]>} : vector<2x8x32xf32>, vector<2x8x32xf32>, vector<2x8x8xf32> -> vector<2x8x8xf32>
    "tpu.trace_stop"() : () -> ()
    %cst_71 = arith.constant dense<0xFF800000> : vector<2x8xf32>
    %197 = vector.multi_reduction <maximumf>, %196, %cst_71 [2] : vector<2x8x8xf32> to vector<2x8xf32>
    %198 = vector.shape_cast %197 : vector<2x8xf32> to vector<2x8x1xf32>
    %199 = vector.broadcast %198 : vector<2x8x1xf32> to vector<2x8x8xf32>
    %200 = arith.subf %196, %199 : vector<2x8x8xf32>
    %201 = math.exp %200 : vector<2x8x8xf32>
    %cst_72 = arith.constant dense<0.000000e+00> : vector<2x8xf32>
    %202 = vector.multi_reduction <add>, %201, %cst_72 [2] : vector<2x8x8xf32> to vector<2x8xf32>
    %203 = vector.shape_cast %202 : vector<2x8xf32> to vector<2x8x1xf32>
    %204 = tpu.reciprocal %203 {approx = true} : vector<2x8x1xf32> -> vector<2x8x1xf32>
    %205 = vector.broadcast %204 : vector<2x8x1xf32> to vector<2x8x8xf32>
    %206 = arith.mulf %201, %205 : vector<2x8x8xf32>
    %207 = vector.extract_strided_slice %193 {offsets = [0, 0, 0], sizes = [2, 8, 32], strides = [1, 1, 1]} : vector<2x8x256xf32> to vector<2x8x32xf32>
    "tpu.trace_start"() <{level = 10 : i32, message = "bqk,bkd->bqd"}> : () -> ()
    %cst_73 = arith.constant dense<0.000000e+00> : vector<2x8x32xf32>
    %208 = tpu.matmul %206, %207, %cst_73 {dimension_numbers = #tpu.dot_dimension_numbers<[2], [1], [1], [2], [0, 0, 0, 1, 1, 2], [0], [0]>} : vector<2x8x8xf32>, vector<2x8x32xf32>, vector<2x8x32xf32> -> vector<2x8x32xf32>
    "tpu.trace_stop"() : () -> ()
    %209 = vector.extract_strided_slice %191 {offsets = [0, 0, 32], sizes = [2, 8, 32], strides = [1, 1, 1]} : vector<2x8x256xf32> to vector<2x8x32xf32>
    %210 = vector.extract_strided_slice %192 {offsets = [0, 0, 32], sizes = [2, 8, 32], strides = [1, 1, 1]} : vector<2x8x256xf32> to vector<2x8x32xf32>
    "tpu.trace_start"() <{level = 10 : i32, message = "bqd,bkd->bqk"}> : () -> ()
    %cst_74 = arith.constant dense<0.000000e+00> : vector<2x8x8xf32>
    %211 = tpu.matmul %209, %210, %cst_74 {dimension_numbers = #tpu.dot_dimension_numbers<[2], [2], [1], [1], [0, 0, 0, 1, 1, 1], [0], [0]>} : vector<2x8x32xf32>, vector<2x8x32xf32>, vector<2x8x8xf32> -> vector<2x8x8xf32>
    "tpu.trace_stop"() : () -> ()
    %cst_75 = arith.constant dense<0xFF800000> : vector<2x8xf32>
    %212 = vector.multi_reduction <maximumf>, %211, %cst_75 [2] : vector<2x8x8xf32> to vector<2x8xf32>
    %213 = vector.shape_cast %212 : vector<2x8xf32> to vector<2x8x1xf32>
    %214 = vector.broadcast %213 : vector<2x8x1xf32> to vector<2x8x8xf32>
    %215 = arith.subf %211, %214 : vector<2x8x8xf32>
    %216 = math.exp %215 : vector<2x8x8xf32>
    %cst_76 = arith.constant dense<0.000000e+00> : vector<2x8xf32>
    %217 = vector.multi_reduction <add>, %216, %cst_76 [2] : vector<2x8x8xf32> to vector<2x8xf32>
    %218 = vector.shape_cast %217 : vector<2x8xf32> to vector<2x8x1xf32>
    %219 = tpu.reciprocal %218 {approx = true} : vector<2x8x1xf32> -> vector<2x8x1xf32>
    %220 = vector.broadcast %219 : vector<2x8x1xf32> to vector<2x8x8xf32>
    %221 = arith.mulf %216, %220 : vector<2x8x8xf32>
    %222 = vector.extract_strided_slice %193 {offsets = [0, 0, 32], sizes = [2, 8, 32], strides = [1, 1, 1]} : vector<2x8x256xf32> to vector<2x8x32xf32>
    "tpu.trace_start"() <{level = 10 : i32, message = "bqk,bkd->bqd"}> : () -> ()
    %cst_77 = arith.constant dense<0.000000e+00> : vector<2x8x32xf32>
    %223 = tpu.matmul %221, %222, %cst_77 {dimension_numbers = #tpu.dot_dimension_numbers<[2], [1], [1], [2], [0, 0, 0, 1, 1, 2], [0], [0]>} : vector<2x8x8xf32>, vector<2x8x32xf32>, vector<2x8x32xf32> -> vector<2x8x32xf32>
    "tpu.trace_stop"() : () -> ()
    %224 = vector.extract_strided_slice %191 {offsets = [0, 0, 64], sizes = [2, 8, 32], strides = [1, 1, 1]} : vector<2x8x256xf32> to vector<2x8x32xf32>
    %225 = vector.extract_strided_slice %192 {offsets = [0, 0, 64], sizes = [2, 8, 32], strides = [1, 1, 1]} : vector<2x8x256xf32> to vector<2x8x32xf32>
    "tpu.trace_start"() <{level = 10 : i32, message = "bqd,bkd->bqk"}> : () -> ()
    %cst_78 = arith.constant dense<0.000000e+00> : vector<2x8x8xf32>
    %226 = tpu.matmul %224, %225, %cst_78 {dimension_numbers = #tpu.dot_dimension_numbers<[2], [2], [1], [1], [0, 0, 0, 1, 1, 1], [0], [0]>} : vector<2x8x32xf32>, vector<2x8x32xf32>, vector<2x8x8xf32> -> vector<2x8x8xf32>
    "tpu.trace_stop"() : () -> ()
    %cst_79 = arith.constant dense<0xFF800000> : vector<2x8xf32>
    %227 = vector.multi_reduction <maximumf>, %226, %cst_79 [2] : vector<2x8x8xf32> to vector<2x8xf32>
    %228 = vector.shape_cast %227 : vector<2x8xf32> to vector<2x8x1xf32>
    %229 = vector.broadcast %228 : vector<2x8x1xf32> to vector<2x8x8xf32>
    %230 = arith.subf %226, %229 : vector<2x8x8xf32>
    %231 = math.exp %230 : vector<2x8x8xf32>
    %cst_80 = arith.constant dense<0.000000e+00> : vector<2x8xf32>
    %232 = vector.multi_reduction <add>, %231, %cst_80 [2] : vector<2x8x8xf32> to vector<2x8xf32>
    %233 = vector.shape_cast %232 : vector<2x8xf32> to vector<2x8x1xf32>
    %234 = tpu.reciprocal %233 {approx = true} : vector<2x8x1xf32> -> vector<2x8x1xf32>
    %235 = vector.broadcast %234 : vector<2x8x1xf32> to vector<2x8x8xf32>
    %236 = arith.mulf %231, %235 : vector<2x8x8xf32>
    %237 = vector.extract_strided_slice %193 {offsets = [0, 0, 64], sizes = [2, 8, 32], strides = [1, 1, 1]} : vector<2x8x256xf32> to vector<2x8x32xf32>
    "tpu.trace_start"() <{level = 10 : i32, message = "bqk,bkd->bqd"}> : () -> ()
    %cst_81 = arith.constant dense<0.000000e+00> : vector<2x8x32xf32>
    %238 = tpu.matmul %236, %237, %cst_81 {dimension_numbers = #tpu.dot_dimension_numbers<[2], [1], [1], [2], [0, 0, 0, 1, 1, 2], [0], [0]>} : vector<2x8x8xf32>, vector<2x8x32xf32>, vector<2x8x32xf32> -> vector<2x8x32xf32>
    "tpu.trace_stop"() : () -> ()
    %239 = vector.extract_strided_slice %191 {offsets = [0, 0, 96], sizes = [2, 8, 32], strides = [1, 1, 1]} : vector<2x8x256xf32> to vector<2x8x32xf32>
    %240 = vector.extract_strided_slice %192 {offsets = [0, 0, 96], sizes = [2, 8, 32], strides = [1, 1, 1]} : vector<2x8x256xf32> to vector<2x8x32xf32>
    "tpu.trace_start"() <{level = 10 : i32, message = "bqd,bkd->bqk"}> : () -> ()
    %cst_82 = arith.constant dense<0.000000e+00> : vector<2x8x8xf32>
    %241 = tpu.matmul %239, %240, %cst_82 {dimension_numbers = #tpu.dot_dimension_numbers<[2], [2], [1], [1], [0, 0, 0, 1, 1, 1], [0], [0]>} : vector<2x8x32xf32>, vector<2x8x32xf32>, vector<2x8x8xf32> -> vector<2x8x8xf32>
    "tpu.trace_stop"() : () -> ()
    %cst_83 = arith.constant dense<0xFF800000> : vector<2x8xf32>
    %242 = vector.multi_reduction <maximumf>, %241, %cst_83 [2] : vector<2x8x8xf32> to vector<2x8xf32>
    %243 = vector.shape_cast %242 : vector<2x8xf32> to vector<2x8x1xf32>
    %244 = vector.broadcast %243 : vector<2x8x1xf32> to vector<2x8x8xf32>
    %245 = arith.subf %241, %244 : vector<2x8x8xf32>
    %246 = math.exp %245 : vector<2x8x8xf32>
    %cst_84 = arith.constant dense<0.000000e+00> : vector<2x8xf32>
    %247 = vector.multi_reduction <add>, %246, %cst_84 [2] : vector<2x8x8xf32> to vector<2x8xf32>
    %248 = vector.shape_cast %247 : vector<2x8xf32> to vector<2x8x1xf32>
    %249 = tpu.reciprocal %248 {approx = true} : vector<2x8x1xf32> -> vector<2x8x1xf32>
    %250 = vector.broadcast %249 : vector<2x8x1xf32> to vector<2x8x8xf32>
    %251 = arith.mulf %246, %250 : vector<2x8x8xf32>
    %252 = vector.extract_strided_slice %193 {offsets = [0, 0, 96], sizes = [2, 8, 32], strides = [1, 1, 1]} : vector<2x8x256xf32> to vector<2x8x32xf32>
    "tpu.trace_start"() <{level = 10 : i32, message = "bqk,bkd->bqd"}> : () -> ()
    %cst_85 = arith.constant dense<0.000000e+00> : vector<2x8x32xf32>
    %253 = tpu.matmul %251, %252, %cst_85 {dimension_numbers = #tpu.dot_dimension_numbers<[2], [1], [1], [2], [0, 0, 0, 1, 1, 2], [0], [0]>} : vector<2x8x8xf32>, vector<2x8x32xf32>, vector<2x8x32xf32> -> vector<2x8x32xf32>
    "tpu.trace_stop"() : () -> ()
    %254 = vector.extract_strided_slice %191 {offsets = [0, 0, 128], sizes = [2, 8, 32], strides = [1, 1, 1]} : vector<2x8x256xf32> to vector<2x8x32xf32>
    %255 = vector.extract_strided_slice %192 {offsets = [0, 0, 128], sizes = [2, 8, 32], strides = [1, 1, 1]} : vector<2x8x256xf32> to vector<2x8x32xf32>
    "tpu.trace_start"() <{level = 10 : i32, message = "bqd,bkd->bqk"}> : () -> ()
    %cst_86 = arith.constant dense<0.000000e+00> : vector<2x8x8xf32>
    %256 = tpu.matmul %254, %255, %cst_86 {dimension_numbers = #tpu.dot_dimension_numbers<[2], [2], [1], [1], [0, 0, 0, 1, 1, 1], [0], [0]>} : vector<2x8x32xf32>, vector<2x8x32xf32>, vector<2x8x8xf32> -> vector<2x8x8xf32>
    "tpu.trace_stop"() : () -> ()
    %cst_87 = arith.constant dense<0xFF800000> : vector<2x8xf32>
    %257 = vector.multi_reduction <maximumf>, %256, %cst_87 [2] : vector<2x8x8xf32> to vector<2x8xf32>
    %258 = vector.shape_cast %257 : vector<2x8xf32> to vector<2x8x1xf32>
    %259 = vector.broadcast %258 : vector<2x8x1xf32> to vector<2x8x8xf32>
    %260 = arith.subf %256, %259 : vector<2x8x8xf32>
    %261 = math.exp %260 : vector<2x8x8xf32>
    %cst_88 = arith.constant dense<0.000000e+00> : vector<2x8xf32>
    %262 = vector.multi_reduction <add>, %261, %cst_88 [2] : vector<2x8x8xf32> to vector<2x8xf32>
    %263 = vector.shape_cast %262 : vector<2x8xf32> to vector<2x8x1xf32>
    %264 = tpu.reciprocal %263 {approx = true} : vector<2x8x1xf32> -> vector<2x8x1xf32>
    %265 = vector.broadcast %264 : vector<2x8x1xf32> to vector<2x8x8xf32>
    %266 = arith.mulf %261, %265 : vector<2x8x8xf32>
    %267 = vector.extract_strided_slice %193 {offsets = [0, 0, 128], sizes = [2, 8, 32], strides = [1, 1, 1]} : vector<2x8x256xf32> to vector<2x8x32xf32>
    "tpu.trace_start"() <{level = 10 : i32, message = "bqk,bkd->bqd"}> : () -> ()
    %cst_89 = arith.constant dense<0.000000e+00> : vector<2x8x32xf32>
    %268 = tpu.matmul %266, %267, %cst_89 {dimension_numbers = #tpu.dot_dimension_numbers<[2], [1], [1], [2], [0, 0, 0, 1, 1, 2], [0], [0]>} : vector<2x8x8xf32>, vector<2x8x32xf32>, vector<2x8x32xf32> -> vector<2x8x32xf32>
    "tpu.trace_stop"() : () -> ()
    %269 = vector.extract_strided_slice %191 {offsets = [0, 0, 160], sizes = [2, 8, 32], strides = [1, 1, 1]} : vector<2x8x256xf32> to vector<2x8x32xf32>
    %270 = vector.extract_strided_slice %192 {offsets = [0, 0, 160], sizes = [2, 8, 32], strides = [1, 1, 1]} : vector<2x8x256xf32> to vector<2x8x32xf32>
    "tpu.trace_start"() <{level = 10 : i32, message = "bqd,bkd->bqk"}> : () -> ()
    %cst_90 = arith.constant dense<0.000000e+00> : vector<2x8x8xf32>
    %271 = tpu.matmul %269, %270, %cst_90 {dimension_numbers = #tpu.dot_dimension_numbers<[2], [2], [1], [1], [0, 0, 0, 1, 1, 1], [0], [0]>} : vector<2x8x32xf32>, vector<2x8x32xf32>, vector<2x8x8xf32> -> vector<2x8x8xf32>
    "tpu.trace_stop"() : () -> ()
    %cst_91 = arith.constant dense<0xFF800000> : vector<2x8xf32>
    %272 = vector.multi_reduction <maximumf>, %271, %cst_91 [2] : vector<2x8x8xf32> to vector<2x8xf32>
    %273 = vector.shape_cast %272 : vector<2x8xf32> to vector<2x8x1xf32>
    %274 = vector.broadcast %273 : vector<2x8x1xf32> to vector<2x8x8xf32>
    %275 = arith.subf %271, %274 : vector<2x8x8xf32>
    %276 = math.exp %275 : vector<2x8x8xf32>
    %cst_92 = arith.constant dense<0.000000e+00> : vector<2x8xf32>
    %277 = vector.multi_reduction <add>, %276, %cst_92 [2] : vector<2x8x8xf32> to vector<2x8xf32>
    %278 = vector.shape_cast %277 : vector<2x8xf32> to vector<2x8x1xf32>
    %279 = tpu.reciprocal %278 {approx = true} : vector<2x8x1xf32> -> vector<2x8x1xf32>
    %280 = vector.broadcast %279 : vector<2x8x1xf32> to vector<2x8x8xf32>
    %281 = arith.mulf %276, %280 : vector<2x8x8xf32>
    %282 = vector.extract_strided_slice %193 {offsets = [0, 0, 160], sizes = [2, 8, 32], strides = [1, 1, 1]} : vector<2x8x256xf32> to vector<2x8x32xf32>
    "tpu.trace_start"() <{level = 10 : i32, message = "bqk,bkd->bqd"}> : () -> ()
    %cst_93 = arith.constant dense<0.000000e+00> : vector<2x8x32xf32>
    %283 = tpu.matmul %281, %282, %cst_93 {dimension_numbers = #tpu.dot_dimension_numbers<[2], [1], [1], [2], [0, 0, 0, 1, 1, 2], [0], [0]>} : vector<2x8x8xf32>, vector<2x8x32xf32>, vector<2x8x32xf32> -> vector<2x8x32xf32>
    "tpu.trace_stop"() : () -> ()
    %284 = vector.extract_strided_slice %191 {offsets = [0, 0, 192], sizes = [2, 8, 32], strides = [1, 1, 1]} : vector<2x8x256xf32> to vector<2x8x32xf32>
    %285 = vector.extract_strided_slice %192 {offsets = [0, 0, 192], sizes = [2, 8, 32], strides = [1, 1, 1]} : vector<2x8x256xf32> to vector<2x8x32xf32>
    "tpu.trace_start"() <{level = 10 : i32, message = "bqd,bkd->bqk"}> : () -> ()
    %cst_94 = arith.constant dense<0.000000e+00> : vector<2x8x8xf32>
    %286 = tpu.matmul %284, %285, %cst_94 {dimension_numbers = #tpu.dot_dimension_numbers<[2], [2], [1], [1], [0, 0, 0, 1, 1, 1], [0], [0]>} : vector<2x8x32xf32>, vector<2x8x32xf32>, vector<2x8x8xf32> -> vector<2x8x8xf32>
    "tpu.trace_stop"() : () -> ()
    %cst_95 = arith.constant dense<0xFF800000> : vector<2x8xf32>
    %287 = vector.multi_reduction <maximumf>, %286, %cst_95 [2] : vector<2x8x8xf32> to vector<2x8xf32>
    %288 = vector.shape_cast %287 : vector<2x8xf32> to vector<2x8x1xf32>
    %289 = vector.broadcast %288 : vector<2x8x1xf32> to vector<2x8x8xf32>
    %290 = arith.subf %286, %289 : vector<2x8x8xf32>
    %291 = math.exp %290 : vector<2x8x8xf32>
    %cst_96 = arith.constant dense<0.000000e+00> : vector<2x8xf32>
    %292 = vector.multi_reduction <add>, %291, %cst_96 [2] : vector<2x8x8xf32> to vector<2x8xf32>
    %293 = vector.shape_cast %292 : vector<2x8xf32> to vector<2x8x1xf32>
    %294 = tpu.reciprocal %293 {approx = true} : vector<2x8x1xf32> -> vector<2x8x1xf32>
    %295 = vector.broadcast %294 : vector<2x8x1xf32> to vector<2x8x8xf32>
    %296 = arith.mulf %291, %295 : vector<2x8x8xf32>
    %297 = vector.extract_strided_slice %193 {offsets = [0, 0, 192], sizes = [2, 8, 32], strides = [1, 1, 1]} : vector<2x8x256xf32> to vector<2x8x32xf32>
    "tpu.trace_start"() <{level = 10 : i32, message = "bqk,bkd->bqd"}> : () -> ()
    %cst_97 = arith.constant dense<0.000000e+00> : vector<2x8x32xf32>
    %298 = tpu.matmul %296, %297, %cst_97 {dimension_numbers = #tpu.dot_dimension_numbers<[2], [1], [1], [2], [0, 0, 0, 1, 1, 2], [0], [0]>} : vector<2x8x8xf32>, vector<2x8x32xf32>, vector<2x8x32xf32> -> vector<2x8x32xf32>
    "tpu.trace_stop"() : () -> ()
    %299 = vector.extract_strided_slice %191 {offsets = [0, 0, 224], sizes = [2, 8, 32], strides = [1, 1, 1]} : vector<2x8x256xf32> to vector<2x8x32xf32>
    %300 = vector.extract_strided_slice %192 {offsets = [0, 0, 224], sizes = [2, 8, 32], strides = [1, 1, 1]} : vector<2x8x256xf32> to vector<2x8x32xf32>
    "tpu.trace_start"() <{level = 10 : i32, message = "bqd,bkd->bqk"}> : () -> ()
    %cst_98 = arith.constant dense<0.000000e+00> : vector<2x8x8xf32>
    %301 = tpu.matmul %299, %300, %cst_98 {dimension_numbers = #tpu.dot_dimension_numbers<[2], [2], [1], [1], [0, 0, 0, 1, 1, 1], [0], [0]>} : vector<2x8x32xf32>, vector<2x8x32xf32>, vector<2x8x8xf32> -> vector<2x8x8xf32>
    "tpu.trace_stop"() : () -> ()
    %cst_99 = arith.constant dense<0xFF800000> : vector<2x8xf32>
    %302 = vector.multi_reduction <maximumf>, %301, %cst_99 [2] : vector<2x8x8xf32> to vector<2x8xf32>
    %303 = vector.shape_cast %302 : vector<2x8xf32> to vector<2x8x1xf32>
    %304 = vector.broadcast %303 : vector<2x8x1xf32> to vector<2x8x8xf32>
    %305 = arith.subf %301, %304 : vector<2x8x8xf32>
    %306 = math.exp %305 : vector<2x8x8xf32>
    %cst_100 = arith.constant dense<0.000000e+00> : vector<2x8xf32>
    %307 = vector.multi_reduction <add>, %306, %cst_100 [2] : vector<2x8x8xf32> to vector<2x8xf32>
    %308 = vector.shape_cast %307 : vector<2x8xf32> to vector<2x8x1xf32>
    %309 = tpu.reciprocal %308 {approx = true} : vector<2x8x1xf32> -> vector<2x8x1xf32>
    %310 = vector.broadcast %309 : vector<2x8x1xf32> to vector<2x8x8xf32>
    %311 = arith.mulf %306, %310 : vector<2x8x8xf32>
    %312 = vector.extract_strided_slice %193 {offsets = [0, 0, 224], sizes = [2, 8, 32], strides = [1, 1, 1]} : vector<2x8x256xf32> to vector<2x8x32xf32>
    "tpu.trace_start"() <{level = 10 : i32, message = "bqk,bkd->bqd"}> : () -> ()
    %cst_101 = arith.constant dense<0.000000e+00> : vector<2x8x32xf32>
    %313 = tpu.matmul %311, %312, %cst_101 {dimension_numbers = #tpu.dot_dimension_numbers<[2], [1], [1], [2], [0, 0, 0, 1, 1, 2], [0], [0]>} : vector<2x8x8xf32>, vector<2x8x32xf32>, vector<2x8x32xf32> -> vector<2x8x32xf32>
    "tpu.trace_stop"() : () -> ()
    %314 = tpu.concatenate %208, %223, %238, %253, %268, %283, %298, %313 in 2 : vector<2x8x32xf32>, vector<2x8x32xf32>, vector<2x8x32xf32>, vector<2x8x32xf32>, vector<2x8x32xf32>, vector<2x8x32xf32>, vector<2x8x32xf32>, vector<2x8x32xf32> -> vector<2x8x256xf32>
    %315 = vector.shape_cast %314 : vector<2x8x256xf32> to vector<16x256xf32>
    %316 = arith.truncf %315 : vector<16x256xf32> to vector<16x256xbf16>
    %cst_102 = arith.constant dense<0.000000e+00> : vector<16x256xf32>
    %317 = tpu.matmul %316, %10, %cst_102 {dimension_numbers = #tpu.dot_dimension_numbers<[1], [0], [0], [1], [0, 0, 1, 1], [], []>} : vector<16x256xbf16>, vector<256x256xbf16>, vector<16x256xf32> -> vector<16x256xf32>
    %318 = vector.broadcast %11 : vector<1x256xf32> to vector<16x256xf32>
    %319 = arith.addf %317, %318 : vector<16x256xf32>
    %320 = arith.addf %319, %178 : vector<16x256xf32>
    %cst_103 = arith.constant dense<0.000000e+00> : vector<16xf32>
    %321 = vector.multi_reduction <add>, %320, %cst_103 [1] : vector<16x256xf32> to vector<16xf32>
    %322 = vector.shape_cast %321 : vector<16xf32> to vector<16x1xf32>
    %cst_104 = arith.constant 2.560000e+02 : f32
    %323 = vector.broadcast %cst_104 : f32 to vector<16x1xf32>
    %324 = arith.divf %322, %323 : vector<16x1xf32>
    %325 = vector.broadcast %324 : vector<16x1xf32> to vector<16x256xf32>
    %326 = arith.subf %320, %325 : vector<16x256xf32>
    %327 = arith.mulf %326, %326 : vector<16x256xf32>
    %cst_105 = arith.constant dense<0.000000e+00> : vector<16xf32>
    %328 = vector.multi_reduction <add>, %327, %cst_105 [1] : vector<16x256xf32> to vector<16xf32>
    %329 = vector.shape_cast %328 : vector<16xf32> to vector<16x1xf32>
    %cst_106 = arith.constant 2.560000e+02 : f32
    %330 = vector.broadcast %cst_106 : f32 to vector<16x1xf32>
    %331 = arith.divf %329, %330 : vector<16x1xf32>
    %332 = vector.broadcast %324 : vector<16x1xf32> to vector<16x256xf32>
    %333 = arith.subf %320, %332 : vector<16x256xf32>
    %cst_107 = arith.constant 9.99999974E-6 : f32
    %334 = vector.broadcast %cst_107 : f32 to vector<16x1xf32>
    %335 = arith.addf %331, %334 : vector<16x1xf32>
    %336 = math.rsqrt %335 : vector<16x1xf32>
    %337 = vector.broadcast %336 : vector<16x1xf32> to vector<16x256xf32>
    %338 = arith.mulf %333, %337 : vector<16x256xf32>
    %339 = vector.broadcast %12 : vector<1x256xf32> to vector<16x256xf32>
    %340 = arith.mulf %338, %339 : vector<16x256xf32>
    %341 = vector.broadcast %13 : vector<1x256xf32> to vector<16x256xf32>
    %342 = arith.addf %340, %341 : vector<16x256xf32>
    %343 = arith.truncf %342 : vector<16x256xf32> to vector<16x256xbf16>
    %c0_108 = arith.constant 0 : index
    %c0_109 = arith.constant 0 : index
    %344 = vector.load %arg13[%c0_108, %c0_109] : memref<256x128xbf16, #tpu.memory_space<vmem>>, vector<256x128xbf16>
    %cst_110 = arith.constant dense<0.000000e+00> : vector<16x128xf32>
    %345 = tpu.matmul %343, %344, %cst_110 {dimension_numbers = #tpu.dot_dimension_numbers<[1], [0], [0], [1], [0, 0, 1, 1], [], []>} : vector<16x256xbf16>, vector<256x128xbf16>, vector<16x128xf32> -> vector<16x128xf32>
    %c0_111 = arith.constant 0 : index
    %c0_112 = arith.constant 0 : index
    %346 = vector.load %arg14[%c0_111, %c0_112] : memref<1x128xf32, #tpu.memory_space<vmem>>, vector<1x128xf32>
    %347 = vector.broadcast %346 : vector<1x128xf32> to vector<16x128xf32>
    %348 = arith.addf %345, %347 : vector<16x128xf32>
    %cst_113 = arith.constant 0.000000e+00 : f32
    %349 = vector.broadcast %cst_113 : f32 to vector<16x128xf32>
    %350 = arith.maximumf %348, %349 : vector<16x128xf32>
    %351 = vector.shape_cast %350 : vector<16x128xf32> to vector<2x8x128xf32>
    %c0_114 = arith.constant 0 : index
    %c0_115 = arith.constant 0 : index
    %352 = vector.load %arg15[%c0_114, %c0_115] : memref<1x128xf32, #tpu.memory_space<vmem>>, vector<1x128xf32>
    %353 = vector.shape_cast %352 : vector<1x128xf32> to vector<1x1x128xf32>
    %354 = vector.broadcast %353 : vector<1x1x128xf32> to vector<2x8x128xf32>
    %355 = arith.mulf %351, %354 : vector<2x8x128xf32>
    %cst_116 = arith.constant dense<0.000000e+00> : vector<2x8xf32>
    %356 = vector.multi_reduction <add>, %355, %cst_116 [2] : vector<2x8x128xf32> to vector<2x8xf32>
    %c0_117 = arith.constant 0 : index
    %357 = memref.load %arg16[%c0_117] : memref<1xf32, #tpu.memory_space<smem>>
    %358 = vector.broadcast %357 : f32 to vector<2x8xf32>
    %359 = arith.addf %356, %358 : vector<2x8xf32>
    %360 = arith.negf %359 : vector<2x8xf32>
    %361 = math.exp %360 : vector<2x8xf32>
    %cst_118 = arith.constant 1.000000e+00 : f32
    %362 = vector.broadcast %cst_118 : f32 to vector<2x8xf32>
    %363 = arith.addf %362, %361 : vector<2x8xf32>
    %364 = arith.divf %362, %363 : vector<2x8xf32>
    %c0_119 = arith.constant 0 : index
    %c0_120 = arith.constant 0 : index
    %365 = vector.load %arg17[%c0_119, %c0_120] : memref<2x8xf32, #tpu.memory_space<vmem>>, vector<2x8xf32>
    tpu.vector_store %arg17[%c0_119, %c0_120], %364 {strides = array<i32>} : memref<2x8xf32, #tpu.memory_space<vmem>>, vector<2x8xf32>,
    return
  }
  func.func @transform_0(%arg0: i32) -> (i32, i32, i32) {
    %c0_i32 = arith.constant 0 : i32
    %c0_i32_0 = arith.constant 0 : i32
    %c0_i32_1 = arith.constant 0 : i32
    %c0_i32_2 = arith.constant 0 : i32
    return %c0_i32, %c0_i32_0, %c0_i32_1 : i32, i32, i32
  }
  func.func @transform_1(%arg0: i32) -> (i32, i32, i32) {
    %c0_i32 = arith.constant 0 : i32
    %c0_i32_0 = arith.constant 0 : i32
    %c0_i32_1 = arith.constant 0 : i32
    %c0_i32_2 = arith.constant 0 : i32
    return %c0_i32, %c0_i32_0, %c0_i32_1 : i32, i32, i32
  }
  func.func @transform_2(%arg0: i32) -> (i32, i32) {
    %c0_i32 = arith.constant 0 : i32
    %c0_i32_0 = arith.constant 0 : i32
    %c0_i32_1 = arith.constant 0 : i32
    return %c0_i32, %c0_i32_0 : i32, i32
  }
  func.func @transform_3(%arg0: i32) -> (i32, i32) {
    %c0_i32 = arith.constant 0 : i32
    %c0_i32_0 = arith.constant 0 : i32
    %c0_i32_1 = arith.constant 0 : i32
    return %c0_i32, %c0_i32_0 : i32, i32
  }
  func.func @transform_4(%arg0: i32) -> (i32, i32) {
    %c0_i32 = arith.constant 0 : i32
    %c0_i32_0 = arith.constant 0 : i32
    %c0_i32_1 = arith.constant 0 : i32
    return %c0_i32, %c0_i32_0 : i32, i32
  }
  func.func @transform_5(%arg0: i32) -> (i32, i32) {
    %c0_i32 = arith.constant 0 : i32
    %c0_i32_0 = arith.constant 0 : i32
    %c0_i32_1 = arith.constant 0 : i32
    return %c0_i32, %c0_i32_0 : i32, i32
  }
  func.func @transform_6(%arg0: i32) -> (i32, i32) {
    %c0_i32 = arith.constant 0 : i32
    %c0_i32_0 = arith.constant 0 : i32
    %c0_i32_1 = arith.constant 0 : i32
    return %c0_i32, %c0_i32_0 : i32, i32
  }
  func.func @transform_7(%arg0: i32) -> (i32, i32) {
    %c0_i32 = arith.constant 0 : i32
    %c0_i32_0 = arith.constant 0 : i32
    %c0_i32_1 = arith.constant 0 : i32
    return %c0_i32, %c0_i32_0 : i32, i32
  }
  func.func @transform_8(%arg0: i32) -> (i32, i32) {
    %c0_i32 = arith.constant 0 : i32
    %c0_i32_0 = arith.constant 0 : i32
    %c0_i32_1 = arith.constant 0 : i32
    return %c0_i32, %c0_i32_0 : i32, i32
  }
  func.func @transform_9(%arg0: i32) -> (i32, i32) {
    %c0_i32 = arith.constant 0 : i32
    %c0_i32_0 = arith.constant 0 : i32
    %c0_i32_1 = arith.constant 0 : i32
    return %c0_i32, %c0_i32_0 : i32, i32
  }
  func.func @transform_10(%arg0: i32) -> (i32, i32) {
    %c0_i32 = arith.constant 0 : i32
    %c0_i32_0 = arith.constant 0 : i32
    %c0_i32_1 = arith.constant 0 : i32
    return %c0_i32, %c0_i32_0 : i32, i32
  }
  func.func @transform_11(%arg0: i32) -> (i32, i32) {
    %c0_i32 = arith.constant 0 : i32
    %c0_i32_0 = arith.constant 0 : i32
    %c0_i32_1 = arith.constant 0 : i32
    return %c0_i32, %c0_i32_0 : i32, i32
  }
  func.func @transform_12(%arg0: i32) -> (i32, i32) {
    %c0_i32 = arith.constant 0 : i32
    %c0_i32_0 = arith.constant 0 : i32
    %c0_i32_1 = arith.constant 0 : i32
    return %c0_i32, %c0_i32_0 : i32, i32
  }
  func.func @transform_13(%arg0: i32) -> (i32, i32) {
    %c0_i32 = arith.constant 0 : i32
    %c0_i32_0 = arith.constant 0 : i32
    %c0_i32_1 = arith.constant 0 : i32
    return %c0_i32, %c0_i32_0 : i32, i32
  }
  func.func @transform_14(%arg0: i32) -> (i32, i32) {
    %c0_i32 = arith.constant 0 : i32
    %c0_i32_0 = arith.constant 0 : i32
    %c0_i32_1 = arith.constant 0 : i32
    return %c0_i32, %c0_i32_0 : i32, i32
  }
  func.func @transform_15(%arg0: i32) -> i32 {
    %c0_i32 = arith.constant 0 : i32
    %c0_i32_0 = arith.constant 0 : i32
    return %c0_i32 : i32
  }
  func.func @transform_16(%arg0: i32) -> (i32, i32) {
    %c0_i32 = arith.constant 0 : i32
    %c0_i32_0 = arith.constant 0 : i32
    %c0_i32_1 = arith.constant 0 : i32
    return %c0_i32, %c0_i32_0 : i32, i32
  }
}

</mosaic_0001>

<llo_original>
// kernel: tpu_custom_call.1
$region0: #{tpu_custom_call.1}
  #allocation0 [shape = 'u32[]', space=smem, size = 0x4, offset = 0x4, fixed_abs, tag = 'smem constant byte address 0x4 - core index']
  #allocation1 [shape = 'u32[144,128]{1,0:T(1,128)}', space=vmem, size = 0x12000, scoped, tag = 'internal scratch']
  #allocation2 [shape = 'f32[1]{0:T(128)S(6)}', space=smem, size = 0x200, scoped, tag = 'scoped memory for tpu_custom_call.1']
  %s0 = inlined_call_operand.hbm [shape: f32[2,8,256], index: 0, kind: input, shape index: {}]
  %s1 = inlined_call_operand.hbm [shape: f32[2,8,256], index: 1, kind: input, shape index: {}]
  %s2 = inlined_call_operand.hbm [shape: bf16[256,256], index: 2, kind: input, shape index: {}]
  %s3 = inlined_call_operand.vmem [shape: f32[1,256], index: 3, kind: input, shape index: {}]
  %s4 = inlined_call_operand.hbm [shape: bf16[256,256], index: 4, kind: input, shape index: {}]
  %s5 = inlined_call_operand.vmem [shape: f32[1,256], index: 5, kind: input, shape index: {}]
  %s6 = inlined_call_operand.hbm [shape: bf16[256,256], index: 6, kind: input, shape index: {}]
  %s7 = inlined_call_operand.vmem [shape: f32[1,256], index: 7, kind: input, shape index: {}]
  %s8 = inlined_call_operand.hbm [shape: bf16[256,256], index: 8, kind: input, shape index: {}]
  %s9 = inlined_call_operand.vmem [shape: f32[1,256], index: 9, kind: input, shape index: {}]
  %s10 = inlined_call_operand.vmem [shape: f32[1,256], index: 10, kind: input, shape index: {}]
  %s11 = inlined_call_operand.vmem [shape: f32[1,256], index: 11, kind: input, shape index: {}]
  %s12 = inlined_call_operand.hbm [shape: bf16[256,128], index: 12, kind: input, shape index: {}]
  %s13 = inlined_call_operand.vmem [shape: f32[1,128], index: 13, kind: input, shape index: {}]
  %s14 = inlined_call_operand.vmem [shape: f32[1,128], index: 14, kind: input, shape index: {}]
  %s15 = inlined_call_operand.<no memory space> [shape: f32[1], index: 15, kind: input, shape index: {}]
  %s16 = inlined_call_operand.hbm [shape: f32[2,8], index: 16, kind: output, shape index: {}]
  %s17 = sld [smem:[#allocation0]]
  $region102: #{tpu_custom_call.1} parent=0
    _
  %s19 = ssub.s32 1, %s17
  %s20 = scalar_select 0, %s19, %s17
  %21 = sst [smem:[#allocation2]] %s15
  $region1: #{tpu_custom_call.1} parent=0
    #allocation3 [shape = 'u8[16384]{0}', space=vmem, size = 0x4000, scoped, tag = 'input window, operand 0, single buffered']
    #allocation4 [shape = 's32[1]{0}', space=sflag, size = 0x4, scoped, tag = 'scoped memory for tpu_custom_call.1']
    #allocation5 [shape = 's32[1]{0}', space=sflag, size = 0x4, scoped, tag = 'scoped memory for tpu_custom_call.1']
    #allocation6 [shape = 'u8[16384]{0}', space=vmem, size = 0x4000, scoped, tag = 'input window, operand 1, single buffered']
    #allocation7 [shape = 's32[1]{0}', space=sflag, size = 0x4, scoped, tag = 'scoped memory for tpu_custom_call.1']
    #allocation8 [shape = 'u8[131072]{0}', space=vmem, size = 0x20000, scoped, tag = 'input window, operand 2, single buffered']
    #allocation9 [shape = 'u8[131072]{0}', space=vmem, size = 0x20000, scoped, tag = 'input window, operand 4, single buffered']
    #allocation10 [shape = 's32[1]{0}', space=sflag, size = 0x4, scoped, tag = 'scoped memory for tpu_custom_call.1']
    #allocation11 [shape = 'u8[131072]{0}', space=vmem, size = 0x20000, scoped, tag = 'input window, operand 6, single buffered']
    #allocation12 [shape = 'u8[131072]{0}', space=vmem, size = 0x20000, scoped, tag = 'input window, operand 8, single buffered']
    #allocation13 [shape = 's32[1]{0}', space=sflag, size = 0x4, scoped, tag = 'scoped memory for tpu_custom_call.1']
    #allocation14 [shape = 'u8[65536]{0}', space=vmem, size = 0x10000, scoped, tag = 'input window, operand 12, single buffered']
    #allocation15 [shape = 'u8[1024]{0}', space=vmem, size = 0x400, scoped, tag = 'output window, operand 0, single buffered']
    %22 = vsyncpa [#allocation4], 0
    %23 = vsyncpa [#allocation7], 0
    %24 = vsyncpa [#allocation10], 0
    %25 = vsyncpa [#allocation13], 0
    %26 = vsyncpa [#allocation5], 0
    // Predicated region
    $region2: #{tpu_custom_call.1} parent=1 // pred_check
      _
    $region3: #{tpu_custom_call.1} parent=1 // pred_check_branch
      %28 = sbr.rel (0) target = $region5
    $region4: #{tpu_custom_call.1} parent=1 // pred_region
      %s30 = ssub.s32 512, 512
      %31 = vsyncadd [#allocation4], %s30
      %s32 = sshll.u32 [#allocation3], 4
      %s33 = int_to_ptr.vmem [resolvable:$true] %s32
      %38 = dma.hbm_to_vmem [thread:$0]  %s0, 512, %s33, [#allocation4], 256, 256, 16
    $region5: #{tpu_custom_call.1} parent=1 // pred_fallthru
      _
    // Predicated region
    $region6: #{tpu_custom_call.1} parent=1 // pred_check
      _
    $region7: #{tpu_custom_call.1} parent=1 // pred_check_branch
      %40 = sbr.rel (0) target = $region9
    $region8: #{tpu_custom_call.1} parent=1 // pred_region
      %s42 = ssub.s32 512, 512
      %43 = vsyncadd [#allocation7], %s42
      %s44 = sshll.u32 [#allocation6], 4
      %s45 = int_to_ptr.vmem [resolvable:$true] %s44
      %50 = dma.hbm_to_vmem [thread:$0]  %s1, 512, %s45, [#allocation7], 256, 256, 16
    $region9: #{tpu_custom_call.1} parent=1 // pred_fallthru
      _
    // Predicated region
    $region10: #{tpu_custom_call.1} parent=1 // pred_check
      _
    $region11: #{tpu_custom_call.1} parent=1 // pred_check_branch
      %52 = sbr.rel (0) target = $region13
    $region12: #{tpu_custom_call.1} parent=1 // pred_region
      %s54 = ssub.s32 4096, 4096
      %55 = vsyncadd [#allocation7], %s54
      %s56 = sshll.u32 [#allocation8], 4
      %s57 = int_to_ptr.vmem [resolvable:$true] %s56
      %62 = dma.hbm_to_vmem [thread:$0]  %s2, 4096, %s57, [#allocation7], 128, 128, 8
    $region13: #{tpu_custom_call.1} parent=1 // pred_fallthru
      _
    // Predicated region
    $region14: #{tpu_custom_call.1} parent=1 // pred_check
      _
    $region15: #{tpu_custom_call.1} parent=1 // pred_check_branch
      %64 = sbr.rel (0) target = $region17
    $region16: #{tpu_custom_call.1} parent=1 // pred_region
      _
    $region17: #{tpu_custom_call.1} parent=1 // pred_fallthru
      _
    // Predicated region
    $region18: #{tpu_custom_call.1} parent=1 // pred_check
      _
    $region19: #{tpu_custom_call.1} parent=1 // pred_check_branch
      %66 = sbr.rel (0) target = $region21
    $region20: #{tpu_custom_call.1} parent=1 // pred_region
      %s68 = ssub.s32 4096, 4096
      %69 = vsyncadd [#allocation10], %s68
      %s70 = sshll.u32 [#allocation9], 4
      %s71 = int_to_ptr.vmem [resolvable:$true] %s70
      %76 = dma.hbm_to_vmem [thread:$0]  %s4, 4096, %s71, [#allocation10], 128, 128, 8
    $region21: #{tpu_custom_call.1} parent=1 // pred_fallthru
      _
    // Predicated region
    $region22: #{tpu_custom_call.1} parent=1 // pred_check
      _
    $region23: #{tpu_custom_call.1} parent=1 // pred_check_branch
      %78 = sbr.rel (0) target = $region25
    $region24: #{tpu_custom_call.1} parent=1 // pred_region
      _
    $region25: #{tpu_custom_call.1} parent=1 // pred_fallthru
      _
    // Predicated region
    $region26: #{tpu_custom_call.1} parent=1 // pred_check
      _
    $region27: #{tpu_custom_call.1} parent=1 // pred_check_branch
      %80 = sbr.rel (0) target = $region29
    $region28: #{tpu_custom_call.1} parent=1 // pred_region
      %s82 = ssub.s32 4096, 4096
      %83 = vsyncadd [#allocation10], %s82
      %s84 = sshll.u32 [#allocation11], 4
      %s85 = int_to_ptr.vmem [resolvable:$true] %s84
      %90 = dma.hbm_to_vmem [thread:$0]  %s6, 4096, %s85, [#allocation10], 128, 128, 8
    $region29: #{tpu_custom_call.1} parent=1 // pred_fallthru
      _
    // Predicated region
    $region30: #{tpu_custom_call.1} parent=1 // pred_check
      _
    $region31: #{tpu_custom_call.1} parent=1 // pred_check_branch
      %92 = sbr.rel (0) target = $region33
    $region32: #{tpu_custom_call.1} parent=1 // pred_region
      _
    $region33: #{tpu_custom_call.1} parent=1 // pred_fallthru
      _
    // Predicated region
    $region34: #{tpu_custom_call.1} parent=1 // pred_check
      _
    $region35: #{tpu_custom_call.1} parent=1 // pred_check_branch
      %94 = sbr.rel (0) target = $region37
    $region36: #{tpu_custom_call.1} parent=1 // pred_region
      %s96 = ssub.s32 4096, 4096
      %97 = vsyncadd [#allocation13], %s96
      %s98 = sshll.u32 [#allocation12], 4
      %s99 = int_to_ptr.vmem [resolvable:$true] %s98
      %104 = dma.hbm_to_vmem [thread:$0]  %s8, 4096, %s99, [#allocation13], 128, 128, 8
    $region37: #{tpu_custom_call.1} parent=1 // pred_fallthru
      _
    // Predicated region
    $region38: #{tpu_custom_call.1} parent=1 // pred_check
      _
    $region39: #{tpu_custom_call.1} parent=1 // pred_check_branch
      %106 = sbr.rel (0) target = $region41
    $region40: #{tpu_custom_call.1} parent=1 // pred_region
      _
    $region41: #{tpu_custom_call.1} parent=1 // pred_fallthru
      _
    // Predicated region
    $region42: #{tpu_custom_call.1} parent=1 // pred_check
      _
    $region43: #{tpu_custom_call.1} parent=1 // pred_check_branch
      %108 = sbr.rel (0) target = $region45
    $region44: #{tpu_custom_call.1} parent=1 // pred_region
      _
    $region45: #{tpu_custom_call.1} parent=1 // pred_fallthru
      _
    // Predicated region
    $region46: #{tpu_custom_call.1} parent=1 // pred_check
      _
    $region47: #{tpu_custom_call.1} parent=1 // pred_check_branch
      %110 = sbr.rel (0) target = $region49
    $region48: #{tpu_custom_call.1} parent=1 // pred_region
      _
    $region49: #{tpu_custom_call.1} parent=1 // pred_fallthru
      _
    // Predicated region
    $region50: #{tpu_custom_call.1} parent=1 // pred_check
      _
    $region51: #{tpu_custom_call.1} parent=1 // pred_check_branch
      %112 = sbr.rel (0) target = $region53
    $region52: #{tpu_custom_call.1} parent=1 // pred_region
      %s114 = ssub.s32 2048, 2048
      %115 = vsyncadd [#allocation13], %s114
      %s116 = sshll.u32 [#allocation14], 4
      %s117 = int_to_ptr.vmem [resolvable:$true] %s116
      %122 = dma.hbm_to_vmem [thread:$0]  %s12, 2048, %s117, [#allocation13], 64, 64, 4
    $region53: #{tpu_custom_call.1} parent=1 // pred_fallthru
      _
    // Predicated region
    $region54: #{tpu_custom_call.1} parent=1 // pred_check
      _
    $region55: #{tpu_custom_call.1} parent=1 // pred_check_branch
      %124 = sbr.rel (0) target = $region57
    $region56: #{tpu_custom_call.1} parent=1 // pred_region
      _
    $region57: #{tpu_custom_call.1} parent=1 // pred_fallthru
      _
    // Predicated region
    $region58: #{tpu_custom_call.1} parent=1 // pred_check
      _
    $region59: #{tpu_custom_call.1} parent=1 // pred_check_branch
      %126 = sbr.rel (0) target = $region61
    $region60: #{tpu_custom_call.1} parent=1 // pred_region
      _
    $region61: #{tpu_custom_call.1} parent=1 // pred_fallthru
      _
    // Predicated region
    $region62: #{tpu_custom_call.1} parent=1 // pred_check
      _
    $region63: #{tpu_custom_call.1} parent=1 // pred_check_branch
      %128 = sbr.rel (0) target = $region65
    $region64: #{tpu_custom_call.1} parent=1 // pred_region
      _
    $region65: #{tpu_custom_call.1} parent=1 // pred_fallthru
      _
    // Predicated region
    $region66: #{tpu_custom_call.1} parent=1 // pred_check
      _
    $region67: #{tpu_custom_call.1} parent=1 // pred_check_branch
      %130 = sbr.rel (0) target = $region69
    $region68: #{tpu_custom_call.1} parent=1 // pred_region
      %131 = dma.done [#allocation4], 512
    $region69: #{tpu_custom_call.1} parent=1 // pred_fallthru
      _
    // Predicated region
    $region70: #{tpu_custom_call.1} parent=1 // pred_check
      _
    $region71: #{tpu_custom_call.1} parent=1 // pred_check_branch
      %133 = sbr.rel (0) target = $region73
    $region72: #{tpu_custom_call.1} parent=1 // pred_region
      %134 = dma.done [#allocation7], 512
    $region73: #{tpu_custom_call.1} parent=1 // pred_fallthru
      _
    // Predicated region
    $region74: #{tpu_custom_call.1} parent=1 // pred_check
      _
    $region75: #{tpu_custom_call.1} parent=1 // pred_check_branch
      %136 = sbr.rel (0) target = $region77
    $region76: #{tpu_custom_call.1} parent=1 // pred_region
      %137 = dma.done [#allocation7], 4096
    $region77: #{tpu_custom_call.1} parent=1 // pred_fallthru
      _
    // Predicated region
    $region78: #{tpu_custom_call.1} parent=1 // pred_check
      _
    $region79: #{tpu_custom_call.1} parent=1 // pred_check_branch
      %139 = sbr.rel (0) target = $region81
    $region80: #{tpu_custom_call.1} parent=1 // pred_region
      %140 = dma.done [#allocation10], 4096
    $region81: #{tpu_custom_call.1} parent=1 // pred_fallthru
      _
    // Predicated region
    $region82: #{tpu_custom_call.1} parent=1 // pred_check
      _
    $region83: #{tpu_custom_call.1} parent=1 // pred_check_branch
      %142 = sbr.rel (0) target = $region85
    $region84: #{tpu_custom_call.1} parent=1 // pred_region
      %143 = dma.done [#allocation10], 4096
    $region85: #{tpu_custom_call.1} parent=1 // pred_fallthru
      _
    // Predicated region
    $region86: #{tpu_custom_call.1} parent=1 // pred_check
      _
    $region87: #{tpu_custom_call.1} parent=1 // pred_check_branch
      %145 = sbr.rel (0) target = $region89
    $region88: #{tpu_custom_call.1} parent=1 // pred_region
      %146 = dma.done [#allocation13], 4096
    $region89: #{tpu_custom_call.1} parent=1 // pred_fallthru
      _
    // Predicated region
    $region90: #{tpu_custom_call.1} parent=1 // pred_check
      _
    $region91: #{tpu_custom_call.1} parent=1 // pred_check_branch
      %148 = sbr.rel (0) target = $region93
    $region92: #{tpu_custom_call.1} parent=1 // pred_region
      %149 = dma.done [#allocation13], 2048
    $region93: #{tpu_custom_call.1} parent=1 // pred_fallthru
      _
    %v151 = vld [vmem:[#allocation3] sm:$0xff]
    %v152 = vld [vmem:[#allocation3 + $0x8] sm:$0xff]
    %v153 = vld [vmem:[#allocation3 + $0x10] sm:$0xff]
    %v154 = vld [vmem:[#allocation3 + $0x18] sm:$0xff]
    %v155 = vld [vmem:[#allocation6] sm:$0xff]
    %v156 = vld [vmem:[#allocation6 + $0x8] sm:$0xff]
    %v157 = vld [vmem:[#allocation6 + $0x10] sm:$0xff]
    %v158 = vld [vmem:[#allocation6 + $0x18] sm:$0xff]
    %v159 = vld [vmem:[#allocation8] sm:$0xff]
    %v160 = vld [vmem:[#allocation8 + $0x8] sm:$0xff]
    %v161 = vld [vmem:[#allocation8 + $0x10] sm:$0xff]
    %v162 = vld [vmem:[#allocation8 + $0x18] sm:$0xff]
    %v163 = vld [vmem:[#allocation8 + $0x20] sm:$0xff]
    %v164 = vld [vmem:[#allocation8 + $0x28] sm:$0xff]
    %v165 = vld [vmem:[#allocation8 + $0x30] sm:$0xff]
    %v166 = vld [vmem:[#allocation8 + $0x38] sm:$0xff]
    %v167 = vld [vmem:[#allocation8 + $0x40] sm:$0xff]
    %v168 = vld [vmem:[#allocation8 + $0x48] sm:$0xff]
    %v169 = vld [vmem:[#allocation8 + $0x50] sm:$0xff]
    %v170 = vld [vmem:[#allocation8 + $0x58] sm:$0xff]
    %v171 = vld [vmem:[#allocation8 + $0x60] sm:$0xff]
    %v172 = vld [vmem:[#allocation8 + $0x68] sm:$0xff]
    %v173 = vld [vmem:[#allocation8 + $0x70] sm:$0xff]
    %v174 = vld [vmem:[#allocation8 + $0x78] sm:$0xff]
    %v175 = vld [vmem:[#allocation8 + $0x80] sm:$0xff]
    %v176 = vld [vmem:[#allocation8 + $0x88] sm:$0xff]
    %v177 = vld [vmem:[#allocation8 + $0x90] sm:$0xff]
    %v178 = vld [vmem:[#allocation8 + $0x98] sm:$0xff]
    %v179 = vld [vmem:[#allocation8 + $0xa0] sm:$0xff]
    %v180 = vld [vmem:[#allocation8 + $0xa8] sm:$0xff]
    %v181 = vld [vmem:[#allocation8 + $0xb0] sm:$0xff]
    %v182 = vld [vmem:[#allocation8 + $0xb8] sm:$0xff]
    %v183 = vld [vmem:[#allocation8 + $0xc0] sm:$0xff]
    %v184 = vld [vmem:[#allocation8 + $0xc8] sm:$0xff]
    %v185 = vld [vmem:[#allocation8 + $0xd0] sm:$0xff]
    %v186 = vld [vmem:[#allocation8 + $0xd8] sm:$0xff]
    %v187 = vld [vmem:[#allocation8 + $0xe0] sm:$0xff]
    %v188 = vld [vmem:[#allocation8 + $0xe8] sm:$0xff]
    %v189 = vld [vmem:[#allocation8 + $0xf0] sm:$0xff]
    %v190 = vld [vmem:[#allocation8 + $0xf8] sm:$0xff]
    %v191 = vld [vmem:[%s3] sm:$0x3]
    %v192 = vld [vmem:[#allocation9] sm:$0xff]
    %v193 = vld [vmem:[#allocation9 + $0x8] sm:$0xff]
    %v194 = vld [vmem:[#allocation9 + $0x10] sm:$0xff]
    %v195 = vld [vmem:[#allocation9 + $0x18] sm:$0xff]
    %v196 = vld [vmem:[#allocation9 + $0x20] sm:$0xff]
    %v197 = vld [vmem:[#allocation9 + $0x28] sm:$0xff]
    %v198 = vld [vmem:[#allocation9 + $0x30] sm:$0xff]
    %v199 = vld [vmem:[#allocation9 + $0x38] sm:$0xff]
    %v200 = vld [vmem:[#allocation9 + $0x40] sm:$0xff]
    %v201 = vld [vmem:[#allocation9 + $0x48] sm:$0xff]
    %v202 = vld [vmem:[#allocation9 + $0x50] sm:$0xff]
    %v203 = vld [vmem:[#allocation9 + $0x58] sm:$0xff]
    %v204 = vld [vmem:[#allocation9 + $0x60] sm:$0xff]
    %v205 = vld [vmem:[#allocation9 + $0x68] sm:$0xff]
    %v206 = vld [vmem:[#allocation9 + $0x70] sm:$0xff]
    %v207 = vld [vmem:[#allocation9 + $0x78] sm:$0xff]
    %v208 = vld [vmem:[#allocation9 + $0x80] sm:$0xff]
    %v209 = vld [vmem:[#allocation9 + $0x88] sm:$0xff]
    %v210 = vld [vmem:[#allocation9 + $0x90] sm:$0xff]
    %v211 = vld [vmem:[#allocation9 + $0x98] sm:$0xff]
    %v212 = vld [vmem:[#allocation9 + $0xa0] sm:$0xff]
    %v213 = vld [vmem:[#allocation9 + $0xa8] sm:$0xff]
    %v214 = vld [vmem:[#allocation9 + $0xb0] sm:$0xff]
    %v215 = vld [vmem:[#allocation9 + $0xb8] sm:$0xff]
    %v216 = vld [vmem:[#allocation9 + $0xc0] sm:$0xff]
    %v217 = vld [vmem:[#allocation9 + $0xc8] sm:$0xff]
    %v218 = vld [vmem:[#allocation9 + $0xd0] sm:$0xff]
    %v219 = vld [vmem:[#allocation9 + $0xd8] sm:$0xff]
    %v220 = vld [vmem:[#allocation9 + $0xe0] sm:$0xff]
    %v221 = vld [vmem:[#allocation9 + $0xe8] sm:$0xff]
    %v222 = vld [vmem:[#allocation9 + $0xf0] sm:$0xff]
    %v223 = vld [vmem:[#allocation9 + $0xf8] sm:$0xff]
    %v224 = vld [vmem:[%s5] sm:$0x3]
    %v225 = vld [vmem:[#allocation11] sm:$0xff]
    %v226 = vld [vmem:[#allocation11 + $0x8] sm:$0xff]
    %v227 = vld [vmem:[#allocation11 + $0x10] sm:$0xff]
    %v228 = vld [vmem:[#allocation11 + $0x18] sm:$0xff]
    %v229 = vld [vmem:[#allocation11 + $0x20] sm:$0xff]
    %v230 = vld [vmem:[#allocation11 + $0x28] sm:$0xff]
    %v231 = vld [vmem:[#allocation11 + $0x30] sm:$0xff]
    %v232 = vld [vmem:[#allocation11 + $0x38] sm:$0xff]
    %v233 = vld [vmem:[#allocation11 + $0x40] sm:$0xff]
    %v234 = vld [vmem:[#allocation11 + $0x48] sm:$0xff]
    %v235 = vld [vmem:[#allocation11 + $0x50] sm:$0xff]
    %v236 = vld [vmem:[#allocation11 + $0x58] sm:$0xff]
    %v237 = vld [vmem:[#allocation11 + $0x60] sm:$0xff]
    %v238 = vld [vmem:[#allocation11 + $0x68] sm:$0xff]
    %v239 = vld [vmem:[#allocation11 + $0x70] sm:$0xff]
    %v240 = vld [vmem:[#allocation11 + $0x78] sm:$0xff]
    %v241 = vld [vmem:[#allocation11 + $0x80] sm:$0xff]
    %v242 = vld [vmem:[#allocation11 + $0x88] sm:$0xff]
    %v243 = vld [vmem:[#allocation11 + $0x90] sm:$0xff]
    %v244 = vld [vmem:[#allocation11 + $0x98] sm:$0xff]
    %v245 = vld [vmem:[#allocation11 + $0xa0] sm:$0xff]
    %v246 = vld [vmem:[#allocation11 + $0xa8] sm:$0xff]
    %v247 = vld [vmem:[#allocation11 + $0xb0] sm:$0xff]
    %v248 = vld [vmem:[#allocation11 + $0xb8] sm:$0xff]
    %v249 = vld [vmem:[#allocation11 + $0xc0] sm:$0xff]
    %v250 = vld [vmem:[#allocation11 + $0xc8] sm:$0xff]
    %v251 = vld [vmem:[#allocation11 + $0xd0] sm:$0xff]
    %v252 = vld [vmem:[#allocation11 + $0xd8] sm:$0xff]
    %v253 = vld [vmem:[#allocation11 + $0xe0] sm:$0xff]
    %v254 = vld [vmem:[#allocation11 + $0xe8] sm:$0xff]
    %v255 = vld [vmem:[#allocation11 + $0xf0] sm:$0xff]
    %v256 = vld [vmem:[#allocation11 + $0xf8] sm:$0xff]
    %v257 = vld [vmem:[%s7] sm:$0x3]
    %v258 = vld [vmem:[#allocation12] sm:$0xff]
    %v259 = vld [vmem:[#allocation12 + $0x8] sm:$0xff]
    %v260 = vld [vmem:[#allocation12 + $0x10] sm:$0xff]
    %v261 = vld [vmem:[#allocation12 + $0x18] sm:$0xff]
    %v262 = vld [vmem:[#allocation12 + $0x20] sm:$0xff]
    %v263 = vld [vmem:[#allocation12 + $0x28] sm:$0xff]
    %v264 = vld [vmem:[#allocation12 + $0x30] sm:$0xff]
    %v265 = vld [vmem:[#allocation12 + $0x38] sm:$0xff]
    %v266 = vld [vmem:[#allocation12 + $0x40] sm:$0xff]
    %v267 = vld [vmem:[#allocation12 + $0x48] sm:$0xff]
    %v268 = vld [vmem:[#allocation12 + $0x50] sm:$0xff]
    %v269 = vld [vmem:[#allocation12 + $0x58] sm:$0xff]
    %v270 = vld [vmem:[#allocation12 + $0x60] sm:$0xff]
    %v271 = vld [vmem:[#allocation12 + $0x68] sm:$0xff]
    %v272 = vld [vmem:[#allocation12 + $0x70] sm:$0xff]
    %v273 = vld [vmem:[#allocation12 + $0x78] sm:$0xff]
    %v274 = vld [vmem:[#allocation12 + $0x80] sm:$0xff]
    %v275 = vld [vmem:[#allocation12 + $0x88] sm:$0xff]
    %v276 = vld [vmem:[#allocation12 + $0x90] sm:$0xff]
    %v277 = vld [vmem:[#allocation12 + $0x98] sm:$0xff]
    %v278 = vld [vmem:[#allocation12 + $0xa0] sm:$0xff]
    %v279 = vld [vmem:[#allocation12 + $0xa8] sm:$0xff]
    %v280 = vld [vmem:[#allocation12 + $0xb0] sm:$0xff]
    %v281 = vld [vmem:[#allocation12 + $0xb8] sm:$0xff]
    %v282 = vld [vmem:[#allocation12 + $0xc0] sm:$0xff]
    %v283 = vld [vmem:[#allocation12 + $0xc8] sm:$0xff]
    %v284 = vld [vmem:[#allocation12 + $0xd0] sm:$0xff]
    %v285 = vld [vmem:[#allocation12 + $0xd8] sm:$0xff]
    %v286 = vld [vmem:[#allocation12 + $0xe0] sm:$0xff]
    %v287 = vld [vmem:[#allocation12 + $0xe8] sm:$0xff]
    %v288 = vld [vmem:[#allocation12 + $0xf0] sm:$0xff]
    %v289 = vld [vmem:[#allocation12 + $0xf8] sm:$0xff]
    %v290 = vld [vmem:[%s9] sm:$0x3]
    %v291 = vld [vmem:[%s10] sm:$0x3]
    %v292 = vld [vmem:[%s11] sm:$0x3]
    %v293 = vpack.c.bf16 %v153, %v151
    %v294 = vpack.c.bf16 %v154, %v152
    %v295 = vpack.c.bf16 %v157, %v155
    %v296 = vpack.c.bf16 %v158, %v156
    %v298 = vlaneseq
    %v299 = vshrl.u32 %v298, 7
    %v300 = vsub.s32 0, %v299
    %v301 = vrot.slane %v191, %v300
    %v302 = vlaneseq
    %v303 = vshrl.u32 %v302, 7
    %v304 = vsub.s32 1, %v303
    %v305 = vrot.slane %v191, %v304
    %v340 = vunpack.c.l.b16 %v159
    %v341 = vunpack.c.h.b16 %v159
    %v342 = vunpack.c.l.b16 %v160
    %v343 = vunpack.c.h.b16 %v160
    %v344 = vunpack.c.l.b16 %v161
    %v345 = vunpack.c.h.b16 %v161
    %v346 = vunpack.c.l.b16 %v162
    %v347 = vunpack.c.h.b16 %v162
    %v348 = vunpack.c.l.b16 %v163
    %v349 = vunpack.c.h.b16 %v163
    %v350 = vunpack.c.l.b16 %v164
    %v351 = vunpack.c.h.b16 %v164
    %v352 = vunpack.c.l.b16 %v165
    %v353 = vunpack.c.h.b16 %v165
    %v354 = vunpack.c.l.b16 %v166
    %v355 = vunpack.c.h.b16 %v166
    %v356 = vunpack.c.l.b16 %v167
    %v357 = vunpack.c.h.b16 %v167
    %v358 = vunpack.c.l.b16 %v168
    %v359 = vunpack.c.h.b16 %v168
    %v360 = vunpack.c.l.b16 %v169
    %v361 = vunpack.c.h.b16 %v169
    %v362 = vunpack.c.l.b16 %v170
    %v363 = vunpack.c.h.b16 %v170
    %v364 = vunpack.c.l.b16 %v171
    %v365 = vunpack.c.h.b16 %v171
    %v366 = vunpack.c.l.b16 %v172
    %v367 = vunpack.c.h.b16 %v172
    %v368 = vunpack.c.l.b16 %v173
    %v369 = vunpack.c.h.b16 %v173
    %v370 = vunpack.c.l.b16 %v174
    %v371 = vunpack.c.h.b16 %v174
    %v372 = vunpack.c.l.b16 %v175
    %v373 = vunpack.c.h.b16 %v175
    %v374 = vunpack.c.l.b16 %v176
    %v375 = vunpack.c.h.b16 %v176
    %v376 = vunpack.c.l.b16 %v177
    %v377 = vunpack.c.h.b16 %v177
    %v378 = vunpack.c.l.b16 %v178
    %v379 = vunpack.c.h.b16 %v178
    %v380 = vunpack.c.l.b16 %v179
    %v381 = vunpack.c.h.b16 %v179
    %v382 = vunpack.c.l.b16 %v180
    %v383 = vunpack.c.h.b16 %v180
    %v384 = vunpack.c.l.b16 %v181
    %v385 = vunpack.c.h.b16 %v181
    %v386 = vunpack.c.l.b16 %v182
    %v387 = vunpack.c.h.b16 %v182
    %v388 = vunpack.c.l.b16 %v183
    %v389 = vunpack.c.h.b16 %v183
    %v390 = vunpack.c.l.b16 %v184
    %v391 = vunpack.c.h.b16 %v184
    %v392 = vunpack.c.l.b16 %v185
    %v393 = vunpack.c.h.b16 %v185
    %v394 = vunpack.c.l.b16 %v186
    %v395 = vunpack.c.h.b16 %v186
    %v396 = vunpack.c.l.b16 %v187
    %v397 = vunpack.c.h.b16 %v187
    %v398 = vunpack.c.l.b16 %v188
    %v399 = vunpack.c.h.b16 %v188
    %v400 = vunpack.c.l.b16 %v189
    %v401 = vunpack.c.h.b16 %v189
    %v402 = vunpack.c.l.b16 %v190
    %v403 = vunpack.c.h.b16 %v190
    %v404 = vpack.c.b16 %v342, %v340
    %v405 = vpack.c.b16 %v343, %v341
    %v406 = vpack.c.b16 %v346, %v344
    %v407 = vpack.c.b16 %v347, %v345
    %v408 = vpack.c.b16 %v350, %v348
    %v409 = vpack.c.b16 %v351, %v349
    %v410 = vpack.c.b16 %v354, %v352
    %v411 = vpack.c.b16 %v355, %v353
    %v412 = vpack.c.b16 %v358, %v356
    %v413 = vpack.c.b16 %v359, %v357
    %v414 = vpack.c.b16 %v362, %v360
    %v415 = vpack.c.b16 %v363, %v361
    %v416 = vpack.c.b16 %v366, %v364
    %v417 = vpack.c.b16 %v367, %v365
    %v418 = vpack.c.b16 %v370, %v368
    %v419 = vpack.c.b16 %v371, %v369
    %v420 = vpack.c.b16 %v374, %v372
    %v421 = vpack.c.b16 %v375, %v373
    %v422 = vpack.c.b16 %v378, %v376
    %v423 = vpack.c.b16 %v379, %v377
    %v424 = vpack.c.b16 %v382, %v380
    %v425 = vpack.c.b16 %v383, %v381
    %v426 = vpack.c.b16 %v386, %v384
    %v427 = vpack.c.b16 %v387, %v385
    %v428 = vpack.c.b16 %v390, %v388
    %v429 = vpack.c.b16 %v391, %v389
    %v430 = vpack.c.b16 %v394, %v392
    %v431 = vpack.c.b16 %v395, %v393
    %v432 = vpack.c.b16 %v398, %v396
    %v433 = vpack.c.b16 %v399, %v397
    %v434 = vpack.c.b16 %v402, %v400
    %v435 = vpack.c.b16 %v403, %v401
    %468 = vmatprep.subr.bf16.mxu0 %v405
    %469 = vmatpush1.bf16.msra.mxu0 %v404
    %470 = vmatprep.subr.bf16.mxu0 %v407
    %471 = vmatpush1.bf16.msra.mxu0 %v406
    %472 = vmatprep.subr.bf16.mxu0 %v409
    %473 = vmatpush1.bf16.msra.mxu0 %v408
    %474 = vmatprep.subr.bf16.mxu0 %v411
    %475 = vmatpush1.bf16.msra.mxu0 %v410
    %476 = vmatprep.subr.bf16.mxu0 %v413
    %477 = vmatpush1.bf16.msra.mxu0 %v412
    %478 = vmatprep.subr.bf16.mxu0 %v415
    %479 = vmatpush1.bf16.msra.mxu0 %v414
    %480 = vmatprep.subr.bf16.mxu0 %v417
    %481 = vmatpush1.bf16.msra.mxu0 %v416
    %482 = vmatprep.subr.bf16.mxu0 %v419
    %483 = vmatpush1.bf16.msra.mxu0 %v418
    %484 = vmatprep.subr.bf16.mxu0 %v421
    %485 = vmatpush1.bf16.msra.mxu0 %v420
    %486 = vmatprep.subr.bf16.mxu0 %v423
    %487 = vmatpush1.bf16.msra.mxu0 %v422
    %488 = vmatprep.subr.bf16.mxu0 %v425
    %489 = vmatpush1.bf16.msra.mxu0 %v424
    %490 = vmatprep.subr.bf16.mxu0 %v427
    %491 = vmatpush1.bf16.msra.mxu0 %v426
    %492 = vmatprep.subr.bf16.mxu0 %v429
    %493 = vmatpush1.bf16.msra.mxu0 %v428
    %494 = vmatprep.subr.bf16.mxu0 %v431
    %495 = vmatpush1.bf16.msra.mxu0 %v430
    %496 = vmatprep.subr.bf16.mxu0 %v433
    %497 = vmatpush1.bf16.msra.mxu0 %v432
    %498 = vmatprep.subr.bf16.mxu0 %v435
    %499 = vmatpush1.bf16.msra.mxu0 %v434
    %500 = vmatprep.mubr.bf16.mxu0 %v294
    %501 = vmatmul.mubr.bf16.gmra.mrb[0].mxu0 %v293
    %v502 = vpop.f32.mrb[0].mxu0
    %v503 = vadd.f32 %v301, %v502
    %v504 = vpop.f32.mrb[0].mxu0
    %v505 = vadd.f32 %v305, %v504
    %v506 = vpop.f32.mrb[0].mxu0
    %v507 = vadd.f32 %v301, %v506
    %v508 = vpop.f32.mrb[0].mxu0
    %v509 = vadd.f32 %v305, %v508
    %510 = vdwg.mxu0
    %v511 = vmul.f32 %v503, 0.17677669
    %v512 = vmul.f32 %v505, 0.17677669
    %v513 = vmul.f32 %v507, 0.17677669
    %v514 = vmul.f32 %v509, 0.17677669
    %v516 = vlaneseq
    %v517 = vshrl.u32 %v516, 7
    %v518 = vsub.s32 0, %v517
    %v519 = vrot.slane %v224, %v518
    %v520 = vlaneseq
    %v521 = vshrl.u32 %v520, 7
    %v522 = vsub.s32 1, %v521
    %v523 = vrot.slane %v224, %v522
    %v558 = vunpack.c.l.b16 %v192
    %v559 = vunpack.c.h.b16 %v192
    %v560 = vunpack.c.l.b16 %v193
    %v561 = vunpack.c.h.b16 %v193
    %v562 = vunpack.c.l.b16 %v194
    %v563 = vunpack.c.h.b16 %v194
    %v564 = vunpack.c.l.b16 %v195
    %v565 = vunpack.c.h.b16 %v195
    %v566 = vunpack.c.l.b16 %v196
    %v567 = vunpack.c.h.b16 %v196
    %v568 = vunpack.c.l.b16 %v197
    %v569 = vunpack.c.h.b16 %v197
    %v570 = vunpack.c.l.b16 %v198
    %v571 = vunpack.c.h.b16 %v198
    %v572 = vunpack.c.l.b16 %v199
    %v573 = vunpack.c.h.b16 %v199
    %v574 = vunpack.c.l.b16 %v200
    %v575 = vunpack.c.h.b16 %v200
    %v576 = vunpack.c.l.b16 %v201
    %v577 = vunpack.c.h.b16 %v201
    %v578 = vunpack.c.l.b16 %v202
    %v579 = vunpack.c.h.b16 %v202
    %v580 = vunpack.c.l.b16 %v203
    %v581 = vunpack.c.h.b16 %v203
    %v582 = vunpack.c.l.b16 %v204
    %v583 = vunpack.c.h.b16 %v204
    %v584 = vunpack.c.l.b16 %v205
    %v585 = vunpack.c.h.b16 %v205
    %v586 = vunpack.c.l.b16 %v206
    %v587 = vunpack.c.h.b16 %v206
    %v588 = vunpack.c.l.b16 %v207
    %v589 = vunpack.c.h.b16 %v207
    %v590 = vunpack.c.l.b16 %v208
    %v591 = vunpack.c.h.b16 %v208
    %v592 = vunpack.c.l.b16 %v209
    %v593 = vunpack.c.h.b16 %v209
    %v594 = vunpack.c.l.b16 %v210
    %v595 = vunpack.c.h.b16 %v210
    %v596 = vunpack.c.l.b16 %v211
    %v597 = vunpack.c.h.b16 %v211
    %v598 = vunpack.c.l.b16 %v212
    %v599 = vunpack.c.h.b16 %v212
    %v600 = vunpack.c.l.b16 %v213
    %v601 = vunpack.c.h.b16 %v213
    %v602 = vunpack.c.l.b16 %v214
    %v603 = vunpack.c.h.b16 %v214
    %v604 = vunpack.c.l.b16 %v215
    %v605 = vunpack.c.h.b16 %v215
    %v606 = vunpack.c.l.b16 %v216
    %v607 = vunpack.c.h.b16 %v216
    %v608 = vunpack.c.l.b16 %v217
    %v609 = vunpack.c.h.b16 %v217
    %v610 = vunpack.c.l.b16 %v218
    %v611 = vunpack.c.h.b16 %v218
    %v612 = vunpack.c.l.b16 %v219
    %v613 = vunpack.c.h.b16 %v219
    %v614 = vunpack.c.l.b16 %v220
    %v615 = vunpack.c.h.b16 %v220
    %v616 = vunpack.c.l.b16 %v221
    %v617 = vunpack.c.h.b16 %v221
    %v618 = vunpack.c.l.b16 %v222
    %v619 = vunpack.c.h.b16 %v222
    %v620 = vunpack.c.l.b16 %v223
    %v621 = vunpack.c.h.b16 %v223
    %v622 = vpack.c.b16 %v560, %v558
    %v623 = vpack.c.b16 %v561, %v559
    %v624 = vpack.c.b16 %v564, %v562
    %v625 = vpack.c.b16 %v565, %v563
    %v626 = vpack.c.b16 %v568, %v566
    %v627 = vpack.c.b16 %v569, %v567
    %v628 = vpack.c.b16 %v572, %v570
    %v629 = vpack.c.b16 %v573, %v571
    %v630 = vpack.c.b16 %v576, %v574
    %v631 = vpack.c.b16 %v577, %v575
    %v632 = vpack.c.b16 %v580, %v578
    %v633 = vpack.c.b16 %v581, %v579
    %v634 = vpack.c.b16 %v584, %v582
    %v635 = vpack.c.b16 %v585, %v583
    %v636 = vpack.c.b16 %v588, %v586
    %v637 = vpack.c.b16 %v589, %v587
    %v638 = vpack.c.b16 %v592, %v590
    %v639 = vpack.c.b16 %v593, %v591
    %v640 = vpack.c.b16 %v596, %v594
    %v641 = vpack.c.b16 %v597, %v595
    %v642 = vpack.c.b16 %v600, %v598
    %v643 = vpack.c.b16 %v601, %v599
    %v644 = vpack.c.b16 %v604, %v602
    %v645 = vpack.c.b16 %v605, %v603
    %v646 = vpack.c.b16 %v608, %v606
    %v647 = vpack.c.b16 %v609, %v607
    %v648 = vpack.c.b16 %v612, %v610
    %v649 = vpack.c.b16 %v613, %v611
    %v650 = vpack.c.b16 %v616, %v614
    %v651 = vpack.c.b16 %v617, %v615
    %v652 = vpack.c.b16 %v620, %v618
    %v653 = vpack.c.b16 %v621, %v619
    %686 = vmatprep.subr.bf16.mxu0 %v623
    %687 = vmatpush1.bf16.msra.mxu0 %v622
    %688 = vmatprep.subr.bf16.mxu0 %v625
    %689 = vmatpush1.bf16.msra.mxu0 %v624
    %690 = vmatprep.subr.bf16.mxu0 %v627
    %691 = vmatpush1.bf16.msra.mxu0 %v626
    %692 = vmatprep.subr.bf16.mxu0 %v629
    %693 = vmatpush1.bf16.msra.mxu0 %v628
    %694 = vmatprep.subr.bf16.mxu0 %v631
    %695 = vmatpush1.bf16.msra.mxu0 %v630
    %696 = vmatprep.subr.bf16.mxu0 %v633
    %697 = vmatpush1.bf16.msra.mxu0 %v632
    %698 = vmatprep.subr.bf16.mxu0 %v635
    %699 = vmatpush1.bf16.msra.mxu0 %v634
    %700 = vmatprep.subr.bf16.mxu0 %v637
    %701 = vmatpush1.bf16.msra.mxu0 %v636
    %702 = vmatprep.subr.bf16.mxu0 %v639
    %703 = vmatpush1.bf16.msra.mxu0 %v638
    %704 = vmatprep.subr.bf16.mxu0 %v641
    %705 = vmatpush1.bf16.msra.mxu0 %v640
    %706 = vmatprep.subr.bf16.mxu0 %v643
    %707 = vmatpush1.bf16.msra.mxu0 %v642
    %708 = vmatprep.subr.bf16.mxu0 %v645
    %709 = vmatpush1.bf16.msra.mxu0 %v644
    %710 = vmatprep.subr.bf16.mxu0 %v647
    %711 = vmatpush1.bf16.msra.mxu0 %v646
    %712 = vmatprep.subr.bf16.mxu0 %v649
    %713 = vmatpush1.bf16.msra.mxu0 %v648
    %714 = vmatprep.subr.bf16.mxu0 %v651
    %715 = vmatpush1.bf16.msra.mxu0 %v650
    %716 = vmatprep.subr.bf16.mxu0 %v653
    %717 = vmatpush1.bf16.msra.mxu0 %v652
    %718 = vmatprep.mubr.bf16.mxu0 %v296
    %719 = vmatmul.mubr.bf16.gmra.mrb[0].mxu0 %v295
    %v720 = vpop.f32.mrb[0].mxu0
    %v721 = vadd.f32 %v519, %v720
    %v722 = vpop.f32.mrb[0].mxu0
    %v723 = vadd.f32 %v523, %v722
    %v724 = vpop.f32.mrb[0].mxu0
    %v725 = vadd.f32 %v519, %v724
    %v726 = vpop.f32.mrb[0].mxu0
    %v727 = vadd.f32 %v523, %v726
    %728 = vdwg.mxu0
    %v730 = vlaneseq
    %v731 = vshrl.u32 %v730, 7
    %v732 = vsub.s32 0, %v731
    %v733 = vrot.slane %v257, %v732
    %v734 = vlaneseq
    %v735 = vshrl.u32 %v734, 7
    %v736 = vsub.s32 1, %v735
    %v737 = vrot.slane %v257, %v736
    %v772 = vunpack.c.l.b16 %v225
    %v773 = vunpack.c.h.b16 %v225
    %v774 = vunpack.c.l.b16 %v226
    %v775 = vunpack.c.h.b16 %v226
    %v776 = vunpack.c.l.b16 %v227
    %v777 = vunpack.c.h.b16 %v227
    %v778 = vunpack.c.l.b16 %v228
    %v779 = vunpack.c.h.b16 %v228
    %v780 = vunpack.c.l.b16 %v229
    %v781 = vunpack.c.h.b16 %v229
    %v782 = vunpack.c.l.b16 %v230
    %v783 = vunpack.c.h.b16 %v230
    %v784 = vunpack.c.l.b16 %v231
    %v785 = vunpack.c.h.b16 %v231
    %v786 = vunpack.c.l.b16 %v232
    %v787 = vunpack.c.h.b16 %v232
    %v788 = vunpack.c.l.b16 %v233
    %v789 = vunpack.c.h.b16 %v233
    %v790 = vunpack.c.l.b16 %v234
    %v791 = vunpack.c.h.b16 %v234
    %v792 = vunpack.c.l.b16 %v235
    %v793 = vunpack.c.h.b16 %v235
    %v794 = vunpack.c.l.b16 %v236
    %v795 = vunpack.c.h.b16 %v236
    %v796 = vunpack.c.l.b16 %v237
    %v797 = vunpack.c.h.b16 %v237
    %v798 = vunpack.c.l.b16 %v238
    %v799 = vunpack.c.h.b16 %v238
    %v800 = vunpack.c.l.b16 %v239
    %v801 = vunpack.c.h.b16 %v239
    %v802 = vunpack.c.l.b16 %v240
    %v803 = vunpack.c.h.b16 %v240
    %v804 = vunpack.c.l.b16 %v241
    %v805 = vunpack.c.h.b16 %v241
    %v806 = vunpack.c.l.b16 %v242
    %v807 = vunpack.c.h.b16 %v242
    %v808 = vunpack.c.l.b16 %v243
    %v809 = vunpack.c.h.b16 %v243
    %v810 = vunpack.c.l.b16 %v244
    %v811 = vunpack.c.h.b16 %v244
    %v812 = vunpack.c.l.b16 %v245
    %v813 = vunpack.c.h.b16 %v245
    %v814 = vunpack.c.l.b16 %v246
    %v815 = vunpack.c.h.b16 %v246
    %v816 = vunpack.c.l.b16 %v247
    %v817 = vunpack.c.h.b16 %v247
    %v818 = vunpack.c.l.b16 %v248
    %v819 = vunpack.c.h.b16 %v248
    %v820 = vunpack.c.l.b16 %v249
    %v821 = vunpack.c.h.b16 %v249
    %v822 = vunpack.c.l.b16 %v250
    %v823 = vunpack.c.h.b16 %v250
    %v824 = vunpack.c.l.b16 %v251
    %v825 = vunpack.c.h.b16 %v251
    %v826 = vunpack.c.l.b16 %v252
    %v827 = vunpack.c.h.b16 %v252
    %v828 = vunpack.c.l.b16 %v253
    %v829 = vunpack.c.h.b16 %v253
    %v830 = vunpack.c.l.b16 %v254
    %v831 = vunpack.c.h.b16 %v254
    %v832 = vunpack.c.l.b16 %v255
    %v833 = vunpack.c.h.b16 %v255
    %v834 = vunpack.c.l.b16 %v256
    %v835 = vunpack.c.h.b16 %v256
    %v836 = vpack.c.b16 %v774, %v772
    %v837 = vpack.c.b16 %v775, %v773
    %v838 = vpack.c.b16 %v778, %v776
    %v839 = vpack.c.b16 %v779, %v777
    %v840 = vpack.c.b16 %v782, %v780
    %v841 = vpack.c.b16 %v783, %v781
    %v842 = vpack.c.b16 %v786, %v784
    %v843 = vpack.c.b16 %v787, %v785
    %v844 = vpack.c.b16 %v790, %v788
    %v845 = vpack.c.b16 %v791, %v789
    %v846 = vpack.c.b16 %v794, %v792
    %v847 = vpack.c.b16 %v795, %v793
    %v848 = vpack.c.b16 %v798, %v796
    %v849 = vpack.c.b16 %v799, %v797
    %v850 = vpack.c.b16 %v802, %v800
    %v851 = vpack.c.b16 %v803, %v801
    %v852 = vpack.c.b16 %v806, %v804
    %v853 = vpack.c.b16 %v807, %v805
    %v854 = vpack.c.b16 %v810, %v808
    %v855 = vpack.c.b16 %v811, %v809
    %v856 = vpack.c.b16 %v814, %v812
    %v857 = vpack.c.b16 %v815, %v813
    %v858 = vpack.c.b16 %v818, %v816
    %v859 = vpack.c.b16 %v819, %v817
    %v860 = vpack.c.b16 %v822, %v820
    %v861 = vpack.c.b16 %v823, %v821
    %v862 = vpack.c.b16 %v826, %v824
    %v863 = vpack.c.b16 %v827, %v825
    %v864 = vpack.c.b16 %v830, %v828
    %v865 = vpack.c.b16 %v831, %v829
    %v866 = vpack.c.b16 %v834, %v832
    %v867 = vpack.c.b16 %v835, %v833
    %900 = vmatprep.subr.bf16.mxu0 %v837
    %901 = vmatpush1.bf16.msra.mxu0 %v836
    %902 = vmatprep.subr.bf16.mxu0 %v839
    %903 = vmatpush1.bf16.msra.mxu0 %v838
    %904 = vmatprep.subr.bf16.mxu0 %v841
    %905 = vmatpush1.bf16.msra.mxu0 %v840
    %906 = vmatprep.subr.bf16.mxu0 %v843
    %907 = vmatpush1.bf16.msra.mxu0 %v842
    %908 = vmatprep.subr.bf16.mxu0 %v845
    %909 = vmatpush1.bf16.msra.mxu0 %v844
    %910 = vmatprep.subr.bf16.mxu0 %v847
    %911 = vmatpush1.bf16.msra.mxu0 %v846
    %912 = vmatprep.subr.bf16.mxu0 %v849
    %913 = vmatpush1.bf16.msra.mxu0 %v848
    %914 = vmatprep.subr.bf16.mxu0 %v851
    %915 = vmatpush1.bf16.msra.mxu0 %v850
    %916 = vmatprep.subr.bf16.mxu0 %v853
    %917 = vmatpush1.bf16.msra.mxu0 %v852
    %918 = vmatprep.subr.bf16.mxu0 %v855
    %919 = vmatpush1.bf16.msra.mxu0 %v854
    %920 = vmatprep.subr.bf16.mxu0 %v857
    %921 = vmatpush1.bf16.msra.mxu0 %v856
    %922 = vmatprep.subr.bf16.mxu0 %v859
    %923 = vmatpush1.bf16.msra.mxu0 %v858
    %924 = vmatprep.subr.bf16.mxu0 %v861
    %925 = vmatpush1.bf16.msra.mxu0 %v860
    %926 = vmatprep.subr.bf16.mxu0 %v863
    %927 = vmatpush1.bf16.msra.mxu0 %v862
    %928 = vmatprep.subr.bf16.mxu0 %v865
    %929 = vmatpush1.bf16.msra.mxu0 %v864
    %930 = vmatprep.subr.bf16.mxu0 %v867
    %931 = vmatpush1.bf16.msra.mxu0 %v866
    %932 = vmatprep.mubr.bf16.mxu0 %v296
    %933 = vmatmul.mubr.bf16.gmra.mrb[0].mxu0 %v295
    %v934 = vpop.f32.mrb[0].mxu0
    %v935 = vadd.f32 %v733, %v934
    %v936 = vpop.f32.mrb[0].mxu0
    %v937 = vadd.f32 %v737, %v936
    %v938 = vpop.f32.mrb[0].mxu0
    %v939 = vadd.f32 %v733, %v938
    %v940 = vpop.f32.mrb[0].mxu0
    %v941 = vadd.f32 %v737, %v940
    %942 = vdwg.mxu0
    %vm943 = vcmask 261120
    %v945 = vsel %vm943, %v511, 0
    %v948 = vsel %vm943, %v721, 0
    %950 = vmatprep.subr.mxu0 0.0
    %951 = vmatpush1.xpose.msra.mxu0 %v948
    %952 = vmatprep.subr.mxu0 0.0
    %953 = vmatpush1.xpose.msra.mxu0 0.0
    %954 = vmatprep.subr.mxu0 0.0
    %955 = vmatpush1.xpose.msra.mxu0 0.0
    %956 = vmatprep.subr.mxu0 0.0
    %957 = vmatpush1.xpose.msra.mxu0 0.0
    %958 = vmatprep.subr.mxu0 0.0
    %959 = vmatpush1.xpose.msra.mxu0 0.0
    %960 = vmatprep.subr.mxu0 0.0
    %961 = vmatpush1.xpose.msra.mxu0 0.0
    %962 = vmatprep.subr.mxu0 0.0
    %963 = vmatpush1.xpose.msra.mxu0 0.0
    %964 = vmatprep.subr.mxu0 0.0
    %965 = vmatpush1.xpose.msra.mxu0 0.0
    %966 = vmatprep.subr.mxu0 0.0
    %967 = vmatpush1.xpose.msra.mxu0 0.0
    %968 = vmatprep.subr.mxu0 0.0
    %969 = vmatpush1.xpose.msra.mxu0 0.0
    %970 = vmatprep.subr.mxu0 0.0
    %971 = vmatpush1.xpose.msra.mxu0 0.0
    %972 = vmatprep.subr.mxu0 0.0
    %973 = vmatpush1.xpose.msra.mxu0 0.0
    %974 = vmatprep.subr.mxu0 0.0
    %975 = vmatpush1.xpose.msra.mxu0 0.0
    %976 = vmatprep.subr.mxu0 0.0
    %977 = vmatpush1.xpose.msra.mxu0 0.0
    %978 = vmatprep.subr.mxu0 0.0
    %979 = vmatpush1.xpose.msra.mxu0 0.0
    %980 = vmatprep.subr.mxu0 0.0
    %981 = vmatpush1.xpose.msra.mxu0 0.0
    %982 = vmatprep.subr.mxu0 0.0
    %983 = vmatpush1.xpose.msra.mxu0 0.0
    %984 = vmatprep.subr.mxu0 0.0
    %985 = vmatpush1.xpose.msra.mxu0 0.0
    %986 = vmatprep.subr.mxu0 0.0
    %987 = vmatpush1.xpose.msra.mxu0 0.0
    %988 = vmatprep.subr.mxu0 0.0
    %989 = vmatpush1.xpose.msra.mxu0 0.0
    %990 = vmatprep.subr.mxu0 0.0
    %991 = vmatpush1.xpose.msra.mxu0 0.0
    %992 = vmatprep.subr.mxu0 0.0
    %993 = vmatpush1.xpose.msra.mxu0 0.0
    %994 = vmatprep.subr.mxu0 0.0
    %995 = vmatpush1.xpose.msra.mxu0 0.0
    %996 = vmatprep.subr.mxu0 0.0
    %997 = vmatpush1.xpose.msra.mxu0 0.0
    %998 = vmatprep.subr.mxu0 0.0
    %999 = vmatpush1.xpose.msra.mxu0 0.0
    %1000 = vmatprep.subr.mxu0 0.0
    %1001 = vmatpush1.xpose.msra.mxu0 0.0
    %1002 = vmatprep.subr.mxu0 0.0
    %1003 = vmatpush1.xpose.msra.mxu0 0.0
    %1004 = vmatprep.subr.mxu0 0.0
    %1005 = vmatpush1.xpose.msra.mxu0 0.0
    %1006 = vmatprep.subr.mxu0 0.0
    %1007 = vmatpush1.xpose.msra.mxu0 0.0
    %1008 = vmatprep.subr.mxu0 0.0
    %1009 = vmatpush1.xpose.msra.mxu0 0.0
    %1010 = vmatprep.subr.mxu0 0.0
    %1011 = vmatpush1.xpose.msra.mxu0 0.0
    %1012 = vmatprep.subr.mxu0 0.0
    %1013 = vmatpush1.xpose.msra.mxu0 0.0
    %1014 = vmatprep.mubr.f32.mxu0 0.0
    %1015 = vmatmul.mubr.f32.gmra.mrb[0].mxu0 %v945
    %v1016 = vpop.f32.mrb[0].mxu0
    %v1017 = vadd.f32 0.0, %v1016
    %v1018 = vpop.f32.mrb[0].mxu0
    %1019 = vdwg.mxu0
    %v1021 = vsel %vm943, %v513, 0
    %v1024 = vsel %vm943, %v725, 0
    %1026 = vmatprep.subr.mxu0 0.0
    %1027 = vmatpush1.xpose.msra.mxu0 %v1024
    %1028 = vmatprep.subr.mxu0 0.0
    %1029 = vmatpush1.xpose.msra.mxu0 0.0
    %1030 = vmatprep.subr.mxu0 0.0
    %1031 = vmatpush1.xpose.msra.mxu0 0.0
    %1032 = vmatprep.subr.mxu0 0.0
    %1033 = vmatpush1.xpose.msra.mxu0 0.0
    %1034 = vmatprep.subr.mxu0 0.0
    %1035 = vmatpush1.xpose.msra.mxu0 0.0
    %1036 = vmatprep.subr.mxu0 0.0
    %1037 = vmatpush1.xpose.msra.mxu0 0.0
    %1038 = vmatprep.subr.mxu0 0.0
    %1039 = vmatpush1.xpose.msra.mxu0 0.0
    %1040 = vmatprep.subr.mxu0 0.0
    %1041 = vmatpush1.xpose.msra.mxu0 0.0
    %1042 = vmatprep.subr.mxu0 0.0
    %1043 = vmatpush1.xpose.msra.mxu0 0.0
    %1044 = vmatprep.subr.mxu0 0.0
    %1045 = vmatpush1.xpose.msra.mxu0 0.0
    %1046 = vmatprep.subr.mxu0 0.0
    %1047 = vmatpush1.xpose.msra.mxu0 0.0
    %1048 = vmatprep.subr.mxu0 0.0
    %1049 = vmatpush1.xpose.msra.mxu0 0.0
    %1050 = vmatprep.subr.mxu0 0.0
    %1051 = vmatpush1.xpose.msra.mxu0 0.0
    %1052 = vmatprep.subr.mxu0 0.0
    %1053 = vmatpush1.xpose.msra.mxu0 0.0
    %1054 = vmatprep.subr.mxu0 0.0
    %1055 = vmatpush1.xpose.msra.mxu0 0.0
    %1056 = vmatprep.subr.mxu0 0.0
    %1057 = vmatpush1.xpose.msra.mxu0 0.0
    %1058 = vmatprep.subr.mxu0 0.0
    %1059 = vmatpush1.xpose.msra.mxu0 0.0
    %1060 = vmatprep.subr.mxu0 0.0
    %1061 = vmatpush1.xpose.msra.mxu0 0.0
    %1062 = vmatprep.subr.mxu0 0.0
    %1063 = vmatpush1.xpose.msra.mxu0 0.0
    %1064 = vmatprep.subr.mxu0 0.0
    %1065 = vmatpush1.xpose.msra.mxu0 0.0
    %1066 = vmatprep.subr.mxu0 0.0
    %1067 = vmatpush1.xpose.msra.mxu0 0.0
    %1068 = vmatprep.subr.mxu0 0.0
    %1069 = vmatpush1.xpose.msra.mxu0 0.0
    %1070 = vmatprep.subr.mxu0 0.0
    %1071 = vmatpush1.xpose.msra.mxu0 0.0
    %1072 = vmatprep.subr.mxu0 0.0
    %1073 = vmatpush1.xpose.msra.mxu0 0.0
    %1074 = vmatprep.subr.mxu0 0.0
    %1075 = vmatpush1.xpose.msra.mxu0 0.0
    %1076 = vmatprep.subr.mxu0 0.0
    %1077 = vmatpush1.xpose.msra.mxu0 0.0
    %1078 = vmatprep.subr.mxu0 0.0
    %1079 = vmatpush1.xpose.msra.mxu0 0.0
    %1080 = vmatprep.subr.mxu0 0.0
    %1081 = vmatpush1.xpose.msra.mxu0 0.0
    %1082 = vmatprep.subr.mxu0 0.0
    %1083 = vmatpush1.xpose.msra.mxu0 0.0
    %1084 = vmatprep.subr.mxu0 0.0
    %1085 = vmatpush1.xpose.msra.mxu0 0.0
    %1086 = vmatprep.subr.mxu0 0.0
    %1087 = vmatpush1.xpose.msra.mxu0 0.0
    %1088 = vmatprep.subr.mxu0 0.0
    %1089 = vmatpush1.xpose.msra.mxu0 0.0
    %1090 = vmatprep.mubr.f32.mxu0 0.0
    %1091 = vmatmul.mubr.f32.gmra.mrb[0].mxu0 %v1021
    %v1092 = vpop.f32.mrb[0].mxu0
    %v1093 = vadd.f32 0.0, %v1092
    %v1094 = vpop.f32.mrb[0].mxu0
    %1095 = vdwg.mxu0
    %vm1096 = vcmask 64512
    %v1097 = vsel %vm1096, %v1017, -inf
    %1098 = vmax.xlane.f32.xlu0 %v1097
    %v1099 = vpop.xlane.xlu0 %1098
    %v1100 = vsel %vm1096, %v1093, -inf
    %1101 = vmax.xlane.f32.xlu0 %v1100
    %v1102 = vpop.xlane.xlu0 %1101
    %v1103 = vsub.f32 %v1017, %v1099
    %v1104 = vsub.f32 %v1093, %v1102
    %v1105 = vmul.f32 %v1103, 1.442695
    %v1106 = vpow.pop %v1105
    %v1107 = vmul.f32 %v1104, 1.442695
    %v1108 = vpow.pop %v1107
    %v1109 = vsel %vm1096, %v1106, 0.0
    %1110 = vadd.xlane.f32.xlu0 %v1109
    %v1111 = vpop.xlane.xlu0 %1110
    %v1112 = vsel %vm1096, %v1108, 0.0
    %1113 = vadd.xlane.f32.xlu0 %v1112
    %v1114 = vpop.xlane.xlu0 %1113
    %v1115 = vrcp.pop %v1111
    %v1116 = vrcp.pop %v1114
    %v1117 = vmul.f32 %v1106, %v1115
    %v1118 = vmul.f32 %v1108, %v1116
    %v1120 = vsel %vm1096, %v1117, 0
    %1122 = vmatprep.subr.mxu0 0.0
    %1123 = vmatpush1.msra.mxu0 %v935
    %1124 = vmatprep.subr.mxu0 0.0
    %1125 = vmatpush1.msra.mxu0 0.0
    %1126 = vmatprep.subr.mxu0 0.0
    %1127 = vmatpush1.msra.mxu0 0.0
    %1128 = vmatprep.subr.mxu0 0.0
    %1129 = vmatpush1.msra.mxu0 0.0
    %1130 = vmatprep.subr.mxu0 0.0
    %1131 = vmatpush1.msra.mxu0 0.0
    %1132 = vmatprep.subr.mxu0 0.0
    %1133 = vmatpush1.msra.mxu0 0.0
    %1134 = vmatprep.subr.mxu0 0.0
    %1135 = vmatpush1.msra.mxu0 0.0
    %1136 = vmatprep.subr.mxu0 0.0
    %1137 = vmatpush1.msra.mxu0 0.0
    %1138 = vmatprep.subr.mxu0 0.0
    %1139 = vmatpush1.msra.mxu0 0.0
    %1140 = vmatprep.subr.mxu0 0.0
    %1141 = vmatpush1.msra.mxu0 0.0
    %1142 = vmatprep.subr.mxu0 0.0
    %1143 = vmatpush1.msra.mxu0 0.0
    %1144 = vmatprep.subr.mxu0 0.0
    %1145 = vmatpush1.msra.mxu0 0.0
    %1146 = vmatprep.subr.mxu0 0.0
    %1147 = vmatpush1.msra.mxu0 0.0
    %1148 = vmatprep.subr.mxu0 0.0
    %1149 = vmatpush1.msra.mxu0 0.0
    %1150 = vmatprep.subr.mxu0 0.0
    %1151 = vmatpush1.msra.mxu0 0.0
    %1152 = vmatprep.subr.mxu0 0.0
    %1153 = vmatpush1.msra.mxu0 0.0
    %1154 = vmatprep.subr.mxu0 0.0
    %1155 = vmatpush1.msra.mxu0 0.0
    %1156 = vmatprep.subr.mxu0 0.0
    %1157 = vmatpush1.msra.mxu0 0.0
    %1158 = vmatprep.subr.mxu0 0.0
    %1159 = vmatpush1.msra.mxu0 0.0
    %1160 = vmatprep.subr.mxu0 0.0
    %1161 = vmatpush1.msra.mxu0 0.0
    %1162 = vmatprep.subr.mxu0 0.0
    %1163 = vmatpush1.msra.mxu0 0.0
    %1164 = vmatprep.subr.mxu0 0.0
    %1165 = vmatpush1.msra.mxu0 0.0
    %1166 = vmatprep.subr.mxu0 0.0
    %1167 = vmatpush1.msra.mxu0 0.0
    %1168 = vmatprep.subr.mxu0 0.0
    %1169 = vmatpush1.msra.mxu0 0.0
    %1170 = vmatprep.subr.mxu0 0.0
    %1171 = vmatpush1.msra.mxu0 0.0
    %1172 = vmatprep.subr.mxu0 0.0
    %1173 = vmatpush1.msra.mxu0 0.0
    %1174 = vmatprep.subr.mxu0 0.0
    %1175 = vmatpush1.msra.mxu0 0.0
    %1176 = vmatprep.subr.mxu0 0.0
    %1177 = vmatpush1.msra.mxu0 0.0
    %1178 = vmatprep.subr.mxu0 0.0
    %1179 = vmatpush1.msra.mxu0 0.0
    %1180 = vmatprep.subr.mxu0 0.0
    %1181 = vmatpush1.msra.mxu0 0.0
    %1182 = vmatprep.subr.mxu0 0.0
    %1183 = vmatpush1.msra.mxu0 0.0
    %1184 = vmatprep.subr.mxu0 0.0
    %1185 = vmatpush1.msra.mxu0 0.0
    %1186 = vmatprep.mubr.f32.mxu0 0.0
    %1187 = vmatmul.mubr.f32.gmra.mrb[0].mxu0 %v1120
    %v1188 = vpop.f32.mrb[0].mxu0
    %v1189 = vadd.f32 0.0, %v1188
    %v1190 = vpop.f32.mrb[0].mxu0
    %1191 = vdwg.mxu0
    %v1193 = vsel %vm1096, %v1118, 0
    %1195 = vmatprep.subr.mxu0 0.0
    %1196 = vmatpush1.msra.mxu0 %v939
    %1197 = vmatprep.subr.mxu0 0.0
    %1198 = vmatpush1.msra.mxu0 0.0
    %1199 = vmatprep.subr.mxu0 0.0
    %1200 = vmatpush1.msra.mxu0 0.0
    %1201 = vmatprep.subr.mxu0 0.0
    %1202 = vmatpush1.msra.mxu0 0.0
    %1203 = vmatprep.subr.mxu0 0.0
    %1204 = vmatpush1.msra.mxu0 0.0
    %1205 = vmatprep.subr.mxu0 0.0
    %1206 = vmatpush1.msra.mxu0 0.0
    %1207 = vmatprep.subr.mxu0 0.0
    %1208 = vmatpush1.msra.mxu0 0.0
    %1209 = vmatprep.subr.mxu0 0.0
    %1210 = vmatpush1.msra.mxu0 0.0
    %1211 = vmatprep.subr.mxu0 0.0
    %1212 = vmatpush1.msra.mxu0 0.0
    %1213 = vmatprep.subr.mxu0 0.0
    %1214 = vmatpush1.msra.mxu0 0.0
    %1215 = vmatprep.subr.mxu0 0.0
    %1216 = vmatpush1.msra.mxu0 0.0
    %1217 = vmatprep.subr.mxu0 0.0
    %1218 = vmatpush1.msra.mxu0 0.0
    %1219 = vmatprep.subr.mxu0 0.0
    %1220 = vmatpush1.msra.mxu0 0.0
    %1221 = vmatprep.subr.mxu0 0.0
    %1222 = vmatpush1.msra.mxu0 0.0
    %1223 = vmatprep.subr.mxu0 0.0
    %1224 = vmatpush1.msra.mxu0 0.0
    %1225 = vmatprep.subr.mxu0 0.0
    %1226 = vmatpush1.msra.mxu0 0.0
    %1227 = vmatprep.subr.mxu0 0.0
    %1228 = vmatpush1.msra.mxu0 0.0
    %1229 = vmatprep.subr.mxu0 0.0
    %1230 = vmatpush1.msra.mxu0 0.0
    %1231 = vmatprep.subr.mxu0 0.0
    %1232 = vmatpush1.msra.mxu0 0.0
    %1233 = vmatprep.subr.mxu0 0.0
    %1234 = vmatpush1.msra.mxu0 0.0
    %1235 = vmatprep.subr.mxu0 0.0
    %1236 = vmatpush1.msra.mxu0 0.0
    %1237 = vmatprep.subr.mxu0 0.0
    %1238 = vmatpush1.msra.mxu0 0.0
    %1239 = vmatprep.subr.mxu0 0.0
    %1240 = vmatpush1.msra.mxu0 0.0
    %1241 = vmatprep.subr.mxu0 0.0
    %1242 = vmatpush1.msra.mxu0 0.0
    %1243 = vmatprep.subr.mxu0 0.0
    %1244 = vmatpush1.msra.mxu0 0.0
    %1245 = vmatprep.subr.mxu0 0.0
    %1246 = vmatpush1.msra.mxu0 0.0
    %1247 = vmatprep.subr.mxu0 0.0
    %1248 = vmatpush1.msra.mxu0 0.0
    %1249 = vmatprep.subr.mxu0 0.0
    %1250 = vmatpush1.msra.mxu0 0.0
    %1251 = vmatprep.subr.mxu0 0.0
    %1252 = vmatpush1.msra.mxu0 0.0
    %1253 = vmatprep.subr.mxu0 0.0
    %1254 = vmatpush1.msra.mxu0 0.0
    %1255 = vmatprep.subr.mxu0 0.0
    %1256 = vmatpush1.msra.mxu0 0.0
    %1257 = vmatprep.subr.mxu0 0.0
    %1258 = vmatpush1.msra.mxu0 0.0
    %1259 = vmatprep.mubr.f32.mxu0 0.0
    %1260 = vmatmul.mubr.f32.gmra.mrb[0].mxu0 %v1193
    %v1261 = vpop.f32.mrb[0].mxu0
    %v1262 = vadd.f32 0.0, %v1261
    %v1263 = vpop.f32.mrb[0].mxu0
    %1264 = vdwg.mxu0
    %1265 = vrot.lane.b32.xlu0 %v511, 96
    %v1266 = vpop.permute.xlu0 %1265
    %1267 = vrot.lane.b32.xlu0 %v721, 96
    %v1268 = vpop.permute.xlu0 %1267
    %v1269 = vsel %vm943, %v1266, 0
    %v1271 = vsel %vm943, %v1268, 0
    %1273 = vmatprep.subr.mxu0 0.0
    %1274 = vmatpush1.xpose.msra.mxu0 %v1271
    %1275 = vmatprep.subr.mxu0 0.0
    %1276 = vmatpush1.xpose.msra.mxu0 0.0
    %1277 = vmatprep.subr.mxu0 0.0
    %1278 = vmatpush1.xpose.msra.mxu0 0.0
    %1279 = vmatprep.subr.mxu0 0.0
    %1280 = vmatpush1.xpose.msra.mxu0 0.0
    %1281 = vmatprep.subr.mxu0 0.0
    %1282 = vmatpush1.xpose.msra.mxu0 0.0
    %1283 = vmatprep.subr.mxu0 0.0
    %1284 = vmatpush1.xpose.msra.mxu0 0.0
    %1285 = vmatprep.subr.mxu0 0.0
    %1286 = vmatpush1.xpose.msra.mxu0 0.0
    %1287 = vmatprep.subr.mxu0 0.0
    %1288 = vmatpush1.xpose.msra.mxu0 0.0
    %1289 = vmatprep.subr.mxu0 0.0
    %1290 = vmatpush1.xpose.msra.mxu0 0.0
    %1291 = vmatprep.subr.mxu0 0.0
    %1292 = vmatpush1.xpose.msra.mxu0 0.0
    %1293 = vmatprep.subr.mxu0 0.0
    %1294 = vmatpush1.xpose.msra.mxu0 0.0
    %1295 = vmatprep.subr.mxu0 0.0
    %1296 = vmatpush1.xpose.msra.mxu0 0.0
    %1297 = vmatprep.subr.mxu0 0.0
    %1298 = vmatpush1.xpose.msra.mxu0 0.0
    %1299 = vmatprep.subr.mxu0 0.0
    %1300 = vmatpush1.xpose.msra.mxu0 0.0
    %1301 = vmatprep.subr.mxu0 0.0
    %1302 = vmatpush1.xpose.msra.mxu0 0.0
    %1303 = vmatprep.subr.mxu0 0.0
    %1304 = vmatpush1.xpose.msra.mxu0 0.0
    %1305 = vmatprep.subr.mxu0 0.0
    %1306 = vmatpush1.xpose.msra.mxu0 0.0
    %1307 = vmatprep.subr.mxu0 0.0
    %1308 = vmatpush1.xpose.msra.mxu0 0.0
    %1309 = vmatprep.subr.mxu0 0.0
    %1310 = vmatpush1.xpose.msra.mxu0 0.0
    %1311 = vmatprep.subr.mxu0 0.0
    %1312 = vmatpush1.xpose.msra.mxu0 0.0
    %1313 = vmatprep.subr.mxu0 0.0
    %1314 = vmatpush1.xpose.msra.mxu0 0.0
    %1315 = vmatprep.subr.mxu0 0.0
    %1316 = vmatpush1.xpose.msra.mxu0 0.0
    %1317 = vmatprep.subr.mxu0 0.0
    %1318 = vmatpush1.xpose.msra.mxu0 0.0
    %1319 = vmatprep.subr.mxu0 0.0
    %1320 = vmatpush1.xpose.msra.mxu0 0.0
    %1321 = vmatprep.subr.mxu0 0.0
    %1322 = vmatpush1.xpose.msra.mxu0 0.0
    %1323 = vmatprep.subr.mxu0 0.0
    %1324 = vmatpush1.xpose.msra.mxu0 0.0
    %1325 = vmatprep.subr.mxu0 0.0
    %1326 = vmatpush1.xpose.msra.mxu0 0.0
    %1327 = vmatprep.subr.mxu0 0.0
    %1328 = vmatpush1.xpose.msra.mxu0 0.0
    %1329 = vmatprep.subr.mxu0 0.0
    %1330 = vmatpush1.xpose.msra.mxu0 0.0
    %1331 = vmatprep.subr.mxu0 0.0
    %1332 = vmatpush1.xpose.msra.mxu0 0.0
    %1333 = vmatprep.subr.mxu0 0.0
    %1334 = vmatpush1.xpose.msra.mxu0 0.0
    %1335 = vmatprep.subr.mxu0 0.0
    %1336 = vmatpush1.xpose.msra.mxu0 0.0
    %1337 = vmatprep.mubr.f32.mxu0 0.0
    %1338 = vmatmul.mubr.f32.gmra.mrb[0].mxu0 %v1269
    %v1339 = vpop.f32.mrb[0].mxu0
    %v1340 = vadd.f32 0.0, %v1339
    %v1341 = vpop.f32.mrb[0].mxu0
    %1342 = vdwg.mxu0
    %1343 = vrot.lane.b32.xlu0 %v513, 96
    %v1344 = vpop.permute.xlu0 %1343
    %1345 = vrot.lane.b32.xlu0 %v725, 96
    %v1346 = vpop.permute.xlu0 %1345
    %v1347 = vsel %vm943, %v1344, 0
    %v1349 = vsel %vm943, %v1346, 0
    %1351 = vmatprep.subr.mxu0 0.0
    %1352 = vmatpush1.xpose.msra.mxu0 %v1349
    %1353 = vmatprep.subr.mxu0 0.0
    %1354 = vmatpush1.xpose.msra.mxu0 0.0
    %1355 = vmatprep.subr.mxu0 0.0
    %1356 = vmatpush1.xpose.msra.mxu0 0.0
    %1357 = vmatprep.subr.mxu0 0.0
    %1358 = vmatpush1.xpose.msra.mxu0 0.0
    %1359 = vmatprep.subr.mxu0 0.0
    %1360 = vmatpush1.xpose.msra.mxu0 0.0
    %1361 = vmatprep.subr.mxu0 0.0
    %1362 = vmatpush1.xpose.msra.mxu0 0.0
    %1363 = vmatprep.subr.mxu0 0.0
    %1364 = vmatpush1.xpose.msra.mxu0 0.0
    %1365 = vmatprep.subr.mxu0 0.0
    %1366 = vmatpush1.xpose.msra.mxu0 0.0
    %1367 = vmatprep.subr.mxu0 0.0
    %1368 = vmatpush1.xpose.msra.mxu0 0.0
    %1369 = vmatprep.subr.mxu0 0.0
    %1370 = vmatpush1.xpose.msra.mxu0 0.0
    %1371 = vmatprep.subr.mxu0 0.0
    %1372 = vmatpush1.xpose.msra.mxu0 0.0
    %1373 = vmatprep.subr.mxu0 0.0
    %1374 = vmatpush1.xpose.msra.mxu0 0.0
    %1375 = vmatprep.subr.mxu0 0.0
    %1376 = vmatpush1.xpose.msra.mxu0 0.0
    %1377 = vmatprep.subr.mxu0 0.0
    %1378 = vmatpush1.xpose.msra.mxu0 0.0
    %1379 = vmatprep.subr.mxu0 0.0
    %1380 = vmatpush1.xpose.msra.mxu0 0.0
    %1381 = vmatprep.subr.mxu0 0.0
    %1382 = vmatpush1.xpose.msra.mxu0 0.0
    %1383 = vmatprep.subr.mxu0 0.0
    %1384 = vmatpush1.xpose.msra.mxu0 0.0
    %1385 = vmatprep.subr.mxu0 0.0
    %1386 = vmatpush1.xpose.msra.mxu0 0.0
    %1387 = vmatprep.subr.mxu0 0.0
    %1388 = vmatpush1.xpose.msra.mxu0 0.0
    %1389 = vmatprep.subr.mxu0 0.0
    %1390 = vmatpush1.xpose.msra.mxu0 0.0
    %1391 = vmatprep.subr.mxu0 0.0
    %1392 = vmatpush1.xpose.msra.mxu0 0.0
    %1393 = vmatprep.subr.mxu0 0.0
    %1394 = vmatpush1.xpose.msra.mxu0 0.0
    %1395 = vmatprep.subr.mxu0 0.0
    %1396 = vmatpush1.xpose.msra.mxu0 0.0
    %1397 = vmatprep.subr.mxu0 0.0
    %1398 = vmatpush1.xpose.msra.mxu0 0.0
    %1399 = vmatprep.subr.mxu0 0.0
    %1400 = vmatpush1.xpose.msra.mxu0 0.0
    %1401 = vmatprep.subr.mxu0 0.0
    %1402 = vmatpush1.xpose.msra.mxu0 0.0
    %1403 = vmatprep.subr.mxu0 0.0
    %1404 = vmatpush1.xpose.msra.mxu0 0.0
    %1405 = vmatprep.subr.mxu0 0.0
    %1406 = vmatpush1.xpose.msra.mxu0 0.0
    %1407 = vmatprep.subr.mxu0 0.0
    %1408 = vmatpush1.xpose.msra.mxu0 0.0
    %1409 = vmatprep.subr.mxu0 0.0
    %1410 = vmatpush1.xpose.msra.mxu0 0.0
    %1411 = vmatprep.subr.mxu0 0.0
    %1412 = vmatpush1.xpose.msra.mxu0 0.0
    %1413 = vmatprep.subr.mxu0 0.0
    %1414 = vmatpush1.xpose.msra.mxu0 0.0
    %1415 = vmatprep.mubr.f32.mxu0 0.0
    %1416 = vmatmul.mubr.f32.gmra.mrb[0].mxu0 %v1347
    %v1417 = vpop.f32.mrb[0].mxu0
    %v1418 = vadd.f32 0.0, %v1417
    %v1419 = vpop.f32.mrb[0].mxu0
    %1420 = vdwg.mxu0
    %v1421 = vsel %vm1096, %v1340, -inf
    %1422 = vmax.xlane.f32.xlu0 %v1421
    %v1423 = vpop.xlane.xlu0 %1422
    %v1424 = vsel %vm1096, %v1418, -inf
    %1425 = vmax.xlane.f32.xlu0 %v1424
    %v1426 = vpop.xlane.xlu0 %1425
    %v1427 = vsub.f32 %v1340, %v1423
    %v1428 = vsub.f32 %v1418, %v1426
    %v1429 = vmul.f32 %v1427, 1.442695
    %v1430 = vpow.pop %v1429
    %v1431 = vmul.f32 %v1428, 1.442695
    %v1432 = vpow.pop %v1431
    %v1433 = vsel %vm1096, %v1430, 0.0
    %1434 = vadd.xlane.f32.xlu0 %v1433
    %v1435 = vpop.xlane.xlu0 %1434
    %v1436 = vsel %vm1096, %v1432, 0.0
    %1437 = vadd.xlane.f32.xlu0 %v1436
    %v1438 = vpop.xlane.xlu0 %1437
    %v1439 = vrcp.pop %v1435
    %v1440 = vrcp.pop %v1438
    %v1441 = vmul.f32 %v1430, %v1439
    %v1442 = vmul.f32 %v1432, %v1440
    %1444 = vrot.lane.b32.xlu0 %v935, 96
    %v1445 = vpop.permute.xlu0 %1444
    %v1448 = vsel %vm1096, %v1441, 0
    %1450 = vmatprep.subr.mxu0 0.0
    %1451 = vmatpush1.msra.mxu0 %v1445
    %1452 = vmatprep.subr.mxu0 0.0
    %1453 = vmatpush1.msra.mxu0 0.0
    %1454 = vmatprep.subr.mxu0 0.0
    %1455 = vmatpush1.msra.mxu0 0.0
    %1456 = vmatprep.subr.mxu0 0.0
    %1457 = vmatpush1.msra.mxu0 0.0
    %1458 = vmatprep.subr.mxu0 0.0
    %1459 = vmatpush1.msra.mxu0 0.0
    %1460 = vmatprep.subr.mxu0 0.0
    %1461 = vmatpush1.msra.mxu0 0.0
    %1462 = vmatprep.subr.mxu0 0.0
    %1463 = vmatpush1.msra.mxu0 0.0
    %1464 = vmatprep.subr.mxu0 0.0
    %1465 = vmatpush1.msra.mxu0 0.0
    %1466 = vmatprep.subr.mxu0 0.0
    %1467 = vmatpush1.msra.mxu0 0.0
    %1468 = vmatprep.subr.mxu0 0.0
    %1469 = vmatpush1.msra.mxu0 0.0
    %1470 = vmatprep.subr.mxu0 0.0
    %1471 = vmatpush1.msra.mxu0 0.0
    %1472 = vmatprep.subr.mxu0 0.0
    %1473 = vmatpush1.msra.mxu0 0.0
    %1474 = vmatprep.subr.mxu0 0.0
    %1475 = vmatpush1.msra.mxu0 0.0
    %1476 = vmatprep.subr.mxu0 0.0
    %1477 = vmatpush1.msra.mxu0 0.0
    %1478 = vmatprep.subr.mxu0 0.0
    %1479 = vmatpush1.msra.mxu0 0.0
    %1480 = vmatprep.subr.mxu0 0.0
    %1481 = vmatpush1.msra.mxu0 0.0
    %1482 = vmatprep.subr.mxu0 0.0
    %1483 = vmatpush1.msra.mxu0 0.0
    %1484 = vmatprep.subr.mxu0 0.0
    %1485 = vmatpush1.msra.mxu0 0.0
    %1486 = vmatprep.subr.mxu0 0.0
    %1487 = vmatpush1.msra.mxu0 0.0
    %1488 = vmatprep.subr.mxu0 0.0
    %1489 = vmatpush1.msra.mxu0 0.0
    %1490 = vmatprep.subr.mxu0 0.0
    %1491 = vmatpush1.msra.mxu0 0.0
    %1492 = vmatprep.subr.mxu0 0.0
    %1493 = vmatpush1.msra.mxu0 0.0
    %1494 = vmatprep.subr.mxu0 0.0
    %1495 = vmatpush1.msra.mxu0 0.0
    %1496 = vmatprep.subr.mxu0 0.0
    %1497 = vmatpush1.msra.mxu0 0.0
    %1498 = vmatprep.subr.mxu0 0.0
    %1499 = vmatpush1.msra.mxu0 0.0
    %1500 = vmatprep.subr.mxu0 0.0
    %1501 = vmatpush1.msra.mxu0 0.0
    %1502 = vmatprep.subr.mxu0 0.0
    %1503 = vmatpush1.msra.mxu0 0.0
    %1504 = vmatprep.subr.mxu0 0.0
    %1505 = vmatpush1.msra.mxu0 0.0
    %1506 = vmatprep.subr.mxu0 0.0
    %1507 = vmatpush1.msra.mxu0 0.0
    %1508 = vmatprep.subr.mxu0 0.0
    %1509 = vmatpush1.msra.mxu0 0.0
    %1510 = vmatprep.subr.mxu0 0.0
    %1511 = vmatpush1.msra.mxu0 0.0
    %1512 = vmatprep.subr.mxu0 0.0
    %1513 = vmatpush1.msra.mxu0 0.0
    %1514 = vmatprep.mubr.f32.mxu0 0.0
    %1515 = vmatmul.mubr.f32.gmra.mrb[0].mxu0 %v1448
    %v1516 = vpop.f32.mrb[0].mxu0
    %v1517 = vadd.f32 0.0, %v1516
    %v1518 = vpop.f32.mrb[0].mxu0
    %1519 = vdwg.mxu0
    %1521 = vrot.lane.b32.xlu0 %v939, 96
    %v1522 = vpop.permute.xlu0 %1521
    %v1525 = vsel %vm1096, %v1442, 0
    %1527 = vmatprep.subr.mxu0 0.0
    %1528 = vmatpush1.msra.mxu0 %v1522
    %1529 = vmatprep.subr.mxu0 0.0
    %1530 = vmatpush1.msra.mxu0 0.0
    %1531 = vmatprep.subr.mxu0 0.0
    %1532 = vmatpush1.msra.mxu0 0.0
    %1533 = vmatprep.subr.mxu0 0.0
    %1534 = vmatpush1.msra.mxu0 0.0
    %1535 = vmatprep.subr.mxu0 0.0
    %1536 = vmatpush1.msra.mxu0 0.0
    %1537 = vmatprep.subr.mxu0 0.0
    %1538 = vmatpush1.msra.mxu0 0.0
    %1539 = vmatprep.subr.mxu0 0.0
    %1540 = vmatpush1.msra.mxu0 0.0
    %1541 = vmatprep.subr.mxu0 0.0
    %1542 = vmatpush1.msra.mxu0 0.0
    %1543 = vmatprep.subr.mxu0 0.0
    %1544 = vmatpush1.msra.mxu0 0.0
    %1545 = vmatprep.subr.mxu0 0.0
    %1546 = vmatpush1.msra.mxu0 0.0
    %1547 = vmatprep.subr.mxu0 0.0
    %1548 = vmatpush1.msra.mxu0 0.0
    %1549 = vmatprep.subr.mxu0 0.0
    %1550 = vmatpush1.msra.mxu0 0.0
    %1551 = vmatprep.subr.mxu0 0.0
    %1552 = vmatpush1.msra.mxu0 0.0
    %1553 = vmatprep.subr.mxu0 0.0
    %1554 = vmatpush1.msra.mxu0 0.0
    %1555 = vmatprep.subr.mxu0 0.0
    %1556 = vmatpush1.msra.mxu0 0.0
    %1557 = vmatprep.subr.mxu0 0.0
    %1558 = vmatpush1.msra.mxu0 0.0
    %1559 = vmatprep.subr.mxu0 0.0
    %1560 = vmatpush1.msra.mxu0 0.0
    %1561 = vmatprep.subr.mxu0 0.0
    %1562 = vmatpush1.msra.mxu0 0.0
    %1563 = vmatprep.subr.mxu0 0.0
    %1564 = vmatpush1.msra.mxu0 0.0
    %1565 = vmatprep.subr.mxu0 0.0
    %1566 = vmatpush1.msra.mxu0 0.0
    %1567 = vmatprep.subr.mxu0 0.0
    %1568 = vmatpush1.msra.mxu0 0.0
    %1569 = vmatprep.subr.mxu0 0.0
    %1570 = vmatpush1.msra.mxu0 0.0
    %1571 = vmatprep.subr.mxu0 0.0
    %1572 = vmatpush1.msra.mxu0 0.0
    %1573 = vmatprep.subr.mxu0 0.0
    %1574 = vmatpush1.msra.mxu0 0.0
    %1575 = vmatprep.subr.mxu0 0.0
    %1576 = vmatpush1.msra.mxu0 0.0
    %1577 = vmatprep.subr.mxu0 0.0
    %1578 = vmatpush1.msra.mxu0 0.0
    %1579 = vmatprep.subr.mxu0 0.0
    %1580 = vmatpush1.msra.mxu0 0.0
    %1581 = vmatprep.subr.mxu0 0.0
    %1582 = vmatpush1.msra.mxu0 0.0
    %1583 = vmatprep.subr.mxu0 0.0
    %1584 = vmatpush1.msra.mxu0 0.0
    %1585 = vmatprep.subr.mxu0 0.0
    %1586 = vmatpush1.msra.mxu0 0.0
    %1587 = vmatprep.subr.mxu0 0.0
    %1588 = vmatpush1.msra.mxu0 0.0
    %1589 = vmatprep.subr.mxu0 0.0
    %1590 = vmatpush1.msra.mxu0 0.0
    %1591 = vmatprep.mubr.f32.mxu0 0.0
    %1592 = vmatmul.mubr.f32.gmra.mrb[0].mxu0 %v1525
    %v1593 = vpop.f32.mrb[0].mxu0
    %v1594 = vadd.f32 0.0, %v1593
    %v1595 = vpop.f32.mrb[0].mxu0
    %1596 = vdwg.mxu0
    %1597 = vrot.lane.b32.xlu0 %v511, 64
    %v1598 = vpop.permute.xlu0 %1597
    %1599 = vrot.lane.b32.xlu0 %v721, 64
    %v1600 = vpop.permute.xlu0 %1599
    %v1601 = vsel %vm943, %v1598, 0
    %v1603 = vsel %vm943, %v1600, 0
    %1605 = vmatprep.subr.mxu0 0.0
    %1606 = vmatpush1.xpose.msra.mxu0 %v1603
    %1607 = vmatprep.subr.mxu0 0.0
    %1608 = vmatpush1.xpose.msra.mxu0 0.0
    %1609 = vmatprep.subr.mxu0 0.0
    %1610 = vmatpush1.xpose.msra.mxu0 0.0
    %1611 = vmatprep.subr.mxu0 0.0
    %1612 = vmatpush1.xpose.msra.mxu0 0.0
    %1613 = vmatprep.subr.mxu0 0.0
    %1614 = vmatpush1.xpose.msra.mxu0 0.0
    %1615 = vmatprep.subr.mxu0 0.0
    %1616 = vmatpush1.xpose.msra.mxu0 0.0
    %1617 = vmatprep.subr.mxu0 0.0
    %1618 = vmatpush1.xpose.msra.mxu0 0.0
    %1619 = vmatprep.subr.mxu0 0.0
    %1620 = vmatpush1.xpose.msra.mxu0 0.0
    %1621 = vmatprep.subr.mxu0 0.0
    %1622 = vmatpush1.xpose.msra.mxu0 0.0
    %1623 = vmatprep.subr.mxu0 0.0
    %1624 = vmatpush1.xpose.msra.mxu0 0.0
    %1625 = vmatprep.subr.mxu0 0.0
    %1626 = vmatpush1.xpose.msra.mxu0 0.0
    %1627 = vmatprep.subr.mxu0 0.0
    %1628 = vmatpush1.xpose.msra.mxu0 0.0
    %1629 = vmatprep.subr.mxu0 0.0
    %1630 = vmatpush1.xpose.msra.mxu0 0.0
    %1631 = vmatprep.subr.mxu0 0.0
    %1632 = vmatpush1.xpose.msra.mxu0 0.0
    %1633 = vmatprep.subr.mxu0 0.0
    %1634 = vmatpush1.xpose.msra.mxu0 0.0
    %1635 = vmatprep.subr.mxu0 0.0
    %1636 = vmatpush1.xpose.msra.mxu0 0.0
    %1637 = vmatprep.subr.mxu0 0.0
    %1638 = vmatpush1.xpose.msra.mxu0 0.0
    %1639 = vmatprep.subr.mxu0 0.0
    %1640 = vmatpush1.xpose.msra.mxu0 0.0
    %1641 = vmatprep.subr.mxu0 0.0
    %1642 = vmatpush1.xpose.msra.mxu0 0.0
    %1643 = vmatprep.subr.mxu0 0.0
    %1644 = vmatpush1.xpose.msra.mxu0 0.0
    %1645 = vmatprep.subr.mxu0 0.0
    %1646 = vmatpush1.xpose.msra.mxu0 0.0
    %1647 = vmatprep.subr.mxu0 0.0
    %1648 = vmatpush1.xpose.msra.mxu0 0.0
    %1649 = vmatprep.subr.mxu0 0.0
    %1650 = vmatpush1.xpose.msra.mxu0 0.0
    %1651 = vmatprep.subr.mxu0 0.0
    %1652 = vmatpush1.xpose.msra.mxu0 0.0
    %1653 = vmatprep.subr.mxu0 0.0
    %1654 = vmatpush1.xpose.msra.mxu0 0.0
    %1655 = vmatprep.subr.mxu0 0.0
    %1656 = vmatpush1.xpose.msra.mxu0 0.0
    %1657 = vmatprep.subr.mxu0 0.0
    %1658 = vmatpush1.xpose.msra.mxu0 0.0
    %1659 = vmatprep.subr.mxu0 0.0
    %1660 = vmatpush1.xpose.msra.mxu0 0.0
    %1661 = vmatprep.subr.mxu0 0.0
    %1662 = vmatpush1.xpose.msra.mxu0 0.0
    %1663 = vmatprep.subr.mxu0 0.0
    %1664 = vmatpush1.xpose.msra.mxu0 0.0
    %1665 = vmatprep.subr.mxu0 0.0
    %1666 = vmatpush1.xpose.msra.mxu0 0.0
    %1667 = vmatprep.subr.mxu0 0.0
    %1668 = vmatpush1.xpose.msra.mxu0 0.0
    %1669 = vmatprep.mubr.f32.mxu0 0.0
    %1670 = vmatmul.mubr.f32.gmra.mrb[0].mxu0 %v1601
    %v1671 = vpop.f32.mrb[0].mxu0
    %v1672 = vadd.f32 0.0, %v1671
    %v1673 = vpop.f32.mrb[0].mxu0
    %1674 = vdwg.mxu0
    %1675 = vrot.lane.b32.xlu0 %v513, 64
    %v1676 = vpop.permute.xlu0 %1675
    %1677 = vrot.lane.b32.xlu0 %v725, 64
    %v1678 = vpop.permute.xlu0 %1677
    %v1679 = vsel %vm943, %v1676, 0
    %v1681 = vsel %vm943, %v1678, 0
    %1683 = vmatprep.subr.mxu0 0.0
    %1684 = vmatpush1.xpose.msra.mxu0 %v1681
    %1685 = vmatprep.subr.mxu0 0.0
    %1686 = vmatpush1.xpose.msra.mxu0 0.0
    %1687 = vmatprep.subr.mxu0 0.0
    %1688 = vmatpush1.xpose.msra.mxu0 0.0
    %1689 = vmatprep.subr.mxu0 0.0
    %1690 = vmatpush1.xpose.msra.mxu0 0.0
    %1691 = vmatprep.subr.mxu0 0.0
    %1692 = vmatpush1.xpose.msra.mxu0 0.0
    %1693 = vmatprep.subr.mxu0 0.0
    %1694 = vmatpush1.xpose.msra.mxu0 0.0
    %1695 = vmatprep.subr.mxu0 0.0
    %1696 = vmatpush1.xpose.msra.mxu0 0.0
    %1697 = vmatprep.subr.mxu0 0.0
    %1698 = vmatpush1.xpose.msra.mxu0 0.0
    %1699 = vmatprep.subr.mxu0 0.0
    %1700 = vmatpush1.xpose.msra.mxu0 0.0
    %1701 = vmatprep.subr.mxu0 0.0
    %1702 = vmatpush1.xpose.msra.mxu0 0.0
    %1703 = vmatprep.subr.mxu0 0.0
    %1704 = vmatpush1.xpose.msra.mxu0 0.0
    %1705 = vmatprep.subr.mxu0 0.0
    %1706 = vmatpush1.xpose.msra.mxu0 0.0
    %1707 = vmatprep.subr.mxu0 0.0
    %1708 = vmatpush1.xpose.msra.mxu0 0.0
    %1709 = vmatprep.subr.mxu0 0.0
    %1710 = vmatpush1.xpose.msra.mxu0 0.0
    %1711 = vmatprep.subr.mxu0 0.0
    %1712 = vmatpush1.xpose.msra.mxu0 0.0
    %1713 = vmatprep.subr.mxu0 0.0
    %1714 = vmatpush1.xpose.msra.mxu0 0.0
    %1715 = vmatprep.subr.mxu0 0.0
    %1716 = vmatpush1.xpose.msra.mxu0 0.0
    %1717 = vmatprep.subr.mxu0 0.0
    %1718 = vmatpush1.xpose.msra.mxu0 0.0
    %1719 = vmatprep.subr.mxu0 0.0
    %1720 = vmatpush1.xpose.msra.mxu0 0.0
    %1721 = vmatprep.subr.mxu0 0.0
    %1722 = vmatpush1.xpose.msra.mxu0 0.0
    %1723 = vmatprep.subr.mxu0 0.0
    %1724 = vmatpush1.xpose.msra.mxu0 0.0
    %1725 = vmatprep.subr.mxu0 0.0
    %1726 = vmatpush1.xpose.msra.mxu0 0.0
    %1727 = vmatprep.subr.mxu0 0.0
    %1728 = vmatpush1.xpose.msra.mxu0 0.0
    %1729 = vmatprep.subr.mxu0 0.0
    %1730 = vmatpush1.xpose.msra.mxu0 0.0
    %1731 = vmatprep.subr.mxu0 0.0
    %1732 = vmatpush1.xpose.msra.mxu0 0.0
    %1733 = vmatprep.subr.mxu0 0.0
    %1734 = vmatpush1.xpose.msra.mxu0 0.0
    %1735 = vmatprep.subr.mxu0 0.0
    %1736 = vmatpush1.xpose.msra.mxu0 0.0
    %1737 = vmatprep.subr.mxu0 0.0
    %1738 = vmatpush1.xpose.msra.mxu0 0.0
    %1739 = vmatprep.subr.mxu0 0.0
    %1740 = vmatpush1.xpose.msra.mxu0 0.0
    %1741 = vmatprep.subr.mxu0 0.0
    %1742 = vmatpush1.xpose.msra.mxu0 0.0
    %1743 = vmatprep.subr.mxu0 0.0
    %1744 = vmatpush1.xpose.msra.mxu0 0.0
    %1745 = vmatprep.subr.mxu0 0.0
    %1746 = vmatpush1.xpose.msra.mxu0 0.0
    %1747 = vmatprep.mubr.f32.mxu0 0.0
    %1748 = vmatmul.mubr.f32.gmra.mrb[0].mxu0 %v1679
    %v1749 = vpop.f32.mrb[0].mxu0
    %v1750 = vadd.f32 0.0, %v1749
    %v1751 = vpop.f32.mrb[0].mxu0
    %1752 = vdwg.mxu0
    %v1753 = vsel %vm1096, %v1672, -inf
    %1754 = vmax.xlane.f32.xlu0 %v1753
    %v1755 = vpop.xlane.xlu0 %1754
    %v1756 = vsel %vm1096, %v1750, -inf
    %1757 = vmax.xlane.f32.xlu0 %v1756
    %v1758 = vpop.xlane.xlu0 %1757
    %v1759 = vsub.f32 %v1672, %v1755
    %v1760 = vsub.f32 %v1750, %v1758
    %v1761 = vmul.f32 %v1759, 1.442695
    %v1762 = vpow.pop %v1761
    %v1763 = vmul.f32 %v1760, 1.442695
    %v1764 = vpow.pop %v1763
    %v1765 = vsel %vm1096, %v1762, 0.0
    %1766 = vadd.xlane.f32.xlu0 %v1765
    %v1767 = vpop.xlane.xlu0 %1766
    %v1768 = vsel %vm1096, %v1764, 0.0
    %1769 = vadd.xlane.f32.xlu0 %v1768
    %v1770 = vpop.xlane.xlu0 %1769
    %v1771 = vrcp.pop %v1767
    %v1772 = vrcp.pop %v1770
    %v1773 = vmul.f32 %v1762, %v1771
    %v1774 = vmul.f32 %v1764, %v1772
    %1775 = vrot.lane.b32.xlu0 %v935, 64
    %v1776 = vpop.permute.xlu0 %1775
    %v1779 = vsel %vm1096, %v1773, 0
    %1781 = vmatprep.subr.mxu0 0.0
    %1782 = vmatpush1.msra.mxu0 %v1776
    %1783 = vmatprep.subr.mxu0 0.0
    %1784 = vmatpush1.msra.mxu0 0.0
    %1785 = vmatprep.subr.mxu0 0.0
    %1786 = vmatpush1.msra.mxu0 0.0
    %1787 = vmatprep.subr.mxu0 0.0
    %1788 = vmatpush1.msra.mxu0 0.0
    %1789 = vmatprep.subr.mxu0 0.0
    %1790 = vmatpush1.msra.mxu0 0.0
    %1791 = vmatprep.subr.mxu0 0.0
    %1792 = vmatpush1.msra.mxu0 0.0
    %1793 = vmatprep.subr.mxu0 0.0
    %1794 = vmatpush1.msra.mxu0 0.0
    %1795 = vmatprep.subr.mxu0 0.0
    %1796 = vmatpush1.msra.mxu0 0.0
    %1797 = vmatprep.subr.mxu0 0.0
    %1798 = vmatpush1.msra.mxu0 0.0
    %1799 = vmatprep.subr.mxu0 0.0
    %1800 = vmatpush1.msra.mxu0 0.0
    %1801 = vmatprep.subr.mxu0 0.0
    %1802 = vmatpush1.msra.mxu0 0.0
    %1803 = vmatprep.subr.mxu0 0.0
    %1804 = vmatpush1.msra.mxu0 0.0
    %1805 = vmatprep.subr.mxu0 0.0
    %1806 = vmatpush1.msra.mxu0 0.0
    %1807 = vmatprep.subr.mxu0 0.0
    %1808 = vmatpush1.msra.mxu0 0.0
    %1809 = vmatprep.subr.mxu0 0.0
    %1810 = vmatpush1.msra.mxu0 0.0
    %1811 = vmatprep.subr.mxu0 0.0
    %1812 = vmatpush1.msra.mxu0 0.0
    %1813 = vmatprep.subr.mxu0 0.0
    %1814 = vmatpush1.msra.mxu0 0.0
    %1815 = vmatprep.subr.mxu0 0.0
    %1816 = vmatpush1.msra.mxu0 0.0
    %1817 = vmatprep.subr.mxu0 0.0
    %1818 = vmatpush1.msra.mxu0 0.0
    %1819 = vmatprep.subr.mxu0 0.0
    %1820 = vmatpush1.msra.mxu0 0.0
    %1821 = vmatprep.subr.mxu0 0.0
    %1822 = vmatpush1.msra.mxu0 0.0
    %1823 = vmatprep.subr.mxu0 0.0
    %1824 = vmatpush1.msra.mxu0 0.0
    %1825 = vmatprep.subr.mxu0 0.0
    %1826 = vmatpush1.msra.mxu0 0.0
    %1827 = vmatprep.subr.mxu0 0.0
    %1828 = vmatpush1.msra.mxu0 0.0
    %1829 = vmatprep.subr.mxu0 0.0
    %1830 = vmatpush1.msra.mxu0 0.0
    %1831 = vmatprep.subr.mxu0 0.0
    %1832 = vmatpush1.msra.mxu0 0.0
    %1833 = vmatprep.subr.mxu0 0.0
    %1834 = vmatpush1.msra.mxu0 0.0
    %1835 = vmatprep.subr.mxu0 0.0
    %1836 = vmatpush1.msra.mxu0 0.0
    %1837 = vmatprep.subr.mxu0 0.0
    %1838 = vmatpush1.msra.mxu0 0.0
    %1839 = vmatprep.subr.mxu0 0.0
    %1840 = vmatpush1.msra.mxu0 0.0
    %1841 = vmatprep.subr.mxu0 0.0
    %1842 = vmatpush1.msra.mxu0 0.0
    %1843 = vmatprep.subr.mxu0 0.0
    %1844 = vmatpush1.msra.mxu0 0.0
    %1845 = vmatprep.mubr.f32.mxu0 0.0
    %1846 = vmatmul.mubr.f32.gmra.mrb[0].mxu0 %v1779
    %v1847 = vpop.f32.mrb[0].mxu0
    %v1848 = vadd.f32 0.0, %v1847
    %v1849 = vpop.f32.mrb[0].mxu0
    %1850 = vdwg.mxu0
    %1851 = vrot.lane.b32.xlu0 %v939, 64
    %v1852 = vpop.permute.xlu0 %1851
    %v1855 = vsel %vm1096, %v1774, 0
    %1857 = vmatprep.subr.mxu0 0.0
    %1858 = vmatpush1.msra.mxu0 %v1852
    %1859 = vmatprep.subr.mxu0 0.0
    %1860 = vmatpush1.msra.mxu0 0.0
    %1861 = vmatprep.subr.mxu0 0.0
    %1862 = vmatpush1.msra.mxu0 0.0
    %1863 = vmatprep.subr.mxu0 0.0
    %1864 = vmatpush1.msra.mxu0 0.0
    %1865 = vmatprep.subr.mxu0 0.0
    %1866 = vmatpush1.msra.mxu0 0.0
    %1867 = vmatprep.subr.mxu0 0.0
    %1868 = vmatpush1.msra.mxu0 0.0
    %1869 = vmatprep.subr.mxu0 0.0
    %1870 = vmatpush1.msra.mxu0 0.0
    %1871 = vmatprep.subr.mxu0 0.0
    %1872 = vmatpush1.msra.mxu0 0.0
    %1873 = vmatprep.subr.mxu0 0.0
    %1874 = vmatpush1.msra.mxu0 0.0
    %1875 = vmatprep.subr.mxu0 0.0
    %1876 = vmatpush1.msra.mxu0 0.0
    %1877 = vmatprep.subr.mxu0 0.0
    %1878 = vmatpush1.msra.mxu0 0.0
    %1879 = vmatprep.subr.mxu0 0.0
    %1880 = vmatpush1.msra.mxu0 0.0
    %1881 = vmatprep.subr.mxu0 0.0
    %1882 = vmatpush1.msra.mxu0 0.0
    %1883 = vmatprep.subr.mxu0 0.0
    %1884 = vmatpush1.msra.mxu0 0.0
    %1885 = vmatprep.subr.mxu0 0.0
    %1886 = vmatpush1.msra.mxu0 0.0
    %1887 = vmatprep.subr.mxu0 0.0
    %1888 = vmatpush1.msra.mxu0 0.0
    %1889 = vmatprep.subr.mxu0 0.0
    %1890 = vmatpush1.msra.mxu0 0.0
    %1891 = vmatprep.subr.mxu0 0.0
    %1892 = vmatpush1.msra.mxu0 0.0
    %1893 = vmatprep.subr.mxu0 0.0
    %1894 = vmatpush1.msra.mxu0 0.0
    %1895 = vmatprep.subr.mxu0 0.0
    %1896 = vmatpush1.msra.mxu0 0.0
    %1897 = vmatprep.subr.mxu0 0.0
    %1898 = vmatpush1.msra.mxu0 0.0
    %1899 = vmatprep.subr.mxu0 0.0
    %1900 = vmatpush1.msra.mxu0 0.0
    %1901 = vmatprep.subr.mxu0 0.0
    %1902 = vmatpush1.msra.mxu0 0.0
    %1903 = vmatprep.subr.mxu0 0.0
    %1904 = vmatpush1.msra.mxu0 0.0
    %1905 = vmatprep.subr.mxu0 0.0
    %1906 = vmatpush1.msra.mxu0 0.0
    %1907 = vmatprep.subr.mxu0 0.0
    %1908 = vmatpush1.msra.mxu0 0.0
    %1909 = vmatprep.subr.mxu0 0.0
    %1910 = vmatpush1.msra.mxu0 0.0
    %1911 = vmatprep.subr.mxu0 0.0
    %1912 = vmatpush1.msra.mxu0 0.0
    %1913 = vmatprep.subr.mxu0 0.0
    %1914 = vmatpush1.msra.mxu0 0.0
    %1915 = vmatprep.subr.mxu0 0.0
    %1916 = vmatpush1.msra.mxu0 0.0
    %1917 = vmatprep.subr.mxu0 0.0
    %1918 = vmatpush1.msra.mxu0 0.0
    %1919 = vmatprep.subr.mxu0 0.0
    %1920 = vmatpush1.msra.mxu0 0.0
    %1921 = vmatprep.mubr.f32.mxu0 0.0
    %1922 = vmatmul.mubr.f32.gmra.mrb[0].mxu0 %v1855
    %v1923 = vpop.f32.mrb[0].mxu0
    %v1924 = vadd.f32 0.0, %v1923
    %v1925 = vpop.f32.mrb[0].mxu0
    %1926 = vdwg.mxu0
    %1927 = vrot.lane.b32.xlu0 %v511, 32
    %v1928 = vpop.permute.xlu0 %1927
    %1929 = vrot.lane.b32.xlu0 %v721, 32
    %v1930 = vpop.permute.xlu0 %1929
    %v1931 = vsel %vm943, %v1928, 0
    %v1933 = vsel %vm943, %v1930, 0
    %1935 = vmatprep.subr.mxu0 0.0
    %1936 = vmatpush1.xpose.msra.mxu0 %v1933
    %1937 = vmatprep.subr.mxu0 0.0
    %1938 = vmatpush1.xpose.msra.mxu0 0.0
    %1939 = vmatprep.subr.mxu0 0.0
    %1940 = vmatpush1.xpose.msra.mxu0 0.0
    %1941 = vmatprep.subr.mxu0 0.0
    %1942 = vmatpush1.xpose.msra.mxu0 0.0
    %1943 = vmatprep.subr.mxu0 0.0
    %1944 = vmatpush1.xpose.msra.mxu0 0.0
    %1945 = vmatprep.subr.mxu0 0.0
    %1946 = vmatpush1.xpose.msra.mxu0 0.0
    %1947 = vmatprep.subr.mxu0 0.0
    %1948 = vmatpush1.xpose.msra.mxu0 0.0
    %1949 = vmatprep.subr.mxu0 0.0
    %1950 = vmatpush1.xpose.msra.mxu0 0.0
    %1951 = vmatprep.subr.mxu0 0.0
    %1952 = vmatpush1.xpose.msra.mxu0 0.0
    %1953 = vmatprep.subr.mxu0 0.0
    %1954 = vmatpush1.xpose.msra.mxu0 0.0
    %1955 = vmatprep.subr.mxu0 0.0
    %1956 = vmatpush1.xpose.msra.mxu0 0.0
    %1957 = vmatprep.subr.mxu0 0.0
    %1958 = vmatpush1.xpose.msra.mxu0 0.0
    %1959 = vmatprep.subr.mxu0 0.0
    %1960 = vmatpush1.xpose.msra.mxu0 0.0
    %1961 = vmatprep.subr.mxu0 0.0
    %1962 = vmatpush1.xpose.msra.mxu0 0.0
    %1963 = vmatprep.subr.mxu0 0.0
    %1964 = vmatpush1.xpose.msra.mxu0 0.0
    %1965 = vmatprep.subr.mxu0 0.0
    %1966 = vmatpush1.xpose.msra.mxu0 0.0
    %1967 = vmatprep.subr.mxu0 0.0
    %1968 = vmatpush1.xpose.msra.mxu0 0.0
    %1969 = vmatprep.subr.mxu0 0.0
    %1970 = vmatpush1.xpose.msra.mxu0 0.0
    %1971 = vmatprep.subr.mxu0 0.0
    %1972 = vmatpush1.xpose.msra.mxu0 0.0
    %1973 = vmatprep.subr.mxu0 0.0
    %1974 = vmatpush1.xpose.msra.mxu0 0.0
    %1975 = vmatprep.subr.mxu0 0.0
    %1976 = vmatpush1.xpose.msra.mxu0 0.0
    %1977 = vmatprep.subr.mxu0 0.0
    %1978 = vmatpush1.xpose.msra.mxu0 0.0
    %1979 = vmatprep.subr.mxu0 0.0
    %1980 = vmatpush1.xpose.msra.mxu0 0.0
    %1981 = vmatprep.subr.mxu0 0.0
    %1982 = vmatpush1.xpose.msra.mxu0 0.0
    %1983 = vmatprep.subr.mxu0 0.0
    %1984 = vmatpush1.xpose.msra.mxu0 0.0
    %1985 = vmatprep.subr.mxu0 0.0
    %1986 = vmatpush1.xpose.msra.mxu0 0.0
    %1987 = vmatprep.subr.mxu0 0.0
    %1988 = vmatpush1.xpose.msra.mxu0 0.0
    %1989 = vmatprep.subr.mxu0 0.0
    %1990 = vmatpush1.xpose.msra.mxu0 0.0
    %1991 = vmatprep.subr.mxu0 0.0
    %1992 = vmatpush1.xpose.msra.mxu0 0.0
    %1993 = vmatprep.subr.mxu0 0.0
    %1994 = vmatpush1.xpose.msra.mxu0 0.0
    %1995 = vmatprep.subr.mxu0 0.0
    %1996 = vmatpush1.xpose.msra.mxu0 0.0
    %1997 = vmatprep.subr.mxu0 0.0
    %1998 = vmatpush1.xpose.msra.mxu0 0.0
    %1999 = vmatprep.mubr.f32.mxu0 0.0
    %2000 = vmatmul.mubr.f32.gmra.mrb[0].mxu0 %v1931
    %v2001 = vpop.f32.mrb[0].mxu0
    %v2002 = vadd.f32 0.0, %v2001
    %v2003 = vpop.f32.mrb[0].mxu0
    %2004 = vdwg.mxu0
    %2005 = vrot.lane.b32.xlu0 %v513, 32
    %v2006 = vpop.permute.xlu0 %2005
    %2007 = vrot.lane.b32.xlu0 %v725, 32
    %v2008 = vpop.permute.xlu0 %2007
    %v2009 = vsel %vm943, %v2006, 0
    %v2011 = vsel %vm943, %v2008, 0
    %2013 = vmatprep.subr.mxu0 0.0
    %2014 = vmatpush1.xpose.msra.mxu0 %v2011
    %2015 = vmatprep.subr.mxu0 0.0
    %2016 = vmatpush1.xpose.msra.mxu0 0.0
    %2017 = vmatprep.subr.mxu0 0.0
    %2018 = vmatpush1.xpose.msra.mxu0 0.0
    %2019 = vmatprep.subr.mxu0 0.0
    %2020 = vmatpush1.xpose.msra.mxu0 0.0
    %2021 = vmatprep.subr.mxu0 0.0
    %2022 = vmatpush1.xpose.msra.mxu0 0.0
    %2023 = vmatprep.subr.mxu0 0.0
    %2024 = vmatpush1.xpose.msra.mxu0 0.0
    %2025 = vmatprep.subr.mxu0 0.0
    %2026 = vmatpush1.xpose.msra.mxu0 0.0
    %2027 = vmatprep.subr.mxu0 0.0
    %2028 = vmatpush1.xpose.msra.mxu0 0.0
    %2029 = vmatprep.subr.mxu0 0.0
    %2030 = vmatpush1.xpose.msra.mxu0 0.0
    %2031 = vmatprep.subr.mxu0 0.0
    %2032 = vmatpush1.xpose.msra.mxu0 0.0
    %2033 = vmatprep.subr.mxu0 0.0
    %2034 = vmatpush1.xpose.msra.mxu0 0.0
    %2035 = vmatprep.subr.mxu0 0.0
    %2036 = vmatpush1.xpose.msra.mxu0 0.0
    %2037 = vmatprep.subr.mxu0 0.0
    %2038 = vmatpush1.xpose.msra.mxu0 0.0
    %2039 = vmatprep.subr.mxu0 0.0
    %2040 = vmatpush1.xpose.msra.mxu0 0.0
    %2041 = vmatprep.subr.mxu0 0.0
    %2042 = vmatpush1.xpose.msra.mxu0 0.0
    %2043 = vmatprep.subr.mxu0 0.0
    %2044 = vmatpush1.xpose.msra.mxu0 0.0
    %2045 = vmatprep.subr.mxu0 0.0
    %2046 = vmatpush1.xpose.msra.mxu0 0.0
    %2047 = vmatprep.subr.mxu0 0.0
    %2048 = vmatpush1.xpose.msra.mxu0 0.0
    %2049 = vmatprep.subr.mxu0 0.0
    %2050 = vmatpush1.xpose.msra.mxu0 0.0
    %2051 = vmatprep.subr.mxu0 0.0
    %2052 = vmatpush1.xpose.msra.mxu0 0.0
    %2053 = vmatprep.subr.mxu0 0.0
    %2054 = vmatpush1.xpose.msra.mxu0 0.0
    %2055 = vmatprep.subr.mxu0 0.0
    %2056 = vmatpush1.xpose.msra.mxu0 0.0
    %2057 = vmatprep.subr.mxu0 0.0
    %2058 = vmatpush1.xpose.msra.mxu0 0.0
    %2059 = vmatprep.subr.mxu0 0.0
    %2060 = vmatpush1.xpose.msra.mxu0 0.0
    %2061 = vmatprep.subr.mxu0 0.0
    %2062 = vmatpush1.xpose.msra.mxu0 0.0
    %2063 = vmatprep.subr.mxu0 0.0
    %2064 = vmatpush1.xpose.msra.mxu0 0.0
    %2065 = vmatprep.subr.mxu0 0.0
    %2066 = vmatpush1.xpose.msra.mxu0 0.0
    %2067 = vmatprep.subr.mxu0 0.0
    %2068 = vmatpush1.xpose.msra.mxu0 0.0
    %2069 = vmatprep.subr.mxu0 0.0
    %2070 = vmatpush1.xpose.msra.mxu0 0.0
    %2071 = vmatprep.subr.mxu0 0.0
    %2072 = vmatpush1.xpose.msra.mxu0 0.0
    %2073 = vmatprep.subr.mxu0 0.0
    %2074 = vmatpush1.xpose.msra.mxu0 0.0
    %2075 = vmatprep.subr.mxu0 0.0
    %2076 = vmatpush1.xpose.msra.mxu0 0.0
    %2077 = vmatprep.mubr.f32.mxu0 0.0
    %2078 = vmatmul.mubr.f32.gmra.mrb[0].mxu0 %v2009
    %v2079 = vpop.f32.mrb[0].mxu0
    %v2080 = vadd.f32 0.0, %v2079
    %v2081 = vpop.f32.mrb[0].mxu0
    %2082 = vdwg.mxu0
    %v2083 = vsel %vm1096, %v2002, -inf
    %2084 = vmax.xlane.f32.xlu0 %v2083
    %v2085 = vpop.xlane.xlu0 %2084
    %v2086 = vsel %vm1096, %v2080, -inf
    %2087 = vmax.xlane.f32.xlu0 %v2086
    %v2088 = vpop.xlane.xlu0 %2087
    %v2089 = vsub.f32 %v2002, %v2085
    %v2090 = vsub.f32 %v2080, %v2088
    %v2091 = vmul.f32 %v2089, 1.442695
    %v2092 = vpow.pop %v2091
    %v2093 = vmul.f32 %v2090, 1.442695
    %v2094 = vpow.pop %v2093
    %v2095 = vsel %vm1096, %v2092, 0.0
    %2096 = vadd.xlane.f32.xlu0 %v2095
    %v2097 = vpop.xlane.xlu0 %2096
    %v2098 = vsel %vm1096, %v2094, 0.0
    %2099 = vadd.xlane.f32.xlu0 %v2098
    %v2100 = vpop.xlane.xlu0 %2099
    %v2101 = vrcp.pop %v2097
    %v2102 = vrcp.pop %v2100
    %v2103 = vmul.f32 %v2092, %v2101
    %v2104 = vmul.f32 %v2094, %v2102
    %2105 = vrot.lane.b32.xlu0 %v935, 32
    %v2106 = vpop.permute.xlu0 %2105
    %v2109 = vsel %vm1096, %v2103, 0
    %2111 = vmatprep.subr.mxu0 0.0
    %2112 = vmatpush1.msra.mxu0 %v2106
    %2113 = vmatprep.subr.mxu0 0.0
    %2114 = vmatpush1.msra.mxu0 0.0
    %2115 = vmatprep.subr.mxu0 0.0
    %2116 = vmatpush1.msra.mxu0 0.0
    %2117 = vmatprep.subr.mxu0 0.0
    %2118 = vmatpush1.msra.mxu0 0.0
    %2119 = vmatprep.subr.mxu0 0.0
    %2120 = vmatpush1.msra.mxu0 0.0
    %2121 = vmatprep.subr.mxu0 0.0
    %2122 = vmatpush1.msra.mxu0 0.0
    %2123 = vmatprep.subr.mxu0 0.0
    %2124 = vmatpush1.msra.mxu0 0.0
    %2125 = vmatprep.subr.mxu0 0.0
    %2126 = vmatpush1.msra.mxu0 0.0
    %2127 = vmatprep.subr.mxu0 0.0
    %2128 = vmatpush1.msra.mxu0 0.0
    %2129 = vmatprep.subr.mxu0 0.0
    %2130 = vmatpush1.msra.mxu0 0.0
    %2131 = vmatprep.subr.mxu0 0.0
    %2132 = vmatpush1.msra.mxu0 0.0
    %2133 = vmatprep.subr.mxu0 0.0
    %2134 = vmatpush1.msra.mxu0 0.0
    %2135 = vmatprep.subr.mxu0 0.0
    %2136 = vmatpush1.msra.mxu0 0.0
    %2137 = vmatprep.subr.mxu0 0.0
    %2138 = vmatpush1.msra.mxu0 0.0
    %2139 = vmatprep.subr.mxu0 0.0
    %2140 = vmatpush1.msra.mxu0 0.0
    %2141 = vmatprep.subr.mxu0 0.0
    %2142 = vmatpush1.msra.mxu0 0.0
    %2143 = vmatprep.subr.mxu0 0.0
    %2144 = vmatpush1.msra.mxu0 0.0
    %2145 = vmatprep.subr.mxu0 0.0
    %2146 = vmatpush1.msra.mxu0 0.0
    %2147 = vmatprep.subr.mxu0 0.0
    %2148 = vmatpush1.msra.mxu0 0.0
    %2149 = vmatprep.subr.mxu0 0.0
    %2150 = vmatpush1.msra.mxu0 0.0
    %2151 = vmatprep.subr.mxu0 0.0
    %2152 = vmatpush1.msra.mxu0 0.0
    %2153 = vmatprep.subr.mxu0 0.0
    %2154 = vmatpush1.msra.mxu0 0.0
    %2155 = vmatprep.subr.mxu0 0.0
    %2156 = vmatpush1.msra.mxu0 0.0
    %2157 = vmatprep.subr.mxu0 0.0
    %2158 = vmatpush1.msra.mxu0 0.0
    %2159 = vmatprep.subr.mxu0 0.0
    %2160 = vmatpush1.msra.mxu0 0.0
    %2161 = vmatprep.subr.mxu0 0.0
    %2162 = vmatpush1.msra.mxu0 0.0
    %2163 = vmatprep.subr.mxu0 0.0
    %2164 = vmatpush1.msra.mxu0 0.0
    %2165 = vmatprep.subr.mxu0 0.0
    %2166 = vmatpush1.msra.mxu0 0.0
    %2167 = vmatprep.subr.mxu0 0.0
    %2168 = vmatpush1.msra.mxu0 0.0
    %2169 = vmatprep.subr.mxu0 0.0
    %2170 = vmatpush1.msra.mxu0 0.0
    %2171 = vmatprep.subr.mxu0 0.0
    %2172 = vmatpush1.msra.mxu0 0.0
    %2173 = vmatprep.subr.mxu0 0.0
    %2174 = vmatpush1.msra.mxu0 0.0
    %2175 = vmatprep.mubr.f32.mxu0 0.0
    %2176 = vmatmul.mubr.f32.gmra.mrb[0].mxu0 %v2109
    %v2177 = vpop.f32.mrb[0].mxu0
    %v2178 = vadd.f32 0.0, %v2177
    %v2179 = vpop.f32.mrb[0].mxu0
    %2180 = vdwg.mxu0
    %2181 = vrot.lane.b32.xlu0 %v939, 32
    %v2182 = vpop.permute.xlu0 %2181
    %v2185 = vsel %vm1096, %v2104, 0
    %2187 = vmatprep.subr.mxu0 0.0
    %2188 = vmatpush1.msra.mxu0 %v2182
    %2189 = vmatprep.subr.mxu0 0.0
    %2190 = vmatpush1.msra.mxu0 0.0
    %2191 = vmatprep.subr.mxu0 0.0
    %2192 = vmatpush1.msra.mxu0 0.0
    %2193 = vmatprep.subr.mxu0 0.0
    %2194 = vmatpush1.msra.mxu0 0.0
    %2195 = vmatprep.subr.mxu0 0.0
    %2196 = vmatpush1.msra.mxu0 0.0
    %2197 = vmatprep.subr.mxu0 0.0
    %2198 = vmatpush1.msra.mxu0 0.0
    %2199 = vmatprep.subr.mxu0 0.0
    %2200 = vmatpush1.msra.mxu0 0.0
    %2201 = vmatprep.subr.mxu0 0.0
    %2202 = vmatpush1.msra.mxu0 0.0
    %2203 = vmatprep.subr.mxu0 0.0
    %2204 = vmatpush1.msra.mxu0 0.0
    %2205 = vmatprep.subr.mxu0 0.0
    %2206 = vmatpush1.msra.mxu0 0.0
    %2207 = vmatprep.subr.mxu0 0.0
    %2208 = vmatpush1.msra.mxu0 0.0
    %2209 = vmatprep.subr.mxu0 0.0
    %2210 = vmatpush1.msra.mxu0 0.0
    %2211 = vmatprep.subr.mxu0 0.0
    %2212 = vmatpush1.msra.mxu0 0.0
    %2213 = vmatprep.subr.mxu0 0.0
    %2214 = vmatpush1.msra.mxu0 0.0
    %2215 = vmatprep.subr.mxu0 0.0
    %2216 = vmatpush1.msra.mxu0 0.0
    %2217 = vmatprep.subr.mxu0 0.0
    %2218 = vmatpush1.msra.mxu0 0.0
    %2219 = vmatprep.subr.mxu0 0.0
    %2220 = vmatpush1.msra.mxu0 0.0
    %2221 = vmatprep.subr.mxu0 0.0
    %2222 = vmatpush1.msra.mxu0 0.0
    %2223 = vmatprep.subr.mxu0 0.0
    %2224 = vmatpush1.msra.mxu0 0.0
    %2225 = vmatprep.subr.mxu0 0.0
    %2226 = vmatpush1.msra.mxu0 0.0
    %2227 = vmatprep.subr.mxu0 0.0
    %2228 = vmatpush1.msra.mxu0 0.0
    %2229 = vmatprep.subr.mxu0 0.0
    %2230 = vmatpush1.msra.mxu0 0.0
    %2231 = vmatprep.subr.mxu0 0.0
    %2232 = vmatpush1.msra.mxu0 0.0
    %2233 = vmatprep.subr.mxu0 0.0
    %2234 = vmatpush1.msra.mxu0 0.0
    %2235 = vmatprep.subr.mxu0 0.0
    %2236 = vmatpush1.msra.mxu0 0.0
    %2237 = vmatprep.subr.mxu0 0.0
    %2238 = vmatpush1.msra.mxu0 0.0
    %2239 = vmatprep.subr.mxu0 0.0
    %2240 = vmatpush1.msra.mxu0 0.0
    %2241 = vmatprep.subr.mxu0 0.0
    %2242 = vmatpush1.msra.mxu0 0.0
    %2243 = vmatprep.subr.mxu0 0.0
    %2244 = vmatpush1.msra.mxu0 0.0
    %2245 = vmatprep.subr.mxu0 0.0
    %2246 = vmatpush1.msra.mxu0 0.0
    %2247 = vmatprep.subr.mxu0 0.0
    %2248 = vmatpush1.msra.mxu0 0.0
    %2249 = vmatprep.subr.mxu0 0.0
    %2250 = vmatpush1.msra.mxu0 0.0
    %2251 = vmatprep.mubr.f32.mxu0 0.0
    %2252 = vmatmul.mubr.f32.gmra.mrb[0].mxu0 %v2185
    %v2253 = vpop.f32.mrb[0].mxu0
    %v2254 = vadd.f32 0.0, %v2253
    %v2255 = vpop.f32.mrb[0].mxu0
    %2256 = vdwg.mxu0
    %v2258 = vsel %vm943, %v512, 0
    %v2261 = vsel %vm943, %v723, 0
    %2263 = vmatprep.subr.mxu0 0.0
    %2264 = vmatpush1.xpose.msra.mxu0 %v2261
    %2265 = vmatprep.subr.mxu0 0.0
    %2266 = vmatpush1.xpose.msra.mxu0 0.0
    %2267 = vmatprep.subr.mxu0 0.0
    %2268 = vmatpush1.xpose.msra.mxu0 0.0
    %2269 = vmatprep.subr.mxu0 0.0
    %2270 = vmatpush1.xpose.msra.mxu0 0.0
    %2271 = vmatprep.subr.mxu0 0.0
    %2272 = vmatpush1.xpose.msra.mxu0 0.0
    %2273 = vmatprep.subr.mxu0 0.0
    %2274 = vmatpush1.xpose.msra.mxu0 0.0
    %2275 = vmatprep.subr.mxu0 0.0
    %2276 = vmatpush1.xpose.msra.mxu0 0.0
    %2277 = vmatprep.subr.mxu0 0.0
    %2278 = vmatpush1.xpose.msra.mxu0 0.0
    %2279 = vmatprep.subr.mxu0 0.0
    %2280 = vmatpush1.xpose.msra.mxu0 0.0
    %2281 = vmatprep.subr.mxu0 0.0
    %2282 = vmatpush1.xpose.msra.mxu0 0.0
    %2283 = vmatprep.subr.mxu0 0.0
    %2284 = vmatpush1.xpose.msra.mxu0 0.0
    %2285 = vmatprep.subr.mxu0 0.0
    %2286 = vmatpush1.xpose.msra.mxu0 0.0
    %2287 = vmatprep.subr.mxu0 0.0
    %2288 = vmatpush1.xpose.msra.mxu0 0.0
    %2289 = vmatprep.subr.mxu0 0.0
    %2290 = vmatpush1.xpose.msra.mxu0 0.0
    %2291 = vmatprep.subr.mxu0 0.0
    %2292 = vmatpush1.xpose.msra.mxu0 0.0
    %2293 = vmatprep.subr.mxu0 0.0
    %2294 = vmatpush1.xpose.msra.mxu0 0.0
    %2295 = vmatprep.subr.mxu0 0.0
    %2296 = vmatpush1.xpose.msra.mxu0 0.0
    %2297 = vmatprep.subr.mxu0 0.0
    %2298 = vmatpush1.xpose.msra.mxu0 0.0
    %2299 = vmatprep.subr.mxu0 0.0
    %2300 = vmatpush1.xpose.msra.mxu0 0.0
    %2301 = vmatprep.subr.mxu0 0.0
    %2302 = vmatpush1.xpose.msra.mxu0 0.0
    %2303 = vmatprep.subr.mxu0 0.0
    %2304 = vmatpush1.xpose.msra.mxu0 0.0
    %2305 = vmatprep.subr.mxu0 0.0
    %2306 = vmatpush1.xpose.msra.mxu0 0.0
    %2307 = vmatprep.subr.mxu0 0.0
    %2308 = vmatpush1.xpose.msra.mxu0 0.0
    %2309 = vmatprep.subr.mxu0 0.0
    %2310 = vmatpush1.xpose.msra.mxu0 0.0
    %2311 = vmatprep.subr.mxu0 0.0
    %2312 = vmatpush1.xpose.msra.mxu0 0.0
    %2313 = vmatprep.subr.mxu0 0.0
    %2314 = vmatpush1.xpose.msra.mxu0 0.0
    %2315 = vmatprep.subr.mxu0 0.0
    %2316 = vmatpush1.xpose.msra.mxu0 0.0
    %2317 = vmatprep.subr.mxu0 0.0
    %2318 = vmatpush1.xpose.msra.mxu0 0.0
    %2319 = vmatprep.subr.mxu0 0.0
    %2320 = vmatpush1.xpose.msra.mxu0 0.0
    %2321 = vmatprep.subr.mxu0 0.0
    %2322 = vmatpush1.xpose.msra.mxu0 0.0
    %2323 = vmatprep.subr.mxu0 0.0
    %2324 = vmatpush1.xpose.msra.mxu0 0.0
    %2325 = vmatprep.subr.mxu0 0.0
    %2326 = vmatpush1.xpose.msra.mxu0 0.0
    %2327 = vmatprep.mubr.f32.mxu0 0.0
    %2328 = vmatmul.mubr.f32.gmra.mrb[0].mxu0 %v2258
    %v2329 = vpop.f32.mrb[0].mxu0
    %v2330 = vadd.f32 0.0, %v2329
    %v2331 = vpop.f32.mrb[0].mxu0
    %2332 = vdwg.mxu0
    %v2334 = vsel %vm943, %v514, 0
    %v2337 = vsel %vm943, %v727, 0
    %2339 = vmatprep.subr.mxu0 0.0
    %2340 = vmatpush1.xpose.msra.mxu0 %v2337
    %2341 = vmatprep.subr.mxu0 0.0
    %2342 = vmatpush1.xpose.msra.mxu0 0.0
    %2343 = vmatprep.subr.mxu0 0.0
    %2344 = vmatpush1.xpose.msra.mxu0 0.0
    %2345 = vmatprep.subr.mxu0 0.0
    %2346 = vmatpush1.xpose.msra.mxu0 0.0
    %2347 = vmatprep.subr.mxu0 0.0
    %2348 = vmatpush1.xpose.msra.mxu0 0.0
    %2349 = vmatprep.subr.mxu0 0.0
    %2350 = vmatpush1.xpose.msra.mxu0 0.0
    %2351 = vmatprep.subr.mxu0 0.0
    %2352 = vmatpush1.xpose.msra.mxu0 0.0
    %2353 = vmatprep.subr.mxu0 0.0
    %2354 = vmatpush1.xpose.msra.mxu0 0.0
    %2355 = vmatprep.subr.mxu0 0.0
    %2356 = vmatpush1.xpose.msra.mxu0 0.0
    %2357 = vmatprep.subr.mxu0 0.0
    %2358 = vmatpush1.xpose.msra.mxu0 0.0
    %2359 = vmatprep.subr.mxu0 0.0
    %2360 = vmatpush1.xpose.msra.mxu0 0.0
    %2361 = vmatprep.subr.mxu0 0.0
    %2362 = vmatpush1.xpose.msra.mxu0 0.0
    %2363 = vmatprep.subr.mxu0 0.0
    %2364 = vmatpush1.xpose.msra.mxu0 0.0
    %2365 = vmatprep.subr.mxu0 0.0
    %2366 = vmatpush1.xpose.msra.mxu0 0.0
    %2367 = vmatprep.subr.mxu0 0.0
    %2368 = vmatpush1.xpose.msra.mxu0 0.0
    %2369 = vmatprep.subr.mxu0 0.0
    %2370 = vmatpush1.xpose.msra.mxu0 0.0
    %2371 = vmatprep.subr.mxu0 0.0
    %2372 = vmatpush1.xpose.msra.mxu0 0.0
    %2373 = vmatprep.subr.mxu0 0.0
    %2374 = vmatpush1.xpose.msra.mxu0 0.0
    %2375 = vmatprep.subr.mxu0 0.0
    %2376 = vmatpush1.xpose.msra.mxu0 0.0
    %2377 = vmatprep.subr.mxu0 0.0
    %2378 = vmatpush1.xpose.msra.mxu0 0.0
    %2379 = vmatprep.subr.mxu0 0.0
    %2380 = vmatpush1.xpose.msra.mxu0 0.0
    %2381 = vmatprep.subr.mxu0 0.0
    %2382 = vmatpush1.xpose.msra.mxu0 0.0
    %2383 = vmatprep.subr.mxu0 0.0
    %2384 = vmatpush1.xpose.msra.mxu0 0.0
    %2385 = vmatprep.subr.mxu0 0.0
    %2386 = vmatpush1.xpose.msra.mxu0 0.0
    %2387 = vmatprep.subr.mxu0 0.0
    %2388 = vmatpush1.xpose.msra.mxu0 0.0
    %2389 = vmatprep.subr.mxu0 0.0
    %2390 = vmatpush1.xpose.msra.mxu0 0.0
    %2391 = vmatprep.subr.mxu0 0.0
    %2392 = vmatpush1.xpose.msra.mxu0 0.0
    %2393 = vmatprep.subr.mxu0 0.0
    %2394 = vmatpush1.xpose.msra.mxu0 0.0
    %2395 = vmatprep.subr.mxu0 0.0
    %2396 = vmatpush1.xpose.msra.mxu0 0.0
    %2397 = vmatprep.subr.mxu0 0.0
    %2398 = vmatpush1.xpose.msra.mxu0 0.0
    %2399 = vmatprep.subr.mxu0 0.0
    %2400 = vmatpush1.xpose.msra.mxu0 0.0
    %2401 = vmatprep.subr.mxu0 0.0
    %2402 = vmatpush1.xpose.msra.mxu0 0.0
    %2403 = vmatprep.mubr.f32.mxu0 0.0
    %2404 = vmatmul.mubr.f32.gmra.mrb[0].mxu0 %v2334
    %v2405 = vpop.f32.mrb[0].mxu0
    %v2406 = vadd.f32 0.0, %v2405
    %v2407 = vpop.f32.mrb[0].mxu0
    %2408 = vdwg.mxu0
    %v2409 = vsel %vm1096, %v2330, -inf
    %2410 = vmax.xlane.f32.xlu0 %v2409
    %v2411 = vpop.xlane.xlu0 %2410
    %v2412 = vsel %vm1096, %v2406, -inf
    %2413 = vmax.xlane.f32.xlu0 %v2412
    %v2414 = vpop.xlane.xlu0 %2413
    %v2415 = vsub.f32 %v2330, %v2411
    %v2416 = vsub.f32 %v2406, %v2414
    %v2417 = vmul.f32 %v2415, 1.442695
    %v2418 = vpow.pop %v2417
    %v2419 = vmul.f32 %v2416, 1.442695
    %v2420 = vpow.pop %v2419
    %v2421 = vsel %vm1096, %v2418, 0.0
    %2422 = vadd.xlane.f32.xlu0 %v2421
    %v2423 = vpop.xlane.xlu0 %2422
    %v2424 = vsel %vm1096, %v2420, 0.0
    %2425 = vadd.xlane.f32.xlu0 %v2424
    %v2426 = vpop.xlane.xlu0 %2425
    %v2427 = vrcp.pop %v2423
    %v2428 = vrcp.pop %v2426
    %v2429 = vmul.f32 %v2418, %v2427
    %v2430 = vmul.f32 %v2420, %v2428
    %v2432 = vsel %vm1096, %v2429, 0
    %2434 = vmatprep.subr.mxu0 0.0
    %2435 = vmatpush1.msra.mxu0 %v937
    %2436 = vmatprep.subr.mxu0 0.0
    %2437 = vmatpush1.msra.mxu0 0.0
    %2438 = vmatprep.subr.mxu0 0.0
    %2439 = vmatpush1.msra.mxu0 0.0
    %2440 = vmatprep.subr.mxu0 0.0
    %2441 = vmatpush1.msra.mxu0 0.0
    %2442 = vmatprep.subr.mxu0 0.0
    %2443 = vmatpush1.msra.mxu0 0.0
    %2444 = vmatprep.subr.mxu0 0.0
    %2445 = vmatpush1.msra.mxu0 0.0
    %2446 = vmatprep.subr.mxu0 0.0
    %2447 = vmatpush1.msra.mxu0 0.0
    %2448 = vmatprep.subr.mxu0 0.0
    %2449 = vmatpush1.msra.mxu0 0.0
    %2450 = vmatprep.subr.mxu0 0.0
    %2451 = vmatpush1.msra.mxu0 0.0
    %2452 = vmatprep.subr.mxu0 0.0
    %2453 = vmatpush1.msra.mxu0 0.0
    %2454 = vmatprep.subr.mxu0 0.0
    %2455 = vmatpush1.msra.mxu0 0.0
    %2456 = vmatprep.subr.mxu0 0.0
    %2457 = vmatpush1.msra.mxu0 0.0
    %2458 = vmatprep.subr.mxu0 0.0
    %2459 = vmatpush1.msra.mxu0 0.0
    %2460 = vmatprep.subr.mxu0 0.0
    %2461 = vmatpush1.msra.mxu0 0.0
    %2462 = vmatprep.subr.mxu0 0.0
    %2463 = vmatpush1.msra.mxu0 0.0
    %2464 = vmatprep.subr.mxu0 0.0
    %2465 = vmatpush1.msra.mxu0 0.0
    %2466 = vmatprep.subr.mxu0 0.0
    %2467 = vmatpush1.msra.mxu0 0.0
    %2468 = vmatprep.subr.mxu0 0.0
    %2469 = vmatpush1.msra.mxu0 0.0
    %2470 = vmatprep.subr.mxu0 0.0
    %2471 = vmatpush1.msra.mxu0 0.0
    %2472 = vmatprep.subr.mxu0 0.0
    %2473 = vmatpush1.msra.mxu0 0.0
    %2474 = vmatprep.subr.mxu0 0.0
    %2475 = vmatpush1.msra.mxu0 0.0
    %2476 = vmatprep.subr.mxu0 0.0
    %2477 = vmatpush1.msra.mxu0 0.0
    %2478 = vmatprep.subr.mxu0 0.0
    %2479 = vmatpush1.msra.mxu0 0.0
    %2480 = vmatprep.subr.mxu0 0.0
    %2481 = vmatpush1.msra.mxu0 0.0
    %2482 = vmatprep.subr.mxu0 0.0
    %2483 = vmatpush1.msra.mxu0 0.0
    %2484 = vmatprep.subr.mxu0 0.0
    %2485 = vmatpush1.msra.mxu0 0.0
    %2486 = vmatprep.subr.mxu0 0.0
    %2487 = vmatpush1.msra.mxu0 0.0
    %2488 = vmatprep.subr.mxu0 0.0
    %2489 = vmatpush1.msra.mxu0 0.0
    %2490 = vmatprep.subr.mxu0 0.0
    %2491 = vmatpush1.msra.mxu0 0.0
    %2492 = vmatprep.subr.mxu0 0.0
    %2493 = vmatpush1.msra.mxu0 0.0
    %2494 = vmatprep.subr.mxu0 0.0
    %2495 = vmatpush1.msra.mxu0 0.0
    %2496 = vmatprep.subr.mxu0 0.0
    %2497 = vmatpush1.msra.mxu0 0.0
    %2498 = vmatprep.mubr.f32.mxu0 0.0
    %2499 = vmatmul.mubr.f32.gmra.mrb[0].mxu0 %v2432
    %v2500 = vpop.f32.mrb[0].mxu0
    %v2501 = vadd.f32 0.0, %v2500
    %v2502 = vpop.f32.mrb[0].mxu0
    %2503 = vdwg.mxu0
    %v2505 = vsel %vm1096, %v2430, 0
    %2507 = vmatprep.subr.mxu0 0.0
    %2508 = vmatpush1.msra.mxu0 %v941
    %2509 = vmatprep.subr.mxu0 0.0
    %2510 = vmatpush1.msra.mxu0 0.0
    %2511 = vmatprep.subr.mxu0 0.0
    %2512 = vmatpush1.msra.mxu0 0.0
    %2513 = vmatprep.subr.mxu0 0.0
    %2514 = vmatpush1.msra.mxu0 0.0
    %2515 = vmatprep.subr.mxu0 0.0
    %2516 = vmatpush1.msra.mxu0 0.0
    %2517 = vmatprep.subr.mxu0 0.0
    %2518 = vmatpush1.msra.mxu0 0.0
    %2519 = vmatprep.subr.mxu0 0.0
    %2520 = vmatpush1.msra.mxu0 0.0
    %2521 = vmatprep.subr.mxu0 0.0
    %2522 = vmatpush1.msra.mxu0 0.0
    %2523 = vmatprep.subr.mxu0 0.0
    %2524 = vmatpush1.msra.mxu0 0.0
    %2525 = vmatprep.subr.mxu0 0.0
    %2526 = vmatpush1.msra.mxu0 0.0
    %2527 = vmatprep.subr.mxu0 0.0
    %2528 = vmatpush1.msra.mxu0 0.0
    %2529 = vmatprep.subr.mxu0 0.0
    %2530 = vmatpush1.msra.mxu0 0.0
    %2531 = vmatprep.subr.mxu0 0.0
    %2532 = vmatpush1.msra.mxu0 0.0
    %2533 = vmatprep.subr.mxu0 0.0
    %2534 = vmatpush1.msra.mxu0 0.0
    %2535 = vmatprep.subr.mxu0 0.0
    %2536 = vmatpush1.msra.mxu0 0.0
    %2537 = vmatprep.subr.mxu0 0.0
    %2538 = vmatpush1.msra.mxu0 0.0
    %2539 = vmatprep.subr.mxu0 0.0
    %2540 = vmatpush1.msra.mxu0 0.0
    %2541 = vmatprep.subr.mxu0 0.0
    %2542 = vmatpush1.msra.mxu0 0.0
    %2543 = vmatprep.subr.mxu0 0.0
    %2544 = vmatpush1.msra.mxu0 0.0
    %2545 = vmatprep.subr.mxu0 0.0
    %2546 = vmatpush1.msra.mxu0 0.0
    %2547 = vmatprep.subr.mxu0 0.0
    %2548 = vmatpush1.msra.mxu0 0.0
    %2549 = vmatprep.subr.mxu0 0.0
    %2550 = vmatpush1.msra.mxu0 0.0
    %2551 = vmatprep.subr.mxu0 0.0
    %2552 = vmatpush1.msra.mxu0 0.0
    %2553 = vmatprep.subr.mxu0 0.0
    %2554 = vmatpush1.msra.mxu0 0.0
    %2555 = vmatprep.subr.mxu0 0.0
    %2556 = vmatpush1.msra.mxu0 0.0
    %2557 = vmatprep.subr.mxu0 0.0
    %2558 = vmatpush1.msra.mxu0 0.0
    %2559 = vmatprep.subr.mxu0 0.0
    %2560 = vmatpush1.msra.mxu0 0.0
    %2561 = vmatprep.subr.mxu0 0.0
    %2562 = vmatpush1.msra.mxu0 0.0
    %2563 = vmatprep.subr.mxu0 0.0
    %2564 = vmatpush1.msra.mxu0 0.0
    %2565 = vmatprep.subr.mxu0 0.0
    %2566 = vmatpush1.msra.mxu0 0.0
    %2567 = vmatprep.subr.mxu0 0.0
    %2568 = vmatpush1.msra.mxu0 0.0
    %2569 = vmatprep.subr.mxu0 0.0
    %2570 = vmatpush1.msra.mxu0 0.0
    %2571 = vmatprep.mubr.f32.mxu0 0.0
    %2572 = vmatmul.mubr.f32.gmra.mrb[0].mxu0 %v2505
    %v2573 = vpop.f32.mrb[0].mxu0
    %v2574 = vadd.f32 0.0, %v2573
    %v2575 = vpop.f32.mrb[0].mxu0
    %2576 = vdwg.mxu0
    %2577 = vrot.lane.b32.xlu0 %v512, 96
    %v2578 = vpop.permute.xlu0 %2577
    %2579 = vrot.lane.b32.xlu0 %v723, 96
    %v2580 = vpop.permute.xlu0 %2579
    %v2581 = vsel %vm943, %v2578, 0
    %v2583 = vsel %vm943, %v2580, 0
    %2585 = vmatprep.subr.mxu0 0.0
    %2586 = vmatpush1.xpose.msra.mxu0 %v2583
    %2587 = vmatprep.subr.mxu0 0.0
    %2588 = vmatpush1.xpose.msra.mxu0 0.0
    %2589 = vmatprep.subr.mxu0 0.0
    %2590 = vmatpush1.xpose.msra.mxu0 0.0
    %2591 = vmatprep.subr.mxu0 0.0
    %2592 = vmatpush1.xpose.msra.mxu0 0.0
    %2593 = vmatprep.subr.mxu0 0.0
    %2594 = vmatpush1.xpose.msra.mxu0 0.0
    %2595 = vmatprep.subr.mxu0 0.0
    %2596 = vmatpush1.xpose.msra.mxu0 0.0
    %2597 = vmatprep.subr.mxu0 0.0
    %2598 = vmatpush1.xpose.msra.mxu0 0.0
    %2599 = vmatprep.subr.mxu0 0.0
    %2600 = vmatpush1.xpose.msra.mxu0 0.0
    %2601 = vmatprep.subr.mxu0 0.0
    %2602 = vmatpush1.xpose.msra.mxu0 0.0
    %2603 = vmatprep.subr.mxu0 0.0
    %2604 = vmatpush1.xpose.msra.mxu0 0.0
    %2605 = vmatprep.subr.mxu0 0.0
    %2606 = vmatpush1.xpose.msra.mxu0 0.0
    %2607 = vmatprep.subr.mxu0 0.0
    %2608 = vmatpush1.xpose.msra.mxu0 0.0
    %2609 = vmatprep.subr.mxu0 0.0
    %2610 = vmatpush1.xpose.msra.mxu0 0.0
    %2611 = vmatprep.subr.mxu0 0.0
    %2612 = vmatpush1.xpose.msra.mxu0 0.0
    %2613 = vmatprep.subr.mxu0 0.0
    %2614 = vmatpush1.xpose.msra.mxu0 0.0
    %2615 = vmatprep.subr.mxu0 0.0
    %2616 = vmatpush1.xpose.msra.mxu0 0.0
    %2617 = vmatprep.subr.mxu0 0.0
    %2618 = vmatpush1.xpose.msra.mxu0 0.0
    %2619 = vmatprep.subr.mxu0 0.0
    %2620 = vmatpush1.xpose.msra.mxu0 0.0
    %2621 = vmatprep.subr.mxu0 0.0
    %2622 = vmatpush1.xpose.msra.mxu0 0.0
    %2623 = vmatprep.subr.mxu0 0.0
    %2624 = vmatpush1.xpose.msra.mxu0 0.0
    %2625 = vmatprep.subr.mxu0 0.0
    %2626 = vmatpush1.xpose.msra.mxu0 0.0
    %2627 = vmatprep.subr.mxu0 0.0
    %2628 = vmatpush1.xpose.msra.mxu0 0.0
    %2629 = vmatprep.subr.mxu0 0.0
    %2630 = vmatpush1.xpose.msra.mxu0 0.0
    %2631 = vmatprep.subr.mxu0 0.0
    %2632 = vmatpush1.xpose.msra.mxu0 0.0
    %2633 = vmatprep.subr.mxu0 0.0
    %2634 = vmatpush1.xpose.msra.mxu0 0.0
    %2635 = vmatprep.subr.mxu0 0.0
    %2636 = vmatpush1.xpose.msra.mxu0 0.0
    %2637 = vmatprep.subr.mxu0 0.0
    %2638 = vmatpush1.xpose.msra.mxu0 0.0
    %2639 = vmatprep.subr.mxu0 0.0
    %2640 = vmatpush1.xpose.msra.mxu0 0.0
    %2641 = vmatprep.subr.mxu0 0.0
    %2642 = vmatpush1.xpose.msra.mxu0 0.0
    %2643 = vmatprep.subr.mxu0 0.0
    %2644 = vmatpush1.xpose.msra.mxu0 0.0
    %2645 = vmatprep.subr.mxu0 0.0
    %2646 = vmatpush1.xpose.msra.mxu0 0.0
    %2647 = vmatprep.subr.mxu0 0.0
    %2648 = vmatpush1.xpose.msra.mxu0 0.0
    %2649 = vmatprep.mubr.f32.mxu0 0.0
    %2650 = vmatmul.mubr.f32.gmra.mrb[0].mxu0 %v2581
    %v2651 = vpop.f32.mrb[0].mxu0
    %v2652 = vadd.f32 0.0, %v2651
    %v2653 = vpop.f32.mrb[0].mxu0
    %2654 = vdwg.mxu0
    %2655 = vrot.lane.b32.xlu0 %v514, 96
    %v2656 = vpop.permute.xlu0 %2655
    %2657 = vrot.lane.b32.xlu0 %v727, 96
    %v2658 = vpop.permute.xlu0 %2657
    %v2659 = vsel %vm943, %v2656, 0
    %v2661 = vsel %vm943, %v2658, 0
    %2663 = vmatprep.subr.mxu0 0.0
    %2664 = vmatpush1.xpose.msra.mxu0 %v2661
    %2665 = vmatprep.subr.mxu0 0.0
    %2666 = vmatpush1.xpose.msra.mxu0 0.0
    %2667 = vmatprep.subr.mxu0 0.0
    %2668 = vmatpush1.xpose.msra.mxu0 0.0
    %2669 = vmatprep.subr.mxu0 0.0
    %2670 = vmatpush1.xpose.msra.mxu0 0.0
    %2671 = vmatprep.subr.mxu0 0.0
    %2672 = vmatpush1.xpose.msra.mxu0 0.0
    %2673 = vmatprep.subr.mxu0 0.0
    %2674 = vmatpush1.xpose.msra.mxu0 0.0
    %2675 = vmatprep.subr.mxu0 0.0
    %2676 = vmatpush1.xpose.msra.mxu0 0.0
    %2677 = vmatprep.subr.mxu0 0.0
    %2678 = vmatpush1.xpose.msra.mxu0 0.0
    %2679 = vmatprep.subr.mxu0 0.0
    %2680 = vmatpush1.xpose.msra.mxu0 0.0
    %2681 = vmatprep.subr.mxu0 0.0
    %2682 = vmatpush1.xpose.msra.mxu0 0.0
    %2683 = vmatprep.subr.mxu0 0.0
    %2684 = vmatpush1.xpose.msra.mxu0 0.0
    %2685 = vmatprep.subr.mxu0 0.0
    %2686 = vmatpush1.xpose.msra.mxu0 0.0
    %2687 = vmatprep.subr.mxu0 0.0
    %2688 = vmatpush1.xpose.msra.mxu0 0.0
    %2689 = vmatprep.subr.mxu0 0.0
    %2690 = vmatpush1.xpose.msra.mxu0 0.0
    %2691 = vmatprep.subr.mxu0 0.0
    %2692 = vmatpush1.xpose.msra.mxu0 0.0
    %2693 = vmatprep.subr.mxu0 0.0
    %2694 = vmatpush1.xpose.msra.mxu0 0.0
    %2695 = vmatprep.subr.mxu0 0.0
    %2696 = vmatpush1.xpose.msra.mxu0 0.0
    %2697 = vmatprep.subr.mxu0 0.0
    %2698 = vmatpush1.xpose.msra.mxu0 0.0
    %2699 = vmatprep.subr.mxu0 0.0
    %2700 = vmatpush1.xpose.msra.mxu0 0.0
    %2701 = vmatprep.subr.mxu0 0.0
    %2702 = vmatpush1.xpose.msra.mxu0 0.0
    %2703 = vmatprep.subr.mxu0 0.0
    %2704 = vmatpush1.xpose.msra.mxu0 0.0
    %2705 = vmatprep.subr.mxu0 0.0
    %2706 = vmatpush1.xpose.msra.mxu0 0.0
    %2707 = vmatprep.subr.mxu0 0.0
    %2708 = vmatpush1.xpose.msra.mxu0 0.0
    %2709 = vmatprep.subr.mxu0 0.0
    %2710 = vmatpush1.xpose.msra.mxu0 0.0
    %2711 = vmatprep.subr.mxu0 0.0
    %2712 = vmatpush1.xpose.msra.mxu0 0.0
    %2713 = vmatprep.subr.mxu0 0.0
    %2714 = vmatpush1.xpose.msra.mxu0 0.0
    %2715 = vmatprep.subr.mxu0 0.0
    %2716 = vmatpush1.xpose.msra.mxu0 0.0
    %2717 = vmatprep.subr.mxu0 0.0
    %2718 = vmatpush1.xpose.msra.mxu0 0.0
    %2719 = vmatprep.subr.mxu0 0.0
    %2720 = vmatpush1.xpose.msra.mxu0 0.0
    %2721 = vmatprep.subr.mxu0 0.0
    %2722 = vmatpush1.xpose.msra.mxu0 0.0
    %2723 = vmatprep.subr.mxu0 0.0
    %2724 = vmatpush1.xpose.msra.mxu0 0.0
    %2725 = vmatprep.subr.mxu0 0.0
    %2726 = vmatpush1.xpose.msra.mxu0 0.0
    %2727 = vmatprep.mubr.f32.mxu0 0.0
    %2728 = vmatmul.mubr.f32.gmra.mrb[0].mxu0 %v2659
    %v2729 = vpop.f32.mrb[0].mxu0
    %v2730 = vadd.f32 0.0, %v2729
    %v2731 = vpop.f32.mrb[0].mxu0
    %2732 = vdwg.mxu0
    %v2733 = vsel %vm1096, %v2652, -inf
    %2734 = vmax.xlane.f32.xlu0 %v2733
    %v2735 = vpop.xlane.xlu0 %2734
    %v2736 = vsel %vm1096, %v2730, -inf
    %2737 = vmax.xlane.f32.xlu0 %v2736
    %v2738 = vpop.xlane.xlu0 %2737
    %v2739 = vsub.f32 %v2652, %v2735
    %v2740 = vsub.f32 %v2730, %v2738
    %v2741 = vmul.f32 %v2739, 1.442695
    %v2742 = vpow.pop %v2741
    %v2743 = vmul.f32 %v2740, 1.442695
    %v2744 = vpow.pop %v2743
    %v2745 = vsel %vm1096, %v2742, 0.0
    %2746 = vadd.xlane.f32.xlu0 %v2745
    %v2747 = vpop.xlane.xlu0 %2746
    %v2748 = vsel %vm1096, %v2744, 0.0
    %2749 = vadd.xlane.f32.xlu0 %v2748
    %v2750 = vpop.xlane.xlu0 %2749
    %v2751 = vrcp.pop %v2747
    %v2752 = vrcp.pop %v2750
    %v2753 = vmul.f32 %v2742, %v2751
    %v2754 = vmul.f32 %v2744, %v2752
    %2756 = vrot.lane.b32.xlu0 %v937, 96
    %v2757 = vpop.permute.xlu0 %2756
    %v2760 = vsel %vm1096, %v2753, 0
    %2762 = vmatprep.subr.mxu0 0.0
    %2763 = vmatpush1.msra.mxu0 %v2757
    %2764 = vmatprep.subr.mxu0 0.0
    %2765 = vmatpush1.msra.mxu0 0.0
    %2766 = vmatprep.subr.mxu0 0.0
    %2767 = vmatpush1.msra.mxu0 0.0
    %2768 = vmatprep.subr.mxu0 0.0
    %2769 = vmatpush1.msra.mxu0 0.0
    %2770 = vmatprep.subr.mxu0 0.0
    %2771 = vmatpush1.msra.mxu0 0.0
    %2772 = vmatprep.subr.mxu0 0.0
    %2773 = vmatpush1.msra.mxu0 0.0
    %2774 = vmatprep.subr.mxu0 0.0
    %2775 = vmatpush1.msra.mxu0 0.0
    %2776 = vmatprep.subr.mxu0 0.0
    %2777 = vmatpush1.msra.mxu0 0.0
    %2778 = vmatprep.subr.mxu0 0.0
    %2779 = vmatpush1.msra.mxu0 0.0
    %2780 = vmatprep.subr.mxu0 0.0
    %2781 = vmatpush1.msra.mxu0 0.0
    %2782 = vmatprep.subr.mxu0 0.0
    %2783 = vmatpush1.msra.mxu0 0.0
    %2784 = vmatprep.subr.mxu0 0.0
    %2785 = vmatpush1.msra.mxu0 0.0
    %2786 = vmatprep.subr.mxu0 0.0
    %2787 = vmatpush1.msra.mxu0 0.0
    %2788 = vmatprep.subr.mxu0 0.0
    %2789 = vmatpush1.msra.mxu0 0.0
    %2790 = vmatprep.subr.mxu0 0.0
    %2791 = vmatpush1.msra.mxu0 0.0
    %2792 = vmatprep.subr.mxu0 0.0
    %2793 = vmatpush1.msra.mxu0 0.0
    %2794 = vmatprep.subr.mxu0 0.0
    %2795 = vmatpush1.msra.mxu0 0.0
    %2796 = vmatprep.subr.mxu0 0.0
    %2797 = vmatpush1.msra.mxu0 0.0
    %2798 = vmatprep.subr.mxu0 0.0
    %2799 = vmatpush1.msra.mxu0 0.0
    %2800 = vmatprep.subr.mxu0 0.0
    %2801 = vmatpush1.msra.mxu0 0.0
    %2802 = vmatprep.subr.mxu0 0.0
    %2803 = vmatpush1.msra.mxu0 0.0
    %2804 = vmatprep.subr.mxu0 0.0
    %2805 = vmatpush1.msra.mxu0 0.0
    %2806 = vmatprep.subr.mxu0 0.0
    %2807 = vmatpush1.msra.mxu0 0.0
    %2808 = vmatprep.subr.mxu0 0.0
    %2809 = vmatpush1.msra.mxu0 0.0
    %2810 = vmatprep.subr.mxu0 0.0
    %2811 = vmatpush1.msra.mxu0 0.0
    %2812 = vmatprep.subr.mxu0 0.0
    %2813 = vmatpush1.msra.mxu0 0.0
    %2814 = vmatprep.subr.mxu0 0.0
    %2815 = vmatpush1.msra.mxu0 0.0
    %2816 = vmatprep.subr.mxu0 0.0
    %2817 = vmatpush1.msra.mxu0 0.0
    %2818 = vmatprep.subr.mxu0 0.0
    %2819 = vmatpush1.msra.mxu0 0.0
    %2820 = vmatprep.subr.mxu0 0.0
    %2821 = vmatpush1.msra.mxu0 0.0
    %2822 = vmatprep.subr.mxu0 0.0
    %2823 = vmatpush1.msra.mxu0 0.0
    %2824 = vmatprep.subr.mxu0 0.0
    %2825 = vmatpush1.msra.mxu0 0.0
    %2826 = vmatprep.mubr.f32.mxu0 0.0
    %2827 = vmatmul.mubr.f32.gmra.mrb[0].mxu0 %v2760
    %v2828 = vpop.f32.mrb[0].mxu0
    %v2829 = vadd.f32 0.0, %v2828
    %v2830 = vpop.f32.mrb[0].mxu0
    %2831 = vdwg.mxu0
    %2833 = vrot.lane.b32.xlu0 %v941, 96
    %v2834 = vpop.permute.xlu0 %2833
    %v2837 = vsel %vm1096, %v2754, 0
    %2839 = vmatprep.subr.mxu0 0.0
    %2840 = vmatpush1.msra.mxu0 %v2834
    %2841 = vmatprep.subr.mxu0 0.0
    %2842 = vmatpush1.msra.mxu0 0.0
    %2843 = vmatprep.subr.mxu0 0.0
    %2844 = vmatpush1.msra.mxu0 0.0
    %2845 = vmatprep.subr.mxu0 0.0
    %2846 = vmatpush1.msra.mxu0 0.0
    %2847 = vmatprep.subr.mxu0 0.0
    %2848 = vmatpush1.msra.mxu0 0.0
    %2849 = vmatprep.subr.mxu0 0.0
    %2850 = vmatpush1.msra.mxu0 0.0
    %2851 = vmatprep.subr.mxu0 0.0
    %2852 = vmatpush1.msra.mxu0 0.0
    %2853 = vmatprep.subr.mxu0 0.0
    %2854 = vmatpush1.msra.mxu0 0.0
    %2855 = vmatprep.subr.mxu0 0.0
    %2856 = vmatpush1.msra.mxu0 0.0
    %2857 = vmatprep.subr.mxu0 0.0
    %2858 = vmatpush1.msra.mxu0 0.0
    %2859 = vmatprep.subr.mxu0 0.0
    %2860 = vmatpush1.msra.mxu0 0.0
    %2861 = vmatprep.subr.mxu0 0.0
    %2862 = vmatpush1.msra.mxu0 0.0
    %2863 = vmatprep.subr.mxu0 0.0
    %2864 = vmatpush1.msra.mxu0 0.0
    %2865 = vmatprep.subr.mxu0 0.0
    %2866 = vmatpush1.msra.mxu0 0.0
    %2867 = vmatprep.subr.mxu0 0.0
    %2868 = vmatpush1.msra.mxu0 0.0
    %2869 = vmatprep.subr.mxu0 0.0
    %2870 = vmatpush1.msra.mxu0 0.0
    %2871 = vmatprep.subr.mxu0 0.0
    %2872 = vmatpush1.msra.mxu0 0.0
    %2873 = vmatprep.subr.mxu0 0.0
    %2874 = vmatpush1.msra.mxu0 0.0
    %2875 = vmatprep.subr.mxu0 0.0
    %2876 = vmatpush1.msra.mxu0 0.0
    %2877 = vmatprep.subr.mxu0 0.0
    %2878 = vmatpush1.msra.mxu0 0.0
    %2879 = vmatprep.subr.mxu0 0.0
    %2880 = vmatpush1.msra.mxu0 0.0
    %2881 = vmatprep.subr.mxu0 0.0
    %2882 = vmatpush1.msra.mxu0 0.0
    %2883 = vmatprep.subr.mxu0 0.0
    %2884 = vmatpush1.msra.mxu0 0.0
    %2885 = vmatprep.subr.mxu0 0.0
    %2886 = vmatpush1.msra.mxu0 0.0
    %2887 = vmatprep.subr.mxu0 0.0
    %2888 = vmatpush1.msra.mxu0 0.0
    %2889 = vmatprep.subr.mxu0 0.0
    %2890 = vmatpush1.msra.mxu0 0.0
    %2891 = vmatprep.subr.mxu0 0.0
    %2892 = vmatpush1.msra.mxu0 0.0
    %2893 = vmatprep.subr.mxu0 0.0
    %2894 = vmatpush1.msra.mxu0 0.0
    %2895 = vmatprep.subr.mxu0 0.0
    %2896 = vmatpush1.msra.mxu0 0.0
    %2897 = vmatprep.subr.mxu0 0.0
    %2898 = vmatpush1.msra.mxu0 0.0
    %2899 = vmatprep.subr.mxu0 0.0
    %2900 = vmatpush1.msra.mxu0 0.0
    %2901 = vmatprep.subr.mxu0 0.0
    %2902 = vmatpush1.msra.mxu0 0.0
    %2903 = vmatprep.mubr.f32.mxu0 0.0
    %2904 = vmatmul.mubr.f32.gmra.mrb[0].mxu0 %v2837
    %v2905 = vpop.f32.mrb[0].mxu0
    %v2906 = vadd.f32 0.0, %v2905
    %v2907 = vpop.f32.mrb[0].mxu0
    %2908 = vdwg.mxu0
    %2909 = vrot.lane.b32.xlu0 %v512, 64
    %v2910 = vpop.permute.xlu0 %2909
    %2911 = vrot.lane.b32.xlu0 %v723, 64
    %v2912 = vpop.permute.xlu0 %2911
    %v2913 = vsel %vm943, %v2910, 0
    %v2915 = vsel %vm943, %v2912, 0
    %2917 = vmatprep.subr.mxu0 0.0
    %2918 = vmatpush1.xpose.msra.mxu0 %v2915
    %2919 = vmatprep.subr.mxu0 0.0
    %2920 = vmatpush1.xpose.msra.mxu0 0.0
    %2921 = vmatprep.subr.mxu0 0.0
    %2922 = vmatpush1.xpose.msra.mxu0 0.0
    %2923 = vmatprep.subr.mxu0 0.0
    %2924 = vmatpush1.xpose.msra.mxu0 0.0
    %2925 = vmatprep.subr.mxu0 0.0
    %2926 = vmatpush1.xpose.msra.mxu0 0.0
    %2927 = vmatprep.subr.mxu0 0.0
    %2928 = vmatpush1.xpose.msra.mxu0 0.0
    %2929 = vmatprep.subr.mxu0 0.0
    %2930 = vmatpush1.xpose.msra.mxu0 0.0
    %2931 = vmatprep.subr.mxu0 0.0
    %2932 = vmatpush1.xpose.msra.mxu0 0.0
    %2933 = vmatprep.subr.mxu0 0.0
    %2934 = vmatpush1.xpose.msra.mxu0 0.0
    %2935 = vmatprep.subr.mxu0 0.0
    %2936 = vmatpush1.xpose.msra.mxu0 0.0
    %2937 = vmatprep.subr.mxu0 0.0
    %2938 = vmatpush1.xpose.msra.mxu0 0.0
    %2939 = vmatprep.subr.mxu0 0.0
    %2940 = vmatpush1.xpose.msra.mxu0 0.0
    %2941 = vmatprep.subr.mxu0 0.0
    %2942 = vmatpush1.xpose.msra.mxu0 0.0
    %2943 = vmatprep.subr.mxu0 0.0
    %2944 = vmatpush1.xpose.msra.mxu0 0.0
    %2945 = vmatprep.subr.mxu0 0.0
    %2946 = vmatpush1.xpose.msra.mxu0 0.0
    %2947 = vmatprep.subr.mxu0 0.0
    %2948 = vmatpush1.xpose.msra.mxu0 0.0
    %2949 = vmatprep.subr.mxu0 0.0
    %2950 = vmatpush1.xpose.msra.mxu0 0.0
    %2951 = vmatprep.subr.mxu0 0.0
    %2952 = vmatpush1.xpose.msra.mxu0 0.0
    %2953 = vmatprep.subr.mxu0 0.0
    %2954 = vmatpush1.xpose.msra.mxu0 0.0
    %2955 = vmatprep.subr.mxu0 0.0
    %2956 = vmatpush1.xpose.msra.mxu0 0.0
    %2957 = vmatprep.subr.mxu0 0.0
    %2958 = vmatpush1.xpose.msra.mxu0 0.0
    %2959 = vmatprep.subr.mxu0 0.0
    %2960 = vmatpush1.xpose.msra.mxu0 0.0
    %2961 = vmatprep.subr.mxu0 0.0
    %2962 = vmatpush1.xpose.msra.mxu0 0.0
    %2963 = vmatprep.subr.mxu0 0.0
    %2964 = vmatpush1.xpose.msra.mxu0 0.0
    %2965 = vmatprep.subr.mxu0 0.0
    %2966 = vmatpush1.xpose.msra.mxu0 0.0
    %2967 = vmatprep.subr.mxu0 0.0
    %2968 = vmatpush1.xpose.msra.mxu0 0.0
    %2969 = vmatprep.subr.mxu0 0.0
    %2970 = vmatpush1.xpose.msra.mxu0 0.0
    %2971 = vmatprep.subr.mxu0 0.0
    %2972 = vmatpush1.xpose.msra.mxu0 0.0
    %2973 = vmatprep.subr.mxu0 0.0
    %2974 = vmatpush1.xpose.msra.mxu0 0.0
    %2975 = vmatprep.subr.mxu0 0.0
    %2976 = vmatpush1.xpose.msra.mxu0 0.0
    %2977 = vmatprep.subr.mxu0 0.0
    %2978 = vmatpush1.xpose.msra.mxu0 0.0
    %2979 = vmatprep.subr.mxu0 0.0
    %2980 = vmatpush1.xpose.msra.mxu0 0.0
    %2981 = vmatprep.mubr.f32.mxu0 0.0
    %2982 = vmatmul.mubr.f32.gmra.mrb[0].mxu0 %v2913
    %v2983 = vpop.f32.mrb[0].mxu0
    %v2984 = vadd.f32 0.0, %v2983
    %v2985 = vpop.f32.mrb[0].mxu0
    %2986 = vdwg.mxu0
    %2987 = vrot.lane.b32.xlu0 %v514, 64
    %v2988 = vpop.permute.xlu0 %2987
    %2989 = vrot.lane.b32.xlu0 %v727, 64
    %v2990 = vpop.permute.xlu0 %2989
    %v2991 = vsel %vm943, %v2988, 0
    %v2993 = vsel %vm943, %v2990, 0
    %2995 = vmatprep.subr.mxu0 0.0
    %2996 = vmatpush1.xpose.msra.mxu0 %v2993
    %2997 = vmatprep.subr.mxu0 0.0
    %2998 = vmatpush1.xpose.msra.mxu0 0.0
    %2999 = vmatprep.subr.mxu0 0.0
    %3000 = vmatpush1.xpose.msra.mxu0 0.0
    %3001 = vmatprep.subr.mxu0 0.0
    %3002 = vmatpush1.xpose.msra.mxu0 0.0
    %3003 = vmatprep.subr.mxu0 0.0
    %3004 = vmatpush1.xpose.msra.mxu0 0.0
    %3005 = vmatprep.subr.mxu0 0.0
    %3006 = vmatpush1.xpose.msra.mxu0 0.0
    %3007 = vmatprep.subr.mxu0 0.0
    %3008 = vmatpush1.xpose.msra.mxu0 0.0
    %3009 = vmatprep.subr.mxu0 0.0
    %3010 = vmatpush1.xpose.msra.mxu0 0.0
    %3011 = vmatprep.subr.mxu0 0.0
    %3012 = vmatpush1.xpose.msra.mxu0 0.0
    %3013 = vmatprep.subr.mxu0 0.0
    %3014 = vmatpush1.xpose.msra.mxu0 0.0
    %3015 = vmatprep.subr.mxu0 0.0
    %3016 = vmatpush1.xpose.msra.mxu0 0.0
    %3017 = vmatprep.subr.mxu0 0.0
    %3018 = vmatpush1.xpose.msra.mxu0 0.0
    %3019 = vmatprep.subr.mxu0 0.0
    %3020 = vmatpush1.xpose.msra.mxu0 0.0
    %3021 = vmatprep.subr.mxu0 0.0
    %3022 = vmatpush1.xpose.msra.mxu0 0.0
    %3023 = vmatprep.subr.mxu0 0.0
    %3024 = vmatpush1.xpose.msra.mxu0 0.0
    %3025 = vmatprep.subr.mxu0 0.0
    %3026 = vmatpush1.xpose.msra.mxu0 0.0
    %3027 = vmatprep.subr.mxu0 0.0
    %3028 = vmatpush1.xpose.msra.mxu0 0.0
    %3029 = vmatprep.subr.mxu0 0.0
    %3030 = vmatpush1.xpose.msra.mxu0 0.0
    %3031 = vmatprep.subr.mxu0 0.0
    %3032 = vmatpush1.xpose.msra.mxu0 0.0
    %3033 = vmatprep.subr.mxu0 0.0
    %3034 = vmatpush1.xpose.msra.mxu0 0.0
    %3035 = vmatprep.subr.mxu0 0.0
    %3036 = vmatpush1.xpose.msra.mxu0 0.0
    %3037 = vmatprep.subr.mxu0 0.0
    %3038 = vmatpush1.xpose.msra.mxu0 0.0
    %3039 = vmatprep.subr.mxu0 0.0
    %3040 = vmatpush1.xpose.msra.mxu0 0.0
    %3041 = vmatprep.subr.mxu0 0.0
    %3042 = vmatpush1.xpose.msra.mxu0 0.0
    %3043 = vmatprep.subr.mxu0 0.0
    %3044 = vmatpush1.xpose.msra.mxu0 0.0
    %3045 = vmatprep.subr.mxu0 0.0
    %3046 = vmatpush1.xpose.msra.mxu0 0.0
    %3047 = vmatprep.subr.mxu0 0.0
    %3048 = vmatpush1.xpose.msra.mxu0 0.0
    %3049 = vmatprep.subr.mxu0 0.0
    %3050 = vmatpush1.xpose.msra.mxu0 0.0
    %3051 = vmatprep.subr.mxu0 0.0
    %3052 = vmatpush1.xpose.msra.mxu0 0.0
    %3053 = vmatprep.subr.mxu0 0.0
    %3054 = vmatpush1.xpose.msra.mxu0 0.0
    %3055 = vmatprep.subr.mxu0 0.0
    %3056 = vmatpush1.xpose.msra.mxu0 0.0
    %3057 = vmatprep.subr.mxu0 0.0
    %3058 = vmatpush1.xpose.msra.mxu0 0.0
    %3059 = vmatprep.mubr.f32.mxu0 0.0
    %3060 = vmatmul.mubr.f32.gmra.mrb[0].mxu0 %v2991
    %v3061 = vpop.f32.mrb[0].mxu0
    %v3062 = vadd.f32 0.0, %v3061
    %v3063 = vpop.f32.mrb[0].mxu0
    %3064 = vdwg.mxu0
    %v3065 = vsel %vm1096, %v2984, -inf
    %3066 = vmax.xlane.f32.xlu0 %v3065
    %v3067 = vpop.xlane.xlu0 %3066
    %v3068 = vsel %vm1096, %v3062, -inf
    %3069 = vmax.xlane.f32.xlu0 %v3068
    %v3070 = vpop.xlane.xlu0 %3069
    %v3071 = vsub.f32 %v2984, %v3067
    %v3072 = vsub.f32 %v3062, %v3070
    %v3073 = vmul.f32 %v3071, 1.442695
    %v3074 = vpow.pop %v3073
    %v3075 = vmul.f32 %v3072, 1.442695
    %v3076 = vpow.pop %v3075
    %v3077 = vsel %vm1096, %v3074, 0.0
    %3078 = vadd.xlane.f32.xlu0 %v3077
    %v3079 = vpop.xlane.xlu0 %3078
    %v3080 = vsel %vm1096, %v3076, 0.0
    %3081 = vadd.xlane.f32.xlu0 %v3080
    %v3082 = vpop.xlane.xlu0 %3081
    %v3083 = vrcp.pop %v3079
    %v3084 = vrcp.pop %v3082
    %v3085 = vmul.f32 %v3074, %v3083
    %v3086 = vmul.f32 %v3076, %v3084
    %3087 = vrot.lane.b32.xlu0 %v937, 64
    %v3088 = vpop.permute.xlu0 %3087
    %v3091 = vsel %vm1096, %v3085, 0
    %3093 = vmatprep.subr.mxu0 0.0
    %3094 = vmatpush1.msra.mxu0 %v3088
    %3095 = vmatprep.subr.mxu0 0.0
    %3096 = vmatpush1.msra.mxu0 0.0
    %3097 = vmatprep.subr.mxu0 0.0
    %3098 = vmatpush1.msra.mxu0 0.0
    %3099 = vmatprep.subr.mxu0 0.0
    %3100 = vmatpush1.msra.mxu0 0.0
    %3101 = vmatprep.subr.mxu0 0.0
    %3102 = vmatpush1.msra.mxu0 0.0
    %3103 = vmatprep.subr.mxu0 0.0
    %3104 = vmatpush1.msra.mxu0 0.0
    %3105 = vmatprep.subr.mxu0 0.0
    %3106 = vmatpush1.msra.mxu0 0.0
    %3107 = vmatprep.subr.mxu0 0.0
    %3108 = vmatpush1.msra.mxu0 0.0
    %3109 = vmatprep.subr.mxu0 0.0
    %3110 = vmatpush1.msra.mxu0 0.0
    %3111 = vmatprep.subr.mxu0 0.0
    %3112 = vmatpush1.msra.mxu0 0.0
    %3113 = vmatprep.subr.mxu0 0.0
    %3114 = vmatpush1.msra.mxu0 0.0
    %3115 = vmatprep.subr.mxu0 0.0
    %3116 = vmatpush1.msra.mxu0 0.0
    %3117 = vmatprep.subr.mxu0 0.0
    %3118 = vmatpush1.msra.mxu0 0.0
    %3119 = vmatprep.subr.mxu0 0.0
    %3120 = vmatpush1.msra.mxu0 0.0
    %3121 = vmatprep.subr.mxu0 0.0
    %3122 = vmatpush1.msra.mxu0 0.0
    %3123 = vmatprep.subr.mxu0 0.0
    %3124 = vmatpush1.msra.mxu0 0.0
    %3125 = vmatprep.subr.mxu0 0.0
    %3126 = vmatpush1.msra.mxu0 0.0
    %3127 = vmatprep.subr.mxu0 0.0
    %3128 = vmatpush1.msra.mxu0 0.0
    %3129 = vmatprep.subr.mxu0 0.0
    %3130 = vmatpush1.msra.mxu0 0.0
    %3131 = vmatprep.subr.mxu0 0.0
    %3132 = vmatpush1.msra.mxu0 0.0
    %3133 = vmatprep.subr.mxu0 0.0
    %3134 = vmatpush1.msra.mxu0 0.0
    %3135 = vmatprep.subr.mxu0 0.0
    %3136 = vmatpush1.msra.mxu0 0.0
    %3137 = vmatprep.subr.mxu0 0.0
    %3138 = vmatpush1.msra.mxu0 0.0
    %3139 = vmatprep.subr.mxu0 0.0
    %3140 = vmatpush1.msra.mxu0 0.0
    %3141 = vmatprep.subr.mxu0 0.0
    %3142 = vmatpush1.msra.mxu0 0.0
    %3143 = vmatprep.subr.mxu0 0.0
    %3144 = vmatpush1.msra.mxu0 0.0
    %3145 = vmatprep.subr.mxu0 0.0
    %3146 = vmatpush1.msra.mxu0 0.0
    %3147 = vmatprep.subr.mxu0 0.0
    %3148 = vmatpush1.msra.mxu0 0.0
    %3149 = vmatprep.subr.mxu0 0.0
    %3150 = vmatpush1.msra.mxu0 0.0
    %3151 = vmatprep.subr.mxu0 0.0
    %3152 = vmatpush1.msra.mxu0 0.0
    %3153 = vmatprep.subr.mxu0 0.0
    %3154 = vmatpush1.msra.mxu0 0.0
    %3155 = vmatprep.subr.mxu0 0.0
    %3156 = vmatpush1.msra.mxu0 0.0
    %3157 = vmatprep.mubr.f32.mxu0 0.0
    %3158 = vmatmul.mubr.f32.gmra.mrb[0].mxu0 %v3091
    %v3159 = vpop.f32.mrb[0].mxu0
    %v3160 = vadd.f32 0.0, %v3159
    %v3161 = vpop.f32.mrb[0].mxu0
    %3162 = vdwg.mxu0
    %3163 = vrot.lane.b32.xlu0 %v941, 64
    %v3164 = vpop.permute.xlu0 %3163
    %v3167 = vsel %vm1096, %v3086, 0
    %3169 = vmatprep.subr.mxu0 0.0
    %3170 = vmatpush1.msra.mxu0 %v3164
    %3171 = vmatprep.subr.mxu0 0.0
    %3172 = vmatpush1.msra.mxu0 0.0
    %3173 = vmatprep.subr.mxu0 0.0
    %3174 = vmatpush1.msra.mxu0 0.0
    %3175 = vmatprep.subr.mxu0 0.0
    %3176 = vmatpush1.msra.mxu0 0.0
    %3177 = vmatprep.subr.mxu0 0.0
    %3178 = vmatpush1.msra.mxu0 0.0
    %3179 = vmatprep.subr.mxu0 0.0
    %3180 = vmatpush1.msra.mxu0 0.0
    %3181 = vmatprep.subr.mxu0 0.0
    %3182 = vmatpush1.msra.mxu0 0.0
    %3183 = vmatprep.subr.mxu0 0.0
    %3184 = vmatpush1.msra.mxu0 0.0
    %3185 = vmatprep.subr.mxu0 0.0
    %3186 = vmatpush1.msra.mxu0 0.0
    %3187 = vmatprep.subr.mxu0 0.0
    %3188 = vmatpush1.msra.mxu0 0.0
    %3189 = vmatprep.subr.mxu0 0.0
    %3190 = vmatpush1.msra.mxu0 0.0
    %3191 = vmatprep.subr.mxu0 0.0
    %3192 = vmatpush1.msra.mxu0 0.0
    %3193 = vmatprep.subr.mxu0 0.0
    %3194 = vmatpush1.msra.mxu0 0.0
    %3195 = vmatprep.subr.mxu0 0.0
    %3196 = vmatpush1.msra.mxu0 0.0
    %3197 = vmatprep.subr.mxu0 0.0
    %3198 = vmatpush1.msra.mxu0 0.0
    %3199 = vmatprep.subr.mxu0 0.0
    %3200 = vmatpush1.msra.mxu0 0.0
    %3201 = vmatprep.subr.mxu0 0.0
    %3202 = vmatpush1.msra.mxu0 0.0
    %3203 = vmatprep.subr.mxu0 0.0
    %3204 = vmatpush1.msra.mxu0 0.0
    %3205 = vmatprep.subr.mxu0 0.0
    %3206 = vmatpush1.msra.mxu0 0.0
    %3207 = vmatprep.subr.mxu0 0.0
    %3208 = vmatpush1.msra.mxu0 0.0
    %3209 = vmatprep.subr.mxu0 0.0
    %3210 = vmatpush1.msra.mxu0 0.0
    %3211 = vmatprep.subr.mxu0 0.0
    %3212 = vmatpush1.msra.mxu0 0.0
    %3213 = vmatprep.subr.mxu0 0.0
    %3214 = vmatpush1.msra.mxu0 0.0
    %3215 = vmatprep.subr.mxu0 0.0
    %3216 = vmatpush1.msra.mxu0 0.0
    %3217 = vmatprep.subr.mxu0 0.0
    %3218 = vmatpush1.msra.mxu0 0.0
    %3219 = vmatprep.subr.mxu0 0.0
    %3220 = vmatpush1.msra.mxu0 0.0
    %3221 = vmatprep.subr.mxu0 0.0
    %3222 = vmatpush1.msra.mxu0 0.0
    %3223 = vmatprep.subr.mxu0 0.0
    %3224 = vmatpush1.msra.mxu0 0.0
    %3225 = vmatprep.subr.mxu0 0.0
    %3226 = vmatpush1.msra.mxu0 0.0
    %3227 = vmatprep.subr.mxu0 0.0
    %3228 = vmatpush1.msra.mxu0 0.0
    %3229 = vmatprep.subr.mxu0 0.0
    %3230 = vmatpush1.msra.mxu0 0.0
    %3231 = vmatprep.subr.mxu0 0.0
    %3232 = vmatpush1.msra.mxu0 0.0
    %3233 = vmatprep.mubr.f32.mxu0 0.0
    %3234 = vmatmul.mubr.f32.gmra.mrb[0].mxu0 %v3167
    %v3235 = vpop.f32.mrb[0].mxu0
    %v3236 = vadd.f32 0.0, %v3235
    %v3237 = vpop.f32.mrb[0].mxu0
    %3238 = vdwg.mxu0
    %3239 = vrot.lane.b32.xlu0 %v512, 32
    %v3240 = vpop.permute.xlu0 %3239
    %3241 = vrot.lane.b32.xlu0 %v723, 32
    %v3242 = vpop.permute.xlu0 %3241
    %v3243 = vsel %vm943, %v3240, 0
    %v3245 = vsel %vm943, %v3242, 0
    %3247 = vmatprep.subr.mxu0 0.0
    %3248 = vmatpush1.xpose.msra.mxu0 %v3245
    %3249 = vmatprep.subr.mxu0 0.0
    %3250 = vmatpush1.xpose.msra.mxu0 0.0
    %3251 = vmatprep.subr.mxu0 0.0
    %3252 = vmatpush1.xpose.msra.mxu0 0.0
    %3253 = vmatprep.subr.mxu0 0.0
    %3254 = vmatpush1.xpose.msra.mxu0 0.0
    %3255 = vmatprep.subr.mxu0 0.0
    %3256 = vmatpush1.xpose.msra.mxu0 0.0
    %3257 = vmatprep.subr.mxu0 0.0
    %3258 = vmatpush1.xpose.msra.mxu0 0.0
    %3259 = vmatprep.subr.mxu0 0.0
    %3260 = vmatpush1.xpose.msra.mxu0 0.0
    %3261 = vmatprep.subr.mxu0 0.0
    %3262 = vmatpush1.xpose.msra.mxu0 0.0
    %3263 = vmatprep.subr.mxu0 0.0
    %3264 = vmatpush1.xpose.msra.mxu0 0.0
    %3265 = vmatprep.subr.mxu0 0.0
    %3266 = vmatpush1.xpose.msra.mxu0 0.0
    %3267 = vmatprep.subr.mxu0 0.0
    %3268 = vmatpush1.xpose.msra.mxu0 0.0
    %3269 = vmatprep.subr.mxu0 0.0
    %3270 = vmatpush1.xpose.msra.mxu0 0.0
    %3271 = vmatprep.subr.mxu0 0.0
    %3272 = vmatpush1.xpose.msra.mxu0 0.0
    %3273 = vmatprep.subr.mxu0 0.0
    %3274 = vmatpush1.xpose.msra.mxu0 0.0
    %3275 = vmatprep.subr.mxu0 0.0
    %3276 = vmatpush1.xpose.msra.mxu0 0.0
    %3277 = vmatprep.subr.mxu0 0.0
    %3278 = vmatpush1.xpose.msra.mxu0 0.0
    %3279 = vmatprep.subr.mxu0 0.0
    %3280 = vmatpush1.xpose.msra.mxu0 0.0
    %3281 = vmatprep.subr.mxu0 0.0
    %3282 = vmatpush1.xpose.msra.mxu0 0.0
    %3283 = vmatprep.subr.mxu0 0.0
    %3284 = vmatpush1.xpose.msra.mxu0 0.0
    %3285 = vmatprep.subr.mxu0 0.0
    %3286 = vmatpush1.xpose.msra.mxu0 0.0
    %3287 = vmatprep.subr.mxu0 0.0
    %3288 = vmatpush1.xpose.msra.mxu0 0.0
    %3289 = vmatprep.subr.mxu0 0.0
    %3290 = vmatpush1.xpose.msra.mxu0 0.0
    %3291 = vmatprep.subr.mxu0 0.0
    %3292 = vmatpush1.xpose.msra.mxu0 0.0
    %3293 = vmatprep.subr.mxu0 0.0
    %3294 = vmatpush1.xpose.msra.mxu0 0.0
    %3295 = vmatprep.subr.mxu0 0.0
    %3296 = vmatpush1.xpose.msra.mxu0 0.0
    %3297 = vmatprep.subr.mxu0 0.0
    %3298 = vmatpush1.xpose.msra.mxu0 0.0
    %3299 = vmatprep.subr.mxu0 0.0
    %3300 = vmatpush1.xpose.msra.mxu0 0.0
    %3301 = vmatprep.subr.mxu0 0.0
    %3302 = vmatpush1.xpose.msra.mxu0 0.0
    %3303 = vmatprep.subr.mxu0 0.0
    %3304 = vmatpush1.xpose.msra.mxu0 0.0
    %3305 = vmatprep.subr.mxu0 0.0
    %3306 = vmatpush1.xpose.msra.mxu0 0.0
    %3307 = vmatprep.subr.mxu0 0.0
    %3308 = vmatpush1.xpose.msra.mxu0 0.0
    %3309 = vmatprep.subr.mxu0 0.0
    %3310 = vmatpush1.xpose.msra.mxu0 0.0
    %3311 = vmatprep.mubr.f32.mxu0 0.0
    %3312 = vmatmul.mubr.f32.gmra.mrb[0].mxu0 %v3243
    %v3313 = vpop.f32.mrb[0].mxu0
    %v3314 = vadd.f32 0.0, %v3313
    %v3315 = vpop.f32.mrb[0].mxu0
    %3316 = vdwg.mxu0
    %3317 = vrot.lane.b32.xlu0 %v514, 32
    %v3318 = vpop.permute.xlu0 %3317
    %3319 = vrot.lane.b32.xlu0 %v727, 32
    %v3320 = vpop.permute.xlu0 %3319
    %v3321 = vsel %vm943, %v3318, 0
    %v3323 = vsel %vm943, %v3320, 0
    %3325 = vmatprep.subr.mxu0 0.0
    %3326 = vmatpush1.xpose.msra.mxu0 %v3323
    %3327 = vmatprep.subr.mxu0 0.0
    %3328 = vmatpush1.xpose.msra.mxu0 0.0
    %3329 = vmatprep.subr.mxu0 0.0
    %3330 = vmatpush1.xpose.msra.mxu0 0.0
    %3331 = vmatprep.subr.mxu0 0.0
    %3332 = vmatpush1.xpose.msra.mxu0 0.0
    %3333 = vmatprep.subr.mxu0 0.0
    %3334 = vmatpush1.xpose.msra.mxu0 0.0
    %3335 = vmatprep.subr.mxu0 0.0
    %3336 = vmatpush1.xpose.msra.mxu0 0.0
    %3337 = vmatprep.subr.mxu0 0.0
    %3338 = vmatpush1.xpose.msra.mxu0 0.0
    %3339 = vmatprep.subr.mxu0 0.0
    %3340 = vmatpush1.xpose.msra.mxu0 0.0
    %3341 = vmatprep.subr.mxu0 0.0
    %3342 = vmatpush1.xpose.msra.mxu0 0.0
    %3343 = vmatprep.subr.mxu0 0.0
    %3344 = vmatpush1.xpose.msra.mxu0 0.0
    %3345 = vmatprep.subr.mxu0 0.0
    %3346 = vmatpush1.xpose.msra.mxu0 0.0
    %3347 = vmatprep.subr.mxu0 0.0
    %3348 = vmatpush1.xpose.msra.mxu0 0.0
    %3349 = vmatprep.subr.mxu0 0.0
    %3350 = vmatpush1.xpose.msra.mxu0 0.0
    %3351 = vmatprep.subr.mxu0 0.0
    %3352 = vmatpush1.xpose.msra.mxu0 0.0
    %3353 = vmatprep.subr.mxu0 0.0
    %3354 = vmatpush1.xpose.msra.mxu0 0.0
    %3355 = vmatprep.subr.mxu0 0.0
    %3356 = vmatpush1.xpose.msra.mxu0 0.0
    %3357 = vmatprep.subr.mxu0 0.0
    %3358 = vmatpush1.xpose.msra.mxu0 0.0
    %3359 = vmatprep.subr.mxu0 0.0
    %3360 = vmatpush1.xpose.msra.mxu0 0.0
    %3361 = vmatprep.subr.mxu0 0.0
    %3362 = vmatpush1.xpose.msra.mxu0 0.0
    %3363 = vmatprep.subr.mxu0 0.0
    %3364 = vmatpush1.xpose.msra.mxu0 0.0
    %3365 = vmatprep.subr.mxu0 0.0
    %3366 = vmatpush1.xpose.msra.mxu0 0.0
    %3367 = vmatprep.subr.mxu0 0.0
    %3368 = vmatpush1.xpose.msra.mxu0 0.0
    %3369 = vmatprep.subr.mxu0 0.0
    %3370 = vmatpush1.xpose.msra.mxu0 0.0
    %3371 = vmatprep.subr.mxu0 0.0
    %3372 = vmatpush1.xpose.msra.mxu0 0.0
    %3373 = vmatprep.subr.mxu0 0.0
    %3374 = vmatpush1.xpose.msra.mxu0 0.0
    %3375 = vmatprep.subr.mxu0 0.0
    %3376 = vmatpush1.xpose.msra.mxu0 0.0
    %3377 = vmatprep.subr.mxu0 0.0
    %3378 = vmatpush1.xpose.msra.mxu0 0.0
    %3379 = vmatprep.subr.mxu0 0.0
    %3380 = vmatpush1.xpose.msra.mxu0 0.0
    %3381 = vmatprep.subr.mxu0 0.0
    %3382 = vmatpush1.xpose.msra.mxu0 0.0
    %3383 = vmatprep.subr.mxu0 0.0
    %3384 = vmatpush1.xpose.msra.mxu0 0.0
    %3385 = vmatprep.subr.mxu0 0.0
    %3386 = vmatpush1.xpose.msra.mxu0 0.0
    %3387 = vmatprep.subr.mxu0 0.0
    %3388 = vmatpush1.xpose.msra.mxu0 0.0
    %3389 = vmatprep.mubr.f32.mxu0 0.0
    %3390 = vmatmul.mubr.f32.gmra.mrb[0].mxu0 %v3321
    %v3391 = vpop.f32.mrb[0].mxu0
    %v3392 = vadd.f32 0.0, %v3391
    %v3393 = vpop.f32.mrb[0].mxu0
    %3394 = vdwg.mxu0
    %v3395 = vsel %vm1096, %v3314, -inf
    %3396 = vmax.xlane.f32.xlu0 %v3395
    %v3397 = vpop.xlane.xlu0 %3396
    %v3398 = vsel %vm1096, %v3392, -inf
    %3399 = vmax.xlane.f32.xlu0 %v3398
    %v3400 = vpop.xlane.xlu0 %3399
    %v3401 = vsub.f32 %v3314, %v3397
    %v3402 = vsub.f32 %v3392, %v3400
    %v3403 = vmul.f32 %v3401, 1.442695
    %v3404 = vpow.pop %v3403
    %v3405 = vmul.f32 %v3402, 1.442695
    %v3406 = vpow.pop %v3405
    %v3407 = vsel %vm1096, %v3404, 0.0
    %3408 = vadd.xlane.f32.xlu0 %v3407
    %v3409 = vpop.xlane.xlu0 %3408
    %v3410 = vsel %vm1096, %v3406, 0.0
    %3411 = vadd.xlane.f32.xlu0 %v3410
    %v3412 = vpop.xlane.xlu0 %3411
    %v3413 = vrcp.pop %v3409
    %v3414 = vrcp.pop %v3412
    %v3415 = vmul.f32 %v3404, %v3413
    %v3416 = vmul.f32 %v3406, %v3414
    %3417 = vrot.lane.b32.xlu0 %v937, 32
    %v3418 = vpop.permute.xlu0 %3417
    %v3421 = vsel %vm1096, %v3415, 0
    %3423 = vmatprep.subr.mxu0 0.0
    %3424 = vmatpush1.msra.mxu0 %v3418
    %3425 = vmatprep.subr.mxu0 0.0
    %3426 = vmatpush1.msra.mxu0 0.0
    %3427 = vmatprep.subr.mxu0 0.0
    %3428 = vmatpush1.msra.mxu0 0.0
    %3429 = vmatprep.subr.mxu0 0.0
    %3430 = vmatpush1.msra.mxu0 0.0
    %3431 = vmatprep.subr.mxu0 0.0
    %3432 = vmatpush1.msra.mxu0 0.0
    %3433 = vmatprep.subr.mxu0 0.0
    %3434 = vmatpush1.msra.mxu0 0.0
    %3435 = vmatprep.subr.mxu0 0.0
    %3436 = vmatpush1.msra.mxu0 0.0
    %3437 = vmatprep.subr.mxu0 0.0
    %3438 = vmatpush1.msra.mxu0 0.0
    %3439 = vmatprep.subr.mxu0 0.0
    %3440 = vmatpush1.msra.mxu0 0.0
    %3441 = vmatprep.subr.mxu0 0.0
    %3442 = vmatpush1.msra.mxu0 0.0
    %3443 = vmatprep.subr.mxu0 0.0
    %3444 = vmatpush1.msra.mxu0 0.0
    %3445 = vmatprep.subr.mxu0 0.0
    %3446 = vmatpush1.msra.mxu0 0.0
    %3447 = vmatprep.subr.mxu0 0.0
    %3448 = vmatpush1.msra.mxu0 0.0
    %3449 = vmatprep.subr.mxu0 0.0
    %3450 = vmatpush1.msra.mxu0 0.0
    %3451 = vmatprep.subr.mxu0 0.0
    %3452 = vmatpush1.msra.mxu0 0.0
    %3453 = vmatprep.subr.mxu0 0.0
    %3454 = vmatpush1.msra.mxu0 0.0
    %3455 = vmatprep.subr.mxu0 0.0
    %3456 = vmatpush1.msra.mxu0 0.0
    %3457 = vmatprep.subr.mxu0 0.0
    %3458 = vmatpush1.msra.mxu0 0.0
    %3459 = vmatprep.subr.mxu0 0.0
    %3460 = vmatpush1.msra.mxu0 0.0
    %3461 = vmatprep.subr.mxu0 0.0
    %3462 = vmatpush1.msra.mxu0 0.0
    %3463 = vmatprep.subr.mxu0 0.0
    %3464 = vmatpush1.msra.mxu0 0.0
    %3465 = vmatprep.subr.mxu0 0.0
    %3466 = vmatpush1.msra.mxu0 0.0
    %3467 = vmatprep.subr.mxu0 0.0
    %3468 = vmatpush1.msra.mxu0 0.0
    %3469 = vmatprep.subr.mxu0 0.0
    %3470 = vmatpush1.msra.mxu0 0.0
    %3471 = vmatprep.subr.mxu0 0.0
    %3472 = vmatpush1.msra.mxu0 0.0
    %3473 = vmatprep.subr.mxu0 0.0
    %3474 = vmatpush1.msra.mxu0 0.0
    %3475 = vmatprep.subr.mxu0 0.0
    %3476 = vmatpush1.msra.mxu0 0.0
    %3477 = vmatprep.subr.mxu0 0.0
    %3478 = vmatpush1.msra.mxu0 0.0
    %3479 = vmatprep.subr.mxu0 0.0
    %3480 = vmatpush1.msra.mxu0 0.0
    %3481 = vmatprep.subr.mxu0 0.0
    %3482 = vmatpush1.msra.mxu0 0.0
    %3483 = vmatprep.subr.mxu0 0.0
    %3484 = vmatpush1.msra.mxu0 0.0
    %3485 = vmatprep.subr.mxu0 0.0
    %3486 = vmatpush1.msra.mxu0 0.0
    %3487 = vmatprep.mubr.f32.mxu0 0.0
    %3488 = vmatmul.mubr.f32.gmra.mrb[0].mxu0 %v3421
    %v3489 = vpop.f32.mrb[0].mxu0
    %v3490 = vadd.f32 0.0, %v3489
    %v3491 = vpop.f32.mrb[0].mxu0
    %3492 = vdwg.mxu0
    %3493 = vrot.lane.b32.xlu0 %v941, 32
    %v3494 = vpop.permute.xlu0 %3493
    %v3497 = vsel %vm1096, %v3416, 0
    %3499 = vmatprep.subr.mxu0 0.0
    %3500 = vmatpush1.msra.mxu0 %v3494
    %3501 = vmatprep.subr.mxu0 0.0
    %3502 = vmatpush1.msra.mxu0 0.0
    %3503 = vmatprep.subr.mxu0 0.0
    %3504 = vmatpush1.msra.mxu0 0.0
    %3505 = vmatprep.subr.mxu0 0.0
    %3506 = vmatpush1.msra.mxu0 0.0
    %3507 = vmatprep.subr.mxu0 0.0
    %3508 = vmatpush1.msra.mxu0 0.0
    %3509 = vmatprep.subr.mxu0 0.0
    %3510 = vmatpush1.msra.mxu0 0.0
    %3511 = vmatprep.subr.mxu0 0.0
    %3512 = vmatpush1.msra.mxu0 0.0
    %3513 = vmatprep.subr.mxu0 0.0
    %3514 = vmatpush1.msra.mxu0 0.0
    %3515 = vmatprep.subr.mxu0 0.0
    %3516 = vmatpush1.msra.mxu0 0.0
    %3517 = vmatprep.subr.mxu0 0.0
    %3518 = vmatpush1.msra.mxu0 0.0
    %3519 = vmatprep.subr.mxu0 0.0
    %3520 = vmatpush1.msra.mxu0 0.0
    %3521 = vmatprep.subr.mxu0 0.0
    %3522 = vmatpush1.msra.mxu0 0.0
    %3523 = vmatprep.subr.mxu0 0.0
    %3524 = vmatpush1.msra.mxu0 0.0
    %3525 = vmatprep.subr.mxu0 0.0
    %3526 = vmatpush1.msra.mxu0 0.0
    %3527 = vmatprep.subr.mxu0 0.0
    %3528 = vmatpush1.msra.mxu0 0.0
    %3529 = vmatprep.subr.mxu0 0.0
    %3530 = vmatpush1.msra.mxu0 0.0
    %3531 = vmatprep.subr.mxu0 0.0
    %3532 = vmatpush1.msra.mxu0 0.0
    %3533 = vmatprep.subr.mxu0 0.0
    %3534 = vmatpush1.msra.mxu0 0.0
    %3535 = vmatprep.subr.mxu0 0.0
    %3536 = vmatpush1.msra.mxu0 0.0
    %3537 = vmatprep.subr.mxu0 0.0
    %3538 = vmatpush1.msra.mxu0 0.0
    %3539 = vmatprep.subr.mxu0 0.0
    %3540 = vmatpush1.msra.mxu0 0.0
    %3541 = vmatprep.subr.mxu0 0.0
    %3542 = vmatpush1.msra.mxu0 0.0
    %3543 = vmatprep.subr.mxu0 0.0
    %3544 = vmatpush1.msra.mxu0 0.0
    %3545 = vmatprep.subr.mxu0 0.0
    %3546 = vmatpush1.msra.mxu0 0.0
    %3547 = vmatprep.subr.mxu0 0.0
    %3548 = vmatpush1.msra.mxu0 0.0
    %3549 = vmatprep.subr.mxu0 0.0
    %3550 = vmatpush1.msra.mxu0 0.0
    %3551 = vmatprep.subr.mxu0 0.0
    %3552 = vmatpush1.msra.mxu0 0.0
    %3553 = vmatprep.subr.mxu0 0.0
    %3554 = vmatpush1.msra.mxu0 0.0
    %3555 = vmatprep.subr.mxu0 0.0
    %3556 = vmatpush1.msra.mxu0 0.0
    %3557 = vmatprep.subr.mxu0 0.0
    %3558 = vmatpush1.msra.mxu0 0.0
    %3559 = vmatprep.subr.mxu0 0.0
    %3560 = vmatpush1.msra.mxu0 0.0
    %3561 = vmatprep.subr.mxu0 0.0
    %3562 = vmatpush1.msra.mxu0 0.0
    %3563 = vmatprep.mubr.f32.mxu0 0.0
    %3564 = vmatmul.mubr.f32.gmra.mrb[0].mxu0 %v3497
    %v3565 = vpop.f32.mrb[0].mxu0
    %v3566 = vadd.f32 0.0, %v3565
    %v3567 = vpop.f32.mrb[0].mxu0
    %3568 = vdwg.mxu0
    %3571 = vrot.lane.b32.xlu0 %v1517, 32
    %v3572 = vpop.permute.xlu0 %3571
    %3573 = vrot.lane.b32.xlu0 %v1594, 32
    %v3574 = vpop.permute.xlu0 %3573
    %3579 = vrot.lane.b32.xlu0 %v1848, 64
    %v3580 = vpop.permute.xlu0 %3579
    %3581 = vrot.lane.b32.xlu0 %v1924, 64
    %v3582 = vpop.permute.xlu0 %3581
    %3587 = vrot.lane.b32.xlu0 %v2178, 96
    %v3588 = vpop.permute.xlu0 %3587
    %3589 = vrot.lane.b32.xlu0 %v2254, 96
    %v3590 = vpop.permute.xlu0 %3589
    %3595 = vrot.lane.b32.xlu0 %v2829, 32
    %v3596 = vpop.permute.xlu0 %3595
    %3597 = vrot.lane.b32.xlu0 %v2906, 32
    %v3598 = vpop.permute.xlu0 %3597
    %3603 = vrot.lane.b32.xlu0 %v3160, 64
    %v3604 = vpop.permute.xlu0 %3603
    %3605 = vrot.lane.b32.xlu0 %v3236, 64
    %v3606 = vpop.permute.xlu0 %3605
    %3611 = vrot.lane.b32.xlu0 %v3490, 96
    %v3612 = vpop.permute.xlu0 %3611
    %3613 = vrot.lane.b32.xlu0 %v3566, 96
    %v3614 = vpop.permute.xlu0 %3613
    %v3617 = vsel %vm943, %v1189, %v3572
    %v3618 = vsel %vm943, %v1262, %v3574
    %vm3619 = vcmask 523264
    %v3620 = vsel %vm3619, %v3617, %v3580
    %v3621 = vsel %vm3619, %v3618, %v3582
    %vm3622 = vcmask 785408
    %v3623 = vsel %vm3622, %v3620, %v3588
    %v3624 = vsel %vm3622, %v3621, %v3590
    %v3625 = vsel %vm943, %v2501, %v3596
    %v3626 = vsel %vm943, %v2574, %v3598
    %v3627 = vsel %vm3619, %v3625, %v3604
    %v3628 = vsel %vm3619, %v3626, %v3606
    %v3629 = vsel %vm3622, %v3627, %v3612
    %v3630 = vsel %vm3622, %v3628, %v3614
    %v3631 = vpack.c.bf16 %v3624, %v3623
    %v3632 = vpack.c.bf16 %v3630, %v3629
    %v3634 = vlaneseq
    %v3635 = vshrl.u32 %v3634, 7
    %v3636 = vsub.s32 0, %v3635
    %v3637 = vrot.slane %v290, %v3636
    %v3638 = vlaneseq
    %v3639 = vshrl.u32 %v3638, 7
    %v3640 = vsub.s32 1, %v3639
    %v3641 = vrot.slane %v290, %v3640
    %v3676 = vunpack.c.l.b16 %v258
    %v3677 = vunpack.c.h.b16 %v258
    %v3678 = vunpack.c.l.b16 %v259
    %v3679 = vunpack.c.h.b16 %v259
    %v3680 = vunpack.c.l.b16 %v260
    %v3681 = vunpack.c.h.b16 %v260
    %v3682 = vunpack.c.l.b16 %v261
    %v3683 = vunpack.c.h.b16 %v261
    %v3684 = vunpack.c.l.b16 %v262
    %v3685 = vunpack.c.h.b16 %v262
    %v3686 = vunpack.c.l.b16 %v263
    %v3687 = vunpack.c.h.b16 %v263
    %v3688 = vunpack.c.l.b16 %v264
    %v3689 = vunpack.c.h.b16 %v264
    %v3690 = vunpack.c.l.b16 %v265
    %v3691 = vunpack.c.h.b16 %v265
    %v3692 = vunpack.c.l.b16 %v266
    %v3693 = vunpack.c.h.b16 %v266
    %v3694 = vunpack.c.l.b16 %v267
    %v3695 = vunpack.c.h.b16 %v267
    %v3696 = vunpack.c.l.b16 %v268
    %v3697 = vunpack.c.h.b16 %v268
    %v3698 = vunpack.c.l.b16 %v269
    %v3699 = vunpack.c.h.b16 %v269
    %v3700 = vunpack.c.l.b16 %v270
    %v3701 = vunpack.c.h.b16 %v270
    %v3702 = vunpack.c.l.b16 %v271
    %v3703 = vunpack.c.h.b16 %v271
    %v3704 = vunpack.c.l.b16 %v272
    %v3705 = vunpack.c.h.b16 %v272
    %v3706 = vunpack.c.l.b16 %v273
    %v3707 = vunpack.c.h.b16 %v273
    %v3708 = vunpack.c.l.b16 %v274
    %v3709 = vunpack.c.h.b16 %v274
    %v3710 = vunpack.c.l.b16 %v275
    %v3711 = vunpack.c.h.b16 %v275
    %v3712 = vunpack.c.l.b16 %v276
    %v3713 = vunpack.c.h.b16 %v276
    %v3714 = vunpack.c.l.b16 %v277
    %v3715 = vunpack.c.h.b16 %v277
    %v3716 = vunpack.c.l.b16 %v278
    %v3717 = vunpack.c.h.b16 %v278
    %v3718 = vunpack.c.l.b16 %v279
    %v3719 = vunpack.c.h.b16 %v279
    %v3720 = vunpack.c.l.b16 %v280
    %v3721 = vunpack.c.h.b16 %v280
    %v3722 = vunpack.c.l.b16 %v281
    %v3723 = vunpack.c.h.b16 %v281
    %v3724 = vunpack.c.l.b16 %v282
    %v3725 = vunpack.c.h.b16 %v282
    %v3726 = vunpack.c.l.b16 %v283
    %v3727 = vunpack.c.h.b16 %v283
    %v3728 = vunpack.c.l.b16 %v284
    %v3729 = vunpack.c.h.b16 %v284
    %v3730 = vunpack.c.l.b16 %v285
    %v3731 = vunpack.c.h.b16 %v285
    %v3732 = vunpack.c.l.b16 %v286
    %v3733 = vunpack.c.h.b16 %v286
    %v3734 = vunpack.c.l.b16 %v287
    %v3735 = vunpack.c.h.b16 %v287
    %v3736 = vunpack.c.l.b16 %v288
    %v3737 = vunpack.c.h.b16 %v288
    %v3738 = vunpack.c.l.b16 %v289
    %v3739 = vunpack.c.h.b16 %v289
    %v3740 = vpack.c.b16 %v3678, %v3676
    %v3741 = vpack.c.b16 %v3679, %v3677
    %v3742 = vpack.c.b16 %v3682, %v3680
    %v3743 = vpack.c.b16 %v3683, %v3681
    %v3744 = vpack.c.b16 %v3686, %v3684
    %v3745 = vpack.c.b16 %v3687, %v3685
    %v3746 = vpack.c.b16 %v3690, %v3688
    %v3747 = vpack.c.b16 %v3691, %v3689
    %v3748 = vpack.c.b16 %v3694, %v3692
    %v3749 = vpack.c.b16 %v3695, %v3693
    %v3750 = vpack.c.b16 %v3698, %v3696
    %v3751 = vpack.c.b16 %v3699, %v3697
    %v3752 = vpack.c.b16 %v3702, %v3700
    %v3753 = vpack.c.b16 %v3703, %v3701
    %v3754 = vpack.c.b16 %v3706, %v3704
    %v3755 = vpack.c.b16 %v3707, %v3705
    %v3756 = vpack.c.b16 %v3710, %v3708
    %v3757 = vpack.c.b16 %v3711, %v3709
    %v3758 = vpack.c.b16 %v3714, %v3712
    %v3759 = vpack.c.b16 %v3715, %v3713
    %v3760 = vpack.c.b16 %v3718, %v3716
    %v3761 = vpack.c.b16 %v3719, %v3717
    %v3762 = vpack.c.b16 %v3722, %v3720
    %v3763 = vpack.c.b16 %v3723, %v3721
    %v3764 = vpack.c.b16 %v3726, %v3724
    %v3765 = vpack.c.b16 %v3727, %v3725
    %v3766 = vpack.c.b16 %v3730, %v3728
    %v3767 = vpack.c.b16 %v3731, %v3729
    %v3768 = vpack.c.b16 %v3734, %v3732
    %v3769 = vpack.c.b16 %v3735, %v3733
    %v3770 = vpack.c.b16 %v3738, %v3736
    %v3771 = vpack.c.b16 %v3739, %v3737
    %3804 = vmatprep.subr.bf16.mxu0 %v3741
    %3805 = vmatpush1.bf16.msra.mxu0 %v3740
    %3806 = vmatprep.subr.bf16.mxu0 %v3743
    %3807 = vmatpush1.bf16.msra.mxu0 %v3742
    %3808 = vmatprep.subr.bf16.mxu0 %v3745
    %3809 = vmatpush1.bf16.msra.mxu0 %v3744
    %3810 = vmatprep.subr.bf16.mxu0 %v3747
    %3811 = vmatpush1.bf16.msra.mxu0 %v3746
    %3812 = vmatprep.subr.bf16.mxu0 %v3749
    %3813 = vmatpush1.bf16.msra.mxu0 %v3748
    %3814 = vmatprep.subr.bf16.mxu0 %v3751
    %3815 = vmatpush1.bf16.msra.mxu0 %v3750
    %3816 = vmatprep.subr.bf16.mxu0 %v3753
    %3817 = vmatpush1.bf16.msra.mxu0 %v3752
    %3818 = vmatprep.subr.bf16.mxu0 %v3755
    %3819 = vmatpush1.bf16.msra.mxu0 %v3754
    %3820 = vmatprep.subr.bf16.mxu0 %v3757
    %3821 = vmatpush1.bf16.msra.mxu0 %v3756
    %3822 = vmatprep.subr.bf16.mxu0 %v3759
    %3823 = vmatpush1.bf16.msra.mxu0 %v3758
    %3824 = vmatprep.subr.bf16.mxu0 %v3761
    %3825 = vmatpush1.bf16.msra.mxu0 %v3760
    %3826 = vmatprep.subr.bf16.mxu0 %v3763
    %3827 = vmatpush1.bf16.msra.mxu0 %v3762
    %3828 = vmatprep.subr.bf16.mxu0 %v3765
    %3829 = vmatpush1.bf16.msra.mxu0 %v3764
    %3830 = vmatprep.subr.bf16.mxu0 %v3767
    %3831 = vmatpush1.bf16.msra.mxu0 %v3766
    %3832 = vmatprep.subr.bf16.mxu0 %v3769
    %3833 = vmatpush1.bf16.msra.mxu0 %v3768
    %3834 = vmatprep.subr.bf16.mxu0 %v3771
    %3835 = vmatpush1.bf16.msra.mxu0 %v3770
    %3836 = vmatprep.mubr.bf16.mxu0 %v3632
    %3837 = vmatmul.mubr.bf16.gmra.mrb[0].mxu0 %v3631
    %v3838 = vpop.f32.mrb[0].mxu0
    %v3839 = vadd.f32 %v3637, %v3838
    %v3840 = vpop.f32.mrb[0].mxu0
    %v3841 = vadd.f32 %v3641, %v3840
    %v3842 = vpop.f32.mrb[0].mxu0
    %v3843 = vadd.f32 %v3637, %v3842
    %v3844 = vpop.f32.mrb[0].mxu0
    %v3845 = vadd.f32 %v3641, %v3844
    %3846 = vdwg.mxu0
    %v3847 = vadd.f32 %v3839, %v151
    %v3848 = vadd.f32 %v3841, %v152
    %v3849 = vadd.f32 %v3843, %v153
    %v3850 = vadd.f32 %v3845, %v154
    %v3851 = vadd.f32 %v3847, %v3848
    %3852 = vadd.xlane.f32.xlu0 %v3851
    %v3853 = vpop.xlane.xlu0 %3852
    %v3854 = vadd.f32 %v3849, %v3850
    %3855 = vadd.xlane.f32.xlu0 %v3854
    %v3856 = vpop.xlane.xlu0 %3855
    %v3857 = vrcp.pop 256.0
    %v3858 = vmul.f32 %v3853, %v3857
    %v3859 = vmul.f32 %v3856, %v3857
    %v3860 = vsub.f32 %v3847, %v3858
    %v3861 = vsub.f32 %v3848, %v3858
    %v3862 = vsub.f32 %v3849, %v3859
    %v3863 = vsub.f32 %v3850, %v3859
    %v3864 = vmul.f32 %v3860, %v3860
    %v3865 = vmul.f32 %v3861, %v3861
    %v3866 = vmul.f32 %v3862, %v3862
    %v3867 = vmul.f32 %v3863, %v3863
    %v3868 = vadd.f32 %v3864, %v3865
    %3869 = vadd.xlane.f32.xlu0 %v3868
    %v3870 = vpop.xlane.xlu0 %3869
    %v3871 = vadd.f32 %v3866, %v3867
    %3872 = vadd.xlane.f32.xlu0 %v3871
    %v3873 = vpop.xlane.xlu0 %3872
    %v3874 = vmul.f32 %v3870, %v3857
    %v3875 = vmul.f32 %v3873, %v3857
    %v3876 = vadd.f32 %v3874, 1e-05
    %v3877 = vadd.f32 %v3875, 1e-05
    %v3878 = vrsqrt.pop %v3876
    %v3879 = vrsqrt.pop %v3877
    %v3880 = vmul.f32 %v3860, %v3878
    %v3881 = vmul.f32 %v3861, %v3878
    %v3882 = vmul.f32 %v3862, %v3879
    %v3883 = vmul.f32 %v3863, %v3879
    %v3885 = vlaneseq
    %v3886 = vshrl.u32 %v3885, 7
    %v3887 = vsub.s32 0, %v3886
    %v3888 = vrot.slane %v291, %v3887
    %v3889 = vlaneseq
    %v3890 = vshrl.u32 %v3889, 7
    %v3891 = vsub.s32 1, %v3890
    %v3892 = vrot.slane %v291, %v3891
    %v3895 = vmul.f32 %v3880, %v3888
    %v3896 = vmul.f32 %v3881, %v3892
    %v3897 = vmul.f32 %v3882, %v3888
    %v3898 = vmul.f32 %v3883, %v3892
    %v3900 = vlaneseq
    %v3901 = vshrl.u32 %v3900, 7
    %v3902 = vsub.s32 0, %v3901
    %v3903 = vrot.slane %v292, %v3902
    %v3904 = vlaneseq
    %v3905 = vshrl.u32 %v3904, 7
    %v3906 = vsub.s32 1, %v3905
    %v3907 = vrot.slane %v292, %v3906
    %v3910 = vadd.f32 %v3895, %v3903
    %v3911 = vadd.f32 %v3896, %v3907
    %v3912 = vadd.f32 %v3897, %v3903
    %v3913 = vadd.f32 %v3898, %v3907
    %v3914 = vpack.c.bf16 %v3912, %v3910
    %v3915 = vpack.c.bf16 %v3913, %v3911
    %3916 = vmatprep.subr.bf16.mxu0 %v405
    %3917 = vmatpush1.bf16.msra.mxu0 %v404
    %3918 = vmatprep.subr.bf16.mxu0 %v407
    %3919 = vmatpush1.bf16.msra.mxu0 %v406
    %3920 = vmatprep.subr.bf16.mxu0 %v409
    %3921 = vmatpush1.bf16.msra.mxu0 %v408
    %3922 = vmatprep.subr.bf16.mxu0 %v411
    %3923 = vmatpush1.bf16.msra.mxu0 %v410
    %3924 = vmatprep.subr.bf16.mxu0 %v413
    %3925 = vmatpush1.bf16.msra.mxu0 %v412
    %3926 = vmatprep.subr.bf16.mxu0 %v415
    %3927 = vmatpush1.bf16.msra.mxu0 %v414
    %3928 = vmatprep.subr.bf16.mxu0 %v417
    %3929 = vmatpush1.bf16.msra.mxu0 %v416
    %3930 = vmatprep.subr.bf16.mxu0 %v419
    %3931 = vmatpush1.bf16.msra.mxu0 %v418
    %3932 = vmatprep.subr.bf16.mxu0 %v421
    %3933 = vmatpush1.bf16.msra.mxu0 %v420
    %3934 = vmatprep.subr.bf16.mxu0 %v423
    %3935 = vmatpush1.bf16.msra.mxu0 %v422
    %3936 = vmatprep.subr.bf16.mxu0 %v425
    %3937 = vmatpush1.bf16.msra.mxu0 %v424
    %3938 = vmatprep.subr.bf16.mxu0 %v427
    %3939 = vmatpush1.bf16.msra.mxu0 %v426
    %3940 = vmatprep.subr.bf16.mxu0 %v429
    %3941 = vmatpush1.bf16.msra.mxu0 %v428
    %3942 = vmatprep.subr.bf16.mxu0 %v431
    %3943 = vmatpush1.bf16.msra.mxu0 %v430
    %3944 = vmatprep.subr.bf16.mxu0 %v433
    %3945 = vmatpush1.bf16.msra.mxu0 %v432
    %3946 = vmatprep.subr.bf16.mxu0 %v435
    %3947 = vmatpush1.bf16.msra.mxu0 %v434
    %3948 = vmatprep.mubr.bf16.mxu0 %v3915
    %3949 = vmatmul.mubr.bf16.gmra.mrb[0].mxu0 %v3914
    %v3950 = vpop.f32.mrb[0].mxu0
    %v3951 = vadd.f32 %v301, %v3950
    %v3952 = vpop.f32.mrb[0].mxu0
    %v3953 = vadd.f32 %v305, %v3952
    %v3954 = vpop.f32.mrb[0].mxu0
    %v3955 = vadd.f32 %v301, %v3954
    %v3956 = vpop.f32.mrb[0].mxu0
    %v3957 = vadd.f32 %v305, %v3956
    %3958 = vdwg.mxu0
    %v3959 = vmul.f32 %v3951, 0.17677669
    %v3960 = vmul.f32 %v3953, 0.17677669
    %v3961 = vmul.f32 %v3955, 0.17677669
    %v3962 = vmul.f32 %v3957, 0.17677669
    %3963 = vmatprep.subr.bf16.mxu0 %v623
    %3964 = vmatpush1.bf16.msra.mxu0 %v622
    %3965 = vmatprep.subr.bf16.mxu0 %v625
    %3966 = vmatpush1.bf16.msra.mxu0 %v624
    %3967 = vmatprep.subr.bf16.mxu0 %v627
    %3968 = vmatpush1.bf16.msra.mxu0 %v626
    %3969 = vmatprep.subr.bf16.mxu0 %v629
    %3970 = vmatpush1.bf16.msra.mxu0 %v628
    %3971 = vmatprep.subr.bf16.mxu0 %v631
    %3972 = vmatpush1.bf16.msra.mxu0 %v630
    %3973 = vmatprep.subr.bf16.mxu0 %v633
    %3974 = vmatpush1.bf16.msra.mxu0 %v632
    %3975 = vmatprep.subr.bf16.mxu0 %v635
    %3976 = vmatpush1.bf16.msra.mxu0 %v634
    %3977 = vmatprep.subr.bf16.mxu0 %v637
    %3978 = vmatpush1.bf16.msra.mxu0 %v636
    %3979 = vmatprep.subr.bf16.mxu0 %v639
    %3980 = vmatpush1.bf16.msra.mxu0 %v638
    %3981 = vmatprep.subr.bf16.mxu0 %v641
    %3982 = vmatpush1.bf16.msra.mxu0 %v640
    %3983 = vmatprep.subr.bf16.mxu0 %v643
    %3984 = vmatpush1.bf16.msra.mxu0 %v642
    %3985 = vmatprep.subr.bf16.mxu0 %v645
    %3986 = vmatpush1.bf16.msra.mxu0 %v644
    %3987 = vmatprep.subr.bf16.mxu0 %v647
    %3988 = vmatpush1.bf16.msra.mxu0 %v646
    %3989 = vmatprep.subr.bf16.mxu0 %v649
    %3990 = vmatpush1.bf16.msra.mxu0 %v648
    %3991 = vmatprep.subr.bf16.mxu0 %v651
    %3992 = vmatpush1.bf16.msra.mxu0 %v650
    %3993 = vmatprep.subr.bf16.mxu0 %v653
    %3994 = vmatpush1.bf16.msra.mxu0 %v652
    %3995 = vmatprep.mubr.bf16.mxu0 %v3915
    %3996 = vmatmul.mubr.bf16.gmra.mrb[0].mxu0 %v3914
    %v3997 = vpop.f32.mrb[0].mxu0
    %v3998 = vadd.f32 %v519, %v3997
    %v3999 = vpop.f32.mrb[0].mxu0
    %v4000 = vadd.f32 %v523, %v3999
    %v4001 = vpop.f32.mrb[0].mxu0
    %v4002 = vadd.f32 %v519, %v4001
    %v4003 = vpop.f32.mrb[0].mxu0
    %v4004 = vadd.f32 %v523, %v4003
    %4005 = vdwg.mxu0
    %4006 = vmatprep.subr.bf16.mxu0 %v837
    %4007 = vmatpush1.bf16.msra.mxu0 %v836
    %4008 = vmatprep.subr.bf16.mxu0 %v839
    %4009 = vmatpush1.bf16.msra.mxu0 %v838
    %4010 = vmatprep.subr.bf16.mxu0 %v841
    %4011 = vmatpush1.bf16.msra.mxu0 %v840
    %4012 = vmatprep.subr.bf16.mxu0 %v843
    %4013 = vmatpush1.bf16.msra.mxu0 %v842
    %4014 = vmatprep.subr.bf16.mxu0 %v845
    %4015 = vmatpush1.bf16.msra.mxu0 %v844
    %4016 = vmatprep.subr.bf16.mxu0 %v847
    %4017 = vmatpush1.bf16.msra.mxu0 %v846
    %4018 = vmatprep.subr.bf16.mxu0 %v849
    %4019 = vmatpush1.bf16.msra.mxu0 %v848
    %4020 = vmatprep.subr.bf16.mxu0 %v851
    %4021 = vmatpush1.bf16.msra.mxu0 %v850
    %4022 = vmatprep.subr.bf16.mxu0 %v853
    %4023 = vmatpush1.bf16.msra.mxu0 %v852
    %4024 = vmatprep.subr.bf16.mxu0 %v855
    %4025 = vmatpush1.bf16.msra.mxu0 %v854
    %4026 = vmatprep.subr.bf16.mxu0 %v857
    %4027 = vmatpush1.bf16.msra.mxu0 %v856
    %4028 = vmatprep.subr.bf16.mxu0 %v859
    %4029 = vmatpush1.bf16.msra.mxu0 %v858
    %4030 = vmatprep.subr.bf16.mxu0 %v861
    %4031 = vmatpush1.bf16.msra.mxu0 %v860
    %4032 = vmatprep.subr.bf16.mxu0 %v863
    %4033 = vmatpush1.bf16.msra.mxu0 %v862
    %4034 = vmatprep.subr.bf16.mxu0 %v865
    %4035 = vmatpush1.bf16.msra.mxu0 %v864
    %4036 = vmatprep.subr.bf16.mxu0 %v867
    %4037 = vmatpush1.bf16.msra.mxu0 %v866
    %4038 = vmatprep.mubr.bf16.mxu0 %v3915
    %4039 = vmatmul.mubr.bf16.gmra.mrb[0].mxu0 %v3914
    %v4040 = vpop.f32.mrb[0].mxu0
    %v4041 = vadd.f32 %v733, %v4040
    %v4042 = vpop.f32.mrb[0].mxu0
    %v4043 = vadd.f32 %v737, %v4042
    %v4044 = vpop.f32.mrb[0].mxu0
    %v4045 = vadd.f32 %v733, %v4044
    %v4046 = vpop.f32.mrb[0].mxu0
    %v4047 = vadd.f32 %v737, %v4046
    %4048 = vdwg.mxu0
    %v4050 = vsel %vm943, %v3959, 0
    %v4053 = vsel %vm943, %v3998, 0
    %4055 = vmatprep.subr.mxu0 0.0
    %4056 = vmatpush1.xpose.msra.mxu0 %v4053
    %4057 = vmatprep.subr.mxu0 0.0
    %4058 = vmatpush1.xpose.msra.mxu0 0.0
    %4059 = vmatprep.subr.mxu0 0.0
    %4060 = vmatpush1.xpose.msra.mxu0 0.0
    %4061 = vmatprep.subr.mxu0 0.0
    %4062 = vmatpush1.xpose.msra.mxu0 0.0
    %4063 = vmatprep.subr.mxu0 0.0
    %4064 = vmatpush1.xpose.msra.mxu0 0.0
    %4065 = vmatprep.subr.mxu0 0.0
    %4066 = vmatpush1.xpose.msra.mxu0 0.0
    %4067 = vmatprep.subr.mxu0 0.0
    %4068 = vmatpush1.xpose.msra.mxu0 0.0
    %4069 = vmatprep.subr.mxu0 0.0
    %4070 = vmatpush1.xpose.msra.mxu0 0.0
    %4071 = vmatprep.subr.mxu0 0.0
    %4072 = vmatpush1.xpose.msra.mxu0 0.0
    %4073 = vmatprep.subr.mxu0 0.0
    %4074 = vmatpush1.xpose.msra.mxu0 0.0
    %4075 = vmatprep.subr.mxu0 0.0
    %4076 = vmatpush1.xpose.msra.mxu0 0.0
    %4077 = vmatprep.subr.mxu0 0.0
    %4078 = vmatpush1.xpose.msra.mxu0 0.0
    %4079 = vmatprep.subr.mxu0 0.0
    %4080 = vmatpush1.xpose.msra.mxu0 0.0
    %4081 = vmatprep.subr.mxu0 0.0
    %4082 = vmatpush1.xpose.msra.mxu0 0.0
    %4083 = vmatprep.subr.mxu0 0.0
    %4084 = vmatpush1.xpose.msra.mxu0 0.0
    %4085 = vmatprep.subr.mxu0 0.0
    %4086 = vmatpush1.xpose.msra.mxu0 0.0
    %4087 = vmatprep.subr.mxu0 0.0
    %4088 = vmatpush1.xpose.msra.mxu0 0.0
    %4089 = vmatprep.subr.mxu0 0.0
    %4090 = vmatpush1.xpose.msra.mxu0 0.0
    %4091 = vmatprep.subr.mxu0 0.0
    %4092 = vmatpush1.xpose.msra.mxu0 0.0
    %4093 = vmatprep.subr.mxu0 0.0
    %4094 = vmatpush1.xpose.msra.mxu0 0.0
    %4095 = vmatprep.subr.mxu0 0.0
    %4096 = vmatpush1.xpose.msra.mxu0 0.0
    %4097 = vmatprep.subr.mxu0 0.0
    %4098 = vmatpush1.xpose.msra.mxu0 0.0
    %4099 = vmatprep.subr.mxu0 0.0
    %4100 = vmatpush1.xpose.msra.mxu0 0.0
    %4101 = vmatprep.subr.mxu0 0.0
    %4102 = vmatpush1.xpose.msra.mxu0 0.0
    %4103 = vmatprep.subr.mxu0 0.0
    %4104 = vmatpush1.xpose.msra.mxu0 0.0
    %4105 = vmatprep.subr.mxu0 0.0
    %4106 = vmatpush1.xpose.msra.mxu0 0.0
    %4107 = vmatprep.subr.mxu0 0.0
    %4108 = vmatpush1.xpose.msra.mxu0 0.0
    %4109 = vmatprep.subr.mxu0 0.0
    %4110 = vmatpush1.xpose.msra.mxu0 0.0
    %4111 = vmatprep.subr.mxu0 0.0
    %4112 = vmatpush1.xpose.msra.mxu0 0.0
    %4113 = vmatprep.subr.mxu0 0.0
    %4114 = vmatpush1.xpose.msra.mxu0 0.0
    %4115 = vmatprep.subr.mxu0 0.0
    %4116 = vmatpush1.xpose.msra.mxu0 0.0
    %4117 = vmatprep.subr.mxu0 0.0
    %4118 = vmatpush1.xpose.msra.mxu0 0.0
    %4119 = vmatprep.mubr.f32.mxu0 0.0
    %4120 = vmatmul.mubr.f32.gmra.mrb[0].mxu0 %v4050
    %v4121 = vpop.f32.mrb[0].mxu0
    %v4122 = vadd.f32 0.0, %v4121
    %v4123 = vpop.f32.mrb[0].mxu0
    %4124 = vdwg.mxu0
    %v4126 = vsel %vm943, %v3961, 0
    %v4129 = vsel %vm943, %v4002, 0
    %4131 = vmatprep.subr.mxu0 0.0
    %4132 = vmatpush1.xpose.msra.mxu0 %v4129
    %4133 = vmatprep.subr.mxu0 0.0
    %4134 = vmatpush1.xpose.msra.mxu0 0.0
    %4135 = vmatprep.subr.mxu0 0.0
    %4136 = vmatpush1.xpose.msra.mxu0 0.0
    %4137 = vmatprep.subr.mxu0 0.0
    %4138 = vmatpush1.xpose.msra.mxu0 0.0
    %4139 = vmatprep.subr.mxu0 0.0
    %4140 = vmatpush1.xpose.msra.mxu0 0.0
    %4141 = vmatprep.subr.mxu0 0.0
    %4142 = vmatpush1.xpose.msra.mxu0 0.0
    %4143 = vmatprep.subr.mxu0 0.0
    %4144 = vmatpush1.xpose.msra.mxu0 0.0
    %4145 = vmatprep.subr.mxu0 0.0
    %4146 = vmatpush1.xpose.msra.mxu0 0.0
    %4147 = vmatprep.subr.mxu0 0.0
    %4148 = vmatpush1.xpose.msra.mxu0 0.0
    %4149 = vmatprep.subr.mxu0 0.0
    %4150 = vmatpush1.xpose.msra.mxu0 0.0
    %4151 = vmatprep.subr.mxu0 0.0
    %4152 = vmatpush1.xpose.msra.mxu0 0.0
    %4153 = vmatprep.subr.mxu0 0.0
    %4154 = vmatpush1.xpose.msra.mxu0 0.0
    %4155 = vmatprep.subr.mxu0 0.0
    %4156 = vmatpush1.xpose.msra.mxu0 0.0
    %4157 = vmatprep.subr.mxu0 0.0
    %4158 = vmatpush1.xpose.msra.mxu0 0.0
    %4159 = vmatprep.subr.mxu0 0.0
    %4160 = vmatpush1.xpose.msra.mxu0 0.0
    %4161 = vmatprep.subr.mxu0 0.0
    %4162 = vmatpush1.xpose.msra.mxu0 0.0
    %4163 = vmatprep.subr.mxu0 0.0
    %4164 = vmatpush1.xpose.msra.mxu0 0.0
    %4165 = vmatprep.subr.mxu0 0.0
    %4166 = vmatpush1.xpose.msra.mxu0 0.0
    %4167 = vmatprep.subr.mxu0 0.0
    %4168 = vmatpush1.xpose.msra.mxu0 0.0
    %4169 = vmatprep.subr.mxu0 0.0
    %4170 = vmatpush1.xpose.msra.mxu0 0.0
    %4171 = vmatprep.subr.mxu0 0.0
    %4172 = vmatpush1.xpose.msra.mxu0 0.0
    %4173 = vmatprep.subr.mxu0 0.0
    %4174 = vmatpush1.xpose.msra.mxu0 0.0
    %4175 = vmatprep.subr.mxu0 0.0
    %4176 = vmatpush1.xpose.msra.mxu0 0.0
    %4177 = vmatprep.subr.mxu0 0.0
    %4178 = vmatpush1.xpose.msra.mxu0 0.0
    %4179 = vmatprep.subr.mxu0 0.0
    %4180 = vmatpush1.xpose.msra.mxu0 0.0
    %4181 = vmatprep.subr.mxu0 0.0
    %4182 = vmatpush1.xpose.msra.mxu0 0.0
    %4183 = vmatprep.subr.mxu0 0.0
    %4184 = vmatpush1.xpose.msra.mxu0 0.0
    %4185 = vmatprep.subr.mxu0 0.0
    %4186 = vmatpush1.xpose.msra.mxu0 0.0
    %4187 = vmatprep.subr.mxu0 0.0
    %4188 = vmatpush1.xpose.msra.mxu0 0.0
    %4189 = vmatprep.subr.mxu0 0.0
    %4190 = vmatpush1.xpose.msra.mxu0 0.0
    %4191 = vmatprep.subr.mxu0 0.0
    %4192 = vmatpush1.xpose.msra.mxu0 0.0
    %4193 = vmatprep.subr.mxu0 0.0
    %4194 = vmatpush1.xpose.msra.mxu0 0.0
    %4195 = vmatprep.mubr.f32.mxu0 0.0
    %4196 = vmatmul.mubr.f32.gmra.mrb[0].mxu0 %v4126
    %v4197 = vpop.f32.mrb[0].mxu0
    %v4198 = vadd.f32 0.0, %v4197
    %v4199 = vpop.f32.mrb[0].mxu0
    %4200 = vdwg.mxu0
    %v4201 = vsel %vm1096, %v4122, -inf
    %4202 = vmax.xlane.f32.xlu0 %v4201
    %v4203 = vpop.xlane.xlu0 %4202
    %v4204 = vsel %vm1096, %v4198, -inf
    %4205 = vmax.xlane.f32.xlu0 %v4204
    %v4206 = vpop.xlane.xlu0 %4205
    %v4207 = vsub.f32 %v4122, %v4203
    %v4208 = vsub.f32 %v4198, %v4206
    %v4209 = vmul.f32 %v4207, 1.442695
    %v4210 = vpow.pop %v4209
    %v4211 = vmul.f32 %v4208, 1.442695
    %v4212 = vpow.pop %v4211
    %v4213 = vsel %vm1096, %v4210, 0.0
    %4214 = vadd.xlane.f32.xlu0 %v4213
    %v4215 = vpop.xlane.xlu0 %4214
    %v4216 = vsel %vm1096, %v4212, 0.0
    %4217 = vadd.xlane.f32.xlu0 %v4216
    %v4218 = vpop.xlane.xlu0 %4217
    %v4219 = vrcp.pop %v4215
    %v4220 = vrcp.pop %v4218
    %v4221 = vmul.f32 %v4210, %v4219
    %v4222 = vmul.f32 %v4212, %v4220
    %v4224 = vsel %vm1096, %v4221, 0
    %4226 = vmatprep.subr.mxu0 0.0
    %4227 = vmatpush1.msra.mxu0 %v4041
    %4228 = vmatprep.subr.mxu0 0.0
    %4229 = vmatpush1.msra.mxu0 0.0
    %4230 = vmatprep.subr.mxu0 0.0
    %4231 = vmatpush1.msra.mxu0 0.0
    %4232 = vmatprep.subr.mxu0 0.0
    %4233 = vmatpush1.msra.mxu0 0.0
    %4234 = vmatprep.subr.mxu0 0.0
    %4235 = vmatpush1.msra.mxu0 0.0
    %4236 = vmatprep.subr.mxu0 0.0
    %4237 = vmatpush1.msra.mxu0 0.0
    %4238 = vmatprep.subr.mxu0 0.0
    %4239 = vmatpush1.msra.mxu0 0.0
    %4240 = vmatprep.subr.mxu0 0.0
    %4241 = vmatpush1.msra.mxu0 0.0
    %4242 = vmatprep.subr.mxu0 0.0
    %4243 = vmatpush1.msra.mxu0 0.0
    %4244 = vmatprep.subr.mxu0 0.0
    %4245 = vmatpush1.msra.mxu0 0.0
    %4246 = vmatprep.subr.mxu0 0.0
    %4247 = vmatpush1.msra.mxu0 0.0
    %4248 = vmatprep.subr.mxu0 0.0
    %4249 = vmatpush1.msra.mxu0 0.0
    %4250 = vmatprep.subr.mxu0 0.0
    %4251 = vmatpush1.msra.mxu0 0.0
    %4252 = vmatprep.subr.mxu0 0.0
    %4253 = vmatpush1.msra.mxu0 0.0
    %4254 = vmatprep.subr.mxu0 0.0
    %4255 = vmatpush1.msra.mxu0 0.0
    %4256 = vmatprep.subr.mxu0 0.0
    %4257 = vmatpush1.msra.mxu0 0.0
    %4258 = vmatprep.subr.mxu0 0.0
    %4259 = vmatpush1.msra.mxu0 0.0
    %4260 = vmatprep.subr.mxu0 0.0
    %4261 = vmatpush1.msra.mxu0 0.0
    %4262 = vmatprep.subr.mxu0 0.0
    %4263 = vmatpush1.msra.mxu0 0.0
    %4264 = vmatprep.subr.mxu0 0.0
    %4265 = vmatpush1.msra.mxu0 0.0
    %4266 = vmatprep.subr.mxu0 0.0
    %4267 = vmatpush1.msra.mxu0 0.0
    %4268 = vmatprep.subr.mxu0 0.0
    %4269 = vmatpush1.msra.mxu0 0.0
    %4270 = vmatprep.subr.mxu0 0.0
    %4271 = vmatpush1.msra.mxu0 0.0
    %4272 = vmatprep.subr.mxu0 0.0
    %4273 = vmatpush1.msra.mxu0 0.0
    %4274 = vmatprep.subr.mxu0 0.0
    %4275 = vmatpush1.msra.mxu0 0.0
    %4276 = vmatprep.subr.mxu0 0.0
    %4277 = vmatpush1.msra.mxu0 0.0
    %4278 = vmatprep.subr.mxu0 0.0
    %4279 = vmatpush1.msra.mxu0 0.0
    %4280 = vmatprep.subr.mxu0 0.0
    %4281 = vmatpush1.msra.mxu0 0.0
    %4282 = vmatprep.subr.mxu0 0.0
    %4283 = vmatpush1.msra.mxu0 0.0
    %4284 = vmatprep.subr.mxu0 0.0
    %4285 = vmatpush1.msra.mxu0 0.0
    %4286 = vmatprep.subr.mxu0 0.0
    %4287 = vmatpush1.msra.mxu0 0.0
    %4288 = vmatprep.subr.mxu0 0.0
    %4289 = vmatpush1.msra.mxu0 0.0
    %4290 = vmatprep.mubr.f32.mxu0 0.0
    %4291 = vmatmul.mubr.f32.gmra.mrb[0].mxu0 %v4224
    %v4292 = vpop.f32.mrb[0].mxu0
    %v4293 = vadd.f32 0.0, %v4292
    %v4294 = vpop.f32.mrb[0].mxu0
    %4295 = vdwg.mxu0
    %v4297 = vsel %vm1096, %v4222, 0
    %4299 = vmatprep.subr.mxu0 0.0
    %4300 = vmatpush1.msra.mxu0 %v4045
    %4301 = vmatprep.subr.mxu0 0.0
    %4302 = vmatpush1.msra.mxu0 0.0
    %4303 = vmatprep.subr.mxu0 0.0
    %4304 = vmatpush1.msra.mxu0 0.0
    %4305 = vmatprep.subr.mxu0 0.0
    %4306 = vmatpush1.msra.mxu0 0.0
    %4307 = vmatprep.subr.mxu0 0.0
    %4308 = vmatpush1.msra.mxu0 0.0
    %4309 = vmatprep.subr.mxu0 0.0
    %4310 = vmatpush1.msra.mxu0 0.0
    %4311 = vmatprep.subr.mxu0 0.0
    %4312 = vmatpush1.msra.mxu0 0.0
    %4313 = vmatprep.subr.mxu0 0.0
    %4314 = vmatpush1.msra.mxu0 0.0
    %4315 = vmatprep.subr.mxu0 0.0
    %4316 = vmatpush1.msra.mxu0 0.0
    %4317 = vmatprep.subr.mxu0 0.0
    %4318 = vmatpush1.msra.mxu0 0.0
    %4319 = vmatprep.subr.mxu0 0.0
    %4320 = vmatpush1.msra.mxu0 0.0
    %4321 = vmatprep.subr.mxu0 0.0
    %4322 = vmatpush1.msra.mxu0 0.0
    %4323 = vmatprep.subr.mxu0 0.0
    %4324 = vmatpush1.msra.mxu0 0.0
    %4325 = vmatprep.subr.mxu0 0.0
    %4326 = vmatpush1.msra.mxu0 0.0
    %4327 = vmatprep.subr.mxu0 0.0
    %4328 = vmatpush1.msra.mxu0 0.0
    %4329 = vmatprep.subr.mxu0 0.0
    %4330 = vmatpush1.msra.mxu0 0.0
    %4331 = vmatprep.subr.mxu0 0.0
    %4332 = vmatpush1.msra.mxu0 0.0
    %4333 = vmatprep.subr.mxu0 0.0
    %4334 = vmatpush1.msra.mxu0 0.0
    %4335 = vmatprep.subr.mxu0 0.0
    %4336 = vmatpush1.msra.mxu0 0.0
    %4337 = vmatprep.subr.mxu0 0.0
    %4338 = vmatpush1.msra.mxu0 0.0
    %4339 = vmatprep.subr.mxu0 0.0
    %4340 = vmatpush1.msra.mxu0 0.0
    %4341 = vmatprep.subr.mxu0 0.0
    %4342 = vmatpush1.msra.mxu0 0.0
    %4343 = vmatprep.subr.mxu0 0.0
    %4344 = vmatpush1.msra.mxu0 0.0
    %4345 = vmatprep.subr.mxu0 0.0
    %4346 = vmatpush1.msra.mxu0 0.0
    %4347 = vmatprep.subr.mxu0 0.0
    %4348 = vmatpush1.msra.mxu0 0.0
    %4349 = vmatprep.subr.mxu0 0.0
    %4350 = vmatpush1.msra.mxu0 0.0
    %4351 = vmatprep.subr.mxu0 0.0
    %4352 = vmatpush1.msra.mxu0 0.0
    %4353 = vmatprep.subr.mxu0 0.0
    %4354 = vmatpush1.msra.mxu0 0.0
    %4355 = vmatprep.subr.mxu0 0.0
    %4356 = vmatpush1.msra.mxu0 0.0
    %4357 = vmatprep.subr.mxu0 0.0
    %4358 = vmatpush1.msra.mxu0 0.0
    %4359 = vmatprep.subr.mxu0 0.0
    %4360 = vmatpush1.msra.mxu0 0.0
    %4361 = vmatprep.subr.mxu0 0.0
    %4362 = vmatpush1.msra.mxu0 0.0
    %4363 = vmatprep.mubr.f32.mxu0 0.0
    %4364 = vmatmul.mubr.f32.gmra.mrb[0].mxu0 %v4297
    %v4365 = vpop.f32.mrb[0].mxu0
    %v4366 = vadd.f32 0.0, %v4365
    %v4367 = vpop.f32.mrb[0].mxu0
    %4368 = vdwg.mxu0
    %4369 = vrot.lane.b32.xlu0 %v3959, 96
    %v4370 = vpop.permute.xlu0 %4369
    %4371 = vrot.lane.b32.xlu0 %v3998, 96
    %v4372 = vpop.permute.xlu0 %4371
    %v4373 = vsel %vm943, %v4370, 0
    %v4375 = vsel %vm943, %v4372, 0
    %4377 = vmatprep.subr.mxu0 0.0
    %4378 = vmatpush1.xpose.msra.mxu0 %v4375
    %4379 = vmatprep.subr.mxu0 0.0
    %4380 = vmatpush1.xpose.msra.mxu0 0.0
    %4381 = vmatprep.subr.mxu0 0.0
    %4382 = vmatpush1.xpose.msra.mxu0 0.0
    %4383 = vmatprep.subr.mxu0 0.0
    %4384 = vmatpush1.xpose.msra.mxu0 0.0
    %4385 = vmatprep.subr.mxu0 0.0
    %4386 = vmatpush1.xpose.msra.mxu0 0.0
    %4387 = vmatprep.subr.mxu0 0.0
    %4388 = vmatpush1.xpose.msra.mxu0 0.0
    %4389 = vmatprep.subr.mxu0 0.0
    %4390 = vmatpush1.xpose.msra.mxu0 0.0
    %4391 = vmatprep.subr.mxu0 0.0
    %4392 = vmatpush1.xpose.msra.mxu0 0.0
    %4393 = vmatprep.subr.mxu0 0.0
    %4394 = vmatpush1.xpose.msra.mxu0 0.0
    %4395 = vmatprep.subr.mxu0 0.0
    %4396 = vmatpush1.xpose.msra.mxu0 0.0
    %4397 = vmatprep.subr.mxu0 0.0
    %4398 = vmatpush1.xpose.msra.mxu0 0.0
    %4399 = vmatprep.subr.mxu0 0.0
    %4400 = vmatpush1.xpose.msra.mxu0 0.0
    %4401 = vmatprep.subr.mxu0 0.0
    %4402 = vmatpush1.xpose.msra.mxu0 0.0
    %4403 = vmatprep.subr.mxu0 0.0
    %4404 = vmatpush1.xpose.msra.mxu0 0.0
    %4405 = vmatprep.subr.mxu0 0.0
    %4406 = vmatpush1.xpose.msra.mxu0 0.0
    %4407 = vmatprep.subr.mxu0 0.0
    %4408 = vmatpush1.xpose.msra.mxu0 0.0
    %4409 = vmatprep.subr.mxu0 0.0
    %4410 = vmatpush1.xpose.msra.mxu0 0.0
    %4411 = vmatprep.subr.mxu0 0.0
    %4412 = vmatpush1.xpose.msra.mxu0 0.0
    %4413 = vmatprep.subr.mxu0 0.0
    %4414 = vmatpush1.xpose.msra.mxu0 0.0
    %4415 = vmatprep.subr.mxu0 0.0
    %4416 = vmatpush1.xpose.msra.mxu0 0.0
    %4417 = vmatprep.subr.mxu0 0.0
    %4418 = vmatpush1.xpose.msra.mxu0 0.0
    %4419 = vmatprep.subr.mxu0 0.0
    %4420 = vmatpush1.xpose.msra.mxu0 0.0
    %4421 = vmatprep.subr.mxu0 0.0
    %4422 = vmatpush1.xpose.msra.mxu0 0.0
    %4423 = vmatprep.subr.mxu0 0.0
    %4424 = vmatpush1.xpose.msra.mxu0 0.0
    %4425 = vmatprep.subr.mxu0 0.0
    %4426 = vmatpush1.xpose.msra.mxu0 0.0
    %4427 = vmatprep.subr.mxu0 0.0
    %4428 = vmatpush1.xpose.msra.mxu0 0.0
    %4429 = vmatprep.subr.mxu0 0.0
    %4430 = vmatpush1.xpose.msra.mxu0 0.0
    %4431 = vmatprep.subr.mxu0 0.0
    %4432 = vmatpush1.xpose.msra.mxu0 0.0
    %4433 = vmatprep.subr.mxu0 0.0
    %4434 = vmatpush1.xpose.msra.mxu0 0.0
    %4435 = vmatprep.subr.mxu0 0.0
    %4436 = vmatpush1.xpose.msra.mxu0 0.0
    %4437 = vmatprep.subr.mxu0 0.0
    %4438 = vmatpush1.xpose.msra.mxu0 0.0
    %4439 = vmatprep.subr.mxu0 0.0
    %4440 = vmatpush1.xpose.msra.mxu0 0.0
    %4441 = vmatprep.mubr.f32.mxu0 0.0
    %4442 = vmatmul.mubr.f32.gmra.mrb[0].mxu0 %v4373
    %v4443 = vpop.f32.mrb[0].mxu0
    %v4444 = vadd.f32 0.0, %v4443
    %v4445 = vpop.f32.mrb[0].mxu0
    %4446 = vdwg.mxu0
    %4447 = vrot.lane.b32.xlu0 %v3961, 96
    %v4448 = vpop.permute.xlu0 %4447
    %4449 = vrot.lane.b32.xlu0 %v4002, 96
    %v4450 = vpop.permute.xlu0 %4449
    %v4451 = vsel %vm943, %v4448, 0
    %v4453 = vsel %vm943, %v4450, 0
    %4455 = vmatprep.subr.mxu0 0.0
    %4456 = vmatpush1.xpose.msra.mxu0 %v4453
    %4457 = vmatprep.subr.mxu0 0.0
    %4458 = vmatpush1.xpose.msra.mxu0 0.0
    %4459 = vmatprep.subr.mxu0 0.0
    %4460 = vmatpush1.xpose.msra.mxu0 0.0
    %4461 = vmatprep.subr.mxu0 0.0
    %4462 = vmatpush1.xpose.msra.mxu0 0.0
    %4463 = vmatprep.subr.mxu0 0.0
    %4464 = vmatpush1.xpose.msra.mxu0 0.0
    %4465 = vmatprep.subr.mxu0 0.0
    %4466 = vmatpush1.xpose.msra.mxu0 0.0
    %4467 = vmatprep.subr.mxu0 0.0
    %4468 = vmatpush1.xpose.msra.mxu0 0.0
    %4469 = vmatprep.subr.mxu0 0.0
    %4470 = vmatpush1.xpose.msra.mxu0 0.0
    %4471 = vmatprep.subr.mxu0 0.0
    %4472 = vmatpush1.xpose.msra.mxu0 0.0
    %4473 = vmatprep.subr.mxu0 0.0
    %4474 = vmatpush1.xpose.msra.mxu0 0.0
    %4475 = vmatprep.subr.mxu0 0.0
    %4476 = vmatpush1.xpose.msra.mxu0 0.0
    %4477 = vmatprep.subr.mxu0 0.0
    %4478 = vmatpush1.xpose.msra.mxu0 0.0
    %4479 = vmatprep.subr.mxu0 0.0
    %4480 = vmatpush1.xpose.msra.mxu0 0.0
    %4481 = vmatprep.subr.mxu0 0.0
    %4482 = vmatpush1.xpose.msra.mxu0 0.0
    %4483 = vmatprep.subr.mxu0 0.0
    %4484 = vmatpush1.xpose.msra.mxu0 0.0
    %4485 = vmatprep.subr.mxu0 0.0
    %4486 = vmatpush1.xpose.msra.mxu0 0.0
    %4487 = vmatprep.subr.mxu0 0.0
    %4488 = vmatpush1.xpose.msra.mxu0 0.0
    %4489 = vmatprep.subr.mxu0 0.0
    %4490 = vmatpush1.xpose.msra.mxu0 0.0
    %4491 = vmatprep.subr.mxu0 0.0
    %4492 = vmatpush1.xpose.msra.mxu0 0.0
    %4493 = vmatprep.subr.mxu0 0.0
    %4494 = vmatpush1.xpose.msra.mxu0 0.0
    %4495 = vmatprep.subr.mxu0 0.0
    %4496 = vmatpush1.xpose.msra.mxu0 0.0
    %4497 = vmatprep.subr.mxu0 0.0
    %4498 = vmatpush1.xpose.msra.mxu0 0.0
    %4499 = vmatprep.subr.mxu0 0.0
    %4500 = vmatpush1.xpose.msra.mxu0 0.0
    %4501 = vmatprep.subr.mxu0 0.0
    %4502 = vmatpush1.xpose.msra.mxu0 0.0
    %4503 = vmatprep.subr.mxu0 0.0
    %4504 = vmatpush1.xpose.msra.mxu0 0.0
    %4505 = vmatprep.subr.mxu0 0.0
    %4506 = vmatpush1.xpose.msra.mxu0 0.0
    %4507 = vmatprep.subr.mxu0 0.0
    %4508 = vmatpush1.xpose.msra.mxu0 0.0
    %4509 = vmatprep.subr.mxu0 0.0
    %4510 = vmatpush1.xpose.msra.mxu0 0.0
    %4511 = vmatprep.subr.mxu0 0.0
    %4512 = vmatpush1.xpose.msra.mxu0 0.0
    %4513 = vmatprep.subr.mxu0 0.0
    %4514 = vmatpush1.xpose.msra.mxu0 0.0
    %4515 = vmatprep.subr.mxu0 0.0
    %4516 = vmatpush1.xpose.msra.mxu0 0.0
    %4517 = vmatprep.subr.mxu0 0.0
    %4518 = vmatpush1.xpose.msra.mxu0 0.0
    %4519 = vmatprep.mubr.f32.mxu0 0.0
    %4520 = vmatmul.mubr.f32.gmra.mrb[0].mxu0 %v4451
    %v4521 = vpop.f32.mrb[0].mxu0
    %v4522 = vadd.f32 0.0, %v4521
    %v4523 = vpop.f32.mrb[0].mxu0
    %4524 = vdwg.mxu0
    %v4525 = vsel %vm1096, %v4444, -inf
    %4526 = vmax.xlane.f32.xlu0 %v4525
    %v4527 = vpop.xlane.xlu0 %4526
    %v4528 = vsel %vm1096, %v4522, -inf
    %4529 = vmax.xlane.f32.xlu0 %v4528
    %v4530 = vpop.xlane.xlu0 %4529
    %v4531 = vsub.f32 %v4444, %v4527
    %v4532 = vsub.f32 %v4522, %v4530
    %v4533 = vmul.f32 %v4531, 1.442695
    %v4534 = vpow.pop %v4533
    %v4535 = vmul.f32 %v4532, 1.442695
    %v4536 = vpow.pop %v4535
    %v4537 = vsel %vm1096, %v4534, 0.0
    %4538 = vadd.xlane.f32.xlu0 %v4537
    %v4539 = vpop.xlane.xlu0 %4538
    %v4540 = vsel %vm1096, %v4536, 0.0
    %4541 = vadd.xlane.f32.xlu0 %v4540
    %v4542 = vpop.xlane.xlu0 %4541
    %v4543 = vrcp.pop %v4539
    %v4544 = vrcp.pop %v4542
    %v4545 = vmul.f32 %v4534, %v4543
    %v4546 = vmul.f32 %v4536, %v4544
    %4548 = vrot.lane.b32.xlu0 %v4041, 96
    %v4549 = vpop.permute.xlu0 %4548
    %v4552 = vsel %vm1096, %v4545, 0
    %4554 = vmatprep.subr.mxu0 0.0
    %4555 = vmatpush1.msra.mxu0 %v4549
    %4556 = vmatprep.subr.mxu0 0.0
    %4557 = vmatpush1.msra.mxu0 0.0
    %4558 = vmatprep.subr.mxu0 0.0
    %4559 = vmatpush1.msra.mxu0 0.0
    %4560 = vmatprep.subr.mxu0 0.0
    %4561 = vmatpush1.msra.mxu0 0.0
    %4562 = vmatprep.subr.mxu0 0.0
    %4563 = vmatpush1.msra.mxu0 0.0
    %4564 = vmatprep.subr.mxu0 0.0
    %4565 = vmatpush1.msra.mxu0 0.0
    %4566 = vmatprep.subr.mxu0 0.0
    %4567 = vmatpush1.msra.mxu0 0.0
    %4568 = vmatprep.subr.mxu0 0.0
    %4569 = vmatpush1.msra.mxu0 0.0
    %4570 = vmatprep.subr.mxu0 0.0
    %4571 = vmatpush1.msra.mxu0 0.0
    %4572 = vmatprep.subr.mxu0 0.0
    %4573 = vmatpush1.msra.mxu0 0.0
    %4574 = vmatprep.subr.mxu0 0.0
    %4575 = vmatpush1.msra.mxu0 0.0
    %4576 = vmatprep.subr.mxu0 0.0
    %4577 = vmatpush1.msra.mxu0 0.0
    %4578 = vmatprep.subr.mxu0 0.0
    %4579 = vmatpush1.msra.mxu0 0.0
    %4580 = vmatprep.subr.mxu0 0.0
    %4581 = vmatpush1.msra.mxu0 0.0
    %4582 = vmatprep.subr.mxu0 0.0
    %4583 = vmatpush1.msra.mxu0 0.0
    %4584 = vmatprep.subr.mxu0 0.0
    %4585 = vmatpush1.msra.mxu0 0.0
    %4586 = vmatprep.subr.mxu0 0.0
    %4587 = vmatpush1.msra.mxu0 0.0
    %4588 = vmatprep.subr.mxu0 0.0
    %4589 = vmatpush1.msra.mxu0 0.0
    %4590 = vmatprep.subr.mxu0 0.0
    %4591 = vmatpush1.msra.mxu0 0.0
    %4592 = vmatprep.subr.mxu0 0.0
    %4593 = vmatpush1.msra.mxu0 0.0
    %4594 = vmatprep.subr.mxu0 0.0
    %4595 = vmatpush1.msra.mxu0 0.0
    %4596 = vmatprep.subr.mxu0 0.0
    %4597 = vmatpush1.msra.mxu0 0.0
    %4598 = vmatprep.subr.mxu0 0.0
    %4599 = vmatpush1.msra.mxu0 0.0
    %4600 = vmatprep.subr.mxu0 0.0
    %4601 = vmatpush1.msra.mxu0 0.0
    %4602 = vmatprep.subr.mxu0 0.0
    %4603 = vmatpush1.msra.mxu0 0.0
    %4604 = vmatprep.subr.mxu0 0.0
    %4605 = vmatpush1.msra.mxu0 0.0
    %4606 = vmatprep.subr.mxu0 0.0
    %4607 = vmatpush1.msra.mxu0 0.0
    %4608 = vmatprep.subr.mxu0 0.0
    %4609 = vmatpush1.msra.mxu0 0.0
    %4610 = vmatprep.subr.mxu0 0.0
    %4611 = vmatpush1.msra.mxu0 0.0
    %4612 = vmatprep.subr.mxu0 0.0
    %4613 = vmatpush1.msra.mxu0 0.0
    %4614 = vmatprep.subr.mxu0 0.0
    %4615 = vmatpush1.msra.mxu0 0.0
    %4616 = vmatprep.subr.mxu0 0.0
    %4617 = vmatpush1.msra.mxu0 0.0
    %4618 = vmatprep.mubr.f32.mxu0 0.0
    %4619 = vmatmul.mubr.f32.gmra.mrb[0].mxu0 %v4552
    %v4620 = vpop.f32.mrb[0].mxu0
    %v4621 = vadd.f32 0.0, %v4620
    %v4622 = vpop.f32.mrb[0].mxu0
    %4623 = vdwg.mxu0
    %4625 = vrot.lane.b32.xlu0 %v4045, 96
    %v4626 = vpop.permute.xlu0 %4625
    %v4629 = vsel %vm1096, %v4546, 0
    %4631 = vmatprep.subr.mxu0 0.0
    %4632 = vmatpush1.msra.mxu0 %v4626
    %4633 = vmatprep.subr.mxu0 0.0
    %4634 = vmatpush1.msra.mxu0 0.0
    %4635 = vmatprep.subr.mxu0 0.0
    %4636 = vmatpush1.msra.mxu0 0.0
    %4637 = vmatprep.subr.mxu0 0.0
    %4638 = vmatpush1.msra.mxu0 0.0
    %4639 = vmatprep.subr.mxu0 0.0
    %4640 = vmatpush1.msra.mxu0 0.0
    %4641 = vmatprep.subr.mxu0 0.0
    %4642 = vmatpush1.msra.mxu0 0.0
    %4643 = vmatprep.subr.mxu0 0.0
    %4644 = vmatpush1.msra.mxu0 0.0
    %4645 = vmatprep.subr.mxu0 0.0
    %4646 = vmatpush1.msra.mxu0 0.0
    %4647 = vmatprep.subr.mxu0 0.0
    %4648 = vmatpush1.msra.mxu0 0.0
    %4649 = vmatprep.subr.mxu0 0.0
    %4650 = vmatpush1.msra.mxu0 0.0
    %4651 = vmatprep.subr.mxu0 0.0
    %4652 = vmatpush1.msra.mxu0 0.0
    %4653 = vmatprep.subr.mxu0 0.0
    %4654 = vmatpush1.msra.mxu0 0.0
    %4655 = vmatprep.subr.mxu0 0.0
    %4656 = vmatpush1.msra.mxu0 0.0
    %4657 = vmatprep.subr.mxu0 0.0
    %4658 = vmatpush1.msra.mxu0 0.0
    %4659 = vmatprep.subr.mxu0 0.0
    %4660 = vmatpush1.msra.mxu0 0.0
    %4661 = vmatprep.subr.mxu0 0.0
    %4662 = vmatpush1.msra.mxu0 0.0
    %4663 = vmatprep.subr.mxu0 0.0
    %4664 = vmatpush1.msra.mxu0 0.0
    %4665 = vmatprep.subr.mxu0 0.0
    %4666 = vmatpush1.msra.mxu0 0.0
    %4667 = vmatprep.subr.mxu0 0.0
    %4668 = vmatpush1.msra.mxu0 0.0
    %4669 = vmatprep.subr.mxu0 0.0
    %4670 = vmatpush1.msra.mxu0 0.0
    %4671 = vmatprep.subr.mxu0 0.0
    %4672 = vmatpush1.msra.mxu0 0.0
    %4673 = vmatprep.subr.mxu0 0.0
    %4674 = vmatpush1.msra.mxu0 0.0
    %4675 = vmatprep.subr.mxu0 0.0
    %4676 = vmatpush1.msra.mxu0 0.0
    %4677 = vmatprep.subr.mxu0 0.0
    %4678 = vmatpush1.msra.mxu0 0.0
    %4679 = vmatprep.subr.mxu0 0.0
    %4680 = vmatpush1.msra.mxu0 0.0
    %4681 = vmatprep.subr.mxu0 0.0
    %4682 = vmatpush1.msra.mxu0 0.0
    %4683 = vmatprep.subr.mxu0 0.0
    %4684 = vmatpush1.msra.mxu0 0.0
    %4685 = vmatprep.subr.mxu0 0.0
    %4686 = vmatpush1.msra.mxu0 0.0
    %4687 = vmatprep.subr.mxu0 0.0
    %4688 = vmatpush1.msra.mxu0 0.0
    %4689 = vmatprep.subr.mxu0 0.0
    %4690 = vmatpush1.msra.mxu0 0.0
    %4691 = vmatprep.subr.mxu0 0.0
    %4692 = vmatpush1.msra.mxu0 0.0
    %4693 = vmatprep.subr.mxu0 0.0
    %4694 = vmatpush1.msra.mxu0 0.0
    %4695 = vmatprep.mubr.f32.mxu0 0.0
    %4696 = vmatmul.mubr.f32.gmra.mrb[0].mxu0 %v4629
    %v4697 = vpop.f32.mrb[0].mxu0
    %v4698 = vadd.f32 0.0, %v4697
    %v4699 = vpop.f32.mrb[0].mxu0
    %4700 = vdwg.mxu0
    %4701 = vrot.lane.b32.xlu0 %v3959, 64
    %v4702 = vpop.permute.xlu0 %4701
    %4703 = vrot.lane.b32.xlu0 %v3998, 64
    %v4704 = vpop.permute.xlu0 %4703
    %v4705 = vsel %vm943, %v4702, 0
    %v4707 = vsel %vm943, %v4704, 0
    %4709 = vmatprep.subr.mxu0 0.0
    %4710 = vmatpush1.xpose.msra.mxu0 %v4707
    %4711 = vmatprep.subr.mxu0 0.0
    %4712 = vmatpush1.xpose.msra.mxu0 0.0
    %4713 = vmatprep.subr.mxu0 0.0
    %4714 = vmatpush1.xpose.msra.mxu0 0.0
    %4715 = vmatprep.subr.mxu0 0.0
    %4716 = vmatpush1.xpose.msra.mxu0 0.0
    %4717 = vmatprep.subr.mxu0 0.0
    %4718 = vmatpush1.xpose.msra.mxu0 0.0
    %4719 = vmatprep.subr.mxu0 0.0
    %4720 = vmatpush1.xpose.msra.mxu0 0.0
    %4721 = vmatprep.subr.mxu0 0.0
    %4722 = vmatpush1.xpose.msra.mxu0 0.0
    %4723 = vmatprep.subr.mxu0 0.0
    %4724 = vmatpush1.xpose.msra.mxu0 0.0
    %4725 = vmatprep.subr.mxu0 0.0
    %4726 = vmatpush1.xpose.msra.mxu0 0.0
    %4727 = vmatprep.subr.mxu0 0.0
    %4728 = vmatpush1.xpose.msra.mxu0 0.0
    %4729 = vmatprep.subr.mxu0 0.0
    %4730 = vmatpush1.xpose.msra.mxu0 0.0
    %4731 = vmatprep.subr.mxu0 0.0
    %4732 = vmatpush1.xpose.msra.mxu0 0.0
    %4733 = vmatprep.subr.mxu0 0.0
    %4734 = vmatpush1.xpose.msra.mxu0 0.0
    %4735 = vmatprep.subr.mxu0 0.0
    %4736 = vmatpush1.xpose.msra.mxu0 0.0
    %4737 = vmatprep.subr.mxu0 0.0
    %4738 = vmatpush1.xpose.msra.mxu0 0.0
    %4739 = vmatprep.subr.mxu0 0.0
    %4740 = vmatpush1.xpose.msra.mxu0 0.0
    %4741 = vmatprep.subr.mxu0 0.0
    %4742 = vmatpush1.xpose.msra.mxu0 0.0
    %4743 = vmatprep.subr.mxu0 0.0
    %4744 = vmatpush1.xpose.msra.mxu0 0.0
    %4745 = vmatprep.subr.mxu0 0.0
    %4746 = vmatpush1.xpose.msra.mxu0 0.0
    %4747 = vmatprep.subr.mxu0 0.0
    %4748 = vmatpush1.xpose.msra.mxu0 0.0
    %4749 = vmatprep.subr.mxu0 0.0
    %4750 = vmatpush1.xpose.msra.mxu0 0.0
    %4751 = vmatprep.subr.mxu0 0.0
    %4752 = vmatpush1.xpose.msra.mxu0 0.0
    %4753 = vmatprep.subr.mxu0 0.0
    %4754 = vmatpush1.xpose.msra.mxu0 0.0
    %4755 = vmatprep.subr.mxu0 0.0
    %4756 = vmatpush1.xpose.msra.mxu0 0.0
    %4757 = vmatprep.subr.mxu0 0.0
    %4758 = vmatpush1.xpose.msra.mxu0 0.0
    %4759 = vmatprep.subr.mxu0 0.0
    %4760 = vmatpush1.xpose.msra.mxu0 0.0
    %4761 = vmatprep.subr.mxu0 0.0
    %4762 = vmatpush1.xpose.msra.mxu0 0.0
    %4763 = vmatprep.subr.mxu0 0.0
    %4764 = vmatpush1.xpose.msra.mxu0 0.0
    %4765 = vmatprep.subr.mxu0 0.0
    %4766 = vmatpush1.xpose.msra.mxu0 0.0
    %4767 = vmatprep.subr.mxu0 0.0
    %4768 = vmatpush1.xpose.msra.mxu0 0.0
    %4769 = vmatprep.subr.mxu0 0.0
    %4770 = vmatpush1.xpose.msra.mxu0 0.0
    %4771 = vmatprep.subr.mxu0 0.0
    %4772 = vmatpush1.xpose.msra.mxu0 0.0
    %4773 = vmatprep.mubr.f32.mxu0 0.0
    %4774 = vmatmul.mubr.f32.gmra.mrb[0].mxu0 %v4705
    %v4775 = vpop.f32.mrb[0].mxu0
    %v4776 = vadd.f32 0.0, %v4775
    %v4777 = vpop.f32.mrb[0].mxu0
    %4778 = vdwg.mxu0
    %4779 = vrot.lane.b32.xlu0 %v3961, 64
    %v4780 = vpop.permute.xlu0 %4779
    %4781 = vrot.lane.b32.xlu0 %v4002, 64
    %v4782 = vpop.permute.xlu0 %4781
    %v4783 = vsel %vm943, %v4780, 0
    %v4785 = vsel %vm943, %v4782, 0
    %4787 = vmatprep.subr.mxu0 0.0
    %4788 = vmatpush1.xpose.msra.mxu0 %v4785
    %4789 = vmatprep.subr.mxu0 0.0
    %4790 = vmatpush1.xpose.msra.mxu0 0.0
    %4791 = vmatprep.subr.mxu0 0.0
    %4792 = vmatpush1.xpose.msra.mxu0 0.0
    %4793 = vmatprep.subr.mxu0 0.0
    %4794 = vmatpush1.xpose.msra.mxu0 0.0
    %4795 = vmatprep.subr.mxu0 0.0
    %4796 = vmatpush1.xpose.msra.mxu0 0.0
    %4797 = vmatprep.subr.mxu0 0.0
    %4798 = vmatpush1.xpose.msra.mxu0 0.0
    %4799 = vmatprep.subr.mxu0 0.0
    %4800 = vmatpush1.xpose.msra.mxu0 0.0
    %4801 = vmatprep.subr.mxu0 0.0
    %4802 = vmatpush1.xpose.msra.mxu0 0.0
    %4803 = vmatprep.subr.mxu0 0.0
    %4804 = vmatpush1.xpose.msra.mxu0 0.0
    %4805 = vmatprep.subr.mxu0 0.0
    %4806 = vmatpush1.xpose.msra.mxu0 0.0
    %4807 = vmatprep.subr.mxu0 0.0
    %4808 = vmatpush1.xpose.msra.mxu0 0.0
    %4809 = vmatprep.subr.mxu0 0.0
    %4810 = vmatpush1.xpose.msra.mxu0 0.0
    %4811 = vmatprep.subr.mxu0 0.0
    %4812 = vmatpush1.xpose.msra.mxu0 0.0
    %4813 = vmatprep.subr.mxu0 0.0
    %4814 = vmatpush1.xpose.msra.mxu0 0.0
    %4815 = vmatprep.subr.mxu0 0.0
    %4816 = vmatpush1.xpose.msra.mxu0 0.0
    %4817 = vmatprep.subr.mxu0 0.0
    %4818 = vmatpush1.xpose.msra.mxu0 0.0
    %4819 = vmatprep.subr.mxu0 0.0
    %4820 = vmatpush1.xpose.msra.mxu0 0.0
    %4821 = vmatprep.subr.mxu0 0.0
    %4822 = vmatpush1.xpose.msra.mxu0 0.0
    %4823 = vmatprep.subr.mxu0 0.0
    %4824 = vmatpush1.xpose.msra.mxu0 0.0
    %4825 = vmatprep.subr.mxu0 0.0
    %4826 = vmatpush1.xpose.msra.mxu0 0.0
    %4827 = vmatprep.subr.mxu0 0.0
    %4828 = vmatpush1.xpose.msra.mxu0 0.0
    %4829 = vmatprep.subr.mxu0 0.0
    %4830 = vmatpush1.xpose.msra.mxu0 0.0
    %4831 = vmatprep.subr.mxu0 0.0
    %4832 = vmatpush1.xpose.msra.mxu0 0.0
    %4833 = vmatprep.subr.mxu0 0.0
    %4834 = vmatpush1.xpose.msra.mxu0 0.0
    %4835 = vmatprep.subr.mxu0 0.0
    %4836 = vmatpush1.xpose.msra.mxu0 0.0
    %4837 = vmatprep.subr.mxu0 0.0
    %4838 = vmatpush1.xpose.msra.mxu0 0.0
    %4839 = vmatprep.subr.mxu0 0.0
    %4840 = vmatpush1.xpose.msra.mxu0 0.0
    %4841 = vmatprep.subr.mxu0 0.0
    %4842 = vmatpush1.xpose.msra.mxu0 0.0
    %4843 = vmatprep.subr.mxu0 0.0
    %4844 = vmatpush1.xpose.msra.mxu0 0.0
    %4845 = vmatprep.subr.mxu0 0.0
    %4846 = vmatpush1.xpose.msra.mxu0 0.0
    %4847 = vmatprep.subr.mxu0 0.0
    %4848 = vmatpush1.xpose.msra.mxu0 0.0
    %4849 = vmatprep.subr.mxu0 0.0
    %4850 = vmatpush1.xpose.msra.mxu0 0.0
    %4851 = vmatprep.mubr.f32.mxu0 0.0
    %4852 = vmatmul.mubr.f32.gmra.mrb[0].mxu0 %v4783
    %v4853 = vpop.f32.mrb[0].mxu0
    %v4854 = vadd.f32 0.0, %v4853
    %v4855 = vpop.f32.mrb[0].mxu0
    %4856 = vdwg.mxu0
    %v4857 = vsel %vm1096, %v4776, -inf
    %4858 = vmax.xlane.f32.xlu0 %v4857
    %v4859 = vpop.xlane.xlu0 %4858
    %v4860 = vsel %vm1096, %v4854, -inf
    %4861 = vmax.xlane.f32.xlu0 %v4860
    %v4862 = vpop.xlane.xlu0 %4861
    %v4863 = vsub.f32 %v4776, %v4859
    %v4864 = vsub.f32 %v4854, %v4862
    %v4865 = vmul.f32 %v4863, 1.442695
    %v4866 = vpow.pop %v4865
    %v4867 = vmul.f32 %v4864, 1.442695
    %v4868 = vpow.pop %v4867
    %v4869 = vsel %vm1096, %v4866, 0.0
    %4870 = vadd.xlane.f32.xlu0 %v4869
    %v4871 = vpop.xlane.xlu0 %4870
    %v4872 = vsel %vm1096, %v4868, 0.0
    %4873 = vadd.xlane.f32.xlu0 %v4872
    %v4874 = vpop.xlane.xlu0 %4873
    %v4875 = vrcp.pop %v4871
    %v4876 = vrcp.pop %v4874
    %v4877 = vmul.f32 %v4866, %v4875
    %v4878 = vmul.f32 %v4868, %v4876
    %4879 = vrot.lane.b32.xlu0 %v4041, 64
    %v4880 = vpop.permute.xlu0 %4879
    %v4883 = vsel %vm1096, %v4877, 0
    %4885 = vmatprep.subr.mxu0 0.0
    %4886 = vmatpush1.msra.mxu0 %v4880
    %4887 = vmatprep.subr.mxu0 0.0
    %4888 = vmatpush1.msra.mxu0 0.0
    %4889 = vmatprep.subr.mxu0 0.0
    %4890 = vmatpush1.msra.mxu0 0.0
    %4891 = vmatprep.subr.mxu0 0.0
    %4892 = vmatpush1.msra.mxu0 0.0
    %4893 = vmatprep.subr.mxu0 0.0
    %4894 = vmatpush1.msra.mxu0 0.0
    %4895 = vmatprep.subr.mxu0 0.0
    %4896 = vmatpush1.msra.mxu0 0.0
    %4897 = vmatprep.subr.mxu0 0.0
    %4898 = vmatpush1.msra.mxu0 0.0
    %4899 = vmatprep.subr.mxu0 0.0
    %4900 = vmatpush1.msra.mxu0 0.0
    %4901 = vmatprep.subr.mxu0 0.0
    %4902 = vmatpush1.msra.mxu0 0.0
    %4903 = vmatprep.subr.mxu0 0.0
    %4904 = vmatpush1.msra.mxu0 0.0
    %4905 = vmatprep.subr.mxu0 0.0
    %4906 = vmatpush1.msra.mxu0 0.0
    %4907 = vmatprep.subr.mxu0 0.0
    %4908 = vmatpush1.msra.mxu0 0.0
    %4909 = vmatprep.subr.mxu0 0.0
    %4910 = vmatpush1.msra.mxu0 0.0
    %4911 = vmatprep.subr.mxu0 0.0
    %4912 = vmatpush1.msra.mxu0 0.0
    %4913 = vmatprep.subr.mxu0 0.0
    %4914 = vmatpush1.msra.mxu0 0.0
    %4915 = vmatprep.subr.mxu0 0.0
    %4916 = vmatpush1.msra.mxu0 0.0
    %4917 = vmatprep.subr.mxu0 0.0
    %4918 = vmatpush1.msra.mxu0 0.0
    %4919 = vmatprep.subr.mxu0 0.0
    %4920 = vmatpush1.msra.mxu0 0.0
    %4921 = vmatprep.subr.mxu0 0.0
    %4922 = vmatpush1.msra.mxu0 0.0
    %4923 = vmatprep.subr.mxu0 0.0
    %4924 = vmatpush1.msra.mxu0 0.0
    %4925 = vmatprep.subr.mxu0 0.0
    %4926 = vmatpush1.msra.mxu0 0.0
    %4927 = vmatprep.subr.mxu0 0.0
    %4928 = vmatpush1.msra.mxu0 0.0
    %4929 = vmatprep.subr.mxu0 0.0
    %4930 = vmatpush1.msra.mxu0 0.0
    %4931 = vmatprep.subr.mxu0 0.0
    %4932 = vmatpush1.msra.mxu0 0.0
    %4933 = vmatprep.subr.mxu0 0.0
    %4934 = vmatpush1.msra.mxu0 0.0
    %4935 = vmatprep.subr.mxu0 0.0
    %4936 = vmatpush1.msra.mxu0 0.0
    %4937 = vmatprep.subr.mxu0 0.0
    %4938 = vmatpush1.msra.mxu0 0.0
    %4939 = vmatprep.subr.mxu0 0.0
    %4940 = vmatpush1.msra.mxu0 0.0
    %4941 = vmatprep.subr.mxu0 0.0
    %4942 = vmatpush1.msra.mxu0 0.0
    %4943 = vmatprep.subr.mxu0 0.0
    %4944 = vmatpush1.msra.mxu0 0.0
    %4945 = vmatprep.subr.mxu0 0.0
    %4946 = vmatpush1.msra.mxu0 0.0
    %4947 = vmatprep.subr.mxu0 0.0
    %4948 = vmatpush1.msra.mxu0 0.0
    %4949 = vmatprep.mubr.f32.mxu0 0.0
    %4950 = vmatmul.mubr.f32.gmra.mrb[0].mxu0 %v4883
    %v4951 = vpop.f32.mrb[0].mxu0
    %v4952 = vadd.f32 0.0, %v4951
    %v4953 = vpop.f32.mrb[0].mxu0
    %4954 = vdwg.mxu0
    %4955 = vrot.lane.b32.xlu0 %v4045, 64
    %v4956 = vpop.permute.xlu0 %4955
    %v4959 = vsel %vm1096, %v4878, 0
    %4961 = vmatprep.subr.mxu0 0.0
    %4962 = vmatpush1.msra.mxu0 %v4956
    %4963 = vmatprep.subr.mxu0 0.0
    %4964 = vmatpush1.msra.mxu0 0.0
    %4965 = vmatprep.subr.mxu0 0.0
    %4966 = vmatpush1.msra.mxu0 0.0
    %4967 = vmatprep.subr.mxu0 0.0
    %4968 = vmatpush1.msra.mxu0 0.0
    %4969 = vmatprep.subr.mxu0 0.0
    %4970 = vmatpush1.msra.mxu0 0.0
    %4971 = vmatprep.subr.mxu0 0.0
    %4972 = vmatpush1.msra.mxu0 0.0
    %4973 = vmatprep.subr.mxu0 0.0
    %4974 = vmatpush1.msra.mxu0 0.0
    %4975 = vmatprep.subr.mxu0 0.0
    %4976 = vmatpush1.msra.mxu0 0.0
    %4977 = vmatprep.subr.mxu0 0.0
    %4978 = vmatpush1.msra.mxu0 0.0
    %4979 = vmatprep.subr.mxu0 0.0
    %4980 = vmatpush1.msra.mxu0 0.0
    %4981 = vmatprep.subr.mxu0 0.0
    %4982 = vmatpush1.msra.mxu0 0.0
    %4983 = vmatprep.subr.mxu0 0.0
    %4984 = vmatpush1.msra.mxu0 0.0
    %4985 = vmatprep.subr.mxu0 0.0
    %4986 = vmatpush1.msra.mxu0 0.0
    %4987 = vmatprep.subr.mxu0 0.0
    %4988 = vmatpush1.msra.mxu0 0.0
    %4989 = vmatprep.subr.mxu0 0.0
    %4990 = vmatpush1.msra.mxu0 0.0
    %4991 = vmatprep.subr.mxu0 0.0
    %4992 = vmatpush1.msra.mxu0 0.0
    %4993 = vmatprep.subr.mxu0 0.0
    %4994 = vmatpush1.msra.mxu0 0.0
    %4995 = vmatprep.subr.mxu0 0.0
    %4996 = vmatpush1.msra.mxu0 0.0
    %4997 = vmatprep.subr.mxu0 0.0
    %4998 = vmatpush1.msra.mxu0 0.0
    %4999 = vmatprep.subr.mxu0 0.0
    %5000 = vmatpush1.msra.mxu0 0.0
    %5001 = vmatprep.subr.mxu0 0.0
    %5002 = vmatpush1.msra.mxu0 0.0
    %5003 = vmatprep.subr.mxu0 0.0
    %5004 = vmatpush1.msra.mxu0 0.0
    %5005 = vmatprep.subr.mxu0 0.0
    %5006 = vmatpush1.msra.mxu0 0.0
    %5007 = vmatprep.subr.mxu0 0.0
    %5008 = vmatpush1.msra.mxu0 0.0
    %5009 = vmatprep.subr.mxu0 0.0
    %5010 = vmatpush1.msra.mxu0 0.0
    %5011 = vmatprep.subr.mxu0 0.0
    %5012 = vmatpush1.msra.mxu0 0.0
    %5013 = vmatprep.subr.mxu0 0.0
    %5014 = vmatpush1.msra.mxu0 0.0
    %5015 = vmatprep.subr.mxu0 0.0
    %5016 = vmatpush1.msra.mxu0 0.0
    %5017 = vmatprep.subr.mxu0 0.0
    %5018 = vmatpush1.msra.mxu0 0.0
    %5019 = vmatprep.subr.mxu0 0.0
    %5020 = vmatpush1.msra.mxu0 0.0
    %5021 = vmatprep.subr.mxu0 0.0
    %5022 = vmatpush1.msra.mxu0 0.0
    %5023 = vmatprep.subr.mxu0 0.0
    %5024 = vmatpush1.msra.mxu0 0.0
    %5025 = vmatprep.mubr.f32.mxu0 0.0
    %5026 = vmatmul.mubr.f32.gmra.mrb[0].mxu0 %v4959
    %v5027 = vpop.f32.mrb[0].mxu0
    %v5028 = vadd.f32 0.0, %v5027
    %v5029 = vpop.f32.mrb[0].mxu0
    %5030 = vdwg.mxu0
    %5031 = vrot.lane.b32.xlu0 %v3959, 32
    %v5032 = vpop.permute.xlu0 %5031
    %5033 = vrot.lane.b32.xlu0 %v3998, 32
    %v5034 = vpop.permute.xlu0 %5033
    %v5035 = vsel %vm943, %v5032, 0
    %v5037 = vsel %vm943, %v5034, 0
    %5039 = vmatprep.subr.mxu0 0.0
    %5040 = vmatpush1.xpose.msra.mxu0 %v5037
    %5041 = vmatprep.subr.mxu0 0.0
    %5042 = vmatpush1.xpose.msra.mxu0 0.0
    %5043 = vmatprep.subr.mxu0 0.0
    %5044 = vmatpush1.xpose.msra.mxu0 0.0
    %5045 = vmatprep.subr.mxu0 0.0
    %5046 = vmatpush1.xpose.msra.mxu0 0.0
    %5047 = vmatprep.subr.mxu0 0.0
    %5048 = vmatpush1.xpose.msra.mxu0 0.0
    %5049 = vmatprep.subr.mxu0 0.0
    %5050 = vmatpush1.xpose.msra.mxu0 0.0
    %5051 = vmatprep.subr.mxu0 0.0
    %5052 = vmatpush1.xpose.msra.mxu0 0.0
    %5053 = vmatprep.subr.mxu0 0.0
    %5054 = vmatpush1.xpose.msra.mxu0 0.0
    %5055 = vmatprep.subr.mxu0 0.0
    %5056 = vmatpush1.xpose.msra.mxu0 0.0
    %5057 = vmatprep.subr.mxu0 0.0
    %5058 = vmatpush1.xpose.msra.mxu0 0.0
    %5059 = vmatprep.subr.mxu0 0.0
    %5060 = vmatpush1.xpose.msra.mxu0 0.0
    %5061 = vmatprep.subr.mxu0 0.0
    %5062 = vmatpush1.xpose.msra.mxu0 0.0
    %5063 = vmatprep.subr.mxu0 0.0
    %5064 = vmatpush1.xpose.msra.mxu0 0.0
    %5065 = vmatprep.subr.mxu0 0.0
    %5066 = vmatpush1.xpose.msra.mxu0 0.0
    %5067 = vmatprep.subr.mxu0 0.0
    %5068 = vmatpush1.xpose.msra.mxu0 0.0
    %5069 = vmatprep.subr.mxu0 0.0
    %5070 = vmatpush1.xpose.msra.mxu0 0.0
    %5071 = vmatprep.subr.mxu0 0.0
    %5072 = vmatpush1.xpose.msra.mxu0 0.0
    %5073 = vmatprep.subr.mxu0 0.0
    %5074 = vmatpush1.xpose.msra.mxu0 0.0
    %5075 = vmatprep.subr.mxu0 0.0
    %5076 = vmatpush1.xpose.msra.mxu0 0.0
    %5077 = vmatprep.subr.mxu0 0.0
    %5078 = vmatpush1.xpose.msra.mxu0 0.0
    %5079 = vmatprep.subr.mxu0 0.0
    %5080 = vmatpush1.xpose.msra.mxu0 0.0
    %5081 = vmatprep.subr.mxu0 0.0
    %5082 = vmatpush1.xpose.msra.mxu0 0.0
    %5083 = vmatprep.subr.mxu0 0.0
    %5084 = vmatpush1.xpose.msra.mxu0 0.0
    %5085 = vmatprep.subr.mxu0 0.0
    %5086 = vmatpush1.xpose.msra.mxu0 0.0
    %5087 = vmatprep.subr.mxu0 0.0
    %5088 = vmatpush1.xpose.msra.mxu0 0.0
    %5089 = vmatprep.subr.mxu0 0.0
    %5090 = vmatpush1.xpose.msra.mxu0 0.0
    %5091 = vmatprep.subr.mxu0 0.0
    %5092 = vmatpush1.xpose.msra.mxu0 0.0
    %5093 = vmatprep.subr.mxu0 0.0
    %5094 = vmatpush1.xpose.msra.mxu0 0.0
    %5095 = vmatprep.subr.mxu0 0.0
    %5096 = vmatpush1.xpose.msra.mxu0 0.0
    %5097 = vmatprep.subr.mxu0 0.0
    %5098 = vmatpush1.xpose.msra.mxu0 0.0
    %5099 = vmatprep.subr.mxu0 0.0
    %5100 = vmatpush1.xpose.msra.mxu0 0.0
    %5101 = vmatprep.subr.mxu0 0.0
    %5102 = vmatpush1.xpose.msra.mxu0 0.0
    %5103 = vmatprep.mubr.f32.mxu0 0.0
    %5104 = vmatmul.mubr.f32.gmra.mrb[0].mxu0 %v5035
    %v5105 = vpop.f32.mrb[0].mxu0
    %v5106 = vadd.f32 0.0, %v5105
    %v5107 = vpop.f32.mrb[0].mxu0
    %5108 = vdwg.mxu0
    %5109 = vrot.lane.b32.xlu0 %v3961, 32
    %v5110 = vpop.permute.xlu0 %5109
    %5111 = vrot.lane.b32.xlu0 %v4002, 32
    %v5112 = vpop.permute.xlu0 %5111
    %v5113 = vsel %vm943, %v5110, 0
    %v5115 = vsel %vm943, %v5112, 0
    %5117 = vmatprep.subr.mxu0 0.0
    %5118 = vmatpush1.xpose.msra.mxu0 %v5115
    %5119 = vmatprep.subr.mxu0 0.0
    %5120 = vmatpush1.xpose.msra.mxu0 0.0
    %5121 = vmatprep.subr.mxu0 0.0
    %5122 = vmatpush1.xpose.msra.mxu0 0.0
    %5123 = vmatprep.subr.mxu0 0.0
    %5124 = vmatpush1.xpose.msra.mxu0 0.0
    %5125 = vmatprep.subr.mxu0 0.0
    %5126 = vmatpush1.xpose.msra.mxu0 0.0
    %5127 = vmatprep.subr.mxu0 0.0
    %5128 = vmatpush1.xpose.msra.mxu0 0.0
    %5129 = vmatprep.subr.mxu0 0.0
    %5130 = vmatpush1.xpose.msra.mxu0 0.0
    %5131 = vmatprep.subr.mxu0 0.0
    %5132 = vmatpush1.xpose.msra.mxu0 0.0
    %5133 = vmatprep.subr.mxu0 0.0
    %5134 = vmatpush1.xpose.msra.mxu0 0.0
    %5135 = vmatprep.subr.mxu0 0.0
    %5136 = vmatpush1.xpose.msra.mxu0 0.0
    %5137 = vmatprep.subr.mxu0 0.0
    %5138 = vmatpush1.xpose.msra.mxu0 0.0
    %5139 = vmatprep.subr.mxu0 0.0
    %5140 = vmatpush1.xpose.msra.mxu0 0.0
    %5141 = vmatprep.subr.mxu0 0.0
    %5142 = vmatpush1.xpose.msra.mxu0 0.0
    %5143 = vmatprep.subr.mxu0 0.0
    %5144 = vmatpush1.xpose.msra.mxu0 0.0
    %5145 = vmatprep.subr.mxu0 0.0
    %5146 = vmatpush1.xpose.msra.mxu0 0.0
    %5147 = vmatprep.subr.mxu0 0.0
    %5148 = vmatpush1.xpose.msra.mxu0 0.0
    %5149 = vmatprep.subr.mxu0 0.0
    %5150 = vmatpush1.xpose.msra.mxu0 0.0
    %5151 = vmatprep.subr.mxu0 0.0
    %5152 = vmatpush1.xpose.msra.mxu0 0.0
    %5153 = vmatprep.subr.mxu0 0.0
    %5154 = vmatpush1.xpose.msra.mxu0 0.0
    %5155 = vmatprep.subr.mxu0 0.0
    %5156 = vmatpush1.xpose.msra.mxu0 0.0
    %5157 = vmatprep.subr.mxu0 0.0
    %5158 = vmatpush1.xpose.msra.mxu0 0.0
    %5159 = vmatprep.subr.mxu0 0.0
    %5160 = vmatpush1.xpose.msra.mxu0 0.0
    %5161 = vmatprep.subr.mxu0 0.0
    %5162 = vmatpush1.xpose.msra.mxu0 0.0
    %5163 = vmatprep.subr.mxu0 0.0
    %5164 = vmatpush1.xpose.msra.mxu0 0.0
    %5165 = vmatprep.subr.mxu0 0.0
    %5166 = vmatpush1.xpose.msra.mxu0 0.0
    %5167 = vmatprep.subr.mxu0 0.0
    %5168 = vmatpush1.xpose.msra.mxu0 0.0
    %5169 = vmatprep.subr.mxu0 0.0
    %5170 = vmatpush1.xpose.msra.mxu0 0.0
    %5171 = vmatprep.subr.mxu0 0.0
    %5172 = vmatpush1.xpose.msra.mxu0 0.0
    %5173 = vmatprep.subr.mxu0 0.0
    %5174 = vmatpush1.xpose.msra.mxu0 0.0
    %5175 = vmatprep.subr.mxu0 0.0
    %5176 = vmatpush1.xpose.msra.mxu0 0.0
    %5177 = vmatprep.subr.mxu0 0.0
    %5178 = vmatpush1.xpose.msra.mxu0 0.0
    %5179 = vmatprep.subr.mxu0 0.0
    %5180 = vmatpush1.xpose.msra.mxu0 0.0
    %5181 = vmatprep.mubr.f32.mxu0 0.0
    %5182 = vmatmul.mubr.f32.gmra.mrb[0].mxu0 %v5113
    %v5183 = vpop.f32.mrb[0].mxu0
    %v5184 = vadd.f32 0.0, %v5183
    %v5185 = vpop.f32.mrb[0].mxu0
    %5186 = vdwg.mxu0
    %v5187 = vsel %vm1096, %v5106, -inf
    %5188 = vmax.xlane.f32.xlu0 %v5187
    %v5189 = vpop.xlane.xlu0 %5188
    %v5190 = vsel %vm1096, %v5184, -inf
    %5191 = vmax.xlane.f32.xlu0 %v5190
    %v5192 = vpop.xlane.xlu0 %5191
    %v5193 = vsub.f32 %v5106, %v5189
    %v5194 = vsub.f32 %v5184, %v5192
    %v5195 = vmul.f32 %v5193, 1.442695
    %v5196 = vpow.pop %v5195
    %v5197 = vmul.f32 %v5194, 1.442695
    %v5198 = vpow.pop %v5197
    %v5199 = vsel %vm1096, %v5196, 0.0
    %5200 = vadd.xlane.f32.xlu0 %v5199
    %v5201 = vpop.xlane.xlu0 %5200
    %v5202 = vsel %vm1096, %v5198, 0.0
    %5203 = vadd.xlane.f32.xlu0 %v5202
    %v5204 = vpop.xlane.xlu0 %5203
    %v5205 = vrcp.pop %v5201
    %v5206 = vrcp.pop %v5204
    %v5207 = vmul.f32 %v5196, %v5205
    %v5208 = vmul.f32 %v5198, %v5206
    %5209 = vrot.lane.b32.xlu0 %v4041, 32
    %v5210 = vpop.permute.xlu0 %5209
    %v5213 = vsel %vm1096, %v5207, 0
    %5215 = vmatprep.subr.mxu0 0.0
    %5216 = vmatpush1.msra.mxu0 %v5210
    %5217 = vmatprep.subr.mxu0 0.0
    %5218 = vmatpush1.msra.mxu0 0.0
    %5219 = vmatprep.subr.mxu0 0.0
    %5220 = vmatpush1.msra.mxu0 0.0
    %5221 = vmatprep.subr.mxu0 0.0
    %5222 = vmatpush1.msra.mxu0 0.0
    %5223 = vmatprep.subr.mxu0 0.0
    %5224 = vmatpush1.msra.mxu0 0.0
    %5225 = vmatprep.subr.mxu0 0.0
    %5226 = vmatpush1.msra.mxu0 0.0
    %5227 = vmatprep.subr.mxu0 0.0
    %5228 = vmatpush1.msra.mxu0 0.0
    %5229 = vmatprep.subr.mxu0 0.0
    %5230 = vmatpush1.msra.mxu0 0.0
    %5231 = vmatprep.subr.mxu0 0.0
    %5232 = vmatpush1.msra.mxu0 0.0
    %5233 = vmatprep.subr.mxu0 0.0
    %5234 = vmatpush1.msra.mxu0 0.0
    %5235 = vmatprep.subr.mxu0 0.0
    %5236 = vmatpush1.msra.mxu0 0.0
    %5237 = vmatprep.subr.mxu0 0.0
    %5238 = vmatpush1.msra.mxu0 0.0
    %5239 = vmatprep.subr.mxu0 0.0
    %5240 = vmatpush1.msra.mxu0 0.0
    %5241 = vmatprep.subr.mxu0 0.0
    %5242 = vmatpush1.msra.mxu0 0.0
    %5243 = vmatprep.subr.mxu0 0.0
    %5244 = vmatpush1.msra.mxu0 0.0
    %5245 = vmatprep.subr.mxu0 0.0
    %5246 = vmatpush1.msra.mxu0 0.0
    %5247 = vmatprep.subr.mxu0 0.0
    %5248 = vmatpush1.msra.mxu0 0.0
    %5249 = vmatprep.subr.mxu0 0.0
    %5250 = vmatpush1.msra.mxu0 0.0
    %5251 = vmatprep.subr.mxu0 0.0
    %5252 = vmatpush1.msra.mxu0 0.0
    %5253 = vmatprep.subr.mxu0 0.0
    %5254 = vmatpush1.msra.mxu0 0.0
    %5255 = vmatprep.subr.mxu0 0.0
    %5256 = vmatpush1.msra.mxu0 0.0
    %5257 = vmatprep.subr.mxu0 0.0
    %5258 = vmatpush1.msra.mxu0 0.0
    %5259 = vmatprep.subr.mxu0 0.0
    %5260 = vmatpush1.msra.mxu0 0.0
    %5261 = vmatprep.subr.mxu0 0.0
    %5262 = vmatpush1.msra.mxu0 0.0
    %5263 = vmatprep.subr.mxu0 0.0
    %5264 = vmatpush1.msra.mxu0 0.0
    %5265 = vmatprep.subr.mxu0 0.0
    %5266 = vmatpush1.msra.mxu0 0.0
    %5267 = vmatprep.subr.mxu0 0.0
    %5268 = vmatpush1.msra.mxu0 0.0
    %5269 = vmatprep.subr.mxu0 0.0
    %5270 = vmatpush1.msra.mxu0 0.0
    %5271 = vmatprep.subr.mxu0 0.0
    %5272 = vmatpush1.msra.mxu0 0.0
    %5273 = vmatprep.subr.mxu0 0.0
    %5274 = vmatpush1.msra.mxu0 0.0
    %5275 = vmatprep.subr.mxu0 0.0
    %5276 = vmatpush1.msra.mxu0 0.0
    %5277 = vmatprep.subr.mxu0 0.0
    %5278 = vmatpush1.msra.mxu0 0.0
    %5279 = vmatprep.mubr.f32.mxu0 0.0
    %5280 = vmatmul.mubr.f32.gmra.mrb[0].mxu0 %v5213
    %v5281 = vpop.f32.mrb[0].mxu0
    %v5282 = vadd.f32 0.0, %v5281
    %v5283 = vpop.f32.mrb[0].mxu0
    %5284 = vdwg.mxu0
    %5285 = vrot.lane.b32.xlu0 %v4045, 32
    %v5286 = vpop.permute.xlu0 %5285
    %v5289 = vsel %vm1096, %v5208, 0
    %5291 = vmatprep.subr.mxu0 0.0
    %5292 = vmatpush1.msra.mxu0 %v5286
    %5293 = vmatprep.subr.mxu0 0.0
    %5294 = vmatpush1.msra.mxu0 0.0
    %5295 = vmatprep.subr.mxu0 0.0
    %5296 = vmatpush1.msra.mxu0 0.0
    %5297 = vmatprep.subr.mxu0 0.0
    %5298 = vmatpush1.msra.mxu0 0.0
    %5299 = vmatprep.subr.mxu0 0.0
    %5300 = vmatpush1.msra.mxu0 0.0
    %5301 = vmatprep.subr.mxu0 0.0
    %5302 = vmatpush1.msra.mxu0 0.0
    %5303 = vmatprep.subr.mxu0 0.0
    %5304 = vmatpush1.msra.mxu0 0.0
    %5305 = vmatprep.subr.mxu0 0.0
    %5306 = vmatpush1.msra.mxu0 0.0
    %5307 = vmatprep.subr.mxu0 0.0
    %5308 = vmatpush1.msra.mxu0 0.0
    %5309 = vmatprep.subr.mxu0 0.0
    %5310 = vmatpush1.msra.mxu0 0.0
    %5311 = vmatprep.subr.mxu0 0.0
    %5312 = vmatpush1.msra.mxu0 0.0
    %5313 = vmatprep.subr.mxu0 0.0
    %5314 = vmatpush1.msra.mxu0 0.0
    %5315 = vmatprep.subr.mxu0 0.0
    %5316 = vmatpush1.msra.mxu0 0.0
    %5317 = vmatprep.subr.mxu0 0.0
    %5318 = vmatpush1.msra.mxu0 0.0
    %5319 = vmatprep.subr.mxu0 0.0
    %5320 = vmatpush1.msra.mxu0 0.0
    %5321 = vmatprep.subr.mxu0 0.0
    %5322 = vmatpush1.msra.mxu0 0.0
    %5323 = vmatprep.subr.mxu0 0.0
    %5324 = vmatpush1.msra.mxu0 0.0
    %5325 = vmatprep.subr.mxu0 0.0
    %5326 = vmatpush1.msra.mxu0 0.0
    %5327 = vmatprep.subr.mxu0 0.0
    %5328 = vmatpush1.msra.mxu0 0.0
    %5329 = vmatprep.subr.mxu0 0.0
    %5330 = vmatpush1.msra.mxu0 0.0
    %5331 = vmatprep.subr.mxu0 0.0
    %5332 = vmatpush1.msra.mxu0 0.0
    %5333 = vmatprep.subr.mxu0 0.0
    %5334 = vmatpush1.msra.mxu0 0.0
    %5335 = vmatprep.subr.mxu0 0.0
    %5336 = vmatpush1.msra.mxu0 0.0
    %5337 = vmatprep.subr.mxu0 0.0
    %5338 = vmatpush1.msra.mxu0 0.0
    %5339 = vmatprep.subr.mxu0 0.0
    %5340 = vmatpush1.msra.mxu0 0.0
    %5341 = vmatprep.subr.mxu0 0.0
    %5342 = vmatpush1.msra.mxu0 0.0
    %5343 = vmatprep.subr.mxu0 0.0
    %5344 = vmatpush1.msra.mxu0 0.0
    %5345 = vmatprep.subr.mxu0 0.0
    %5346 = vmatpush1.msra.mxu0 0.0
    %5347 = vmatprep.subr.mxu0 0.0
    %5348 = vmatpush1.msra.mxu0 0.0
    %5349 = vmatprep.subr.mxu0 0.0
    %5350 = vmatpush1.msra.mxu0 0.0
    %5351 = vmatprep.subr.mxu0 0.0
    %5352 = vmatpush1.msra.mxu0 0.0
    %5353 = vmatprep.subr.mxu0 0.0
    %5354 = vmatpush1.msra.mxu0 0.0
    %5355 = vmatprep.mubr.f32.mxu0 0.0
    %5356 = vmatmul.mubr.f32.gmra.mrb[0].mxu0 %v5289
    %v5357 = vpop.f32.mrb[0].mxu0
    %v5358 = vadd.f32 0.0, %v5357
    %v5359 = vpop.f32.mrb[0].mxu0
    %5360 = vdwg.mxu0
    %v5362 = vsel %vm943, %v3960, 0
    %v5365 = vsel %vm943, %v4000, 0
    %5367 = vmatprep.subr.mxu0 0.0
    %5368 = vmatpush1.xpose.msra.mxu0 %v5365
    %5369 = vmatprep.subr.mxu0 0.0
    %5370 = vmatpush1.xpose.msra.mxu0 0.0
    %5371 = vmatprep.subr.mxu0 0.0
    %5372 = vmatpush1.xpose.msra.mxu0 0.0
    %5373 = vmatprep.subr.mxu0 0.0
    %5374 = vmatpush1.xpose.msra.mxu0 0.0
    %5375 = vmatprep.subr.mxu0 0.0
    %5376 = vmatpush1.xpose.msra.mxu0 0.0
    %5377 = vmatprep.subr.mxu0 0.0
    %5378 = vmatpush1.xpose.msra.mxu0 0.0
    %5379 = vmatprep.subr.mxu0 0.0
    %5380 = vmatpush1.xpose.msra.mxu0 0.0
    %5381 = vmatprep.subr.mxu0 0.0
    %5382 = vmatpush1.xpose.msra.mxu0 0.0
    %5383 = vmatprep.subr.mxu0 0.0
    %5384 = vmatpush1.xpose.msra.mxu0 0.0
    %5385 = vmatprep.subr.mxu0 0.0
    %5386 = vmatpush1.xpose.msra.mxu0 0.0
    %5387 = vmatprep.subr.mxu0 0.0
    %5388 = vmatpush1.xpose.msra.mxu0 0.0
    %5389 = vmatprep.subr.mxu0 0.0
    %5390 = vmatpush1.xpose.msra.mxu0 0.0
    %5391 = vmatprep.subr.mxu0 0.0
    %5392 = vmatpush1.xpose.msra.mxu0 0.0
    %5393 = vmatprep.subr.mxu0 0.0
    %5394 = vmatpush1.xpose.msra.mxu0 0.0
    %5395 = vmatprep.subr.mxu0 0.0
    %5396 = vmatpush1.xpose.msra.mxu0 0.0
    %5397 = vmatprep.subr.mxu0 0.0
    %5398 = vmatpush1.xpose.msra.mxu0 0.0
    %5399 = vmatprep.subr.mxu0 0.0
    %5400 = vmatpush1.xpose.msra.mxu0 0.0
    %5401 = vmatprep.subr.mxu0 0.0
    %5402 = vmatpush1.xpose.msra.mxu0 0.0
    %5403 = vmatprep.subr.mxu0 0.0
    %5404 = vmatpush1.xpose.msra.mxu0 0.0
    %5405 = vmatprep.subr.mxu0 0.0
    %5406 = vmatpush1.xpose.msra.mxu0 0.0
    %5407 = vmatprep.subr.mxu0 0.0
    %5408 = vmatpush1.xpose.msra.mxu0 0.0
    %5409 = vmatprep.subr.mxu0 0.0
    %5410 = vmatpush1.xpose.msra.mxu0 0.0
    %5411 = vmatprep.subr.mxu0 0.0
    %5412 = vmatpush1.xpose.msra.mxu0 0.0
    %5413 = vmatprep.subr.mxu0 0.0
    %5414 = vmatpush1.xpose.msra.mxu0 0.0
    %5415 = vmatprep.subr.mxu0 0.0
    %5416 = vmatpush1.xpose.msra.mxu0 0.0
    %5417 = vmatprep.subr.mxu0 0.0
    %5418 = vmatpush1.xpose.msra.mxu0 0.0
    %5419 = vmatprep.subr.mxu0 0.0
    %5420 = vmatpush1.xpose.msra.mxu0 0.0
    %5421 = vmatprep.subr.mxu0 0.0
    %5422 = vmatpush1.xpose.msra.mxu0 0.0
    %5423 = vmatprep.subr.mxu0 0.0
    %5424 = vmatpush1.xpose.msra.mxu0 0.0
    %5425 = vmatprep.subr.mxu0 0.0
    %5426 = vmatpush1.xpose.msra.mxu0 0.0
    %5427 = vmatprep.subr.mxu0 0.0
    %5428 = vmatpush1.xpose.msra.mxu0 0.0
    %5429 = vmatprep.subr.mxu0 0.0
    %5430 = vmatpush1.xpose.msra.mxu0 0.0
    %5431 = vmatprep.mubr.f32.mxu0 0.0
    %5432 = vmatmul.mubr.f32.gmra.mrb[0].mxu0 %v5362
    %v5433 = vpop.f32.mrb[0].mxu0
    %v5434 = vadd.f32 0.0, %v5433
    %v5435 = vpop.f32.mrb[0].mxu0
    %5436 = vdwg.mxu0
    %v5438 = vsel %vm943, %v3962, 0
    %v5441 = vsel %vm943, %v4004, 0
    %5443 = vmatprep.subr.mxu0 0.0
    %5444 = vmatpush1.xpose.msra.mxu0 %v5441
    %5445 = vmatprep.subr.mxu0 0.0
    %5446 = vmatpush1.xpose.msra.mxu0 0.0
    %5447 = vmatprep.subr.mxu0 0.0
    %5448 = vmatpush1.xpose.msra.mxu0 0.0
    %5449 = vmatprep.subr.mxu0 0.0
    %5450 = vmatpush1.xpose.msra.mxu0 0.0
    %5451 = vmatprep.subr.mxu0 0.0
    %5452 = vmatpush1.xpose.msra.mxu0 0.0
    %5453 = vmatprep.subr.mxu0 0.0
    %5454 = vmatpush1.xpose.msra.mxu0 0.0
    %5455 = vmatprep.subr.mxu0 0.0
    %5456 = vmatpush1.xpose.msra.mxu0 0.0
    %5457 = vmatprep.subr.mxu0 0.0
    %5458 = vmatpush1.xpose.msra.mxu0 0.0
    %5459 = vmatprep.subr.mxu0 0.0
    %5460 = vmatpush1.xpose.msra.mxu0 0.0
    %5461 = vmatprep.subr.mxu0 0.0
    %5462 = vmatpush1.xpose.msra.mxu0 0.0
    %5463 = vmatprep.subr.mxu0 0.0
    %5464 = vmatpush1.xpose.msra.mxu0 0.0
    %5465 = vmatprep.subr.mxu0 0.0
    %5466 = vmatpush1.xpose.msra.mxu0 0.0
    %5467 = vmatprep.subr.mxu0 0.0
    %5468 = vmatpush1.xpose.msra.mxu0 0.0
    %5469 = vmatprep.subr.mxu0 0.0
    %5470 = vmatpush1.xpose.msra.mxu0 0.0
    %5471 = vmatprep.subr.mxu0 0.0
    %5472 = vmatpush1.xpose.msra.mxu0 0.0
    %5473 = vmatprep.subr.mxu0 0.0
    %5474 = vmatpush1.xpose.msra.mxu0 0.0
    %5475 = vmatprep.subr.mxu0 0.0
    %5476 = vmatpush1.xpose.msra.mxu0 0.0
    %5477 = vmatprep.subr.mxu0 0.0
    %5478 = vmatpush1.xpose.msra.mxu0 0.0
    %5479 = vmatprep.subr.mxu0 0.0
    %5480 = vmatpush1.xpose.msra.mxu0 0.0
    %5481 = vmatprep.subr.mxu0 0.0
    %5482 = vmatpush1.xpose.msra.mxu0 0.0
    %5483 = vmatprep.subr.mxu0 0.0
    %5484 = vmatpush1.xpose.msra.mxu0 0.0
    %5485 = vmatprep.subr.mxu0 0.0
    %5486 = vmatpush1.xpose.msra.mxu0 0.0
    %5487 = vmatprep.subr.mxu0 0.0
    %5488 = vmatpush1.xpose.msra.mxu0 0.0
    %5489 = vmatprep.subr.mxu0 0.0
    %5490 = vmatpush1.xpose.msra.mxu0 0.0
    %5491 = vmatprep.subr.mxu0 0.0
    %5492 = vmatpush1.xpose.msra.mxu0 0.0
    %5493 = vmatprep.subr.mxu0 0.0
    %5494 = vmatpush1.xpose.msra.mxu0 0.0
    %5495 = vmatprep.subr.mxu0 0.0
    %5496 = vmatpush1.xpose.msra.mxu0 0.0
    %5497 = vmatprep.subr.mxu0 0.0
    %5498 = vmatpush1.xpose.msra.mxu0 0.0
    %5499 = vmatprep.subr.mxu0 0.0
    %5500 = vmatpush1.xpose.msra.mxu0 0.0
    %5501 = vmatprep.subr.mxu0 0.0
    %5502 = vmatpush1.xpose.msra.mxu0 0.0
    %5503 = vmatprep.subr.mxu0 0.0
    %5504 = vmatpush1.xpose.msra.mxu0 0.0
    %5505 = vmatprep.subr.mxu0 0.0
    %5506 = vmatpush1.xpose.msra.mxu0 0.0
    %5507 = vmatprep.mubr.f32.mxu0 0.0
    %5508 = vmatmul.mubr.f32.gmra.mrb[0].mxu0 %v5438
    %v5509 = vpop.f32.mrb[0].mxu0
    %v5510 = vadd.f32 0.0, %v5509
    %v5511 = vpop.f32.mrb[0].mxu0
    %5512 = vdwg.mxu0
    %v5513 = vsel %vm1096, %v5434, -inf
    %5514 = vmax.xlane.f32.xlu0 %v5513
    %v5515 = vpop.xlane.xlu0 %5514
    %v5516 = vsel %vm1096, %v5510, -inf
    %5517 = vmax.xlane.f32.xlu0 %v5516
    %v5518 = vpop.xlane.xlu0 %5517
    %v5519 = vsub.f32 %v5434, %v5515
    %v5520 = vsub.f32 %v5510, %v5518
    %v5521 = vmul.f32 %v5519, 1.442695
    %v5522 = vpow.pop %v5521
    %v5523 = vmul.f32 %v5520, 1.442695
    %v5524 = vpow.pop %v5523
    %v5525 = vsel %vm1096, %v5522, 0.0
    %5526 = vadd.xlane.f32.xlu0 %v5525
    %v5527 = vpop.xlane.xlu0 %5526
    %v5528 = vsel %vm1096, %v5524, 0.0
    %5529 = vadd.xlane.f32.xlu0 %v5528
    %v5530 = vpop.xlane.xlu0 %5529
    %v5531 = vrcp.pop %v5527
    %v5532 = vrcp.pop %v5530
    %v5533 = vmul.f32 %v5522, %v5531
    %v5534 = vmul.f32 %v5524, %v5532
    %v5536 = vsel %vm1096, %v5533, 0
    %5538 = vmatprep.subr.mxu0 0.0
    %5539 = vmatpush1.msra.mxu0 %v4043
    %5540 = vmatprep.subr.mxu0 0.0
    %5541 = vmatpush1.msra.mxu0 0.0
    %5542 = vmatprep.subr.mxu0 0.0
    %5543 = vmatpush1.msra.mxu0 0.0
    %5544 = vmatprep.subr.mxu0 0.0
    %5545 = vmatpush1.msra.mxu0 0.0
    %5546 = vmatprep.subr.mxu0 0.0
    %5547 = vmatpush1.msra.mxu0 0.0
    %5548 = vmatprep.subr.mxu0 0.0
    %5549 = vmatpush1.msra.mxu0 0.0
    %5550 = vmatprep.subr.mxu0 0.0
    %5551 = vmatpush1.msra.mxu0 0.0
    %5552 = vmatprep.subr.mxu0 0.0
    %5553 = vmatpush1.msra.mxu0 0.0
    %5554 = vmatprep.subr.mxu0 0.0
    %5555 = vmatpush1.msra.mxu0 0.0
    %5556 = vmatprep.subr.mxu0 0.0
    %5557 = vmatpush1.msra.mxu0 0.0
    %5558 = vmatprep.subr.mxu0 0.0
    %5559 = vmatpush1.msra.mxu0 0.0
    %5560 = vmatprep.subr.mxu0 0.0
    %5561 = vmatpush1.msra.mxu0 0.0
    %5562 = vmatprep.subr.mxu0 0.0
    %5563 = vmatpush1.msra.mxu0 0.0
    %5564 = vmatprep.subr.mxu0 0.0
    %5565 = vmatpush1.msra.mxu0 0.0
    %5566 = vmatprep.subr.mxu0 0.0
    %5567 = vmatpush1.msra.mxu0 0.0
    %5568 = vmatprep.subr.mxu0 0.0
    %5569 = vmatpush1.msra.mxu0 0.0
    %5570 = vmatprep.subr.mxu0 0.0
    %5571 = vmatpush1.msra.mxu0 0.0
    %5572 = vmatprep.subr.mxu0 0.0
    %5573 = vmatpush1.msra.mxu0 0.0
    %5574 = vmatprep.subr.mxu0 0.0
    %5575 = vmatpush1.msra.mxu0 0.0
    %5576 = vmatprep.subr.mxu0 0.0
    %5577 = vmatpush1.msra.mxu0 0.0
    %5578 = vmatprep.subr.mxu0 0.0
    %5579 = vmatpush1.msra.mxu0 0.0
    %5580 = vmatprep.subr.mxu0 0.0
    %5581 = vmatpush1.msra.mxu0 0.0
    %5582 = vmatprep.subr.mxu0 0.0
    %5583 = vmatpush1.msra.mxu0 0.0
    %5584 = vmatprep.subr.mxu0 0.0
    %5585 = vmatpush1.msra.mxu0 0.0
    %5586 = vmatprep.subr.mxu0 0.0
    %5587 = vmatpush1.msra.mxu0 0.0
    %5588 = vmatprep.subr.mxu0 0.0
    %5589 = vmatpush1.msra.mxu0 0.0
    %5590 = vmatprep.subr.mxu0 0.0
    %5591 = vmatpush1.msra.mxu0 0.0
    %5592 = vmatprep.subr.mxu0 0.0
    %5593 = vmatpush1.msra.mxu0 0.0
    %5594 = vmatprep.subr.mxu0 0.0
    %5595 = vmatpush1.msra.mxu0 0.0
    %5596 = vmatprep.subr.mxu0 0.0
    %5597 = vmatpush1.msra.mxu0 0.0
    %5598 = vmatprep.subr.mxu0 0.0
    %5599 = vmatpush1.msra.mxu0 0.0
    %5600 = vmatprep.subr.mxu0 0.0
    %5601 = vmatpush1.msra.mxu0 0.0
    %5602 = vmatprep.mubr.f32.mxu0 0.0
    %5603 = vmatmul.mubr.f32.gmra.mrb[0].mxu0 %v5536
    %v5604 = vpop.f32.mrb[0].mxu0
    %v5605 = vadd.f32 0.0, %v5604
    %v5606 = vpop.f32.mrb[0].mxu0
    %5607 = vdwg.mxu0
    %v5609 = vsel %vm1096, %v5534, 0
    %5611 = vmatprep.subr.mxu0 0.0
    %5612 = vmatpush1.msra.mxu0 %v4047
    %5613 = vmatprep.subr.mxu0 0.0
    %5614 = vmatpush1.msra.mxu0 0.0
    %5615 = vmatprep.subr.mxu0 0.0
    %5616 = vmatpush1.msra.mxu0 0.0
    %5617 = vmatprep.subr.mxu0 0.0
    %5618 = vmatpush1.msra.mxu0 0.0
    %5619 = vmatprep.subr.mxu0 0.0
    %5620 = vmatpush1.msra.mxu0 0.0
    %5621 = vmatprep.subr.mxu0 0.0
    %5622 = vmatpush1.msra.mxu0 0.0
    %5623 = vmatprep.subr.mxu0 0.0
    %5624 = vmatpush1.msra.mxu0 0.0
    %5625 = vmatprep.subr.mxu0 0.0
    %5626 = vmatpush1.msra.mxu0 0.0
    %5627 = vmatprep.subr.mxu0 0.0
    %5628 = vmatpush1.msra.mxu0 0.0
    %5629 = vmatprep.subr.mxu0 0.0
    %5630 = vmatpush1.msra.mxu0 0.0
    %5631 = vmatprep.subr.mxu0 0.0
    %5632 = vmatpush1.msra.mxu0 0.0
    %5633 = vmatprep.subr.mxu0 0.0
    %5634 = vmatpush1.msra.mxu0 0.0
    %5635 = vmatprep.subr.mxu0 0.0
    %5636 = vmatpush1.msra.mxu0 0.0
    %5637 = vmatprep.subr.mxu0 0.0
    %5638 = vmatpush1.msra.mxu0 0.0
    %5639 = vmatprep.subr.mxu0 0.0
    %5640 = vmatpush1.msra.mxu0 0.0
    %5641 = vmatprep.subr.mxu0 0.0
    %5642 = vmatpush1.msra.mxu0 0.0
    %5643 = vmatprep.subr.mxu0 0.0
    %5644 = vmatpush1.msra.mxu0 0.0
    %5645 = vmatprep.subr.mxu0 0.0
    %5646 = vmatpush1.msra.mxu0 0.0
    %5647 = vmatprep.subr.mxu0 0.0
    %5648 = vmatpush1.msra.mxu0 0.0
    %5649 = vmatprep.subr.mxu0 0.0
    %5650 = vmatpush1.msra.mxu0 0.0
    %5651 = vmatprep.subr.mxu0 0.0
    %5652 = vmatpush1.msra.mxu0 0.0
    %5653 = vmatprep.subr.mxu0 0.0
    %5654 = vmatpush1.msra.mxu0 0.0
    %5655 = vmatprep.subr.mxu0 0.0
    %5656 = vmatpush1.msra.mxu0 0.0
    %5657 = vmatprep.subr.mxu0 0.0
    %5658 = vmatpush1.msra.mxu0 0.0
    %5659 = vmatprep.subr.mxu0 0.0
    %5660 = vmatpush1.msra.mxu0 0.0
    %5661 = vmatprep.subr.mxu0 0.0
    %5662 = vmatpush1.msra.mxu0 0.0
    %5663 = vmatprep.subr.mxu0 0.0
    %5664 = vmatpush1.msra.mxu0 0.0
    %5665 = vmatprep.subr.mxu0 0.0
    %5666 = vmatpush1.msra.mxu0 0.0
    %5667 = vmatprep.subr.mxu0 0.0
    %5668 = vmatpush1.msra.mxu0 0.0
    %5669 = vmatprep.subr.mxu0 0.0
    %5670 = vmatpush1.msra.mxu0 0.0
    %5671 = vmatprep.subr.mxu0 0.0
    %5672 = vmatpush1.msra.mxu0 0.0
    %5673 = vmatprep.subr.mxu0 0.0
    %5674 = vmatpush1.msra.mxu0 0.0
    %5675 = vmatprep.mubr.f32.mxu0 0.0
    %5676 = vmatmul.mubr.f32.gmra.mrb[0].mxu0 %v5609
    %v5677 = vpop.f32.mrb[0].mxu0
    %v5678 = vadd.f32 0.0, %v5677
    %v5679 = vpop.f32.mrb[0].mxu0
    %5680 = vdwg.mxu0
    %5681 = vrot.lane.b32.xlu0 %v3960, 96
    %v5682 = vpop.permute.xlu0 %5681
    %5683 = vrot.lane.b32.xlu0 %v4000, 96
    %v5684 = vpop.permute.xlu0 %5683
    %v5685 = vsel %vm943, %v5682, 0
    %v5687 = vsel %vm943, %v5684, 0
    %5689 = vmatprep.subr.mxu0 0.0
    %5690 = vmatpush1.xpose.msra.mxu0 %v5687
    %5691 = vmatprep.subr.mxu0 0.0
    %5692 = vmatpush1.xpose.msra.mxu0 0.0
    %5693 = vmatprep.subr.mxu0 0.0
    %5694 = vmatpush1.xpose.msra.mxu0 0.0
    %5695 = vmatprep.subr.mxu0 0.0
    %5696 = vmatpush1.xpose.msra.mxu0 0.0
    %5697 = vmatprep.subr.mxu0 0.0
    %5698 = vmatpush1.xpose.msra.mxu0 0.0
    %5699 = vmatprep.subr.mxu0 0.0
    %5700 = vmatpush1.xpose.msra.mxu0 0.0
    %5701 = vmatprep.subr.mxu0 0.0
    %5702 = vmatpush1.xpose.msra.mxu0 0.0
    %5703 = vmatprep.subr.mxu0 0.0
    %5704 = vmatpush1.xpose.msra.mxu0 0.0
    %5705 = vmatprep.subr.mxu0 0.0
    %5706 = vmatpush1.xpose.msra.mxu0 0.0
    %5707 = vmatprep.subr.mxu0 0.0
    %5708 = vmatpush1.xpose.msra.mxu0 0.0
    %5709 = vmatprep.subr.mxu0 0.0
    %5710 = vmatpush1.xpose.msra.mxu0 0.0
    %5711 = vmatprep.subr.mxu0 0.0
    %5712 = vmatpush1.xpose.msra.mxu0 0.0
    %5713 = vmatprep.subr.mxu0 0.0
    %5714 = vmatpush1.xpose.msra.mxu0 0.0
    %5715 = vmatprep.subr.mxu0 0.0
    %5716 = vmatpush1.xpose.msra.mxu0 0.0
    %5717 = vmatprep.subr.mxu0 0.0
    %5718 = vmatpush1.xpose.msra.mxu0 0.0
    %5719 = vmatprep.subr.mxu0 0.0
    %5720 = vmatpush1.xpose.msra.mxu0 0.0
    %5721 = vmatprep.subr.mxu0 0.0
    %5722 = vmatpush1.xpose.msra.mxu0 0.0
    %5723 = vmatprep.subr.mxu0 0.0
    %5724 = vmatpush1.xpose.msra.mxu0 0.0
    %5725 = vmatprep.subr.mxu0 0.0
    %5726 = vmatpush1.xpose.msra.mxu0 0.0
    %5727 = vmatprep.subr.mxu0 0.0
    %5728 = vmatpush1.xpose.msra.mxu0 0.0
    %5729 = vmatprep.subr.mxu0 0.0
    %5730 = vmatpush1.xpose.msra.mxu0 0.0
    %5731 = vmatprep.subr.mxu0 0.0
    %5732 = vmatpush1.xpose.msra.mxu0 0.0
    %5733 = vmatprep.subr.mxu0 0.0
    %5734 = vmatpush1.xpose.msra.mxu0 0.0
    %5735 = vmatprep.subr.mxu0 0.0
    %5736 = vmatpush1.xpose.msra.mxu0 0.0
    %5737 = vmatprep.subr.mxu0 0.0
    %5738 = vmatpush1.xpose.msra.mxu0 0.0
    %5739 = vmatprep.subr.mxu0 0.0
    %5740 = vmatpush1.xpose.msra.mxu0 0.0
    %5741 = vmatprep.subr.mxu0 0.0
    %5742 = vmatpush1.xpose.msra.mxu0 0.0
    %5743 = vmatprep.subr.mxu0 0.0
    %5744 = vmatpush1.xpose.msra.mxu0 0.0
    %5745 = vmatprep.subr.mxu0 0.0
    %5746 = vmatpush1.xpose.msra.mxu0 0.0
    %5747 = vmatprep.subr.mxu0 0.0
    %5748 = vmatpush1.xpose.msra.mxu0 0.0
    %5749 = vmatprep.subr.mxu0 0.0
    %5750 = vmatpush1.xpose.msra.mxu0 0.0
    %5751 = vmatprep.subr.mxu0 0.0
    %5752 = vmatpush1.xpose.msra.mxu0 0.0
    %5753 = vmatprep.mubr.f32.mxu0 0.0
    %5754 = vmatmul.mubr.f32.gmra.mrb[0].mxu0 %v5685
    %v5755 = vpop.f32.mrb[0].mxu0
    %v5756 = vadd.f32 0.0, %v5755
    %v5757 = vpop.f32.mrb[0].mxu0
    %5758 = vdwg.mxu0
    %5759 = vrot.lane.b32.xlu0 %v3962, 96
    %v5760 = vpop.permute.xlu0 %5759
    %5761 = vrot.lane.b32.xlu0 %v4004, 96
    %v5762 = vpop.permute.xlu0 %5761
    %v5763 = vsel %vm943, %v5760, 0
    %v5765 = vsel %vm943, %v5762, 0
    %5767 = vmatprep.subr.mxu0 0.0
    %5768 = vmatpush1.xpose.msra.mxu0 %v5765
    %5769 = vmatprep.subr.mxu0 0.0
    %5770 = vmatpush1.xpose.msra.mxu0 0.0
    %5771 = vmatprep.subr.mxu0 0.0
    %5772 = vmatpush1.xpose.msra.mxu0 0.0
    %5773 = vmatprep.subr.mxu0 0.0
    %5774 = vmatpush1.xpose.msra.mxu0 0.0
    %5775 = vmatprep.subr.mxu0 0.0
    %5776 = vmatpush1.xpose.msra.mxu0 0.0
    %5777 = vmatprep.subr.mxu0 0.0
    %5778 = vmatpush1.xpose.msra.mxu0 0.0
    %5779 = vmatprep.subr.mxu0 0.0
    %5780 = vmatpush1.xpose.msra.mxu0 0.0
    %5781 = vmatprep.subr.mxu0 0.0
    %5782 = vmatpush1.xpose.msra.mxu0 0.0
    %5783 = vmatprep.subr.mxu0 0.0
    %5784 = vmatpush1.xpose.msra.mxu0 0.0
    %5785 = vmatprep.subr.mxu0 0.0
    %5786 = vmatpush1.xpose.msra.mxu0 0.0
    %5787 = vmatprep.subr.mxu0 0.0
    %5788 = vmatpush1.xpose.msra.mxu0 0.0
    %5789 = vmatprep.subr.mxu0 0.0
    %5790 = vmatpush1.xpose.msra.mxu0 0.0
    %5791 = vmatprep.subr.mxu0 0.0
    %5792 = vmatpush1.xpose.msra.mxu0 0.0
    %5793 = vmatprep.subr.mxu0 0.0
    %5794 = vmatpush1.xpose.msra.mxu0 0.0
    %5795 = vmatprep.subr.mxu0 0.0
    %5796 = vmatpush1.xpose.msra.mxu0 0.0
    %5797 = vmatprep.subr.mxu0 0.0
    %5798 = vmatpush1.xpose.msra.mxu0 0.0
    %5799 = vmatprep.subr.mxu0 0.0
    %5800 = vmatpush1.xpose.msra.mxu0 0.0
    %5801 = vmatprep.subr.mxu0 0.0
    %5802 = vmatpush1.xpose.msra.mxu0 0.0
    %5803 = vmatprep.subr.mxu0 0.0
    %5804 = vmatpush1.xpose.msra.mxu0 0.0
    %5805 = vmatprep.subr.mxu0 0.0
    %5806 = vmatpush1.xpose.msra.mxu0 0.0
    %5807 = vmatprep.subr.mxu0 0.0
    %5808 = vmatpush1.xpose.msra.mxu0 0.0
    %5809 = vmatprep.subr.mxu0 0.0
    %5810 = vmatpush1.xpose.msra.mxu0 0.0
    %5811 = vmatprep.subr.mxu0 0.0
    %5812 = vmatpush1.xpose.msra.mxu0 0.0
    %5813 = vmatprep.subr.mxu0 0.0
    %5814 = vmatpush1.xpose.msra.mxu0 0.0
    %5815 = vmatprep.subr.mxu0 0.0
    %5816 = vmatpush1.xpose.msra.mxu0 0.0
    %5817 = vmatprep.subr.mxu0 0.0
    %5818 = vmatpush1.xpose.msra.mxu0 0.0
    %5819 = vmatprep.subr.mxu0 0.0
    %5820 = vmatpush1.xpose.msra.mxu0 0.0
    %5821 = vmatprep.subr.mxu0 0.0
    %5822 = vmatpush1.xpose.msra.mxu0 0.0
    %5823 = vmatprep.subr.mxu0 0.0
    %5824 = vmatpush1.xpose.msra.mxu0 0.0
    %5825 = vmatprep.subr.mxu0 0.0
    %5826 = vmatpush1.xpose.msra.mxu0 0.0
    %5827 = vmatprep.subr.mxu0 0.0
    %5828 = vmatpush1.xpose.msra.mxu0 0.0
    %5829 = vmatprep.subr.mxu0 0.0
    %5830 = vmatpush1.xpose.msra.mxu0 0.0
    %5831 = vmatprep.mubr.f32.mxu0 0.0
    %5832 = vmatmul.mubr.f32.gmra.mrb[0].mxu0 %v5763
    %v5833 = vpop.f32.mrb[0].mxu0
    %v5834 = vadd.f32 0.0, %v5833
    %v5835 = vpop.f32.mrb[0].mxu0
    %5836 = vdwg.mxu0
    %v5837 = vsel %vm1096, %v5756, -inf
    %5838 = vmax.xlane.f32.xlu0 %v5837
    %v5839 = vpop.xlane.xlu0 %5838
    %v5840 = vsel %vm1096, %v5834, -inf
    %5841 = vmax.xlane.f32.xlu0 %v5840
    %v5842 = vpop.xlane.xlu0 %5841
    %v5843 = vsub.f32 %v5756, %v5839
    %v5844 = vsub.f32 %v5834, %v5842
    %v5845 = vmul.f32 %v5843, 1.442695
    %v5846 = vpow.pop %v5845
    %v5847 = vmul.f32 %v5844, 1.442695
    %v5848 = vpow.pop %v5847
    %v5849 = vsel %vm1096, %v5846, 0.0
    %5850 = vadd.xlane.f32.xlu0 %v5849
    %v5851 = vpop.xlane.xlu0 %5850
    %v5852 = vsel %vm1096, %v5848, 0.0
    %5853 = vadd.xlane.f32.xlu0 %v5852
    %v5854 = vpop.xlane.xlu0 %5853
    %v5855 = vrcp.pop %v5851
    %v5856 = vrcp.pop %v5854
    %v5857 = vmul.f32 %v5846, %v5855
    %v5858 = vmul.f32 %v5848, %v5856
    %5860 = vrot.lane.b32.xlu0 %v4043, 96
    %v5861 = vpop.permute.xlu0 %5860
    %v5864 = vsel %vm1096, %v5857, 0
    %5866 = vmatprep.subr.mxu0 0.0
    %5867 = vmatpush1.msra.mxu0 %v5861
    %5868 = vmatprep.subr.mxu0 0.0
    %5869 = vmatpush1.msra.mxu0 0.0
    %5870 = vmatprep.subr.mxu0 0.0
    %5871 = vmatpush1.msra.mxu0 0.0
    %5872 = vmatprep.subr.mxu0 0.0
    %5873 = vmatpush1.msra.mxu0 0.0
    %5874 = vmatprep.subr.mxu0 0.0
    %5875 = vmatpush1.msra.mxu0 0.0
    %5876 = vmatprep.subr.mxu0 0.0
    %5877 = vmatpush1.msra.mxu0 0.0
    %5878 = vmatprep.subr.mxu0 0.0
    %5879 = vmatpush1.msra.mxu0 0.0
    %5880 = vmatprep.subr.mxu0 0.0
    %5881 = vmatpush1.msra.mxu0 0.0
    %5882 = vmatprep.subr.mxu0 0.0
    %5883 = vmatpush1.msra.mxu0 0.0
    %5884 = vmatprep.subr.mxu0 0.0
    %5885 = vmatpush1.msra.mxu0 0.0
    %5886 = vmatprep.subr.mxu0 0.0
    %5887 = vmatpush1.msra.mxu0 0.0
    %5888 = vmatprep.subr.mxu0 0.0
    %5889 = vmatpush1.msra.mxu0 0.0
    %5890 = vmatprep.subr.mxu0 0.0
    %5891 = vmatpush1.msra.mxu0 0.0
    %5892 = vmatprep.subr.mxu0 0.0
    %5893 = vmatpush1.msra.mxu0 0.0
    %5894 = vmatprep.subr.mxu0 0.0
    %5895 = vmatpush1.msra.mxu0 0.0
    %5896 = vmatprep.subr.mxu0 0.0
    %5897 = vmatpush1.msra.mxu0 0.0
    %5898 = vmatprep.subr.mxu0 0.0
    %5899 = vmatpush1.msra.mxu0 0.0
    %5900 = vmatprep.subr.mxu0 0.0
    %5901 = vmatpush1.msra.mxu0 0.0
    %5902 = vmatprep.subr.mxu0 0.0
    %5903 = vmatpush1.msra.mxu0 0.0
    %5904 = vmatprep.subr.mxu0 0.0
    %5905 = vmatpush1.msra.mxu0 0.0
    %5906 = vmatprep.subr.mxu0 0.0
    %5907 = vmatpush1.msra.mxu0 0.0
    %5908 = vmatprep.subr.mxu0 0.0
    %5909 = vmatpush1.msra.mxu0 0.0
    %5910 = vmatprep.subr.mxu0 0.0
    %5911 = vmatpush1.msra.mxu0 0.0
    %5912 = vmatprep.subr.mxu0 0.0
    %5913 = vmatpush1.msra.mxu0 0.0
    %5914 = vmatprep.subr.mxu0 0.0
    %5915 = vmatpush1.msra.mxu0 0.0
    %5916 = vmatprep.subr.mxu0 0.0
    %5917 = vmatpush1.msra.mxu0 0.0
    %5918 = vmatprep.subr.mxu0 0.0
    %5919 = vmatpush1.msra.mxu0 0.0
    %5920 = vmatprep.subr.mxu0 0.0
    %5921 = vmatpush1.msra.mxu0 0.0
    %5922 = vmatprep.subr.mxu0 0.0
    %5923 = vmatpush1.msra.mxu0 0.0
    %5924 = vmatprep.subr.mxu0 0.0
    %5925 = vmatpush1.msra.mxu0 0.0
    %5926 = vmatprep.subr.mxu0 0.0
    %5927 = vmatpush1.msra.mxu0 0.0
    %5928 = vmatprep.subr.mxu0 0.0
    %5929 = vmatpush1.msra.mxu0 0.0
    %5930 = vmatprep.mubr.f32.mxu0 0.0
    %5931 = vmatmul.mubr.f32.gmra.mrb[0].mxu0 %v5864
    %v5932 = vpop.f32.mrb[0].mxu0
    %v5933 = vadd.f32 0.0, %v5932
    %v5934 = vpop.f32.mrb[0].mxu0
    %5935 = vdwg.mxu0
    %5937 = vrot.lane.b32.xlu0 %v4047, 96
    %v5938 = vpop.permute.xlu0 %5937
    %v5941 = vsel %vm1096, %v5858, 0
    %5943 = vmatprep.subr.mxu0 0.0
    %5944 = vmatpush1.msra.mxu0 %v5938
    %5945 = vmatprep.subr.mxu0 0.0
    %5946 = vmatpush1.msra.mxu0 0.0
    %5947 = vmatprep.subr.mxu0 0.0
    %5948 = vmatpush1.msra.mxu0 0.0
    %5949 = vmatprep.subr.mxu0 0.0
    %5950 = vmatpush1.msra.mxu0 0.0
    %5951 = vmatprep.subr.mxu0 0.0
    %5952 = vmatpush1.msra.mxu0 0.0
    %5953 = vmatprep.subr.mxu0 0.0
    %5954 = vmatpush1.msra.mxu0 0.0
    %5955 = vmatprep.subr.mxu0 0.0
    %5956 = vmatpush1.msra.mxu0 0.0
    %5957 = vmatprep.subr.mxu0 0.0
    %5958 = vmatpush1.msra.mxu0 0.0
    %5959 = vmatprep.subr.mxu0 0.0
    %5960 = vmatpush1.msra.mxu0 0.0
    %5961 = vmatprep.subr.mxu0 0.0
    %5962 = vmatpush1.msra.mxu0 0.0
    %5963 = vmatprep.subr.mxu0 0.0
    %5964 = vmatpush1.msra.mxu0 0.0
    %5965 = vmatprep.subr.mxu0 0.0
    %5966 = vmatpush1.msra.mxu0 0.0
    %5967 = vmatprep.subr.mxu0 0.0
    %5968 = vmatpush1.msra.mxu0 0.0
    %5969 = vmatprep.subr.mxu0 0.0
    %5970 = vmatpush1.msra.mxu0 0.0
    %5971 = vmatprep.subr.mxu0 0.0
    %5972 = vmatpush1.msra.mxu0 0.0
    %5973 = vmatprep.subr.mxu0 0.0
    %5974 = vmatpush1.msra.mxu0 0.0
    %5975 = vmatprep.subr.mxu0 0.0
    %5976 = vmatpush1.msra.mxu0 0.0
    %5977 = vmatprep.subr.mxu0 0.0
    %5978 = vmatpush1.msra.mxu0 0.0
    %5979 = vmatprep.subr.mxu0 0.0
    %5980 = vmatpush1.msra.mxu0 0.0
    %5981 = vmatprep.subr.mxu0 0.0
    %5982 = vmatpush1.msra.mxu0 0.0
    %5983 = vmatprep.subr.mxu0 0.0
    %5984 = vmatpush1.msra.mxu0 0.0
    %5985 = vmatprep.subr.mxu0 0.0
    %5986 = vmatpush1.msra.mxu0 0.0
    %5987 = vmatprep.subr.mxu0 0.0
    %5988 = vmatpush1.msra.mxu0 0.0
    %5989 = vmatprep.subr.mxu0 0.0
    %5990 = vmatpush1.msra.mxu0 0.0
    %5991 = vmatprep.subr.mxu0 0.0
    %5992 = vmatpush1.msra.mxu0 0.0
    %5993 = vmatprep.subr.mxu0 0.0
    %5994 = vmatpush1.msra.mxu0 0.0
    %5995 = vmatprep.subr.mxu0 0.0
    %5996 = vmatpush1.msra.mxu0 0.0
    %5997 = vmatprep.subr.mxu0 0.0
    %5998 = vmatpush1.msra.mxu0 0.0
    %5999 = vmatprep.subr.mxu0 0.0
    %6000 = vmatpush1.msra.mxu0 0.0
    %6001 = vmatprep.subr.mxu0 0.0
    %6002 = vmatpush1.msra.mxu0 0.0
    %6003 = vmatprep.subr.mxu0 0.0
    %6004 = vmatpush1.msra.mxu0 0.0
    %6005 = vmatprep.subr.mxu0 0.0
    %6006 = vmatpush1.msra.mxu0 0.0
    %6007 = vmatprep.mubr.f32.mxu0 0.0
    %6008 = vmatmul.mubr.f32.gmra.mrb[0].mxu0 %v5941
    %v6009 = vpop.f32.mrb[0].mxu0
    %v6010 = vadd.f32 0.0, %v6009
    %v6011 = vpop.f32.mrb[0].mxu0
    %6012 = vdwg.mxu0
    %6013 = vrot.lane.b32.xlu0 %v3960, 64
    %v6014 = vpop.permute.xlu0 %6013
    %6015 = vrot.lane.b32.xlu0 %v4000, 64
    %v6016 = vpop.permute.xlu0 %6015
    %v6017 = vsel %vm943, %v6014, 0
    %v6019 = vsel %vm943, %v6016, 0
    %6021 = vmatprep.subr.mxu0 0.0
    %6022 = vmatpush1.xpose.msra.mxu0 %v6019
    %6023 = vmatprep.subr.mxu0 0.0
    %6024 = vmatpush1.xpose.msra.mxu0 0.0
    %6025 = vmatprep.subr.mxu0 0.0
    %6026 = vmatpush1.xpose.msra.mxu0 0.0
    %6027 = vmatprep.subr.mxu0 0.0
    %6028 = vmatpush1.xpose.msra.mxu0 0.0
    %6029 = vmatprep.subr.mxu0 0.0
    %6030 = vmatpush1.xpose.msra.mxu0 0.0
    %6031 = vmatprep.subr.mxu0 0.0
    %6032 = vmatpush1.xpose.msra.mxu0 0.0
    %6033 = vmatprep.subr.mxu0 0.0
    %6034 = vmatpush1.xpose.msra.mxu0 0.0
    %6035 = vmatprep.subr.mxu0 0.0
    %6036 = vmatpush1.xpose.msra.mxu0 0.0
    %6037 = vmatprep.subr.mxu0 0.0
    %6038 = vmatpush1.xpose.msra.mxu0 0.0
    %6039 = vmatprep.subr.mxu0 0.0
    %6040 = vmatpush1.xpose.msra.mxu0 0.0
    %6041 = vmatprep.subr.mxu0 0.0
    %6042 = vmatpush1.xpose.msra.mxu0 0.0
    %6043 = vmatprep.subr.mxu0 0.0
    %6044 = vmatpush1.xpose.msra.mxu0 0.0
    %6045 = vmatprep.subr.mxu0 0.0
    %6046 = vmatpush1.xpose.msra.mxu0 0.0
    %6047 = vmatprep.subr.mxu0 0.0
    %6048 = vmatpush1.xpose.msra.mxu0 0.0
    %6049 = vmatprep.subr.mxu0 0.0
    %6050 = vmatpush1.xpose.msra.mxu0 0.0
    %6051 = vmatprep.subr.mxu0 0.0
    %6052 = vmatpush1.xpose.msra.mxu0 0.0
    %6053 = vmatprep.subr.mxu0 0.0
    %6054 = vmatpush1.xpose.msra.mxu0 0.0
    %6055 = vmatprep.subr.mxu0 0.0
    %6056 = vmatpush1.xpose.msra.mxu0 0.0
    %6057 = vmatprep.subr.mxu0 0.0
    %6058 = vmatpush1.xpose.msra.mxu0 0.0
    %6059 = vmatprep.subr.mxu0 0.0
    %6060 = vmatpush1.xpose.msra.mxu0 0.0
    %6061 = vmatprep.subr.mxu0 0.0
    %6062 = vmatpush1.xpose.msra.mxu0 0.0
    %6063 = vmatprep.subr.mxu0 0.0
    %6064 = vmatpush1.xpose.msra.mxu0 0.0
    %6065 = vmatprep.subr.mxu0 0.0
    %6066 = vmatpush1.xpose.msra.mxu0 0.0
    %6067 = vmatprep.subr.mxu0 0.0
    %6068 = vmatpush1.xpose.msra.mxu0 0.0
    %6069 = vmatprep.subr.mxu0 0.0
    %6070 = vmatpush1.xpose.msra.mxu0 0.0
    %6071 = vmatprep.subr.mxu0 0.0
    %6072 = vmatpush1.xpose.msra.mxu0 0.0
    %6073 = vmatprep.subr.mxu0 0.0
    %6074 = vmatpush1.xpose.msra.mxu0 0.0
    %6075 = vmatprep.subr.mxu0 0.0
    %6076 = vmatpush1.xpose.msra.mxu0 0.0
    %6077 = vmatprep.subr.mxu0 0.0
    %6078 = vmatpush1.xpose.msra.mxu0 0.0
    %6079 = vmatprep.subr.mxu0 0.0
    %6080 = vmatpush1.xpose.msra.mxu0 0.0
    %6081 = vmatprep.subr.mxu0 0.0
    %6082 = vmatpush1.xpose.msra.mxu0 0.0
    %6083 = vmatprep.subr.mxu0 0.0
    %6084 = vmatpush1.xpose.msra.mxu0 0.0
    %6085 = vmatprep.mubr.f32.mxu0 0.0
    %6086 = vmatmul.mubr.f32.gmra.mrb[0].mxu0 %v6017
    %v6087 = vpop.f32.mrb[0].mxu0
    %v6088 = vadd.f32 0.0, %v6087
    %v6089 = vpop.f32.mrb[0].mxu0
    %6090 = vdwg.mxu0
    %6091 = vrot.lane.b32.xlu0 %v3962, 64
    %v6092 = vpop.permute.xlu0 %6091
    %6093 = vrot.lane.b32.xlu0 %v4004, 64
    %v6094 = vpop.permute.xlu0 %6093
    %v6095 = vsel %vm943, %v6092, 0
    %v6097 = vsel %vm943, %v6094, 0
    %6099 = vmatprep.subr.mxu0 0.0
    %6100 = vmatpush1.xpose.msra.mxu0 %v6097
    %6101 = vmatprep.subr.mxu0 0.0
    %6102 = vmatpush1.xpose.msra.mxu0 0.0
    %6103 = vmatprep.subr.mxu0 0.0
    %6104 = vmatpush1.xpose.msra.mxu0 0.0
    %6105 = vmatprep.subr.mxu0 0.0
    %6106 = vmatpush1.xpose.msra.mxu0 0.0
    %6107 = vmatprep.subr.mxu0 0.0
    %6108 = vmatpush1.xpose.msra.mxu0 0.0
    %6109 = vmatprep.subr.mxu0 0.0
    %6110 = vmatpush1.xpose.msra.mxu0 0.0
    %6111 = vmatprep.subr.mxu0 0.0
    %6112 = vmatpush1.xpose.msra.mxu0 0.0
    %6113 = vmatprep.subr.mxu0 0.0
    %6114 = vmatpush1.xpose.msra.mxu0 0.0
    %6115 = vmatprep.subr.mxu0 0.0
    %6116 = vmatpush1.xpose.msra.mxu0 0.0
    %6117 = vmatprep.subr.mxu0 0.0
    %6118 = vmatpush1.xpose.msra.mxu0 0.0
    %6119 = vmatprep.subr.mxu0 0.0
    %6120 = vmatpush1.xpose.msra.mxu0 0.0
    %6121 = vmatprep.subr.mxu0 0.0
    %6122 = vmatpush1.xpose.msra.mxu0 0.0
    %6123 = vmatprep.subr.mxu0 0.0
    %6124 = vmatpush1.xpose.msra.mxu0 0.0
    %6125 = vmatprep.subr.mxu0 0.0
    %6126 = vmatpush1.xpose.msra.mxu0 0.0
    %6127 = vmatprep.subr.mxu0 0.0
    %6128 = vmatpush1.xpose.msra.mxu0 0.0
    %6129 = vmatprep.subr.mxu0 0.0
    %6130 = vmatpush1.xpose.msra.mxu0 0.0
    %6131 = vmatprep.subr.mxu0 0.0
    %6132 = vmatpush1.xpose.msra.mxu0 0.0
    %6133 = vmatprep.subr.mxu0 0.0
    %6134 = vmatpush1.xpose.msra.mxu0 0.0
    %6135 = vmatprep.subr.mxu0 0.0
    %6136 = vmatpush1.xpose.msra.mxu0 0.0
    %6137 = vmatprep.subr.mxu0 0.0
    %6138 = vmatpush1.xpose.msra.mxu0 0.0
    %6139 = vmatprep.subr.mxu0 0.0
    %6140 = vmatpush1.xpose.msra.mxu0 0.0
    %6141 = vmatprep.subr.mxu0 0.0
    %6142 = vmatpush1.xpose.msra.mxu0 0.0
    %6143 = vmatprep.subr.mxu0 0.0
    %6144 = vmatpush1.xpose.msra.mxu0 0.0
    %6145 = vmatprep.subr.mxu0 0.0
    %6146 = vmatpush1.xpose.msra.mxu0 0.0
    %6147 = vmatprep.subr.mxu0 0.0
    %6148 = vmatpush1.xpose.msra.mxu0 0.0
    %6149 = vmatprep.subr.mxu0 0.0
    %6150 = vmatpush1.xpose.msra.mxu0 0.0
    %6151 = vmatprep.subr.mxu0 0.0
    %6152 = vmatpush1.xpose.msra.mxu0 0.0
    %6153 = vmatprep.subr.mxu0 0.0
    %6154 = vmatpush1.xpose.msra.mxu0 0.0
    %6155 = vmatprep.subr.mxu0 0.0
    %6156 = vmatpush1.xpose.msra.mxu0 0.0
    %6157 = vmatprep.subr.mxu0 0.0
    %6158 = vmatpush1.xpose.msra.mxu0 0.0
    %6159 = vmatprep.subr.mxu0 0.0
    %6160 = vmatpush1.xpose.msra.mxu0 0.0
    %6161 = vmatprep.subr.mxu0 0.0
    %6162 = vmatpush1.xpose.msra.mxu0 0.0
    %6163 = vmatprep.mubr.f32.mxu0 0.0
    %6164 = vmatmul.mubr.f32.gmra.mrb[0].mxu0 %v6095
    %v6165 = vpop.f32.mrb[0].mxu0
    %v6166 = vadd.f32 0.0, %v6165
    %v6167 = vpop.f32.mrb[0].mxu0
    %6168 = vdwg.mxu0
    %v6169 = vsel %vm1096, %v6088, -inf
    %6170 = vmax.xlane.f32.xlu0 %v6169
    %v6171 = vpop.xlane.xlu0 %6170
    %v6172 = vsel %vm1096, %v6166, -inf
    %6173 = vmax.xlane.f32.xlu0 %v6172
    %v6174 = vpop.xlane.xlu0 %6173
    %v6175 = vsub.f32 %v6088, %v6171
    %v6176 = vsub.f32 %v6166, %v6174
    %v6177 = vmul.f32 %v6175, 1.442695
    %v6178 = vpow.pop %v6177
    %v6179 = vmul.f32 %v6176, 1.442695
    %v6180 = vpow.pop %v6179
    %v6181 = vsel %vm1096, %v6178, 0.0
    %6182 = vadd.xlane.f32.xlu0 %v6181
    %v6183 = vpop.xlane.xlu0 %6182
    %v6184 = vsel %vm1096, %v6180, 0.0
    %6185 = vadd.xlane.f32.xlu0 %v6184
    %v6186 = vpop.xlane.xlu0 %6185
    %v6187 = vrcp.pop %v6183
    %v6188 = vrcp.pop %v6186
    %v6189 = vmul.f32 %v6178, %v6187
    %v6190 = vmul.f32 %v6180, %v6188
    %6191 = vrot.lane.b32.xlu0 %v4043, 64
    %v6192 = vpop.permute.xlu0 %6191
    %v6195 = vsel %vm1096, %v6189, 0
    %6197 = vmatprep.subr.mxu0 0.0
    %6198 = vmatpush1.msra.mxu0 %v6192
    %6199 = vmatprep.subr.mxu0 0.0
    %6200 = vmatpush1.msra.mxu0 0.0
    %6201 = vmatprep.subr.mxu0 0.0
    %6202 = vmatpush1.msra.mxu0 0.0
    %6203 = vmatprep.subr.mxu0 0.0
    %6204 = vmatpush1.msra.mxu0 0.0
    %6205 = vmatprep.subr.mxu0 0.0
    %6206 = vmatpush1.msra.mxu0 0.0
    %6207 = vmatprep.subr.mxu0 0.0
    %6208 = vmatpush1.msra.mxu0 0.0
    %6209 = vmatprep.subr.mxu0 0.0
    %6210 = vmatpush1.msra.mxu0 0.0
    %6211 = vmatprep.subr.mxu0 0.0
    %6212 = vmatpush1.msra.mxu0 0.0
    %6213 = vmatprep.subr.mxu0 0.0
    %6214 = vmatpush1.msra.mxu0 0.0
    %6215 = vmatprep.subr.mxu0 0.0
    %6216 = vmatpush1.msra.mxu0 0.0
    %6217 = vmatprep.subr.mxu0 0.0
    %6218 = vmatpush1.msra.mxu0 0.0
    %6219 = vmatprep.subr.mxu0 0.0
    %6220 = vmatpush1.msra.mxu0 0.0
    %6221 = vmatprep.subr.mxu0 0.0
    %6222 = vmatpush1.msra.mxu0 0.0
    %6223 = vmatprep.subr.mxu0 0.0
    %6224 = vmatpush1.msra.mxu0 0.0
    %6225 = vmatprep.subr.mxu0 0.0
    %6226 = vmatpush1.msra.mxu0 0.0
    %6227 = vmatprep.subr.mxu0 0.0
    %6228 = vmatpush1.msra.mxu0 0.0
    %6229 = vmatprep.subr.mxu0 0.0
    %6230 = vmatpush1.msra.mxu0 0.0
    %6231 = vmatprep.subr.mxu0 0.0
    %6232 = vmatpush1.msra.mxu0 0.0
    %6233 = vmatprep.subr.mxu0 0.0
    %6234 = vmatpush1.msra.mxu0 0.0
    %6235 = vmatprep.subr.mxu0 0.0
    %6236 = vmatpush1.msra.mxu0 0.0
    %6237 = vmatprep.subr.mxu0 0.0
    %6238 = vmatpush1.msra.mxu0 0.0
    %6239 = vmatprep.subr.mxu0 0.0
    %6240 = vmatpush1.msra.mxu0 0.0
    %6241 = vmatprep.subr.mxu0 0.0
    %6242 = vmatpush1.msra.mxu0 0.0
    %6243 = vmatprep.subr.mxu0 0.0
    %6244 = vmatpush1.msra.mxu0 0.0
    %6245 = vmatprep.subr.mxu0 0.0
    %6246 = vmatpush1.msra.mxu0 0.0
    %6247 = vmatprep.subr.mxu0 0.0
    %6248 = vmatpush1.msra.mxu0 0.0
    %6249 = vmatprep.subr.mxu0 0.0
    %6250 = vmatpush1.msra.mxu0 0.0
    %6251 = vmatprep.subr.mxu0 0.0
    %6252 = vmatpush1.msra.mxu0 0.0
    %6253 = vmatprep.subr.mxu0 0.0
    %6254 = vmatpush1.msra.mxu0 0.0
    %6255 = vmatprep.subr.mxu0 0.0
    %6256 = vmatpush1.msra.mxu0 0.0
    %6257 = vmatprep.subr.mxu0 0.0
    %6258 = vmatpush1.msra.mxu0 0.0
    %6259 = vmatprep.subr.mxu0 0.0
    %6260 = vmatpush1.msra.mxu0 0.0
    %6261 = vmatprep.mubr.f32.mxu0 0.0
    %6262 = vmatmul.mubr.f32.gmra.mrb[0].mxu0 %v6195
    %v6263 = vpop.f32.mrb[0].mxu0
    %v6264 = vadd.f32 0.0, %v6263
    %v6265 = vpop.f32.mrb[0].mxu0
    %6266 = vdwg.mxu0
    %6267 = vrot.lane.b32.xlu0 %v4047, 64
    %v6268 = vpop.permute.xlu0 %6267
    %v6271 = vsel %vm1096, %v6190, 0
    %6273 = vmatprep.subr.mxu0 0.0
    %6274 = vmatpush1.msra.mxu0 %v6268
    %6275 = vmatprep.subr.mxu0 0.0
    %6276 = vmatpush1.msra.mxu0 0.0
    %6277 = vmatprep.subr.mxu0 0.0
    %6278 = vmatpush1.msra.mxu0 0.0
    %6279 = vmatprep.subr.mxu0 0.0
    %6280 = vmatpush1.msra.mxu0 0.0
    %6281 = vmatprep.subr.mxu0 0.0
    %6282 = vmatpush1.msra.mxu0 0.0
    %6283 = vmatprep.subr.mxu0 0.0
    %6284 = vmatpush1.msra.mxu0 0.0
    %6285 = vmatprep.subr.mxu0 0.0
    %6286 = vmatpush1.msra.mxu0 0.0
    %6287 = vmatprep.subr.mxu0 0.0
    %6288 = vmatpush1.msra.mxu0 0.0
    %6289 = vmatprep.subr.mxu0 0.0
    %6290 = vmatpush1.msra.mxu0 0.0
    %6291 = vmatprep.subr.mxu0 0.0
    %6292 = vmatpush1.msra.mxu0 0.0
    %6293 = vmatprep.subr.mxu0 0.0
    %6294 = vmatpush1.msra.mxu0 0.0
    %6295 = vmatprep.subr.mxu0 0.0
    %6296 = vmatpush1.msra.mxu0 0.0
    %6297 = vmatprep.subr.mxu0 0.0
    %6298 = vmatpush1.msra.mxu0 0.0
    %6299 = vmatprep.subr.mxu0 0.0
    %6300 = vmatpush1.msra.mxu0 0.0
    %6301 = vmatprep.subr.mxu0 0.0
    %6302 = vmatpush1.msra.mxu0 0.0
    %6303 = vmatprep.subr.mxu0 0.0
    %6304 = vmatpush1.msra.mxu0 0.0
    %6305 = vmatprep.subr.mxu0 0.0
    %6306 = vmatpush1.msra.mxu0 0.0
    %6307 = vmatprep.subr.mxu0 0.0
    %6308 = vmatpush1.msra.mxu0 0.0
    %6309 = vmatprep.subr.mxu0 0.0
    %6310 = vmatpush1.msra.mxu0 0.0
    %6311 = vmatprep.subr.mxu0 0.0
    %6312 = vmatpush1.msra.mxu0 0.0
    %6313 = vmatprep.subr.mxu0 0.0
    %6314 = vmatpush1.msra.mxu0 0.0
    %6315 = vmatprep.subr.mxu0 0.0
    %6316 = vmatpush1.msra.mxu0 0.0
    %6317 = vmatprep.subr.mxu0 0.0
    %6318 = vmatpush1.msra.mxu0 0.0
    %6319 = vmatprep.subr.mxu0 0.0
    %6320 = vmatpush1.msra.mxu0 0.0
    %6321 = vmatprep.subr.mxu0 0.0
    %6322 = vmatpush1.msra.mxu0 0.0
    %6323 = vmatprep.subr.mxu0 0.0
    %6324 = vmatpush1.msra.mxu0 0.0
    %6325 = vmatprep.subr.mxu0 0.0
    %6326 = vmatpush1.msra.mxu0 0.0
    %6327 = vmatprep.subr.mxu0 0.0
    %6328 = vmatpush1.msra.mxu0 0.0
    %6329 = vmatprep.subr.mxu0 0.0
    %6330 = vmatpush1.msra.mxu0 0.0
    %6331 = vmatprep.subr.mxu0 0.0
    %6332 = vmatpush1.msra.mxu0 0.0
    %6333 = vmatprep.subr.mxu0 0.0
    %6334 = vmatpush1.msra.mxu0 0.0
    %6335 = vmatprep.subr.mxu0 0.0
    %6336 = vmatpush1.msra.mxu0 0.0
    %6337 = vmatprep.mubr.f32.mxu0 0.0
    %6338 = vmatmul.mubr.f32.gmra.mrb[0].mxu0 %v6271
    %v6339 = vpop.f32.mrb[0].mxu0
    %v6340 = vadd.f32 0.0, %v6339
    %v6341 = vpop.f32.mrb[0].mxu0
    %6342 = vdwg.mxu0
    %6343 = vrot.lane.b32.xlu0 %v3960, 32
    %v6344 = vpop.permute.xlu0 %6343
    %6345 = vrot.lane.b32.xlu0 %v4000, 32
    %v6346 = vpop.permute.xlu0 %6345
    %v6347 = vsel %vm943, %v6344, 0
    %v6349 = vsel %vm943, %v6346, 0
    %6351 = vmatprep.subr.mxu0 0.0
    %6352 = vmatpush1.xpose.msra.mxu0 %v6349
    %6353 = vmatprep.subr.mxu0 0.0
    %6354 = vmatpush1.xpose.msra.mxu0 0.0
    %6355 = vmatprep.subr.mxu0 0.0
    %6356 = vmatpush1.xpose.msra.mxu0 0.0
    %6357 = vmatprep.subr.mxu0 0.0
    %6358 = vmatpush1.xpose.msra.mxu0 0.0
    %6359 = vmatprep.subr.mxu0 0.0
    %6360 = vmatpush1.xpose.msra.mxu0 0.0
    %6361 = vmatprep.subr.mxu0 0.0
    %6362 = vmatpush1.xpose.msra.mxu0 0.0
    %6363 = vmatprep.subr.mxu0 0.0
    %6364 = vmatpush1.xpose.msra.mxu0 0.0
    %6365 = vmatprep.subr.mxu0 0.0
    %6366 = vmatpush1.xpose.msra.mxu0 0.0
    %6367 = vmatprep.subr.mxu0 0.0
    %6368 = vmatpush1.xpose.msra.mxu0 0.0
    %6369 = vmatprep.subr.mxu0 0.0
    %6370 = vmatpush1.xpose.msra.mxu0 0.0
    %6371 = vmatprep.subr.mxu0 0.0
    %6372 = vmatpush1.xpose.msra.mxu0 0.0
    %6373 = vmatprep.subr.mxu0 0.0
    %6374 = vmatpush1.xpose.msra.mxu0 0.0
    %6375 = vmatprep.subr.mxu0 0.0
    %6376 = vmatpush1.xpose.msra.mxu0 0.0
    %6377 = vmatprep.subr.mxu0 0.0
    %6378 = vmatpush1.xpose.msra.mxu0 0.0
    %6379 = vmatprep.subr.mxu0 0.0
    %6380 = vmatpush1.xpose.msra.mxu0 0.0
    %6381 = vmatprep.subr.mxu0 0.0
    %6382 = vmatpush1.xpose.msra.mxu0 0.0
    %6383 = vmatprep.subr.mxu0 0.0
    %6384 = vmatpush1.xpose.msra.mxu0 0.0
    %6385 = vmatprep.subr.mxu0 0.0
    %6386 = vmatpush1.xpose.msra.mxu0 0.0
    %6387 = vmatprep.subr.mxu0 0.0
    %6388 = vmatpush1.xpose.msra.mxu0 0.0
    %6389 = vmatprep.subr.mxu0 0.0
    %6390 = vmatpush1.xpose.msra.mxu0 0.0
    %6391 = vmatprep.subr.mxu0 0.0
    %6392 = vmatpush1.xpose.msra.mxu0 0.0
    %6393 = vmatprep.subr.mxu0 0.0
    %6394 = vmatpush1.xpose.msra.mxu0 0.0
    %6395 = vmatprep.subr.mxu0 0.0
    %6396 = vmatpush1.xpose.msra.mxu0 0.0
    %6397 = vmatprep.subr.mxu0 0.0
    %6398 = vmatpush1.xpose.msra.mxu0 0.0
    %6399 = vmatprep.subr.mxu0 0.0
    %6400 = vmatpush1.xpose.msra.mxu0 0.0
    %6401 = vmatprep.subr.mxu0 0.0
    %6402 = vmatpush1.xpose.msra.mxu0 0.0
    %6403 = vmatprep.subr.mxu0 0.0
    %6404 = vmatpush1.xpose.msra.mxu0 0.0
    %6405 = vmatprep.subr.mxu0 0.0
    %6406 = vmatpush1.xpose.msra.mxu0 0.0
    %6407 = vmatprep.subr.mxu0 0.0
    %6408 = vmatpush1.xpose.msra.mxu0 0.0
    %6409 = vmatprep.subr.mxu0 0.0
    %6410 = vmatpush1.xpose.msra.mxu0 0.0
    %6411 = vmatprep.subr.mxu0 0.0
    %6412 = vmatpush1.xpose.msra.mxu0 0.0
    %6413 = vmatprep.subr.mxu0 0.0
    %6414 = vmatpush1.xpose.msra.mxu0 0.0
    %6415 = vmatprep.mubr.f32.mxu0 0.0
    %6416 = vmatmul.mubr.f32.gmra.mrb[0].mxu0 %v6347
    %v6417 = vpop.f32.mrb[0].mxu0
    %v6418 = vadd.f32 0.0, %v6417
    %v6419 = vpop.f32.mrb[0].mxu0
    %6420 = vdwg.mxu0
    %6421 = vrot.lane.b32.xlu0 %v3962, 32
    %v6422 = vpop.permute.xlu0 %6421
    %6423 = vrot.lane.b32.xlu0 %v4004, 32
    %v6424 = vpop.permute.xlu0 %6423
    %v6425 = vsel %vm943, %v6422, 0
    %v6427 = vsel %vm943, %v6424, 0
    %6429 = vmatprep.subr.mxu0 0.0
    %6430 = vmatpush1.xpose.msra.mxu0 %v6427
    %6431 = vmatprep.subr.mxu0 0.0
    %6432 = vmatpush1.xpose.msra.mxu0 0.0
    %6433 = vmatprep.subr.mxu0 0.0
    %6434 = vmatpush1.xpose.msra.mxu0 0.0
    %6435 = vmatprep.subr.mxu0 0.0
    %6436 = vmatpush1.xpose.msra.mxu0 0.0
    %6437 = vmatprep.subr.mxu0 0.0
    %6438 = vmatpush1.xpose.msra.mxu0 0.0
    %6439 = vmatprep.subr.mxu0 0.0
    %6440 = vmatpush1.xpose.msra.mxu0 0.0
    %6441 = vmatprep.subr.mxu0 0.0
    %6442 = vmatpush1.xpose.msra.mxu0 0.0
    %6443 = vmatprep.subr.mxu0 0.0
    %6444 = vmatpush1.xpose.msra.mxu0 0.0
    %6445 = vmatprep.subr.mxu0 0.0
    %6446 = vmatpush1.xpose.msra.mxu0 0.0
    %6447 = vmatprep.subr.mxu0 0.0
    %6448 = vmatpush1.xpose.msra.mxu0 0.0
    %6449 = vmatprep.subr.mxu0 0.0
    %6450 = vmatpush1.xpose.msra.mxu0 0.0
    %6451 = vmatprep.subr.mxu0 0.0
    %6452 = vmatpush1.xpose.msra.mxu0 0.0
    %6453 = vmatprep.subr.mxu0 0.0
    %6454 = vmatpush1.xpose.msra.mxu0 0.0
    %6455 = vmatprep.subr.mxu0 0.0
    %6456 = vmatpush1.xpose.msra.mxu0 0.0
    %6457 = vmatprep.subr.mxu0 0.0
    %6458 = vmatpush1.xpose.msra.mxu0 0.0
    %6459 = vmatprep.subr.mxu0 0.0
    %6460 = vmatpush1.xpose.msra.mxu0 0.0
    %6461 = vmatprep.subr.mxu0 0.0
    %6462 = vmatpush1.xpose.msra.mxu0 0.0
    %6463 = vmatprep.subr.mxu0 0.0
    %6464 = vmatpush1.xpose.msra.mxu0 0.0
    %6465 = vmatprep.subr.mxu0 0.0
    %6466 = vmatpush1.xpose.msra.mxu0 0.0
    %6467 = vmatprep.subr.mxu0 0.0
    %6468 = vmatpush1.xpose.msra.mxu0 0.0
    %6469 = vmatprep.subr.mxu0 0.0
    %6470 = vmatpush1.xpose.msra.mxu0 0.0
    %6471 = vmatprep.subr.mxu0 0.0
    %6472 = vmatpush1.xpose.msra.mxu0 0.0
    %6473 = vmatprep.subr.mxu0 0.0
    %6474 = vmatpush1.xpose.msra.mxu0 0.0
    %6475 = vmatprep.subr.mxu0 0.0
    %6476 = vmatpush1.xpose.msra.mxu0 0.0
    %6477 = vmatprep.subr.mxu0 0.0
    %6478 = vmatpush1.xpose.msra.mxu0 0.0
    %6479 = vmatprep.subr.mxu0 0.0
    %6480 = vmatpush1.xpose.msra.mxu0 0.0
    %6481 = vmatprep.subr.mxu0 0.0
    %6482 = vmatpush1.xpose.msra.mxu0 0.0
    %6483 = vmatprep.subr.mxu0 0.0
    %6484 = vmatpush1.xpose.msra.mxu0 0.0
    %6485 = vmatprep.subr.mxu0 0.0
    %6486 = vmatpush1.xpose.msra.mxu0 0.0
    %6487 = vmatprep.subr.mxu0 0.0
    %6488 = vmatpush1.xpose.msra.mxu0 0.0
    %6489 = vmatprep.subr.mxu0 0.0
    %6490 = vmatpush1.xpose.msra.mxu0 0.0
    %6491 = vmatprep.subr.mxu0 0.0
    %6492 = vmatpush1.xpose.msra.mxu0 0.0
    %6493 = vmatprep.mubr.f32.mxu0 0.0
    %6494 = vmatmul.mubr.f32.gmra.mrb[0].mxu0 %v6425
    %v6495 = vpop.f32.mrb[0].mxu0
    %v6496 = vadd.f32 0.0, %v6495
    %v6497 = vpop.f32.mrb[0].mxu0
    %6498 = vdwg.mxu0
    %v6499 = vsel %vm1096, %v6418, -inf
    %6500 = vmax.xlane.f32.xlu0 %v6499
    %v6501 = vpop.xlane.xlu0 %6500
    %v6502 = vsel %vm1096, %v6496, -inf
    %6503 = vmax.xlane.f32.xlu0 %v6502
    %v6504 = vpop.xlane.xlu0 %6503
    %v6505 = vsub.f32 %v6418, %v6501
    %v6506 = vsub.f32 %v6496, %v6504
    %v6507 = vmul.f32 %v6505, 1.442695
    %v6508 = vpow.pop %v6507
    %v6509 = vmul.f32 %v6506, 1.442695
    %v6510 = vpow.pop %v6509
    %v6511 = vsel %vm1096, %v6508, 0.0
    %6512 = vadd.xlane.f32.xlu0 %v6511
    %v6513 = vpop.xlane.xlu0 %6512
    %v6514 = vsel %vm1096, %v6510, 0.0
    %6515 = vadd.xlane.f32.xlu0 %v6514
    %v6516 = vpop.xlane.xlu0 %6515
    %v6517 = vrcp.pop %v6513
    %v6518 = vrcp.pop %v6516
    %v6519 = vmul.f32 %v6508, %v6517
    %v6520 = vmul.f32 %v6510, %v6518
    %6521 = vrot.lane.b32.xlu0 %v4043, 32
    %v6522 = vpop.permute.xlu0 %6521
    %v6525 = vsel %vm1096, %v6519, 0
    %6527 = vmatprep.subr.mxu0 0.0
    %6528 = vmatpush1.msra.mxu0 %v6522
    %6529 = vmatprep.subr.mxu0 0.0
    %6530 = vmatpush1.msra.mxu0 0.0
    %6531 = vmatprep.subr.mxu0 0.0
    %6532 = vmatpush1.msra.mxu0 0.0
    %6533 = vmatprep.subr.mxu0 0.0
    %6534 = vmatpush1.msra.mxu0 0.0
    %6535 = vmatprep.subr.mxu0 0.0
    %6536 = vmatpush1.msra.mxu0 0.0
    %6537 = vmatprep.subr.mxu0 0.0
    %6538 = vmatpush1.msra.mxu0 0.0
    %6539 = vmatprep.subr.mxu0 0.0
    %6540 = vmatpush1.msra.mxu0 0.0
    %6541 = vmatprep.subr.mxu0 0.0
    %6542 = vmatpush1.msra.mxu0 0.0
    %6543 = vmatprep.subr.mxu0 0.0
    %6544 = vmatpush1.msra.mxu0 0.0
    %6545 = vmatprep.subr.mxu0 0.0
    %6546 = vmatpush1.msra.mxu0 0.0
    %6547 = vmatprep.subr.mxu0 0.0
    %6548 = vmatpush1.msra.mxu0 0.0
    %6549 = vmatprep.subr.mxu0 0.0
    %6550 = vmatpush1.msra.mxu0 0.0
    %6551 = vmatprep.subr.mxu0 0.0
    %6552 = vmatpush1.msra.mxu0 0.0
    %6553 = vmatprep.subr.mxu0 0.0
    %6554 = vmatpush1.msra.mxu0 0.0
    %6555 = vmatprep.subr.mxu0 0.0
    %6556 = vmatpush1.msra.mxu0 0.0
    %6557 = vmatprep.subr.mxu0 0.0
    %6558 = vmatpush1.msra.mxu0 0.0
    %6559 = vmatprep.subr.mxu0 0.0
    %6560 = vmatpush1.msra.mxu0 0.0
    %6561 = vmatprep.subr.mxu0 0.0
    %6562 = vmatpush1.msra.mxu0 0.0
    %6563 = vmatprep.subr.mxu0 0.0
    %6564 = vmatpush1.msra.mxu0 0.0
    %6565 = vmatprep.subr.mxu0 0.0
    %6566 = vmatpush1.msra.mxu0 0.0
    %6567 = vmatprep.subr.mxu0 0.0
    %6568 = vmatpush1.msra.mxu0 0.0
    %6569 = vmatprep.subr.mxu0 0.0
    %6570 = vmatpush1.msra.mxu0 0.0
    %6571 = vmatprep.subr.mxu0 0.0
    %6572 = vmatpush1.msra.mxu0 0.0
    %6573 = vmatprep.subr.mxu0 0.0
    %6574 = vmatpush1.msra.mxu0 0.0
    %6575 = vmatprep.subr.mxu0 0.0
    %6576 = vmatpush1.msra.mxu0 0.0
    %6577 = vmatprep.subr.mxu0 0.0
    %6578 = vmatpush1.msra.mxu0 0.0
    %6579 = vmatprep.subr.mxu0 0.0
    %6580 = vmatpush1.msra.mxu0 0.0
    %6581 = vmatprep.subr.mxu0 0.0
    %6582 = vmatpush1.msra.mxu0 0.0
    %6583 = vmatprep.subr.mxu0 0.0
    %6584 = vmatpush1.msra.mxu0 0.0
    %6585 = vmatprep.subr.mxu0 0.0
    %6586 = vmatpush1.msra.mxu0 0.0
    %6587 = vmatprep.subr.mxu0 0.0
    %6588 = vmatpush1.msra.mxu0 0.0
    %6589 = vmatprep.subr.mxu0 0.0
    %6590 = vmatpush1.msra.mxu0 0.0
    %6591 = vmatprep.mubr.f32.mxu0 0.0
    %6592 = vmatmul.mubr.f32.gmra.mrb[0].mxu0 %v6525
    %v6593 = vpop.f32.mrb[0].mxu0
    %v6594 = vadd.f32 0.0, %v6593
    %v6595 = vpop.f32.mrb[0].mxu0
    %6596 = vdwg.mxu0
    %6597 = vrot.lane.b32.xlu0 %v4047, 32
    %v6598 = vpop.permute.xlu0 %6597
    %v6601 = vsel %vm1096, %v6520, 0
    %6603 = vmatprep.subr.mxu0 0.0
    %6604 = vmatpush1.msra.mxu0 %v6598
    %6605 = vmatprep.subr.mxu0 0.0
    %6606 = vmatpush1.msra.mxu0 0.0
    %6607 = vmatprep.subr.mxu0 0.0
    %6608 = vmatpush1.msra.mxu0 0.0
    %6609 = vmatprep.subr.mxu0 0.0
    %6610 = vmatpush1.msra.mxu0 0.0
    %6611 = vmatprep.subr.mxu0 0.0
    %6612 = vmatpush1.msra.mxu0 0.0
    %6613 = vmatprep.subr.mxu0 0.0
    %6614 = vmatpush1.msra.mxu0 0.0
    %6615 = vmatprep.subr.mxu0 0.0
    %6616 = vmatpush1.msra.mxu0 0.0
    %6617 = vmatprep.subr.mxu0 0.0
    %6618 = vmatpush1.msra.mxu0 0.0
    %6619 = vmatprep.subr.mxu0 0.0
    %6620 = vmatpush1.msra.mxu0 0.0
    %6621 = vmatprep.subr.mxu0 0.0
    %6622 = vmatpush1.msra.mxu0 0.0
    %6623 = vmatprep.subr.mxu0 0.0
    %6624 = vmatpush1.msra.mxu0 0.0
    %6625 = vmatprep.subr.mxu0 0.0
    %6626 = vmatpush1.msra.mxu0 0.0
    %6627 = vmatprep.subr.mxu0 0.0
    %6628 = vmatpush1.msra.mxu0 0.0
    %6629 = vmatprep.subr.mxu0 0.0
    %6630 = vmatpush1.msra.mxu0 0.0
    %6631 = vmatprep.subr.mxu0 0.0
    %6632 = vmatpush1.msra.mxu0 0.0
    %6633 = vmatprep.subr.mxu0 0.0
    %6634 = vmatpush1.msra.mxu0 0.0
    %6635 = vmatprep.subr.mxu0 0.0
    %6636 = vmatpush1.msra.mxu0 0.0
    %6637 = vmatprep.subr.mxu0 0.0
    %6638 = vmatpush1.msra.mxu0 0.0
    %6639 = vmatprep.subr.mxu0 0.0
    %6640 = vmatpush1.msra.mxu0 0.0
    %6641 = vmatprep.subr.mxu0 0.0
    %6642 = vmatpush1.msra.mxu0 0.0
    %6643 = vmatprep.subr.mxu0 0.0
    %6644 = vmatpush1.msra.mxu0 0.0
    %6645 = vmatprep.subr.mxu0 0.0
    %6646 = vmatpush1.msra.mxu0 0.0
    %6647 = vmatprep.subr.mxu0 0.0
    %6648 = vmatpush1.msra.mxu0 0.0
    %6649 = vmatprep.subr.mxu0 0.0
    %6650 = vmatpush1.msra.mxu0 0.0
    %6651 = vmatprep.subr.mxu0 0.0
    %6652 = vmatpush1.msra.mxu0 0.0
    %6653 = vmatprep.subr.mxu0 0.0
    %6654 = vmatpush1.msra.mxu0 0.0
    %6655 = vmatprep.subr.mxu0 0.0
    %6656 = vmatpush1.msra.mxu0 0.0
    %6657 = vmatprep.subr.mxu0 0.0
    %6658 = vmatpush1.msra.mxu0 0.0
    %6659 = vmatprep.subr.mxu0 0.0
    %6660 = vmatpush1.msra.mxu0 0.0
    %6661 = vmatprep.subr.mxu0 0.0
    %6662 = vmatpush1.msra.mxu0 0.0
    %6663 = vmatprep.subr.mxu0 0.0
    %6664 = vmatpush1.msra.mxu0 0.0
    %6665 = vmatprep.subr.mxu0 0.0
    %6666 = vmatpush1.msra.mxu0 0.0
    %6667 = vmatprep.mubr.f32.mxu0 0.0
    %6668 = vmatmul.mubr.f32.gmra.mrb[0].mxu0 %v6601
    %v6669 = vpop.f32.mrb[0].mxu0
    %v6670 = vadd.f32 0.0, %v6669
    %v6671 = vpop.f32.mrb[0].mxu0
    %6672 = vdwg.mxu0
    %6675 = vrot.lane.b32.xlu0 %v4621, 32
    %v6676 = vpop.permute.xlu0 %6675
    %6677 = vrot.lane.b32.xlu0 %v4698, 32
    %v6678 = vpop.permute.xlu0 %6677
    %6683 = vrot.lane.b32.xlu0 %v4952, 64
    %v6684 = vpop.permute.xlu0 %6683
    %6685 = vrot.lane.b32.xlu0 %v5028, 64
    %v6686 = vpop.permute.xlu0 %6685
    %6691 = vrot.lane.b32.xlu0 %v5282, 96
    %v6692 = vpop.permute.xlu0 %6691
    %6693 = vrot.lane.b32.xlu0 %v5358, 96
    %v6694 = vpop.permute.xlu0 %6693
    %6699 = vrot.lane.b32.xlu0 %v5933, 32
    %v6700 = vpop.permute.xlu0 %6699
    %6701 = vrot.lane.b32.xlu0 %v6010, 32
    %v6702 = vpop.permute.xlu0 %6701
    %6707 = vrot.lane.b32.xlu0 %v6264, 64
    %v6708 = vpop.permute.xlu0 %6707
    %6709 = vrot.lane.b32.xlu0 %v6340, 64
    %v6710 = vpop.permute.xlu0 %6709
    %6715 = vrot.lane.b32.xlu0 %v6594, 96
    %v6716 = vpop.permute.xlu0 %6715
    %6717 = vrot.lane.b32.xlu0 %v6670, 96
    %v6718 = vpop.permute.xlu0 %6717
    %v6721 = vsel %vm943, %v4293, %v6676
    %v6722 = vsel %vm943, %v4366, %v6678
    %v6723 = vsel %vm3619, %v6721, %v6684
    %v6724 = vsel %vm3619, %v6722, %v6686
    %v6725 = vsel %vm3622, %v6723, %v6692
    %v6726 = vsel %vm3622, %v6724, %v6694
    %v6727 = vsel %vm943, %v5605, %v6700
    %v6728 = vsel %vm943, %v5678, %v6702
    %v6729 = vsel %vm3619, %v6727, %v6708
    %v6730 = vsel %vm3619, %v6728, %v6710
    %v6731 = vsel %vm3622, %v6729, %v6716
    %v6732 = vsel %vm3622, %v6730, %v6718
    %v6733 = vpack.c.bf16 %v6726, %v6725
    %v6734 = vpack.c.bf16 %v6732, %v6731
    %6735 = vmatprep.subr.bf16.mxu0 %v3741
    %6736 = vmatpush1.bf16.msra.mxu0 %v3740
    %6737 = vmatprep.subr.bf16.mxu0 %v3743
    %6738 = vmatpush1.bf16.msra.mxu0 %v3742
    %6739 = vmatprep.subr.bf16.mxu0 %v3745
    %6740 = vmatpush1.bf16.msra.mxu0 %v3744
    %6741 = vmatprep.subr.bf16.mxu0 %v3747
    %6742 = vmatpush1.bf16.msra.mxu0 %v3746
    %6743 = vmatprep.subr.bf16.mxu0 %v3749
    %6744 = vmatpush1.bf16.msra.mxu0 %v3748
    %6745 = vmatprep.subr.bf16.mxu0 %v3751
    %6746 = vmatpush1.bf16.msra.mxu0 %v3750
    %6747 = vmatprep.subr.bf16.mxu0 %v3753
    %6748 = vmatpush1.bf16.msra.mxu0 %v3752
    %6749 = vmatprep.subr.bf16.mxu0 %v3755
    %6750 = vmatpush1.bf16.msra.mxu0 %v3754
    %6751 = vmatprep.subr.bf16.mxu0 %v3757
    %6752 = vmatpush1.bf16.msra.mxu0 %v3756
    %6753 = vmatprep.subr.bf16.mxu0 %v3759
    %6754 = vmatpush1.bf16.msra.mxu0 %v3758
    %6755 = vmatprep.subr.bf16.mxu0 %v3761
    %6756 = vmatpush1.bf16.msra.mxu0 %v3760
    %6757 = vmatprep.subr.bf16.mxu0 %v3763
    %6758 = vmatpush1.bf16.msra.mxu0 %v3762
    %6759 = vmatprep.subr.bf16.mxu0 %v3765
    %6760 = vmatpush1.bf16.msra.mxu0 %v3764
    %6761 = vmatprep.subr.bf16.mxu0 %v3767
    %6762 = vmatpush1.bf16.msra.mxu0 %v3766
    %6763 = vmatprep.subr.bf16.mxu0 %v3769
    %6764 = vmatpush1.bf16.msra.mxu0 %v3768
    %6765 = vmatprep.subr.bf16.mxu0 %v3771
    %6766 = vmatpush1.bf16.msra.mxu0 %v3770
    %6767 = vmatprep.mubr.bf16.mxu0 %v6734
    %6768 = vmatmul.mubr.bf16.gmra.mrb[0].mxu0 %v6733
    %v6769 = vpop.f32.mrb[0].mxu0
    %v6770 = vadd.f32 %v3637, %v6769
    %v6771 = vpop.f32.mrb[0].mxu0
    %v6772 = vadd.f32 %v3641, %v6771
    %v6773 = vpop.f32.mrb[0].mxu0
    %v6774 = vadd.f32 %v3637, %v6773
    %v6775 = vpop.f32.mrb[0].mxu0
    %v6776 = vadd.f32 %v3641, %v6775
    %6777 = vdwg.mxu0
    %v6778 = vadd.f32 %v6770, %v3910
    %v6779 = vadd.f32 %v6772, %v3911
    %v6780 = vadd.f32 %v6774, %v3912
    %v6781 = vadd.f32 %v6776, %v3913
    %v6782 = vadd.f32 %v6778, %v6779
    %6783 = vadd.xlane.f32.xlu0 %v6782
    %v6784 = vpop.xlane.xlu0 %6783
    %v6785 = vadd.f32 %v6780, %v6781
    %6786 = vadd.xlane.f32.xlu0 %v6785
    %v6787 = vpop.xlane.xlu0 %6786
    %v6788 = vmul.f32 %v6784, %v3857
    %v6789 = vmul.f32 %v6787, %v3857
    %v6790 = vsub.f32 %v6778, %v6788
    %v6791 = vsub.f32 %v6779, %v6788
    %v6792 = vsub.f32 %v6780, %v6789
    %v6793 = vsub.f32 %v6781, %v6789
    %v6794 = vmul.f32 %v6790, %v6790
    %v6795 = vmul.f32 %v6791, %v6791
    %v6796 = vmul.f32 %v6792, %v6792
    %v6797 = vmul.f32 %v6793, %v6793
    %v6798 = vadd.f32 %v6794, %v6795
    %6799 = vadd.xlane.f32.xlu0 %v6798
    %v6800 = vpop.xlane.xlu0 %6799
    %v6801 = vadd.f32 %v6796, %v6797
    %6802 = vadd.xlane.f32.xlu0 %v6801
    %v6803 = vpop.xlane.xlu0 %6802
    %v6804 = vmul.f32 %v6800, %v3857
    %v6805 = vmul.f32 %v6803, %v3857
    %v6806 = vadd.f32 %v6804, 1e-05
    %v6807 = vadd.f32 %v6805, 1e-05
    %v6808 = vrsqrt.pop %v6806
    %v6809 = vrsqrt.pop %v6807
    %v6810 = vmul.f32 %v6790, %v6808
    %v6811 = vmul.f32 %v6791, %v6808
    %v6812 = vmul.f32 %v6792, %v6809
    %v6813 = vmul.f32 %v6793, %v6809
    %v6814 = vmul.f32 %v6810, %v3888
    %v6815 = vmul.f32 %v6811, %v3892
    %v6816 = vmul.f32 %v6812, %v3888
    %v6817 = vmul.f32 %v6813, %v3892
    %v6818 = vadd.f32 %v6814, %v3903
    %v6819 = vadd.f32 %v6815, %v3907
    %v6820 = vadd.f32 %v6816, %v3903
    %v6821 = vadd.f32 %v6817, %v3907
    %v6822 = vpack.c.bf16 %v6820, %v6818
    %v6823 = vpack.c.bf16 %v6821, %v6819
    %v6824 = vld [vmem:[#allocation14] sm:$0xf]
    %v6825 = vld [vmem:[#allocation14 + $0x4] sm:$0xf]
    %v6826 = vld [vmem:[#allocation14 + $0x8] sm:$0xf]
    %v6827 = vld [vmem:[#allocation14 + $0xc] sm:$0xf]
    %v6828 = vld [vmem:[#allocation14 + $0x10] sm:$0xf]
    %v6829 = vld [vmem:[#allocation14 + $0x14] sm:$0xf]
    %v6830 = vld [vmem:[#allocation14 + $0x18] sm:$0xf]
    %v6831 = vld [vmem:[#allocation14 + $0x1c] sm:$0xf]
    %v6832 = vld [vmem:[#allocation14 + $0x20] sm:$0xf]
    %v6833 = vld [vmem:[#allocation14 + $0x24] sm:$0xf]
    %v6834 = vld [vmem:[#allocation14 + $0x28] sm:$0xf]
    %v6835 = vld [vmem:[#allocation14 + $0x2c] sm:$0xf]
    %v6836 = vld [vmem:[#allocation14 + $0x30] sm:$0xf]
    %v6837 = vld [vmem:[#allocation14 + $0x34] sm:$0xf]
    %v6838 = vld [vmem:[#allocation14 + $0x38] sm:$0xf]
    %v6839 = vld [vmem:[#allocation14 + $0x3c] sm:$0xf]
    %v6840 = vld [vmem:[#allocation14 + $0x40] sm:$0xf]
    %v6841 = vld [vmem:[#allocation14 + $0x44] sm:$0xf]
    %v6842 = vld [vmem:[#allocation14 + $0x48] sm:$0xf]
    %v6843 = vld [vmem:[#allocation14 + $0x4c] sm:$0xf]
    %v6844 = vld [vmem:[#allocation14 + $0x50] sm:$0xf]
    %v6845 = vld [vmem:[#allocation14 + $0x54] sm:$0xf]
    %v6846 = vld [vmem:[#allocation14 + $0x58] sm:$0xf]
    %v6847 = vld [vmem:[#allocation14 + $0x5c] sm:$0xf]
    %v6848 = vld [vmem:[#allocation14 + $0x60] sm:$0xf]
    %v6849 = vld [vmem:[#allocation14 + $0x64] sm:$0xf]
    %v6850 = vld [vmem:[#allocation14 + $0x68] sm:$0xf]
    %v6851 = vld [vmem:[#allocation14 + $0x6c] sm:$0xf]
    %v6852 = vld [vmem:[#allocation14 + $0x70] sm:$0xf]
    %v6853 = vld [vmem:[#allocation14 + $0x74] sm:$0xf]
    %v6854 = vld [vmem:[#allocation14 + $0x78] sm:$0xf]
    %v6855 = vld [vmem:[#allocation14 + $0x7c] sm:$0xf]
    %v6856 = vld [vmem:[%s13] sm:$0x1]
    %v6858 = vlaneseq
    %v6859 = vshrl.u32 %v6858, 7
    %v6860 = vsub.s32 0, %v6859
    %v6861 = vrot.slane %v6856, %v6860
    %v6895 = vunpack.c.l.b16 %v6824
    %v6896 = vunpack.c.l.b16 %v6825
    %v6897 = vunpack.c.l.b16 %v6826
    %v6898 = vunpack.c.l.b16 %v6827
    %v6899 = vunpack.c.l.b16 %v6828
    %v6900 = vunpack.c.l.b16 %v6829
    %v6901 = vunpack.c.l.b16 %v6830
    %v6902 = vunpack.c.l.b16 %v6831
    %v6903 = vunpack.c.l.b16 %v6832
    %v6904 = vunpack.c.l.b16 %v6833
    %v6905 = vunpack.c.l.b16 %v6834
    %v6906 = vunpack.c.l.b16 %v6835
    %v6907 = vunpack.c.l.b16 %v6836
    %v6908 = vunpack.c.l.b16 %v6837
    %v6909 = vunpack.c.l.b16 %v6838
    %v6910 = vunpack.c.l.b16 %v6839
    %v6911 = vunpack.c.l.b16 %v6840
    %v6912 = vunpack.c.l.b16 %v6841
    %v6913 = vunpack.c.l.b16 %v6842
    %v6914 = vunpack.c.l.b16 %v6843
    %v6915 = vunpack.c.l.b16 %v6844
    %v6916 = vunpack.c.l.b16 %v6845
    %v6917 = vunpack.c.l.b16 %v6846
    %v6918 = vunpack.c.l.b16 %v6847
    %v6919 = vunpack.c.l.b16 %v6848
    %v6920 = vunpack.c.l.b16 %v6849
    %v6921 = vunpack.c.l.b16 %v6850
    %v6922 = vunpack.c.l.b16 %v6851
    %v6923 = vunpack.c.l.b16 %v6852
    %v6924 = vunpack.c.l.b16 %v6853
    %v6925 = vunpack.c.l.b16 %v6854
    %v6926 = vunpack.c.l.b16 %v6855
    %v6927 = vpack.c.b16 %v6896, %v6895
    %v6928 = vpack.c.b16 %v6898, %v6897
    %v6929 = vpack.c.b16 %v6900, %v6899
    %v6930 = vpack.c.b16 %v6902, %v6901
    %v6931 = vpack.c.b16 %v6904, %v6903
    %v6932 = vpack.c.b16 %v6906, %v6905
    %v6933 = vpack.c.b16 %v6908, %v6907
    %v6934 = vpack.c.b16 %v6910, %v6909
    %v6935 = vpack.c.b16 %v6912, %v6911
    %v6936 = vpack.c.b16 %v6914, %v6913
    %v6937 = vpack.c.b16 %v6916, %v6915
    %v6938 = vpack.c.b16 %v6918, %v6917
    %v6939 = vpack.c.b16 %v6920, %v6919
    %v6940 = vpack.c.b16 %v6922, %v6921
    %v6941 = vpack.c.b16 %v6924, %v6923
    %v6942 = vpack.c.b16 %v6926, %v6925
    %6959 = vmatprep.subr.bf16.mxu0 0
    %6960 = vmatpush1.bf16.msra.mxu0 %v6927
    %6961 = vmatprep.subr.bf16.mxu0 0
    %6962 = vmatpush1.bf16.msra.mxu0 %v6928
    %6963 = vmatprep.subr.bf16.mxu0 0
    %6964 = vmatpush1.bf16.msra.mxu0 %v6929
    %6965 = vmatprep.subr.bf16.mxu0 0
    %6966 = vmatpush1.bf16.msra.mxu0 %v6930
    %6967 = vmatprep.subr.bf16.mxu0 0
    %6968 = vmatpush1.bf16.msra.mxu0 %v6931
    %6969 = vmatprep.subr.bf16.mxu0 0
    %6970 = vmatpush1.bf16.msra.mxu0 %v6932
    %6971 = vmatprep.subr.bf16.mxu0 0
    %6972 = vmatpush1.bf16.msra.mxu0 %v6933
    %6973 = vmatprep.subr.bf16.mxu0 0
    %6974 = vmatpush1.bf16.msra.mxu0 %v6934
    %6975 = vmatprep.subr.bf16.mxu0 0
    %6976 = vmatpush1.bf16.msra.mxu0 %v6935
    %6977 = vmatprep.subr.bf16.mxu0 0
    %6978 = vmatpush1.bf16.msra.mxu0 %v6936
    %6979 = vmatprep.subr.bf16.mxu0 0
    %6980 = vmatpush1.bf16.msra.mxu0 %v6937
    %6981 = vmatprep.subr.bf16.mxu0 0
    %6982 = vmatpush1.bf16.msra.mxu0 %v6938
    %6983 = vmatprep.subr.bf16.mxu0 0
    %6984 = vmatpush1.bf16.msra.mxu0 %v6939
    %6985 = vmatprep.subr.bf16.mxu0 0
    %6986 = vmatpush1.bf16.msra.mxu0 %v6940
    %6987 = vmatprep.subr.bf16.mxu0 0
    %6988 = vmatpush1.bf16.msra.mxu0 %v6941
    %6989 = vmatprep.subr.bf16.mxu0 0
    %6990 = vmatpush1.bf16.msra.mxu0 %v6942
    %6991 = vmatprep.mubr.bf16.mxu0 %v6823
    %6992 = vmatmul.mubr.bf16.gmra.mrb[0].mxu0 %v6822
    %v6993 = vpop.f32.mrb[0].mxu0
    %v6994 = vadd.f32 %v6861, %v6993
    %v6995 = vpop.f32.mrb[0].mxu0
    %v6996 = vpop.f32.mrb[0].mxu0
    %v6997 = vadd.f32 %v6861, %v6996
    %v6998 = vpop.f32.mrb[0].mxu0
    %6999 = vdwg.mxu0
    %v7000 = vmax.f32 %v6994, 0.0
    %v7001 = vmax.f32 %v6997, 0.0
    %v7002 = vld [vmem:[%s14] sm:$0x1]
    %v7004 = vlaneseq
    %v7005 = vshrl.u32 %v7004, 7
    %v7006 = vsub.s32 0, %v7005
    %v7007 = vrot.slane %v7002, %v7006
    %v7009 = vmul.f32 %v7000, %v7007
    %v7010 = vmul.f32 %v7001, %v7007
    %7011 = vadd.xlane.f32.xlu0 %v7009
    %v7012 = vpop.xlane.xlu0 %7011
    %7013 = vadd.xlane.f32.xlu0 %v7010
    %v7014 = vpop.xlane.xlu0 %7013
    %s7015 = sld [smem:[#allocation2]]
    %v7016 = vstv %s7015
    %v7017 = vadd.f32 %v7012, %v7016
    %v7018 = vadd.f32 %v7014, %v7016
    %v7019 = vxor.u32 %v7017, 2147483648
    %v7020 = vxor.u32 %v7018, 2147483648
    %v7021 = vmul.f32 %v7019, 1.442695
    %v7022 = vpow.pop %v7021
    %v7023 = vmul.f32 %v7020, 1.442695
    %v7024 = vpow.pop %v7023
    %v7025 = vadd.f32 %v7022, 1.0
    %v7026 = vadd.f32 %v7024, 1.0
    %v7027 = vrcp.pop %v7025
    %v7028 = vmul.f32 1.0, %v7027
    %v7029 = vrcp.pop %v7026
    %v7030 = vmul.f32 1.0, %v7029
    %v7033 = vlaneseq
    %v7034 = vand.u32 %v7033, 127
    %v7035 = vlaneseq
    %v7036 = vshrl.u32 %v7035, 7
    %v7037 = vsub.s32 %v7034, %v7036
    %v7038 = vrot.slane %v7028, %v7037
    %v7039 = vlaneseq
    %v7040 = vshrl.u32 %v7039, 7
    %v7041 = vsub.s32 %v7034, %v7040
    %v7042 = vrot.slane %v7030, %v7041
    %vm7043 = vcmask 1041409
    %v7044 = vsel %vm7043, %v7042, %v7038
    %vm7046 = vcmask 58368
    %7047 = vst.msk [vmem:[#allocation15] sm:$0x3] %vm7046, %v7044
    // Predicated region
    $region94: #{tpu_custom_call.1} parent=1 // pred_check
      _
    $region95: #{tpu_custom_call.1} parent=1 // pred_check_branch
      %7049 = sbr.rel (0) target = $region97
    $region96: #{tpu_custom_call.1} parent=1 // pred_region
      %s7051 = ssub.s32 32, 32
      %7052 = vsyncadd [#allocation5], %s7051
      %s7054 = sshll.u32 [#allocation15], 4
      %s7055 = int_to_ptr.vmem [resolvable:$true] %s7054
      %7057 = dma.vmem_to_hbm [thread:$0]  %s7055, 32, %s16, [#allocation5]
    $region97: #{tpu_custom_call.1} parent=1 // pred_fallthru
      _
    // Predicated region
    $region98: #{tpu_custom_call.1} parent=1 // pred_check
      _
    $region99: #{tpu_custom_call.1} parent=1 // pred_check_branch
      %7059 = sbr.rel (0) target = $region101
    $region100: #{tpu_custom_call.1} parent=1 // pred_region
      %7060 = dma.done [#allocation5], 32
    $region101: #{tpu_custom_call.1} parent=1 // pred_fallthru
      _
    %7061 = vsyncpa [#allocation4], 1
    %7062 = vsyncpa [#allocation7], 1
    %7063 = vsyncpa [#allocation10], 1
    %7064 = vsyncpa [#allocation13], 1
    %7065 = vsyncpa [#allocation5], 1

</llo_original>
